<compile_context>
chip_gen: v5e
topology: v5e:2x2
jax: 0.10.0
libtpu: 0.0.40
codegen_flags: <defaults>
</compile_context>

<pallas_src>
import numpy as np
import jax
import jax.numpy as jnp
from jax.experimental import pallas as pl
from jax.experimental.pallas import tpu as pltpu


# --------------------------- Pallas kernels ---------------------------------

def _conv_mm_kernel(p_ref, w_ref, b_ref, o_ref):
    # patches(TM, K) bf16 @ weight(K, Cp) bf16 -> f32 acc -> + shift -> relu -> bf16
    acc = jnp.dot(p_ref[...], w_ref[...], preferred_element_type=jnp.float32)
    o_ref[...] = jnp.maximum(acc + b_ref[...], 0.0).astype(o_ref.dtype)


def _head_kernel(x_ref, w_ref, b_ref, o_ref):
    # x_ref: (B, 49, C) bf16 -> avgpool over spatial (f32) -> linear (bf16 dot, f32 out)
    feat = jnp.mean(x_ref[...].astype(jnp.float32), axis=1)
    o_ref[...] = jnp.dot(feat.astype(jnp.bfloat16), w_ref[...],
                         preferred_element_type=jnp.float32) + b_ref[...]


# --------------------------- helpers -----------------------------------------

def _round_up(n, m):
    return ((n + m - 1) // m) * m


def _choose_tiling(m, max_tm=1024):
    """Return (tm, mp).  Prefer a tile that divides m exactly (no padded rows), is a
    multiple of 8 and <= max_tm, and gives an even (>=4) number of grid steps so the
    'parallel' axis balances across v7x's 2 TensorCores; fall back progressively."""
    divs = [t for t in range(8, min(max_tm, m) + 1, 8) if m % t == 0]
    for pred in (lambda t: (m // t) % 2 == 0 and m // t >= 4,   # even, >=4 steps
                 lambda t: (m // t) % 2 == 0,                   # even steps
                 lambda t: m // t >= 2):                        # >=2 steps
        good = [t for t in divs if pred(t)]
        if good:
            return max(good), m
    if divs:                       # only a single-step divisor exists
        return max(divs), m
    # No multiple-of-8 divisor: pad rows (small M -> one padded step).
    if m <= 2048:
        mp = _round_up(m, 8)
        return mp, mp
    tm = 512
    return tm, _round_up(m, tm)


def _mm_relu(patches, w2, shift):
    """patches(M,K) bf16 @ w2(K,Cp) bf16 + shift(Cp,) -> relu -> (M,Cp) bf16.
    Cp must already be a multiple of 128 (lane-dense stores)."""
    M, K = patches.shape
    Cp = w2.shape[1]
    tm, Mp = _choose_tiling(M)
    if Mp != M:
        patches = jnp.pad(patches, ((0, Mp - M), (0, 0)))
    out = pl.pallas_call(
        _conv_mm_kernel,
        out_shape=jax.ShapeDtypeStruct((Mp, Cp), jnp.bfloat16),
        grid_spec=pltpu.PrefetchScalarGridSpec(
            num_scalar_prefetch=0,
            grid=(Mp // tm,),
            in_specs=[
                pl.BlockSpec((tm, K), lambda i: (i, 0)),
                pl.BlockSpec((K, Cp), lambda i: (0, 0)),
                pl.BlockSpec((1, Cp), lambda i: (0, 0)),
            ],
            out_specs=pl.BlockSpec((tm, Cp), lambda i: (i, 0)),
        ),
        compiler_params=pltpu.CompilerParams(
            dimension_semantics=("parallel",)),
    )(patches, w2, shift.reshape(1, Cp))
    return out[:M]


def _im2col(x, kh, kw, stride, padding):
    """NHWC -> (N*Ho*Wo, kh*kw*Cin) patches, tap-major then channel (plain-JAX glue)."""
    N, H, W, Cin = x.shape
    Ho = (H + 2 * padding - kh) // stride + 1
    Wo = (W + 2 * padding - kw) // stride + 1
    if padding:
        x = jnp.pad(x, ((0, 0), (padding, padding), (padding, padding), (0, 0)))
    if kh == 1 and kw == 1 and stride == 1:
        return x.reshape(N * Ho * Wo, Cin)
    cols = []
    for dh in range(kh):
        for dw in range(kw):
            cols.append(x[:, dh:dh + stride * Ho:stride,
                          dw:dw + stride * Wo:stride, :])
    return jnp.stack(cols, axis=3).reshape(N * Ho * Wo, kh * kw * Cin)


def _fold_pad_weight(w_hwio, scale, shift):
    """Fold BN scale into the conv weight and pad Cout to a multiple of 128."""
    kh, kw, Cin, Cout = w_hwio.shape
    Cp = _round_up(Cout, 128)
    w2 = (w_hwio * scale).reshape(kh * kw * Cin, Cout)
    w2 = jnp.pad(w2, ((0, 0), (0, Cp - Cout))).astype(jnp.bfloat16)
    sh = jnp.pad(shift, (0, Cp - Cout))
    return w2, sh, Cout


def _fuse_1x1(blocks):
    """Concatenate several 1x1 ConvBlock params along Cout (BN scale folded),
    lane-dense padded."""
    ws, shs = [], []
    for (w, s, b) in blocks:
        ws.append((w * s).reshape(w.shape[2], w.shape[3]))
        shs.append(b)
    w = jnp.concatenate(ws, axis=-1)
    sh = jnp.concatenate(shs, axis=-1)
    C = w.shape[-1]
    Cp = _round_up(C, 128)
    w = jnp.pad(w, ((0, 0), (0, Cp - C))).astype(jnp.bfloat16)
    sh = jnp.pad(sh, (0, Cp - C))
    return w, sh, C


def _block_diag(blocks):
    """blocks: list of (w2d(K_i,C_i) f32 BN-folded, shift(C_i,)).  Build a
    block-diagonal (sum K_i, Cp) weight (Cp = lane-dense padded sum C_i)."""
    Cs = [w.shape[1] for w, _ in blocks]
    Ctot = sum(Cs)
    Cp = _round_up(Ctot, 128)
    rows, co = [], 0
    for (w, _), c in zip(blocks, Cs):
        rows.append(jnp.pad(w, ((0, 0), (co, Cp - co - c))))
        co += c
    W = jnp.concatenate(rows, axis=0).astype(jnp.bfloat16)
    sh = jnp.pad(jnp.concatenate([b for _, b in blocks]), (0, Cp - Ctot))
    return W, sh, Ctot


# --------------------------- layer wrappers -----------------------------------

def conv_bn_relu(x, w_hwio, scale, shift, *, stride, padding):
    """x: (N,H,W,Cin) NHWC.  Fused conv + BN(eval) + ReLU via Pallas matmul."""
    N, H, W, Cin = x.shape
    kh, kw, _, _ = w_hwio.shape
    Ho = (H + 2 * padding - kh) // stride + 1
    Wo = (W + 2 * padding - kw) // stride + 1
    patches = _im2col(x, kh, kw, stride, padding).astype(jnp.bfloat16)
    w2, sh, Cout = _fold_pad_weight(w_hwio, scale, shift)
    out = _mm_relu(patches, w2, sh)
    return out[:, :Cout].reshape(N, Ho, Wo, Cout)


def maxpool_nhwc(x, *, k=3, stride=2, padding=1):
    """MaxPool2d(k, stride, padding) on NHWC.  Pure elementwise max of strided
    slices — left to XLA as one fused pass (no Pallas launch, no (k,M,C) tap-stack
    HBM round trip), per the performance review."""
    N, H, W, C = x.shape
    Ho = (H + 2 * padding - k) // stride + 1
    Wo = (W + 2 * padding - k) // stride + 1
    xp = jnp.pad(x, ((0, 0), (padding, padding), (padding, padding), (0, 0)),
                 constant_values=-jnp.inf)
    wm = xp[:, :, 0:stride * Wo:stride, :]
    for dw in range(1, k):
        wm = jnp.maximum(wm, xp[:, :, dw:dw + stride * Wo:stride, :])
    out = wm[:, 0:stride * Ho:stride, :, :]
    for dh in range(1, k):
        out = jnp.maximum(out, wm[:, dh:dh + stride * Ho:stride, :, :])
    return out


def head(x, w, b):
    """AvgPool2d(7) + flatten + Dropout(eval: identity) + Linear(224, num_classes)."""
    # TODO(synk): training-mode Dropout (random mask) not implemented; eval-mode identity.
    B, H, W, C = x.shape
    xf = x.reshape(B, H * W, C).astype(jnp.bfloat16)
    NC = w.shape[1]
    NCp = _round_up(NC, 128)                   # lane-dense store / even MXU tiles
    wp = jnp.pad(w, ((0, 0), (0, NCp - NC))).astype(jnp.bfloat16)
    bp = jnp.pad(b, (0, NCp - NC)).reshape(1, NCp)
    out = pl.pallas_call(
        _head_kernel,
        out_shape=jax.ShapeDtypeStruct((B, NCp), jnp.float32),
        in_specs=[pl.BlockSpec(memory_space=pltpu.MemorySpace.VMEM)] * 3,
        out_specs=pl.BlockSpec(memory_space=pltpu.MemorySpace.VMEM),
    )(xf, wp, bp)
    return out[:, :NC]


# --------------------------- parameters --------------------------------------

def make_convblock(key, cin, cout, k):
    """Deterministic synthetic Conv2d + BatchNorm2d (eval) params, folded into
    (weight_hwio, scale, shift) with y = relu((x conv w) * scale + shift)."""
    k1, k2, k3, k4, k5, k6 = jax.random.split(key, 6)
    w = jax.random.normal(k1, (k, k, cin, cout), jnp.float32) / np.sqrt(k * k * cin)
    bias = 0.01 * jax.random.normal(k2, (cout,), jnp.float32)
    gamma = 1.0 + 0.1 * jax.random.normal(k3, (cout,), jnp.float32)
    beta = 0.1 * jax.random.normal(k4, (cout,), jnp.float32)
    running_mean = 0.1 * jax.random.normal(k5, (cout,), jnp.float32)
    running_var = 1.0 + 0.5 * jax.random.uniform(k6, (cout,), jnp.float32)
    scale = gamma / jnp.sqrt(running_var + 1e-5)
    shift = (bias - running_mean) * scale + beta
    return w, scale, shift


def init_params(key, in_channels=3, num_classes=1000):
    keys = iter(jax.random.split(key, 64))
    p = {}
    p["conv1"] = make_convblock(next(keys), in_channels, 32, 7)
    p["conv2"] = make_convblock(next(keys), 32, 64, 3)

    def make_inception(cin, n1, n3r, n3, n5r, n5, npool):
        return {
            "1x1": make_convblock(next(keys), cin, n1, 1),
            "3x3red": make_convblock(next(keys), cin, n3r, 1),
            "3x3": make_convblock(next(keys), n3r, n3, 3),
            "5x5red": make_convblock(next(keys), cin, n5r, 1),
            "5x5": make_convblock(next(keys), n5r, n5, 5),
            "pool_proj": make_convblock(next(keys), cin, npool, 1),
        }

    p["inc3a"] = make_inception(64, 32, 32, 64, 16, 16, 16)    # -> 128 ch
    p["inc4a"] = make_inception(128, 32, 32, 64, 16, 16, 16)   # -> 128 ch
    p["inc5a"] = make_inception(128, 64, 64, 128, 16, 16, 16)  # -> 224 ch
    kw, kb = jax.random.split(next(keys))
    p["linear_w"] = jax.random.normal(kw, (224, num_classes), jnp.float32) / np.sqrt(224)
    p["linear_b"] = 0.01 * jax.random.normal(kb, (num_classes,), jnp.float32)
    return p


# --------------------------- model forward -----------------------------------

def inception_block(x, p):
    """Two Pallas calls: (A) fused 1x1 trio, (B) merged 3x3 + 5x5 + pool_proj."""
    N, H, W, Cin = x.shape
    M = N * H * W
    n1 = p["1x1"][0].shape[-1]
    n3r = p["3x3red"][0].shape[-1]
    n5r = p["5x5red"][0].shape[-1]
    n3 = p["3x3"][0].shape[-1]
    n5 = p["5x5"][0].shape[-1]
    npool = p["pool_proj"][0].shape[-1]

    # --- call A: three input-sharing 1x1 convs fused into one matmul -----------
    wf, sf, n_trio = _fuse_1x1([p["1x1"], p["3x3red"], p["5x5red"]])
    y = _mm_relu(x.reshape(M, Cin).astype(jnp.bfloat16), wf, sf)
    y = y[:, :n_trio].reshape(N, H, W, n_trio)
    x1 = y[..., :n1]

    # --- stride-1 3x3 maxpool (fused elementwise in XLA, stays bf16) -----------
    pooled = maxpool_nhwc(x, k=3, stride=1, padding=1)

    # --- call B: 3x3 conv + 5x5 conv + pool_proj merged (block-diagonal weight) -
    p3 = _im2col(y[..., n1:n1 + n3r], 3, 3, 1, 1)
    p5 = _im2col(y[..., n1 + n3r:n1 + n3r + n5r], 5, 5, 1, 2)
    pp = pooled.reshape(M, Cin)
    patches = jnp.concatenate([p3, p5, pp], axis=1).astype(jnp.bfloat16)

    wB, sB, nB = _block_diag([
        ((p["3x3"][0] * p["3x3"][1]).reshape(9 * n3r, n3), p["3x3"][2]),
        ((p["5x5"][0] * p["5x5"][1]).reshape(25 * n5r, n5), p["5x5"][2]),
        ((p["pool_proj"][0] * p["pool_proj"][1]).reshape(Cin, npool), p["pool_proj"][2]),
    ])
    z = _mm_relu(patches, wB, sB)[:, :nB].reshape(N, H, W, nB)

    # torch.cat([x1, x2, x3, x4], dim=1) == NHWC channel concat of [x1 | 3x3 5x5 pool]
    return jnp.concatenate([x1, z], axis=-1)


def neural_net_forward(params, x_nchw):
    x = jnp.transpose(x_nchw, (0, 2, 3, 1))  # NCHW (PyTorch) -> NHWC (kernel layout)
    x = conv_bn_relu(x, *params["conv1"], stride=2, padding=3)   # (B,112,112, 32) bf16
    x = maxpool_nhwc(x, k=3, stride=2, padding=1)                # (B, 56, 56, 32)
    x = conv_bn_relu(x, *params["conv2"], stride=1, padding=1)   # (B, 56, 56, 64)
    x = maxpool_nhwc(x, k=3, stride=2, padding=1)                # (B, 28, 28, 64)
    x = inception_block(x, params["inc3a"])                      # (B, 28, 28,128)
    x = maxpool_nhwc(x, k=3, stride=2, padding=1)                # (B, 14, 14,128)
    x = inception_block(x, params["inc4a"])                      # (B, 14, 14,128)
    x = maxpool_nhwc(x, k=3, stride=2, padding=1)                # (B,  7,  7,128)
    x = inception_block(x, params["inc5a"])                      # (B,  7,  7,224)
    return head(x, params["linear_w"], params["linear_b"])       # (B, num_classes) f32


# --------------------------- main ---------------------------------------------

if __name__ == "__main__":
    key = jax.random.PRNGKey(0)
    kp, kx = jax.random.split(key)
    num_classes = 1000
    params = init_params(kp, in_channels=3, num_classes=num_classes)
    # The PyTorch forward implies 224x224 input (Linear expects 224 features =
    # inception5a channels with a 1x1 spatial map after AvgPool2d(7)).
    x = jax.random.normal(kx, (2, 3, 224, 224), jnp.float32)  # NCHW, like PyTorch
    fwd = jax.jit(neural_net_forward)
    out = jax.block_until_ready(fwd(params, x))
    assert out.shape == (2, num_classes) and bool(jnp.all(jnp.isfinite(out)))
    print("KERNEL_OK")
</pallas_src>

<mosaic_0001>
module attributes {stable_mosaic.version = 11 : i64} {
  func.func @_conv_mm_kernel(%arg0: i32, %arg1: memref<896x147xbf16, #tpu.memory_space<vmem>>, %arg2: memref<147x128xbf16, #tpu.memory_space<vmem>>, %arg3: memref<1x128xf32, #tpu.memory_space<vmem>>, %arg4: memref<896x128xbf16, #tpu.memory_space<vmem>>) attributes {dimension_semantics = [#tpu.dimension_semantics<parallel>], iteration_bounds = array<i64: 28>, scalar_prefetch = 0 : i64, scratch_operands = 0 : i64, tpu.core_type = #tpu.core_type<tc>, window_params = [{transform_indices = @transform_0, window_bounds = array<i64: 896, 147>}, {pipeline_mode = #tpu.pipeline_mode<synchronous>, transform_indices = @transform_1, window_bounds = array<i64: 147, 128>}, {pipeline_mode = #tpu.pipeline_mode<synchronous>, transform_indices = @transform_2, window_bounds = array<i64: 1, 128>}, {transform_indices = @transform_3, window_bounds = array<i64: 896, 128>}]} {
    %c0 = arith.constant 0 : index
    %c0_0 = arith.constant 0 : index
    %0 = vector.load %arg1[%c0, %c0_0] : memref<896x147xbf16, #tpu.memory_space<vmem>>, vector<896x147xbf16>
    %c0_1 = arith.constant 0 : index
    %c0_2 = arith.constant 0 : index
    %1 = vector.load %arg2[%c0_1, %c0_2] : memref<147x128xbf16, #tpu.memory_space<vmem>>, vector<147x128xbf16>
    %cst = arith.constant dense<0.000000e+00> : vector<896x128xf32>
    %2 = tpu.matmul %0, %1, %cst {dimension_numbers = #tpu.dot_dimension_numbers<[1], [0], [0], [1], [0, 0, 1, 1], [], []>} : vector<896x147xbf16>, vector<147x128xbf16>, vector<896x128xf32> -> vector<896x128xf32>
    %c0_3 = arith.constant 0 : index
    %c0_4 = arith.constant 0 : index
    %3 = vector.load %arg3[%c0_3, %c0_4] : memref<1x128xf32, #tpu.memory_space<vmem>>, vector<1x128xf32>
    %4 = vector.broadcast %3 : vector<1x128xf32> to vector<896x128xf32>
    %5 = arith.addf %2, %4 : vector<896x128xf32>
    %cst_5 = arith.constant 0.000000e+00 : f32
    %6 = vector.broadcast %cst_5 : f32 to vector<896x128xf32>
    %7 = arith.maximumf %5, %6 : vector<896x128xf32>
    %8 = arith.truncf %7 : vector<896x128xf32> to vector<896x128xbf16>
    %c0_6 = arith.constant 0 : index
    %c0_7 = arith.constant 0 : index
    %9 = vector.load %arg4[%c0_6, %c0_7] : memref<896x128xbf16, #tpu.memory_space<vmem>>, vector<896x128xbf16>
    tpu.vector_store %arg4[%c0_6, %c0_7], %8 {strides = array<i32>} : memref<896x128xbf16, #tpu.memory_space<vmem>>, vector<896x128xbf16>,
    return
  }
  func.func @transform_0(%arg0: i32) -> (i32, i32) {
    %c0_i32 = arith.constant 0 : i32
    %c0_i32_0 = arith.constant 0 : i32
    return %arg0, %c0_i32 : i32, i32
  }
  func.func @transform_1(%arg0: i32) -> (i32, i32) {
    %c0_i32 = arith.constant 0 : i32
    %c0_i32_0 = arith.constant 0 : i32
    %c0_i32_1 = arith.constant 0 : i32
    return %c0_i32, %c0_i32_0 : i32, i32
  }
  func.func @transform_2(%arg0: i32) -> (i32, i32) {
    %c0_i32 = arith.constant 0 : i32
    %c0_i32_0 = arith.constant 0 : i32
    %c0_i32_1 = arith.constant 0 : i32
    return %c0_i32, %c0_i32_0 : i32, i32
  }
  func.func @transform_3(%arg0: i32) -> (i32, i32) {
    %c0_i32 = arith.constant 0 : i32
    %c0_i32_0 = arith.constant 0 : i32
    return %arg0, %c0_i32 : i32, i32
  }
}

module attributes {stable_mosaic.version = 11 : i64} {
  func.func @_conv_mm_kernel(%arg0: i32, %arg1: memref<784x288xbf16, #tpu.memory_space<vmem>>, %arg2: memref<288x128xbf16, #tpu.memory_space<vmem>>, %arg3: memref<1x128xf32, #tpu.memory_space<vmem>>, %arg4: memref<784x128xbf16, #tpu.memory_space<vmem>>) attributes {dimension_semantics = [#tpu.dimension_semantics<parallel>], iteration_bounds = array<i64: 8>, scalar_prefetch = 0 : i64, scratch_operands = 0 : i64, tpu.core_type = #tpu.core_type<tc>, window_params = [{transform_indices = @transform_0, window_bounds = array<i64: 784, 288>}, {pipeline_mode = #tpu.pipeline_mode<synchronous>, transform_indices = @transform_1, window_bounds = array<i64: 288, 128>}, {pipeline_mode = #tpu.pipeline_mode<synchronous>, transform_indices = @transform_2, window_bounds = array<i64: 1, 128>}, {transform_indices = @transform_3, window_bounds = array<i64: 784, 128>}]} {
    %c0 = arith.constant 0 : index
    %c0_0 = arith.constant 0 : index
    %0 = vector.load %arg1[%c0, %c0_0] : memref<784x288xbf16, #tpu.memory_space<vmem>>, vector<784x288xbf16>
    %c0_1 = arith.constant 0 : index
    %c0_2 = arith.constant 0 : index
    %1 = vector.load %arg2[%c0_1, %c0_2] : memref<288x128xbf16, #tpu.memory_space<vmem>>, vector<288x128xbf16>
    %cst = arith.constant dense<0.000000e+00> : vector<784x128xf32>
    %2 = tpu.matmul %0, %1, %cst {dimension_numbers = #tpu.dot_dimension_numbers<[1], [0], [0], [1], [0, 0, 1, 1], [], []>} : vector<784x288xbf16>, vector<288x128xbf16>, vector<784x128xf32> -> vector<784x128xf32>
    %c0_3 = arith.constant 0 : index
    %c0_4 = arith.constant 0 : index
    %3 = vector.load %arg3[%c0_3, %c0_4] : memref<1x128xf32, #tpu.memory_space<vmem>>, vector<1x128xf32>
    %4 = vector.broadcast %3 : vector<1x128xf32> to vector<784x128xf32>
    %5 = arith.addf %2, %4 : vector<784x128xf32>
    %cst_5 = arith.constant 0.000000e+00 : f32
    %6 = vector.broadcast %cst_5 : f32 to vector<784x128xf32>
    %7 = arith.maximumf %5, %6 : vector<784x128xf32>
    %8 = arith.truncf %7 : vector<784x128xf32> to vector<784x128xbf16>
    %c0_6 = arith.constant 0 : index
    %c0_7 = arith.constant 0 : index
    %9 = vector.load %arg4[%c0_6, %c0_7] : memref<784x128xbf16, #tpu.memory_space<vmem>>, vector<784x128xbf16>
    tpu.vector_store %arg4[%c0_6, %c0_7], %8 {strides = array<i32>} : memref<784x128xbf16, #tpu.memory_space<vmem>>, vector<784x128xbf16>,
    return
  }
  func.func @transform_0(%arg0: i32) -> (i32, i32) {
    %c0_i32 = arith.constant 0 : i32
    %c0_i32_0 = arith.constant 0 : i32
    return %arg0, %c0_i32 : i32, i32
  }
  func.func @transform_1(%arg0: i32) -> (i32, i32) {
    %c0_i32 = arith.constant 0 : i32
    %c0_i32_0 = arith.constant 0 : i32
    %c0_i32_1 = arith.constant 0 : i32
    return %c0_i32, %c0_i32_0 : i32, i32
  }
  func.func @transform_2(%arg0: i32) -> (i32, i32) {
    %c0_i32 = arith.constant 0 : i32
    %c0_i32_0 = arith.constant 0 : i32
    %c0_i32_1 = arith.constant 0 : i32
    return %c0_i32, %c0_i32_0 : i32, i32
  }
  func.func @transform_3(%arg0: i32) -> (i32, i32) {
    %c0_i32 = arith.constant 0 : i32
    %c0_i32_0 = arith.constant 0 : i32
    return %arg0, %c0_i32 : i32, i32
  }
}

module attributes {stable_mosaic.version = 11 : i64} {
  func.func @_conv_mm_kernel(%arg0: i32, %arg1: memref<392x64xbf16, #tpu.memory_space<vmem>>, %arg2: memref<64x128xbf16, #tpu.memory_space<vmem>>, %arg3: memref<1x128xf32, #tpu.memory_space<vmem>>, %arg4: memref<392x128xbf16, #tpu.memory_space<vmem>>) attributes {dimension_semantics = [#tpu.dimension_semantics<parallel>], iteration_bounds = array<i64: 4>, scalar_prefetch = 0 : i64, scratch_operands = 0 : i64, tpu.core_type = #tpu.core_type<tc>, window_params = [{transform_indices = @transform_0, window_bounds = array<i64: 392, 64>}, {pipeline_mode = #tpu.pipeline_mode<synchronous>, transform_indices = @transform_1, window_bounds = array<i64: 64, 128>}, {pipeline_mode = #tpu.pipeline_mode<synchronous>, transform_indices = @transform_2, window_bounds = array<i64: 1, 128>}, {transform_indices = @transform_3, window_bounds = array<i64: 392, 128>}]} {
    %c0 = arith.constant 0 : index
    %c0_0 = arith.constant 0 : index
    %0 = vector.load %arg1[%c0, %c0_0] : memref<392x64xbf16, #tpu.memory_space<vmem>>, vector<392x64xbf16>
    %c0_1 = arith.constant 0 : index
    %c0_2 = arith.constant 0 : index
    %1 = vector.load %arg2[%c0_1, %c0_2] : memref<64x128xbf16, #tpu.memory_space<vmem>>, vector<64x128xbf16>
    %cst = arith.constant dense<0.000000e+00> : vector<392x128xf32>
    %2 = tpu.matmul %0, %1, %cst {dimension_numbers = #tpu.dot_dimension_numbers<[1], [0], [0], [1], [0, 0, 1, 1], [], []>} : vector<392x64xbf16>, vector<64x128xbf16>, vector<392x128xf32> -> vector<392x128xf32>
    %c0_3 = arith.constant 0 : index
    %c0_4 = arith.constant 0 : index
    %3 = vector.load %arg3[%c0_3, %c0_4] : memref<1x128xf32, #tpu.memory_space<vmem>>, vector<1x128xf32>
    %4 = vector.broadcast %3 : vector<1x128xf32> to vector<392x128xf32>
    %5 = arith.addf %2, %4 : vector<392x128xf32>
    %cst_5 = arith.constant 0.000000e+00 : f32
    %6 = vector.broadcast %cst_5 : f32 to vector<392x128xf32>
    %7 = arith.maximumf %5, %6 : vector<392x128xf32>
    %8 = arith.truncf %7 : vector<392x128xf32> to vector<392x128xbf16>
    %c0_6 = arith.constant 0 : index
    %c0_7 = arith.constant 0 : index
    %9 = vector.load %arg4[%c0_6, %c0_7] : memref<392x128xbf16, #tpu.memory_space<vmem>>, vector<392x128xbf16>
    tpu.vector_store %arg4[%c0_6, %c0_7], %8 {strides = array<i32>} : memref<392x128xbf16, #tpu.memory_space<vmem>>, vector<392x128xbf16>,
    return
  }
  func.func @transform_0(%arg0: i32) -> (i32, i32) {
    %c0_i32 = arith.constant 0 : i32
    %c0_i32_0 = arith.constant 0 : i32
    return %arg0, %c0_i32 : i32, i32
  }
  func.func @transform_1(%arg0: i32) -> (i32, i32) {
    %c0_i32 = arith.constant 0 : i32
    %c0_i32_0 = arith.constant 0 : i32
    %c0_i32_1 = arith.constant 0 : i32
    return %c0_i32, %c0_i32_0 : i32, i32
  }
  func.func @transform_2(%arg0: i32) -> (i32, i32) {
    %c0_i32 = arith.constant 0 : i32
    %c0_i32_0 = arith.constant 0 : i32
    %c0_i32_1 = arith.constant 0 : i32
    return %c0_i32, %c0_i32_0 : i32, i32
  }
  func.func @transform_3(%arg0: i32) -> (i32, i32) {
    %c0_i32 = arith.constant 0 : i32
    %c0_i32_0 = arith.constant 0 : i32
    return %arg0, %c0_i32 : i32, i32
  }
}

module attributes {stable_mosaic.version = 11 : i64} {
  func.func @_conv_mm_kernel(%arg0: i32, %arg1: memref<392x752xbf16, #tpu.memory_space<vmem>>, %arg2: memref<752x128xbf16, #tpu.memory_space<vmem>>, %arg3: memref<1x128xf32, #tpu.memory_space<vmem>>, %arg4: memref<392x128xbf16, #tpu.memory_space<vmem>>) attributes {dimension_semantics = [#tpu.dimension_semantics<parallel>], iteration_bounds = array<i64: 4>, scalar_prefetch = 0 : i64, scratch_operands = 0 : i64, tpu.core_type = #tpu.core_type<tc>, window_params = [{transform_indices = @transform_0, window_bounds = array<i64: 392, 752>}, {pipeline_mode = #tpu.pipeline_mode<synchronous>, transform_indices = @transform_1, window_bounds = array<i64: 752, 128>}, {pipeline_mode = #tpu.pipeline_mode<synchronous>, transform_indices = @transform_2, window_bounds = array<i64: 1, 128>}, {transform_indices = @transform_3, window_bounds = array<i64: 392, 128>}]} {
    %c0 = arith.constant 0 : index
    %c0_0 = arith.constant 0 : index
    %0 = vector.load %arg1[%c0, %c0_0] : memref<392x752xbf16, #tpu.memory_space<vmem>>, vector<392x752xbf16>
    %c0_1 = arith.constant 0 : index
    %c0_2 = arith.constant 0 : index
    %1 = vector.load %arg2[%c0_1, %c0_2] : memref<752x128xbf16, #tpu.memory_space<vmem>>, vector<752x128xbf16>
    %cst = arith.constant dense<0.000000e+00> : vector<392x128xf32>
    %2 = tpu.matmul %0, %1, %cst {dimension_numbers = #tpu.dot_dimension_numbers<[1], [0], [0], [1], [0, 0, 1, 1], [], []>} : vector<392x752xbf16>, vector<752x128xbf16>, vector<392x128xf32> -> vector<392x128xf32>
    %c0_3 = arith.constant 0 : index
    %c0_4 = arith.constant 0 : index
    %3 = vector.load %arg3[%c0_3, %c0_4] : memref<1x128xf32, #tpu.memory_space<vmem>>, vector<1x128xf32>
    %4 = vector.broadcast %3 : vector<1x128xf32> to vector<392x128xf32>
    %5 = arith.addf %2, %4 : vector<392x128xf32>
    %cst_5 = arith.constant 0.000000e+00 : f32
    %6 = vector.broadcast %cst_5 : f32 to vector<392x128xf32>
    %7 = arith.maximumf %5, %6 : vector<392x128xf32>
    %8 = arith.truncf %7 : vector<392x128xf32> to vector<392x128xbf16>
    %c0_6 = arith.constant 0 : index
    %c0_7 = arith.constant 0 : index
    %9 = vector.load %arg4[%c0_6, %c0_7] : memref<392x128xbf16, #tpu.memory_space<vmem>>, vector<392x128xbf16>
    tpu.vector_store %arg4[%c0_6, %c0_7], %8 {strides = array<i32>} : memref<392x128xbf16, #tpu.memory_space<vmem>>, vector<392x128xbf16>,
    return
  }
  func.func @transform_0(%arg0: i32) -> (i32, i32) {
    %c0_i32 = arith.constant 0 : i32
    %c0_i32_0 = arith.constant 0 : i32
    return %arg0, %c0_i32 : i32, i32
  }
  func.func @transform_1(%arg0: i32) -> (i32, i32) {
    %c0_i32 = arith.constant 0 : i32
    %c0_i32_0 = arith.constant 0 : i32
    %c0_i32_1 = arith.constant 0 : i32
    return %c0_i32, %c0_i32_0 : i32, i32
  }
  func.func @transform_2(%arg0: i32) -> (i32, i32) {
    %c0_i32 = arith.constant 0 : i32
    %c0_i32_0 = arith.constant 0 : i32
    %c0_i32_1 = arith.constant 0 : i32
    return %c0_i32, %c0_i32_0 : i32, i32
  }
  func.func @transform_3(%arg0: i32) -> (i32, i32) {
    %c0_i32 = arith.constant 0 : i32
    %c0_i32_0 = arith.constant 0 : i32
    return %arg0, %c0_i32 : i32, i32
  }
}

module attributes {stable_mosaic.version = 11 : i64} {
  func.func @_conv_mm_kernel(%arg0: i32, %arg1: memref<56x128xbf16, #tpu.memory_space<vmem>>, %arg2: memref<128x128xbf16, #tpu.memory_space<vmem>>, %arg3: memref<1x128xf32, #tpu.memory_space<vmem>>, %arg4: memref<56x128xbf16, #tpu.memory_space<vmem>>) attributes {dimension_semantics = [#tpu.dimension_semantics<parallel>], iteration_bounds = array<i64: 7>, scalar_prefetch = 0 : i64, scratch_operands = 0 : i64, tpu.core_type = #tpu.core_type<tc>, window_params = [{transform_indices = @transform_0, window_bounds = array<i64: 56, 128>}, {pipeline_mode = #tpu.pipeline_mode<synchronous>, transform_indices = @transform_1, window_bounds = array<i64: 128, 128>}, {pipeline_mode = #tpu.pipeline_mode<synchronous>, transform_indices = @transform_2, window_bounds = array<i64: 1, 128>}, {transform_indices = @transform_3, window_bounds = array<i64: 56, 128>}]} {
    %c0 = arith.constant 0 : index
    %c0_0 = arith.constant 0 : index
    %0 = vector.load %arg1[%c0, %c0_0] : memref<56x128xbf16, #tpu.memory_space<vmem>>, vector<56x128xbf16>
    %c0_1 = arith.constant 0 : index
    %c0_2 = arith.constant 0 : index
    %1 = vector.load %arg2[%c0_1, %c0_2] : memref<128x128xbf16, #tpu.memory_space<vmem>>, vector<128x128xbf16>
    %cst = arith.constant dense<0.000000e+00> : vector<56x128xf32>
    %2 = tpu.matmul %0, %1, %cst {dimension_numbers = #tpu.dot_dimension_numbers<[1], [0], [0], [1], [0, 0, 1, 1], [], []>} : vector<56x128xbf16>, vector<128x128xbf16>, vector<56x128xf32> -> vector<56x128xf32>
    %c0_3 = arith.constant 0 : index
    %c0_4 = arith.constant 0 : index
    %3 = vector.load %arg3[%c0_3, %c0_4] : memref<1x128xf32, #tpu.memory_space<vmem>>, vector<1x128xf32>
    %4 = vector.broadcast %3 : vector<1x128xf32> to vector<56x128xf32>
    %5 = arith.addf %2, %4 : vector<56x128xf32>
    %cst_5 = arith.constant 0.000000e+00 : f32
    %6 = vector.broadcast %cst_5 : f32 to vector<56x128xf32>
    %7 = arith.maximumf %5, %6 : vector<56x128xf32>
    %8 = arith.truncf %7 : vector<56x128xf32> to vector<56x128xbf16>
    %c0_6 = arith.constant 0 : index
    %c0_7 = arith.constant 0 : index
    %9 = vector.load %arg4[%c0_6, %c0_7] : memref<56x128xbf16, #tpu.memory_space<vmem>>, vector<56x128xbf16>
    tpu.vector_store %arg4[%c0_6, %c0_7], %8 {strides = array<i32>} : memref<56x128xbf16, #tpu.memory_space<vmem>>, vector<56x128xbf16>,
    return
  }
  func.func @transform_0(%arg0: i32) -> (i32, i32) {
    %c0_i32 = arith.constant 0 : i32
    %c0_i32_0 = arith.constant 0 : i32
    return %arg0, %c0_i32 : i32, i32
  }
  func.func @transform_1(%arg0: i32) -> (i32, i32) {
    %c0_i32 = arith.constant 0 : i32
    %c0_i32_0 = arith.constant 0 : i32
    %c0_i32_1 = arith.constant 0 : i32
    return %c0_i32, %c0_i32_0 : i32, i32
  }
  func.func @transform_2(%arg0: i32) -> (i32, i32) {
    %c0_i32 = arith.constant 0 : i32
    %c0_i32_0 = arith.constant 0 : i32
    %c0_i32_1 = arith.constant 0 : i32
    return %c0_i32, %c0_i32_0 : i32, i32
  }
  func.func @transform_3(%arg0: i32) -> (i32, i32) {
    %c0_i32 = arith.constant 0 : i32
    %c0_i32_0 = arith.constant 0 : i32
    return %arg0, %c0_i32 : i32, i32
  }
}

module attributes {stable_mosaic.version = 11 : i64} {
  func.func @_conv_mm_kernel(%arg0: i32, %arg1: memref<56x816xbf16, #tpu.memory_space<vmem>>, %arg2: memref<816x128xbf16, #tpu.memory_space<vmem>>, %arg3: memref<1x128xf32, #tpu.memory_space<vmem>>, %arg4: memref<56x128xbf16, #tpu.memory_space<vmem>>) attributes {dimension_semantics = [#tpu.dimension_semantics<parallel>], iteration_bounds = array<i64: 7>, scalar_prefetch = 0 : i64, scratch_operands = 0 : i64, tpu.core_type = #tpu.core_type<tc>, window_params = [{transform_indices = @transform_0, window_bounds = array<i64: 56, 816>}, {pipeline_mode = #tpu.pipeline_mode<synchronous>, transform_indices = @transform_1, window_bounds = array<i64: 816, 128>}, {pipeline_mode = #tpu.pipeline_mode<synchronous>, transform_indices = @transform_2, window_bounds = array<i64: 1, 128>}, {transform_indices = @transform_3, window_bounds = array<i64: 56, 128>}]} {
    %c0 = arith.constant 0 : index
    %c0_0 = arith.constant 0 : index
    %0 = vector.load %arg1[%c0, %c0_0] : memref<56x816xbf16, #tpu.memory_space<vmem>>, vector<56x816xbf16>
    %c0_1 = arith.constant 0 : index
    %c0_2 = arith.constant 0 : index
    %1 = vector.load %arg2[%c0_1, %c0_2] : memref<816x128xbf16, #tpu.memory_space<vmem>>, vector<816x128xbf16>
    %cst = arith.constant dense<0.000000e+00> : vector<56x128xf32>
    %2 = tpu.matmul %0, %1, %cst {dimension_numbers = #tpu.dot_dimension_numbers<[1], [0], [0], [1], [0, 0, 1, 1], [], []>} : vector<56x816xbf16>, vector<816x128xbf16>, vector<56x128xf32> -> vector<56x128xf32>
    %c0_3 = arith.constant 0 : index
    %c0_4 = arith.constant 0 : index
    %3 = vector.load %arg3[%c0_3, %c0_4] : memref<1x128xf32, #tpu.memory_space<vmem>>, vector<1x128xf32>
    %4 = vector.broadcast %3 : vector<1x128xf32> to vector<56x128xf32>
    %5 = arith.addf %2, %4 : vector<56x128xf32>
    %cst_5 = arith.constant 0.000000e+00 : f32
    %6 = vector.broadcast %cst_5 : f32 to vector<56x128xf32>
    %7 = arith.maximumf %5, %6 : vector<56x128xf32>
    %8 = arith.truncf %7 : vector<56x128xf32> to vector<56x128xbf16>
    %c0_6 = arith.constant 0 : index
    %c0_7 = arith.constant 0 : index
    %9 = vector.load %arg4[%c0_6, %c0_7] : memref<56x128xbf16, #tpu.memory_space<vmem>>, vector<56x128xbf16>
    tpu.vector_store %arg4[%c0_6, %c0_7], %8 {strides = array<i32>} : memref<56x128xbf16, #tpu.memory_space<vmem>>, vector<56x128xbf16>,
    return
  }
  func.func @transform_0(%arg0: i32) -> (i32, i32) {
    %c0_i32 = arith.constant 0 : i32
    %c0_i32_0 = arith.constant 0 : i32
    return %arg0, %c0_i32 : i32, i32
  }
  func.func @transform_1(%arg0: i32) -> (i32, i32) {
    %c0_i32 = arith.constant 0 : i32
    %c0_i32_0 = arith.constant 0 : i32
    %c0_i32_1 = arith.constant 0 : i32
    return %c0_i32, %c0_i32_0 : i32, i32
  }
  func.func @transform_2(%arg0: i32) -> (i32, i32) {
    %c0_i32 = arith.constant 0 : i32
    %c0_i32_0 = arith.constant 0 : i32
    %c0_i32_1 = arith.constant 0 : i32
    return %c0_i32, %c0_i32_0 : i32, i32
  }
  func.func @transform_3(%arg0: i32) -> (i32, i32) {
    %c0_i32 = arith.constant 0 : i32
    %c0_i32_0 = arith.constant 0 : i32
    return %arg0, %c0_i32 : i32, i32
  }
}

module attributes {stable_mosaic.version = 11 : i64} {
  func.func @_conv_mm_kernel(%arg0: i32, %arg1: memref<104x128xbf16, #tpu.memory_space<vmem>>, %arg2: memref<128x256xbf16, #tpu.memory_space<vmem>>, %arg3: memref<1x256xf32, #tpu.memory_space<vmem>>, %arg4: memref<104x256xbf16, #tpu.memory_space<vmem>>) attributes {dimension_semantics = [#tpu.dimension_semantics<parallel>], iteration_bounds = array<i64: 1>, scalar_prefetch = 0 : i64, scratch_operands = 0 : i64, tpu.core_type = #tpu.core_type<tc>, window_params = [{transform_indices = @transform_0, window_bounds = array<i64: 104, 128>}, {pipeline_mode = #tpu.pipeline_mode<synchronous>, transform_indices = @transform_1, window_bounds = array<i64: 128, 256>}, {pipeline_mode = #tpu.pipeline_mode<synchronous>, transform_indices = @transform_2, window_bounds = array<i64: 1, 256>}, {transform_indices = @transform_3, window_bounds = array<i64: 104, 256>}]} {
    %c0 = arith.constant 0 : index
    %c0_0 = arith.constant 0 : index
    %0 = vector.load %arg1[%c0, %c0_0] : memref<104x128xbf16, #tpu.memory_space<vmem>>, vector<104x128xbf16>
    %c0_1 = arith.constant 0 : index
    %c0_2 = arith.constant 0 : index
    %1 = vector.load %arg2[%c0_1, %c0_2] : memref<128x256xbf16, #tpu.memory_space<vmem>>, vector<128x256xbf16>
    %cst = arith.constant dense<0.000000e+00> : vector<104x256xf32>
    %2 = tpu.matmul %0, %1, %cst {dimension_numbers = #tpu.dot_dimension_numbers<[1], [0], [0], [1], [0, 0, 1, 1], [], []>} : vector<104x128xbf16>, vector<128x256xbf16>, vector<104x256xf32> -> vector<104x256xf32>
    %c0_3 = arith.constant 0 : index
    %c0_4 = arith.constant 0 : index
    %3 = vector.load %arg3[%c0_3, %c0_4] : memref<1x256xf32, #tpu.memory_space<vmem>>, vector<1x256xf32>
    %4 = vector.broadcast %3 : vector<1x256xf32> to vector<104x256xf32>
    %5 = arith.addf %2, %4 : vector<104x256xf32>
    %cst_5 = arith.constant 0.000000e+00 : f32
    %6 = vector.broadcast %cst_5 : f32 to vector<104x256xf32>
    %7 = arith.maximumf %5, %6 : vector<104x256xf32>
    %8 = arith.truncf %7 : vector<104x256xf32> to vector<104x256xbf16>
    %c0_6 = arith.constant 0 : index
    %c0_7 = arith.constant 0 : index
    %9 = vector.load %arg4[%c0_6, %c0_7] : memref<104x256xbf16, #tpu.memory_space<vmem>>, vector<104x256xbf16>
    tpu.vector_store %arg4[%c0_6, %c0_7], %8 {strides = array<i32>} : memref<104x256xbf16, #tpu.memory_space<vmem>>, vector<104x256xbf16>,
    return
  }
  func.func @transform_0(%arg0: i32) -> (i32, i32) {
    %c0_i32 = arith.constant 0 : i32
    %c0_i32_0 = arith.constant 0 : i32
    return %arg0, %c0_i32 : i32, i32
  }
  func.func @transform_1(%arg0: i32) -> (i32, i32) {
    %c0_i32 = arith.constant 0 : i32
    %c0_i32_0 = arith.constant 0 : i32
    %c0_i32_1 = arith.constant 0 : i32
    return %c0_i32, %c0_i32_0 : i32, i32
  }
  func.func @transform_2(%arg0: i32) -> (i32, i32) {
    %c0_i32 = arith.constant 0 : i32
    %c0_i32_0 = arith.constant 0 : i32
    %c0_i32_1 = arith.constant 0 : i32
    return %c0_i32, %c0_i32_0 : i32, i32
  }
  func.func @transform_3(%arg0: i32) -> (i32, i32) {
    %c0_i32 = arith.constant 0 : i32
    %c0_i32_0 = arith.constant 0 : i32
    return %arg0, %c0_i32 : i32, i32
  }
}

module attributes {stable_mosaic.version = 11 : i64} {
  func.func @_conv_mm_kernel(%arg0: i32, %arg1: memref<104x1104xbf16, #tpu.memory_space<vmem>>, %arg2: memref<1104x256xbf16, #tpu.memory_space<vmem>>, %arg3: memref<1x256xf32, #tpu.memory_space<vmem>>, %arg4: memref<104x256xbf16, #tpu.memory_space<vmem>>) attributes {dimension_semantics = [#tpu.dimension_semantics<parallel>], iteration_bounds = array<i64: 1>, scalar_prefetch = 0 : i64, scratch_operands = 0 : i64, tpu.core_type = #tpu.core_type<tc>, window_params = [{transform_indices = @transform_0, window_bounds = array<i64: 104, 1104>}, {pipeline_mode = #tpu.pipeline_mode<synchronous>, transform_indices = @transform_1, window_bounds = array<i64: 1104, 256>}, {pipeline_mode = #tpu.pipeline_mode<synchronous>, transform_indices = @transform_2, window_bounds = array<i64: 1, 256>}, {transform_indices = @transform_3, window_bounds = array<i64: 104, 256>}]} {
    %c0 = arith.constant 0 : index
    %c0_0 = arith.constant 0 : index
    %0 = vector.load %arg1[%c0, %c0_0] : memref<104x1104xbf16, #tpu.memory_space<vmem>>, vector<104x1104xbf16>
    %c0_1 = arith.constant 0 : index
    %c0_2 = arith.constant 0 : index
    %1 = vector.load %arg2[%c0_1, %c0_2] : memref<1104x256xbf16, #tpu.memory_space<vmem>>, vector<1104x256xbf16>
    %cst = arith.constant dense<0.000000e+00> : vector<104x256xf32>
    %2 = tpu.matmul %0, %1, %cst {dimension_numbers = #tpu.dot_dimension_numbers<[1], [0], [0], [1], [0, 0, 1, 1], [], []>} : vector<104x1104xbf16>, vector<1104x256xbf16>, vector<104x256xf32> -> vector<104x256xf32>
    %c0_3 = arith.constant 0 : index
    %c0_4 = arith.constant 0 : index
    %3 = vector.load %arg3[%c0_3, %c0_4] : memref<1x256xf32, #tpu.memory_space<vmem>>, vector<1x256xf32>
    %4 = vector.broadcast %3 : vector<1x256xf32> to vector<104x256xf32>
    %5 = arith.addf %2, %4 : vector<104x256xf32>
    %cst_5 = arith.constant 0.000000e+00 : f32
    %6 = vector.broadcast %cst_5 : f32 to vector<104x256xf32>
    %7 = arith.maximumf %5, %6 : vector<104x256xf32>
    %8 = arith.truncf %7 : vector<104x256xf32> to vector<104x256xbf16>
    %c0_6 = arith.constant 0 : index
    %c0_7 = arith.constant 0 : index
    %9 = vector.load %arg4[%c0_6, %c0_7] : memref<104x256xbf16, #tpu.memory_space<vmem>>, vector<104x256xbf16>
    tpu.vector_store %arg4[%c0_6, %c0_7], %8 {strides = array<i32>} : memref<104x256xbf16, #tpu.memory_space<vmem>>, vector<104x256xbf16>,
    return
  }
  func.func @transform_0(%arg0: i32) -> (i32, i32) {
    %c0_i32 = arith.constant 0 : i32
    %c0_i32_0 = arith.constant 0 : i32
    return %arg0, %c0_i32 : i32, i32
  }
  func.func @transform_1(%arg0: i32) -> (i32, i32) {
    %c0_i32 = arith.constant 0 : i32
    %c0_i32_0 = arith.constant 0 : i32
    %c0_i32_1 = arith.constant 0 : i32
    return %c0_i32, %c0_i32_0 : i32, i32
  }
  func.func @transform_2(%arg0: i32) -> (i32, i32) {
    %c0_i32 = arith.constant 0 : i32
    %c0_i32_0 = arith.constant 0 : i32
    %c0_i32_1 = arith.constant 0 : i32
    return %c0_i32, %c0_i32_0 : i32, i32
  }
  func.func @transform_3(%arg0: i32) -> (i32, i32) {
    %c0_i32 = arith.constant 0 : i32
    %c0_i32_0 = arith.constant 0 : i32
    return %arg0, %c0_i32 : i32, i32
  }
}

module attributes {stable_mosaic.version = 11 : i64} {
  func.func @_head_kernel(%arg0: memref<2x49x224xbf16, #tpu.memory_space<vmem>>, %arg1: memref<224x1024xbf16, #tpu.memory_space<vmem>>, %arg2: memref<1x1024xf32, #tpu.memory_space<vmem>>, %arg3: memref<2x1024xf32, #tpu.memory_space<vmem>>) attributes {dimension_semantics = [], scalar_prefetch = 0 : i64, scratch_operands = 0 : i64, tpu.core_type = #tpu.core_type<tc>} {
    %c0 = arith.constant 0 : index
    %c0_0 = arith.constant 0 : index
    %c0_1 = arith.constant 0 : index
    %0 = vector.load %arg0[%c0, %c0_0, %c0_1] : memref<2x49x224xbf16, #tpu.memory_space<vmem>>, vector<2x49x224xbf16>
    %1 = arith.extf %0 : vector<2x49x224xbf16> to vector<2x49x224xf32>
    %cst = arith.constant dense<0.000000e+00> : vector<2x224xf32>
    %2 = vector.multi_reduction <add>, %1, %cst [1] : vector<2x49x224xf32> to vector<2x224xf32>
    %cst_2 = arith.constant 4.900000e+01 : f32
    %3 = vector.broadcast %cst_2 : f32 to vector<2x224xf32>
    %4 = arith.divf %2, %3 : vector<2x224xf32>
    %5 = arith.truncf %4 : vector<2x224xf32> to vector<2x224xbf16>
    %c0_3 = arith.constant 0 : index
    %c0_4 = arith.constant 0 : index
    %6 = vector.load %arg1[%c0_3, %c0_4] : memref<224x1024xbf16, #tpu.memory_space<vmem>>, vector<224x1024xbf16>
    %cst_5 = arith.constant dense<0.000000e+00> : vector<2x1024xf32>
    %7 = tpu.matmul %5, %6, %cst_5 {dimension_numbers = #tpu.dot_dimension_numbers<[1], [0], [0], [1], [0, 0, 1, 1], [], []>} : vector<2x224xbf16>, vector<224x1024xbf16>, vector<2x1024xf32> -> vector<2x1024xf32>
    %c0_6 = arith.constant 0 : index
    %c0_7 = arith.constant 0 : index
    %8 = vector.load %arg2[%c0_6, %c0_7] : memref<1x1024xf32, #tpu.memory_space<vmem>>, vector<1x1024xf32>
    %9 = vector.broadcast %8 : vector<1x1024xf32> to vector<2x1024xf32>
    %10 = arith.addf %7, %9 : vector<2x1024xf32>
    %c0_8 = arith.constant 0 : index
    %c0_9 = arith.constant 0 : index
    %11 = vector.load %arg3[%c0_8, %c0_9] : memref<2x1024xf32, #tpu.memory_space<vmem>>, vector<2x1024xf32>
    tpu.vector_store %arg3[%c0_8, %c0_9], %10 {strides = array<i32>} : memref<2x1024xf32, #tpu.memory_space<vmem>>, vector<2x1024xf32>,
    return
  }
}

</mosaic_0001>

<llo_original>
// kernel: neural_net_forward.9
$region0: #{neural_net_forward.9}
  #allocation0 [shape = 'u32[]', space=smem, size = 0x4, offset = 0x4, fixed_abs, tag = 'smem constant byte address 0x4 - core index']
  #allocation1 [shape = 'u32[72,128]{1,0:T(1,128)}', space=vmem, size = 0x9000, scoped, tag = 'internal scratch']
  %s0 = inlined_call_operand.vmem [shape: bf16[25088,147], index: 0, kind: input, shape index: {}]
  %s1 = inlined_call_operand.vmem [shape: bf16[147,128], index: 1, kind: input, shape index: {}]
  %s2 = inlined_call_operand.vmem [shape: f32[1,128], index: 2, kind: input, shape index: {}]
  %s3 = inlined_call_operand.vmem [shape: bf16[25088,128], index: 3, kind: output, shape index: {}]
  %s4 = sld [smem:[#allocation0]]
  $region45: #{neural_net_forward.9} parent=0
    _
  %s6 = ssub.s32 1, %s4
  %s7 = scalar_select 0, %s6, %s4
  loop: start=0, step=1, limit=30
  $region2: #{neural_net_forward.9} parent=0 // loop_pre_header
    _
  $region3: #{neural_net_forward.9} parent=0 // loop_header
    %s9 = sphi 0, %s13
    %p10 = scmp.ge.s32.totalorder %s9, 30
    %s19 = sphi 0, %s21
    %s22 = sphi 0, %s19
    %s23 = sphi 0, %s22
    %s39 = sphi 0, %s23
    %s43 = sphi 0, %s43
    %s45 = sphi 0, %s43
    %s46 = sphi 0, %s45
    %s60 = sphi 0, %s46
    %s64 = sphi 0, %s64
    %s66 = sphi 0, %s64
    %s67 = sphi 0, %s66
    %s81 = sphi 0, %s67
    %s87 = sphi 0, %s89
    %s90 = sphi 0, %s87
    %s91 = sphi 0, %s90
    %s107 = sphi 0, %s91
  $region4: #{neural_net_forward.9} parent=0 // loop_header_branch
    %12 = sbr.rel (%p10) target = $region8
  $region5: #{neural_net_forward.9} parent=0 // loop_body
    %s14 = ssub.s32 %s9, 1
    %s15 = ssub.s32 %s9, 2
    %s16 = sadd.s32 %s9, 1
    %s17 = ssub.s32 %s9, %s16
    %p18 = scmp.eq.s32.totalorder %s17, 0
    %s20 = sadd.s32 %s19, 1
    %s21 = scalar_select %p18, %s19, %s20
    %p24 = pneg %p18
    %p25 = scmp.eq.s32.totalorder %s9, 27
    %p26 = por %p24, %p25
    %p27 = scmp.ne.s32.totalorder %s19, %s22
    %p28 = scmp.eq.s32.totalorder %s9, 0
    %p29 = por %p27, %p28
    %p30 = scmp.ne.s32.totalorder %s19, %s22
    %p31 = scmp.eq.s32.totalorder %s14, 27
    %p32 = por %p30, %p31
    %p33 = scmp.ne.s32.totalorder %s22, %s23
    %p34 = scmp.eq.s32.totalorder %s14, 0
    %p35 = por %p33, %p34
    %p36 = scmp.ne.s32.totalorder %s22, %s23
    %p37 = scmp.eq.s32.totalorder %s15, 27
    %p38 = por %p36, %p37
    %p40 = scmp.ne.s32.totalorder %s23, %s39
    %p41 = scmp.eq.s32.totalorder %s15, 0
    %p42 = por %p40, %p41
    %s44 = sadd.s32 %s43, 1
    %p47 = scmp.eq.s32.totalorder %s9, 27
    %p48 = scmp.ne.s32.totalorder %s43, %s45
    %p49 = scmp.eq.s32.totalorder %s9, 0
    %p50 = por %p48, %p49
    %p51 = scmp.ne.s32.totalorder %s43, %s45
    %p52 = scmp.eq.s32.totalorder %s14, 27
    %p53 = por %p51, %p52
    %p54 = scmp.ne.s32.totalorder %s45, %s46
    %p55 = scmp.eq.s32.totalorder %s14, 0
    %p56 = por %p54, %p55
    %p57 = scmp.ne.s32.totalorder %s45, %s46
    %p58 = scmp.eq.s32.totalorder %s15, 27
    %p59 = por %p57, %p58
    %p61 = scmp.ne.s32.totalorder %s46, %s60
    %p62 = scmp.eq.s32.totalorder %s15, 0
    %p63 = por %p61, %p62
    %s65 = sadd.s32 %s64, 1
    %p68 = scmp.eq.s32.totalorder %s9, 27
    %p69 = scmp.ne.s32.totalorder %s64, %s66
    %p70 = scmp.eq.s32.totalorder %s9, 0
    %p71 = por %p69, %p70
    %p72 = scmp.ne.s32.totalorder %s64, %s66
    %p73 = scmp.eq.s32.totalorder %s14, 27
    %p74 = por %p72, %p73
    %p75 = scmp.ne.s32.totalorder %s66, %s67
    %p76 = scmp.eq.s32.totalorder %s14, 0
    %p77 = por %p75, %p76
    %p78 = scmp.ne.s32.totalorder %s66, %s67
    %p79 = scmp.eq.s32.totalorder %s15, 27
    %p80 = por %p78, %p79
    %p82 = scmp.ne.s32.totalorder %s67, %s81
    %p83 = scmp.eq.s32.totalorder %s15, 0
    %p84 = por %p82, %p83
    %s85 = ssub.s32 %s9, %s16
    %p86 = scmp.eq.s32.totalorder %s85, 0
    %s88 = sadd.s32 %s87, 1
    %s89 = scalar_select %p86, %s87, %s88
    %p92 = pneg %p86
    %p93 = scmp.eq.s32.totalorder %s9, 27
    %p94 = por %p92, %p93
    %p95 = scmp.ne.s32.totalorder %s87, %s90
    %p96 = scmp.eq.s32.totalorder %s9, 0
    %p97 = por %p95, %p96
    %p98 = scmp.ne.s32.totalorder %s87, %s90
    %p99 = scmp.eq.s32.totalorder %s14, 27
    %p100 = por %p98, %p99
    %p101 = scmp.ne.s32.totalorder %s90, %s91
    %p102 = scmp.eq.s32.totalorder %s14, 0
    %p103 = por %p101, %p102
    %p104 = scmp.ne.s32.totalorder %s90, %s91
    %p105 = scmp.eq.s32.totalorder %s15, 27
    %p106 = por %p104, %p105
    %p108 = scmp.ne.s32.totalorder %s91, %s107
    %p109 = scmp.eq.s32.totalorder %s15, 0
    %p110 = por %p108, %p109
    %p111 = scmp.le.s32.totalorder 1, %s9
    %p112 = scmp.lt.s32.totalorder %s9, 29
    %p113 = pnand %p111, %p112
    %p114 = pneg %p113
    // Predicated region
    $region9: #{neural_net_forward.9} parent=5 // pred_check
      _
    $region10: #{neural_net_forward.9} parent=5 // pred_check_branch
      %116 = sbr.rel (%p113) target = $region12
    $region11: #{neural_net_forward.9} parent=5 // pred_region
      %s117 = ssub.s32 %s9, 1
      // Predicated region
      $region13: #{neural_net_forward.9} parent=11 // pred_check
        %p118 = pneg %p56
      $region14: #{neural_net_forward.9} parent=11 // pred_check_branch
        %120 = sbr.rel (%p118) target = $region16
      $region15: #{neural_net_forward.9} parent=11 // pred_region
        _
      $region16: #{neural_net_forward.9} parent=11 // pred_fallthru
        _
      // Predicated region
      $region17: #{neural_net_forward.9} parent=11 // pred_check
        %p121 = pneg %p77
      $region18: #{neural_net_forward.9} parent=11 // pred_check_branch
        %123 = sbr.rel (%p121) target = $region20
      $region19: #{neural_net_forward.9} parent=11 // pred_region
        _
      $region20: #{neural_net_forward.9} parent=11 // pred_fallthru
        _
    $region12: #{neural_net_forward.9} parent=5 // pred_fallthru
      _
    %p124 = scmp.lt.s32.totalorder %s9, 28
    // Predicated region
    $region21: #{neural_net_forward.9} parent=5 // pred_check
      %p125 = pneg %p124
    $region22: #{neural_net_forward.9} parent=5 // pred_check_branch
      %127 = sbr.rel (%p125) target = $region24
    $region23: #{neural_net_forward.9} parent=5 // pred_region
      // Predicated region
      $region25: #{neural_net_forward.9} parent=23 // pred_check
        %p128 = pneg %p29
      $region26: #{neural_net_forward.9} parent=23 // pred_check_branch
        %130 = sbr.rel (%p128) target = $region28
      $region27: #{neural_net_forward.9} parent=23 // pred_region
        %s131 = smul.u32 112, %s9
        %p132 = scmp.lt.s32.totalorder %s131, 3135
        %s133 = scalar_select %p132, %s131, 3135
        %s134 = smul.addr %s133, 2
        %s135 = smul.addr %s134, 4
        %s136 = scalar_lea.vmem %s0, %s135
        %s137 = smul.u32 112, %s9
      $region28: #{neural_net_forward.9} parent=23 // pred_fallthru
        _
    $region24: #{neural_net_forward.9} parent=5 // pred_fallthru
      _
    %p138 = scmp.le.s32.totalorder 1, %s9
    %p139 = scmp.lt.s32.totalorder %s9, 29
    %p140 = pnand %p138, %p139
    %p141 = pneg %p140
    // Predicated region
    $region29: #{neural_net_forward.9} parent=5 // pred_check
      _
    $region30: #{neural_net_forward.9} parent=5 // pred_check_branch
      %143 = sbr.rel (%p140) target = $region32
    $region31: #{neural_net_forward.9} parent=5 // pred_region
      %s144 = ssub.s32 %s9, 1
      %s145 = smul.u32 112, %s14
      %p146 = scmp.lt.s32.totalorder %s145, 3135
      %s147 = scalar_select %p146, %s145, 3135
      %s148 = smul.addr %s147, 2
      %s149 = smul.addr %s148, 4
      %s150 = scalar_lea.vmem %s0, %s149
      %p151 = pneg %p35
      %p152 = pneg %p32
      %p153 = pneg %p56
      %p154 = pneg %p53
      %p155 = pneg %p77
      %p156 = pneg %p74
      %p157 = pneg %p103
      %p158 = pneg %p100
      %s159 = smul.u32 112, %s14
      %p160 = scmp.lt.s32.totalorder %s159, 3135
      %s161 = scalar_select %p160, %s159, 3135
      %s162 = smul.addr %s161, 4
      %s163 = scalar_lea.vmem %s3, %s162
      %s164 = smul.u32 112, %s14
      %p165 = scmp.lt.s32.totalorder %s164, 3135
      %s166 = scalar_select %p165, %s164, 3135
      %s167 = smul.addr %s166, 2
      %s168 = smul.addr %s167, 4
      %s169 = scalar_lea.vmem %s0, %s168
      %s170 = smul.u32 112, %s14
      %s171 = smul.u32 112, %s14
      %p172 = scmp.lt.s32.totalorder %s171, 3135
      %s173 = scalar_select %p172, %s171, 3135
      %s174 = smul.addr %s173, 4
      %s175 = scalar_lea.vmem %s3, %s174
      %s176 = smul.u32 112, %s14
      %v178 = vld [vmem:[%s169] sm:$0xff]
      %v179 = vld [vmem:[%s169 + $0x8] sm:$0xff]
      %v180 = vld [vmem:[%s169 + $0x10] sm:$0xff]
      %v181 = vld [vmem:[%s169 + $0x18] sm:$0xff]
      %v182 = vld [vmem:[%s169 + $0x20] sm:$0xff]
      %v183 = vld [vmem:[%s169 + $0x28] sm:$0xff]
      %v184 = vld [vmem:[%s169 + $0x30] sm:$0xff]
      %v185 = vld [vmem:[%s169 + $0x38] sm:$0xff]
      %v186 = vld [vmem:[%s169 + $0x40] sm:$0xff]
      %v187 = vld [vmem:[%s169 + $0x48] sm:$0xff]
      %v188 = vld [vmem:[%s169 + $0x50] sm:$0xff]
      %v189 = vld [vmem:[%s169 + $0x58] sm:$0xff]
      %v190 = vld [vmem:[%s169 + $0x60] sm:$0xff]
      %v191 = vld [vmem:[%s169 + $0x68] sm:$0xff]
      %v192 = vld [vmem:[%s169 + $0x70] sm:$0xff]
      %v193 = vld [vmem:[%s169 + $0x78] sm:$0xff]
      %v194 = vld [vmem:[%s169 + $0x80] sm:$0xff]
      %v195 = vld [vmem:[%s169 + $0x88] sm:$0xff]
      %v196 = vld [vmem:[%s169 + $0x90] sm:$0xff]
      %v197 = vld [vmem:[%s169 + $0x98] sm:$0xff]
      %v198 = vld [vmem:[%s169 + $0xa0] sm:$0xff]
      %v199 = vld [vmem:[%s169 + $0xa8] sm:$0xff]
      %v200 = vld [vmem:[%s169 + $0xb0] sm:$0xff]
      %v201 = vld [vmem:[%s169 + $0xb8] sm:$0xff]
      %v202 = vld [vmem:[%s169 + $0xc0] sm:$0xff]
      %v203 = vld [vmem:[%s169 + $0xc8] sm:$0xff]
      %v204 = vld [vmem:[%s169 + $0xd0] sm:$0xff]
      %v205 = vld [vmem:[%s169 + $0xd8] sm:$0xff]
      %v206 = vld [vmem:[%s169 + $0xe0] sm:$0xff]
      %v207 = vld [vmem:[%s169 + $0xe8] sm:$0xff]
      %v208 = vld [vmem:[%s169 + $0xf0] sm:$0xff]
      %v209 = vld [vmem:[%s169 + $0xf8] sm:$0xff]
      %v210 = vld [vmem:[%s169 + $0x100] sm:$0xff]
      %v211 = vld [vmem:[%s169 + $0x108] sm:$0xff]
      %v212 = vld [vmem:[%s169 + $0x110] sm:$0xff]
      %v213 = vld [vmem:[%s169 + $0x118] sm:$0xff]
      %v214 = vld [vmem:[%s169 + $0x120] sm:$0xff]
      %v215 = vld [vmem:[%s169 + $0x128] sm:$0xff]
      %v216 = vld [vmem:[%s169 + $0x130] sm:$0xff]
      %v217 = vld [vmem:[%s169 + $0x138] sm:$0xff]
      %v218 = vld [vmem:[%s169 + $0x140] sm:$0xff]
      %v219 = vld [vmem:[%s169 + $0x148] sm:$0xff]
      %v220 = vld [vmem:[%s169 + $0x150] sm:$0xff]
      %v221 = vld [vmem:[%s169 + $0x158] sm:$0xff]
      %v222 = vld [vmem:[%s169 + $0x160] sm:$0xff]
      %v223 = vld [vmem:[%s169 + $0x168] sm:$0xff]
      %v224 = vld [vmem:[%s169 + $0x170] sm:$0xff]
      %v225 = vld [vmem:[%s169 + $0x178] sm:$0xff]
      %v226 = vld [vmem:[%s169 + $0x180] sm:$0xff]
      %v227 = vld [vmem:[%s169 + $0x188] sm:$0xff]
      %v228 = vld [vmem:[%s169 + $0x190] sm:$0xff]
      %v229 = vld [vmem:[%s169 + $0x198] sm:$0xff]
      %v230 = vld [vmem:[%s169 + $0x1a0] sm:$0xff]
      %v231 = vld [vmem:[%s169 + $0x1a8] sm:$0xff]
      %v232 = vld [vmem:[%s169 + $0x1b0] sm:$0xff]
      %v233 = vld [vmem:[%s169 + $0x1b8] sm:$0xff]
      %v234 = vld [vmem:[%s169 + $0x1c0] sm:$0xff]
      %v235 = vld [vmem:[%s169 + $0x1c8] sm:$0xff]
      %v236 = vld [vmem:[%s169 + $0x1d0] sm:$0xff]
      %v237 = vld [vmem:[%s169 + $0x1d8] sm:$0xff]
      %v238 = vld [vmem:[%s169 + $0x1e0] sm:$0xff]
      %v239 = vld [vmem:[%s169 + $0x1e8] sm:$0xff]
      %v240 = vld [vmem:[%s169 + $0x1f0] sm:$0xff]
      %v241 = vld [vmem:[%s169 + $0x1f8] sm:$0xff]
      %v242 = vld [vmem:[%s169 + $0x200] sm:$0xff]
      %v243 = vld [vmem:[%s169 + $0x208] sm:$0xff]
      %v244 = vld [vmem:[%s169 + $0x210] sm:$0xff]
      %v245 = vld [vmem:[%s169 + $0x218] sm:$0xff]
      %v246 = vld [vmem:[%s169 + $0x220] sm:$0xff]
      %v247 = vld [vmem:[%s169 + $0x228] sm:$0xff]
      %v248 = vld [vmem:[%s169 + $0x230] sm:$0xff]
      %v249 = vld [vmem:[%s169 + $0x238] sm:$0xff]
      %v250 = vld [vmem:[%s169 + $0x240] sm:$0xff]
      %v251 = vld [vmem:[%s169 + $0x248] sm:$0xff]
      %v252 = vld [vmem:[%s169 + $0x250] sm:$0xff]
      %v253 = vld [vmem:[%s169 + $0x258] sm:$0xff]
      %v254 = vld [vmem:[%s169 + $0x260] sm:$0xff]
      %v255 = vld [vmem:[%s169 + $0x268] sm:$0xff]
      %v256 = vld [vmem:[%s169 + $0x270] sm:$0xff]
      %v257 = vld [vmem:[%s169 + $0x278] sm:$0xff]
      %v258 = vld [vmem:[%s169 + $0x280] sm:$0xff]
      %v259 = vld [vmem:[%s169 + $0x288] sm:$0xff]
      %v260 = vld [vmem:[%s169 + $0x290] sm:$0xff]
      %v261 = vld [vmem:[%s169 + $0x298] sm:$0xff]
      %v262 = vld [vmem:[%s169 + $0x2a0] sm:$0xff]
      %v263 = vld [vmem:[%s169 + $0x2a8] sm:$0xff]
      %v264 = vld [vmem:[%s169 + $0x2b0] sm:$0xff]
      %v265 = vld [vmem:[%s169 + $0x2b8] sm:$0xff]
      %v266 = vld [vmem:[%s169 + $0x2c0] sm:$0xff]
      %v267 = vld [vmem:[%s169 + $0x2c8] sm:$0xff]
      %v268 = vld [vmem:[%s169 + $0x2d0] sm:$0xff]
      %v269 = vld [vmem:[%s169 + $0x2d8] sm:$0xff]
      %v270 = vld [vmem:[%s169 + $0x2e0] sm:$0xff]
      %v271 = vld [vmem:[%s169 + $0x2e8] sm:$0xff]
      %v272 = vld [vmem:[%s169 + $0x2f0] sm:$0xff]
      %v273 = vld [vmem:[%s169 + $0x2f8] sm:$0xff]
      %v274 = vld [vmem:[%s169 + $0x300] sm:$0xff]
      %v275 = vld [vmem:[%s169 + $0x308] sm:$0xff]
      %v276 = vld [vmem:[%s169 + $0x310] sm:$0xff]
      %v277 = vld [vmem:[%s169 + $0x318] sm:$0xff]
      %v278 = vld [vmem:[%s169 + $0x320] sm:$0xff]
      %v279 = vld [vmem:[%s169 + $0x328] sm:$0xff]
      %v280 = vld [vmem:[%s169 + $0x330] sm:$0xff]
      %v281 = vld [vmem:[%s169 + $0x338] sm:$0xff]
      %v282 = vld [vmem:[%s169 + $0x340] sm:$0xff]
      %v283 = vld [vmem:[%s169 + $0x348] sm:$0xff]
      %v284 = vld [vmem:[%s169 + $0x350] sm:$0xff]
      %v285 = vld [vmem:[%s169 + $0x358] sm:$0xff]
      %v286 = vld [vmem:[%s169 + $0x360] sm:$0xff]
      %v287 = vld [vmem:[%s169 + $0x368] sm:$0xff]
      %v288 = vld [vmem:[%s169 + $0x370] sm:$0xff]
      %v289 = vld [vmem:[%s169 + $0x378] sm:$0xff]
      %v290 = vld [vmem:[%s1] sm:$0xf]
      %v291 = vld [vmem:[%s1 + $0x4] sm:$0xf]
      %v292 = vld [vmem:[%s1 + $0x8] sm:$0xf]
      %v293 = vld [vmem:[%s1 + $0xc] sm:$0xf]
      %v294 = vld [vmem:[%s1 + $0x10] sm:$0xf]
      %v295 = vld [vmem:[%s1 + $0x14] sm:$0xf]
      %v296 = vld [vmem:[%s1 + $0x18] sm:$0xf]
      %v297 = vld [vmem:[%s1 + $0x1c] sm:$0xf]
      %v298 = vld [vmem:[%s1 + $0x20] sm:$0xf]
      %v299 = vld [vmem:[%s1 + $0x24] sm:$0xf]
      %v300 = vld [vmem:[%s1 + $0x28] sm:$0xf]
      %v301 = vld [vmem:[%s1 + $0x2c] sm:$0xf]
      %v302 = vld [vmem:[%s1 + $0x30] sm:$0xf]
      %v303 = vld [vmem:[%s1 + $0x34] sm:$0xf]
      %v304 = vld [vmem:[%s1 + $0x38] sm:$0xf]
      %v305 = vld [vmem:[%s1 + $0x3c] sm:$0xf]
      %v306 = vld [vmem:[%s1 + $0x40] sm:$0xf]
      %v307 = vld [vmem:[%s1 + $0x44] sm:$0xf]
      %v308 = vld [vmem:[%s1 + $0x48] sm:$0x3]
      %v309 = vld [vmem:[%s2] sm:$0x1]
      %v311 = vperm.slane %v309, 0
      %v425 = vunpack.c.l.b16 %v178
      %v426 = vunpack.c.h.b16 %v178
      %v427 = vunpack.c.l.b16 %v179
      %v428 = vunpack.c.h.b16 %v179
      %v429 = vunpack.c.l.b16 %v180
      %v430 = vunpack.c.h.b16 %v180
      %v431 = vunpack.c.l.b16 %v181
      %v432 = vunpack.c.h.b16 %v181
      %v433 = vunpack.c.l.b16 %v182
      %v434 = vunpack.c.h.b16 %v182
      %v435 = vunpack.c.l.b16 %v183
      %v436 = vunpack.c.h.b16 %v183
      %v437 = vunpack.c.l.b16 %v184
      %v438 = vunpack.c.h.b16 %v184
      %v439 = vunpack.c.l.b16 %v185
      %v440 = vunpack.c.h.b16 %v185
      %v441 = vunpack.c.l.b16 %v186
      %v442 = vunpack.c.h.b16 %v186
      %v443 = vunpack.c.l.b16 %v187
      %v444 = vunpack.c.h.b16 %v187
      %v445 = vunpack.c.l.b16 %v188
      %v446 = vunpack.c.h.b16 %v188
      %v447 = vunpack.c.l.b16 %v189
      %v448 = vunpack.c.h.b16 %v189
      %v449 = vunpack.c.l.b16 %v190
      %v450 = vunpack.c.h.b16 %v190
      %v451 = vunpack.c.l.b16 %v191
      %v452 = vunpack.c.h.b16 %v191
      %v453 = vunpack.c.l.b16 %v192
      %v454 = vunpack.c.h.b16 %v192
      %v455 = vunpack.c.l.b16 %v193
      %v456 = vunpack.c.h.b16 %v193
      %v457 = vunpack.c.l.b16 %v194
      %v458 = vunpack.c.h.b16 %v194
      %v459 = vunpack.c.l.b16 %v195
      %v460 = vunpack.c.h.b16 %v195
      %v461 = vunpack.c.l.b16 %v196
      %v462 = vunpack.c.h.b16 %v196
      %v463 = vunpack.c.l.b16 %v197
      %v464 = vunpack.c.h.b16 %v197
      %v465 = vunpack.c.l.b16 %v198
      %v466 = vunpack.c.h.b16 %v198
      %v467 = vunpack.c.l.b16 %v199
      %v468 = vunpack.c.h.b16 %v199
      %v469 = vunpack.c.l.b16 %v200
      %v470 = vunpack.c.h.b16 %v200
      %v471 = vunpack.c.l.b16 %v201
      %v472 = vunpack.c.h.b16 %v201
      %v473 = vunpack.c.l.b16 %v202
      %v474 = vunpack.c.h.b16 %v202
      %v475 = vunpack.c.l.b16 %v203
      %v476 = vunpack.c.h.b16 %v203
      %v477 = vunpack.c.l.b16 %v204
      %v478 = vunpack.c.h.b16 %v204
      %v479 = vunpack.c.l.b16 %v205
      %v480 = vunpack.c.h.b16 %v205
      %v481 = vunpack.c.l.b16 %v206
      %v482 = vunpack.c.h.b16 %v206
      %v483 = vunpack.c.l.b16 %v207
      %v484 = vunpack.c.h.b16 %v207
      %v485 = vunpack.c.l.b16 %v208
      %v486 = vunpack.c.h.b16 %v208
      %v487 = vunpack.c.l.b16 %v209
      %v488 = vunpack.c.h.b16 %v209
      %v489 = vunpack.c.l.b16 %v210
      %v490 = vunpack.c.h.b16 %v210
      %v491 = vunpack.c.l.b16 %v211
      %v492 = vunpack.c.h.b16 %v211
      %v493 = vunpack.c.l.b16 %v212
      %v494 = vunpack.c.h.b16 %v212
      %v495 = vunpack.c.l.b16 %v213
      %v496 = vunpack.c.h.b16 %v213
      %v497 = vunpack.c.l.b16 %v214
      %v498 = vunpack.c.h.b16 %v214
      %v499 = vunpack.c.l.b16 %v215
      %v500 = vunpack.c.h.b16 %v215
      %v501 = vunpack.c.l.b16 %v216
      %v502 = vunpack.c.h.b16 %v216
      %v503 = vunpack.c.l.b16 %v217
      %v504 = vunpack.c.h.b16 %v217
      %v505 = vunpack.c.l.b16 %v218
      %v506 = vunpack.c.h.b16 %v218
      %v507 = vunpack.c.l.b16 %v219
      %v508 = vunpack.c.h.b16 %v219
      %v509 = vunpack.c.l.b16 %v220
      %v510 = vunpack.c.h.b16 %v220
      %v511 = vunpack.c.l.b16 %v221
      %v512 = vunpack.c.h.b16 %v221
      %v513 = vunpack.c.l.b16 %v222
      %v514 = vunpack.c.h.b16 %v222
      %v515 = vunpack.c.l.b16 %v223
      %v516 = vunpack.c.h.b16 %v223
      %v517 = vunpack.c.l.b16 %v224
      %v518 = vunpack.c.h.b16 %v224
      %v519 = vunpack.c.l.b16 %v225
      %v520 = vunpack.c.h.b16 %v225
      %v521 = vunpack.c.l.b16 %v226
      %v522 = vunpack.c.h.b16 %v226
      %v523 = vunpack.c.l.b16 %v227
      %v524 = vunpack.c.h.b16 %v227
      %v525 = vunpack.c.l.b16 %v228
      %v526 = vunpack.c.h.b16 %v228
      %v527 = vunpack.c.l.b16 %v229
      %v528 = vunpack.c.h.b16 %v229
      %v529 = vunpack.c.l.b16 %v230
      %v530 = vunpack.c.h.b16 %v230
      %v531 = vunpack.c.l.b16 %v231
      %v532 = vunpack.c.h.b16 %v231
      %v533 = vunpack.c.l.b16 %v232
      %v534 = vunpack.c.h.b16 %v232
      %v535 = vunpack.c.l.b16 %v233
      %v536 = vunpack.c.h.b16 %v233
      %v537 = vunpack.c.l.b16 %v234
      %v538 = vunpack.c.h.b16 %v234
      %v539 = vunpack.c.l.b16 %v235
      %v540 = vunpack.c.h.b16 %v235
      %v541 = vunpack.c.l.b16 %v236
      %v542 = vunpack.c.h.b16 %v236
      %v543 = vunpack.c.l.b16 %v237
      %v544 = vunpack.c.h.b16 %v237
      %v545 = vunpack.c.l.b16 %v238
      %v546 = vunpack.c.h.b16 %v238
      %v547 = vunpack.c.l.b16 %v239
      %v548 = vunpack.c.h.b16 %v239
      %v549 = vunpack.c.l.b16 %v240
      %v550 = vunpack.c.h.b16 %v240
      %v551 = vunpack.c.l.b16 %v241
      %v552 = vunpack.c.h.b16 %v241
      %v553 = vunpack.c.l.b16 %v242
      %v554 = vunpack.c.h.b16 %v242
      %v555 = vunpack.c.l.b16 %v243
      %v556 = vunpack.c.h.b16 %v243
      %v557 = vunpack.c.l.b16 %v244
      %v558 = vunpack.c.h.b16 %v244
      %v559 = vunpack.c.l.b16 %v245
      %v560 = vunpack.c.h.b16 %v245
      %v561 = vunpack.c.l.b16 %v246
      %v562 = vunpack.c.h.b16 %v246
      %v563 = vunpack.c.l.b16 %v247
      %v564 = vunpack.c.h.b16 %v247
      %v565 = vunpack.c.l.b16 %v248
      %v566 = vunpack.c.h.b16 %v248
      %v567 = vunpack.c.l.b16 %v249
      %v568 = vunpack.c.h.b16 %v249
      %v569 = vunpack.c.l.b16 %v250
      %v570 = vunpack.c.h.b16 %v250
      %v571 = vunpack.c.l.b16 %v251
      %v572 = vunpack.c.h.b16 %v251
      %v573 = vunpack.c.l.b16 %v252
      %v574 = vunpack.c.h.b16 %v252
      %v575 = vunpack.c.l.b16 %v253
      %v576 = vunpack.c.h.b16 %v253
      %v577 = vunpack.c.l.b16 %v254
      %v578 = vunpack.c.h.b16 %v254
      %v579 = vunpack.c.l.b16 %v255
      %v580 = vunpack.c.h.b16 %v255
      %v581 = vunpack.c.l.b16 %v256
      %v582 = vunpack.c.h.b16 %v256
      %v583 = vunpack.c.l.b16 %v257
      %v584 = vunpack.c.h.b16 %v257
      %v585 = vunpack.c.l.b16 %v258
      %v586 = vunpack.c.h.b16 %v258
      %v587 = vunpack.c.l.b16 %v259
      %v588 = vunpack.c.h.b16 %v259
      %v589 = vunpack.c.l.b16 %v260
      %v590 = vunpack.c.h.b16 %v260
      %v591 = vunpack.c.l.b16 %v261
      %v592 = vunpack.c.h.b16 %v261
      %v593 = vunpack.c.l.b16 %v262
      %v594 = vunpack.c.h.b16 %v262
      %v595 = vunpack.c.l.b16 %v263
      %v596 = vunpack.c.h.b16 %v263
      %v597 = vunpack.c.l.b16 %v264
      %v598 = vunpack.c.h.b16 %v264
      %v599 = vunpack.c.l.b16 %v265
      %v600 = vunpack.c.h.b16 %v265
      %v601 = vunpack.c.l.b16 %v266
      %v602 = vunpack.c.h.b16 %v266
      %v603 = vunpack.c.l.b16 %v267
      %v604 = vunpack.c.h.b16 %v267
      %v605 = vunpack.c.l.b16 %v268
      %v606 = vunpack.c.h.b16 %v268
      %v607 = vunpack.c.l.b16 %v269
      %v608 = vunpack.c.h.b16 %v269
      %v609 = vunpack.c.l.b16 %v270
      %v610 = vunpack.c.h.b16 %v270
      %v611 = vunpack.c.l.b16 %v271
      %v612 = vunpack.c.h.b16 %v271
      %v613 = vunpack.c.l.b16 %v272
      %v614 = vunpack.c.h.b16 %v272
      %v615 = vunpack.c.l.b16 %v273
      %v616 = vunpack.c.h.b16 %v273
      %v617 = vunpack.c.l.b16 %v274
      %v618 = vunpack.c.h.b16 %v274
      %v619 = vunpack.c.l.b16 %v275
      %v620 = vunpack.c.h.b16 %v275
      %v621 = vunpack.c.l.b16 %v276
      %v622 = vunpack.c.h.b16 %v276
      %v623 = vunpack.c.l.b16 %v277
      %v624 = vunpack.c.h.b16 %v277
      %v625 = vunpack.c.l.b16 %v278
      %v626 = vunpack.c.h.b16 %v278
      %v627 = vunpack.c.l.b16 %v279
      %v628 = vunpack.c.h.b16 %v279
      %v629 = vunpack.c.l.b16 %v280
      %v630 = vunpack.c.h.b16 %v280
      %v631 = vunpack.c.l.b16 %v281
      %v632 = vunpack.c.h.b16 %v281
      %v633 = vunpack.c.l.b16 %v282
      %v634 = vunpack.c.h.b16 %v282
      %v635 = vunpack.c.l.b16 %v283
      %v636 = vunpack.c.h.b16 %v283
      %v637 = vunpack.c.l.b16 %v284
      %v638 = vunpack.c.h.b16 %v284
      %v639 = vunpack.c.l.b16 %v285
      %v640 = vunpack.c.h.b16 %v285
      %v641 = vunpack.c.l.b16 %v286
      %v642 = vunpack.c.h.b16 %v286
      %v643 = vunpack.c.l.b16 %v287
      %v644 = vunpack.c.h.b16 %v287
      %v645 = vunpack.c.l.b16 %v288
      %v646 = vunpack.c.h.b16 %v288
      %v647 = vunpack.c.l.b16 %v289
      %v648 = vunpack.c.h.b16 %v289
      %v649 = vpack.c.b16 %v427, %v425
      %v650 = vpack.c.b16 %v428, %v426
      %v651 = vpack.c.b16 %v431, %v429
      %v652 = vpack.c.b16 %v432, %v430
      %v653 = vpack.c.b16 %v435, %v433
      %v654 = vpack.c.b16 %v436, %v434
      %v655 = vpack.c.b16 %v439, %v437
      %v656 = vpack.c.b16 %v440, %v438
      %v657 = vpack.c.b16 %v443, %v441
      %v658 = vpack.c.b16 %v444, %v442
      %v659 = vpack.c.b16 %v447, %v445
      %v660 = vpack.c.b16 %v448, %v446
      %v661 = vpack.c.b16 %v451, %v449
      %v662 = vpack.c.b16 %v452, %v450
      %v663 = vpack.c.b16 %v455, %v453
      %v664 = vpack.c.b16 %v456, %v454
      %v665 = vpack.c.b16 %v459, %v457
      %v666 = vpack.c.b16 %v460, %v458
      %v667 = vpack.c.b16 %v463, %v461
      %v668 = vpack.c.b16 %v464, %v462
      %v669 = vpack.c.b16 %v467, %v465
      %v670 = vpack.c.b16 %v468, %v466
      %v671 = vpack.c.b16 %v471, %v469
      %v672 = vpack.c.b16 %v472, %v470
      %v673 = vpack.c.b16 %v475, %v473
      %v674 = vpack.c.b16 %v476, %v474
      %v675 = vpack.c.b16 %v479, %v477
      %v676 = vpack.c.b16 %v480, %v478
      %v677 = vpack.c.b16 %v483, %v481
      %v678 = vpack.c.b16 %v484, %v482
      %v679 = vpack.c.b16 %v487, %v485
      %v680 = vpack.c.b16 %v488, %v486
      %v681 = vpack.c.b16 %v491, %v489
      %v682 = vpack.c.b16 %v492, %v490
      %v683 = vpack.c.b16 %v495, %v493
      %v684 = vpack.c.b16 %v496, %v494
      %v685 = vpack.c.b16 %v499, %v497
      %v686 = vpack.c.b16 %v500, %v498
      %v687 = vpack.c.b16 %v503, %v501
      %v688 = vpack.c.b16 %v504, %v502
      %v689 = vpack.c.b16 %v507, %v505
      %v690 = vpack.c.b16 %v508, %v506
      %v691 = vpack.c.b16 %v511, %v509
      %v692 = vpack.c.b16 %v512, %v510
      %v693 = vpack.c.b16 %v515, %v513
      %v694 = vpack.c.b16 %v516, %v514
      %v695 = vpack.c.b16 %v519, %v517
      %v696 = vpack.c.b16 %v520, %v518
      %v697 = vpack.c.b16 %v523, %v521
      %v698 = vpack.c.b16 %v524, %v522
      %v699 = vpack.c.b16 %v527, %v525
      %v700 = vpack.c.b16 %v528, %v526
      %v701 = vpack.c.b16 %v531, %v529
      %v702 = vpack.c.b16 %v532, %v530
      %v703 = vpack.c.b16 %v535, %v533
      %v704 = vpack.c.b16 %v536, %v534
      %v705 = vpack.c.b16 %v539, %v537
      %v706 = vpack.c.b16 %v540, %v538
      %v707 = vpack.c.b16 %v543, %v541
      %v708 = vpack.c.b16 %v544, %v542
      %v709 = vpack.c.b16 %v547, %v545
      %v710 = vpack.c.b16 %v548, %v546
      %v711 = vpack.c.b16 %v551, %v549
      %v712 = vpack.c.b16 %v552, %v550
      %v713 = vpack.c.b16 %v555, %v553
      %v714 = vpack.c.b16 %v556, %v554
      %v715 = vpack.c.b16 %v559, %v557
      %v716 = vpack.c.b16 %v560, %v558
      %v717 = vpack.c.b16 %v563, %v561
      %v718 = vpack.c.b16 %v564, %v562
      %v719 = vpack.c.b16 %v567, %v565
      %v720 = vpack.c.b16 %v568, %v566
      %v721 = vpack.c.b16 %v571, %v569
      %v722 = vpack.c.b16 %v572, %v570
      %v723 = vpack.c.b16 %v575, %v573
      %v724 = vpack.c.b16 %v576, %v574
      %v725 = vpack.c.b16 %v579, %v577
      %v726 = vpack.c.b16 %v580, %v578
      %v727 = vpack.c.b16 %v583, %v581
      %v728 = vpack.c.b16 %v584, %v582
      %v729 = vpack.c.b16 %v587, %v585
      %v730 = vpack.c.b16 %v588, %v586
      %v731 = vpack.c.b16 %v591, %v589
      %v732 = vpack.c.b16 %v592, %v590
      %v733 = vpack.c.b16 %v595, %v593
      %v734 = vpack.c.b16 %v596, %v594
      %v735 = vpack.c.b16 %v599, %v597
      %v736 = vpack.c.b16 %v600, %v598
      %v737 = vpack.c.b16 %v603, %v601
      %v738 = vpack.c.b16 %v604, %v602
      %v739 = vpack.c.b16 %v607, %v605
      %v740 = vpack.c.b16 %v608, %v606
      %v741 = vpack.c.b16 %v611, %v609
      %v742 = vpack.c.b16 %v612, %v610
      %v743 = vpack.c.b16 %v615, %v613
      %v744 = vpack.c.b16 %v616, %v614
      %v745 = vpack.c.b16 %v619, %v617
      %v746 = vpack.c.b16 %v620, %v618
      %v747 = vpack.c.b16 %v623, %v621
      %v748 = vpack.c.b16 %v624, %v622
      %v749 = vpack.c.b16 %v627, %v625
      %v750 = vpack.c.b16 %v628, %v626
      %v751 = vpack.c.b16 %v631, %v629
      %v752 = vpack.c.b16 %v632, %v630
      %v753 = vpack.c.b16 %v635, %v633
      %v754 = vpack.c.b16 %v636, %v634
      %v755 = vpack.c.b16 %v639, %v637
      %v756 = vpack.c.b16 %v640, %v638
      %v757 = vpack.c.b16 %v643, %v641
      %v758 = vpack.c.b16 %v644, %v642
      %v759 = vpack.c.b16 %v647, %v645
      %v760 = vpack.c.b16 %v648, %v646
      %v836 = vunpack.c.l.b16 %v290
      %v837 = vunpack.c.l.b16 %v291
      %v838 = vunpack.c.l.b16 %v292
      %v839 = vunpack.c.l.b16 %v293
      %v840 = vunpack.c.l.b16 %v294
      %v841 = vunpack.c.l.b16 %v295
      %v842 = vunpack.c.l.b16 %v296
      %v843 = vunpack.c.l.b16 %v297
      %v844 = vunpack.c.l.b16 %v298
      %v845 = vunpack.c.l.b16 %v299
      %v846 = vunpack.c.l.b16 %v300
      %v847 = vunpack.c.l.b16 %v301
      %v848 = vunpack.c.l.b16 %v302
      %v849 = vunpack.c.l.b16 %v303
      %v850 = vunpack.c.l.b16 %v304
      %v851 = vunpack.c.l.b16 %v305
      %v852 = vunpack.c.l.b16 %v306
      %v853 = vunpack.c.l.b16 %v307
      %v854 = vunpack.c.l.b16 %v308
      %v855 = vpack.c.b16 %v837, %v836
      %v856 = vpack.c.b16 %v839, %v838
      %v857 = vpack.c.b16 %v841, %v840
      %v858 = vpack.c.b16 %v843, %v842
      %v859 = vpack.c.b16 %v845, %v844
      %v860 = vpack.c.b16 %v847, %v846
      %v861 = vpack.c.b16 %v849, %v848
      %v862 = vpack.c.b16 %v851, %v850
      %v863 = vpack.c.b16 %v853, %v852
      %v864 = vpack.c.b16 %v854, %v854
      %vm874 = vcmask 154624
      %v876 = vsel %vm874, %v650, 0
      %v879 = vsel %vm874, %v652, 0
      %v882 = vsel %vm874, %v654, 0
      %v885 = vsel %vm874, %v656, 0
      %v888 = vsel %vm874, %v658, 0
      %v891 = vsel %vm874, %v660, 0
      %v894 = vsel %vm874, %v662, 0
      %v897 = vsel %vm874, %v664, 0
      %v900 = vsel %vm874, %v666, 0
      %v903 = vsel %vm874, %v668, 0
      %v906 = vsel %vm874, %v670, 0
      %v909 = vsel %vm874, %v672, 0
      %v912 = vsel %vm874, %v674, 0
      %v915 = vsel %vm874, %v676, 0
      %v918 = vsel %vm874, %v678, 0
      %v921 = vsel %vm874, %v680, 0
      %v924 = vsel %vm874, %v682, 0
      %v927 = vsel %vm874, %v684, 0
      %v930 = vsel %vm874, %v686, 0
      %v933 = vsel %vm874, %v688, 0
      %v936 = vsel %vm874, %v690, 0
      %v939 = vsel %vm874, %v692, 0
      %v942 = vsel %vm874, %v694, 0
      %v945 = vsel %vm874, %v696, 0
      %v948 = vsel %vm874, %v698, 0
      %v951 = vsel %vm874, %v700, 0
      %v954 = vsel %vm874, %v702, 0
      %v957 = vsel %vm874, %v704, 0
      %v960 = vsel %vm874, %v706, 0
      %v963 = vsel %vm874, %v708, 0
      %v966 = vsel %vm874, %v710, 0
      %v969 = vsel %vm874, %v712, 0
      %v972 = vsel %vm874, %v714, 0
      %v975 = vsel %vm874, %v716, 0
      %v978 = vsel %vm874, %v718, 0
      %v981 = vsel %vm874, %v720, 0
      %v984 = vsel %vm874, %v722, 0
      %v987 = vsel %vm874, %v724, 0
      %v990 = vsel %vm874, %v726, 0
      %v993 = vsel %vm874, %v728, 0
      %v996 = vsel %vm874, %v730, 0
      %v999 = vsel %vm874, %v732, 0
      %v1002 = vsel %vm874, %v734, 0
      %v1005 = vsel %vm874, %v736, 0
      %v1008 = vsel %vm874, %v738, 0
      %v1011 = vsel %vm874, %v740, 0
      %v1014 = vsel %vm874, %v742, 0
      %v1017 = vsel %vm874, %v744, 0
      %v1020 = vsel %vm874, %v746, 0
      %v1023 = vsel %vm874, %v748, 0
      %v1026 = vsel %vm874, %v750, 0
      %v1029 = vsel %vm874, %v752, 0
      %v1032 = vsel %vm874, %v754, 0
      %v1035 = vsel %vm874, %v756, 0
      %v1038 = vsel %vm874, %v758, 0
      %v1041 = vsel %vm874, %v760, 0
      %vm1043 = vcmask 1040384
      %vm1044 = vcmask 1041408
      %v1045 = vsel %vm1043, 4294967295, 65535
      %v1046 = vsel %vm1044, %v1045, 0
      %v1048 = vand.u32 %v864, %v1046
      %1050 = vmatpush.bf16.msra.mxu0 %v862
      %1051 = vmatpush.bf16.msra.mxu0 %v861
      %1052 = vmatpush.bf16.msra.mxu0 %v860
      %1053 = vmatpush.bf16.msra.mxu0 %v859
      %1054 = vmatpush.bf16.msra.mxu0 %v858
      %1055 = vmatpush.bf16.msra.mxu0 %v857
      %1056 = vmatpush.bf16.msra.mxu0 %v856
      %1057 = vmatpush.bf16.msra.mxu0 %v855
      %1058 = vmatmul.bf16.gmra.mxu0 %v649
      %v1059 = vpop.f32.mrf.mxu0
      %v1060 = vadd.f32 %v311, %v1059
      %v1061 = vpop.f32.mrf.mxu0
      %v1062 = vadd.f32 %v311, %v1061
      %1063 = vmatmul.bf16.gmra.mxu0 %v651
      %v1064 = vpop.f32.mrf.mxu0
      %v1065 = vadd.f32 %v311, %v1064
      %v1066 = vpop.f32.mrf.mxu0
      %v1067 = vadd.f32 %v311, %v1066
      %1068 = vmatmul.bf16.gmra.mxu0 %v653
      %v1069 = vpop.f32.mrf.mxu0
      %v1070 = vadd.f32 %v311, %v1069
      %v1071 = vpop.f32.mrf.mxu0
      %v1072 = vadd.f32 %v311, %v1071
      %1073 = vmatmul.bf16.gmra.mxu0 %v655
      %v1074 = vpop.f32.mrf.mxu0
      %v1075 = vadd.f32 %v311, %v1074
      %v1076 = vpop.f32.mrf.mxu0
      %v1077 = vadd.f32 %v311, %v1076
      %1078 = vmatmul.bf16.gmra.mxu0 %v657
      %v1079 = vpop.f32.mrf.mxu0
      %v1080 = vadd.f32 %v311, %v1079
      %v1081 = vpop.f32.mrf.mxu0
      %v1082 = vadd.f32 %v311, %v1081
      %1083 = vmatmul.bf16.gmra.mxu0 %v659
      %v1084 = vpop.f32.mrf.mxu0
      %v1085 = vadd.f32 %v311, %v1084
      %v1086 = vpop.f32.mrf.mxu0
      %v1087 = vadd.f32 %v311, %v1086
      %1088 = vmatmul.bf16.gmra.mxu0 %v661
      %v1089 = vpop.f32.mrf.mxu0
      %v1090 = vadd.f32 %v311, %v1089
      %v1091 = vpop.f32.mrf.mxu0
      %v1092 = vadd.f32 %v311, %v1091
      %1093 = vmatmul.bf16.gmra.mxu0 %v663
      %v1094 = vpop.f32.mrf.mxu0
      %v1095 = vadd.f32 %v311, %v1094
      %v1096 = vpop.f32.mrf.mxu0
      %v1097 = vadd.f32 %v311, %v1096
      %1098 = vmatmul.bf16.gmra.mxu0 %v665
      %v1099 = vpop.f32.mrf.mxu0
      %v1100 = vadd.f32 %v311, %v1099
      %v1101 = vpop.f32.mrf.mxu0
      %v1102 = vadd.f32 %v311, %v1101
      %1103 = vmatmul.bf16.gmra.mxu0 %v667
      %v1104 = vpop.f32.mrf.mxu0
      %v1105 = vadd.f32 %v311, %v1104
      %v1106 = vpop.f32.mrf.mxu0
      %v1107 = vadd.f32 %v311, %v1106
      %1108 = vmatmul.bf16.gmra.mxu0 %v669
      %v1109 = vpop.f32.mrf.mxu0
      %v1110 = vadd.f32 %v311, %v1109
      %v1111 = vpop.f32.mrf.mxu0
      %v1112 = vadd.f32 %v311, %v1111
      %1113 = vmatmul.bf16.gmra.mxu0 %v671
      %v1114 = vpop.f32.mrf.mxu0
      %v1115 = vadd.f32 %v311, %v1114
      %v1116 = vpop.f32.mrf.mxu0
      %v1117 = vadd.f32 %v311, %v1116
      %1118 = vmatmul.bf16.gmra.mxu0 %v673
      %v1119 = vpop.f32.mrf.mxu0
      %v1120 = vadd.f32 %v311, %v1119
      %v1121 = vpop.f32.mrf.mxu0
      %v1122 = vadd.f32 %v311, %v1121
      %1123 = vmatmul.bf16.gmra.mxu0 %v675
      %v1124 = vpop.f32.mrf.mxu0
      %v1125 = vadd.f32 %v311, %v1124
      %v1126 = vpop.f32.mrf.mxu0
      %v1127 = vadd.f32 %v311, %v1126
      %1128 = vmatmul.bf16.gmra.mxu0 %v677
      %v1129 = vpop.f32.mrf.mxu0
      %v1130 = vadd.f32 %v311, %v1129
      %v1131 = vpop.f32.mrf.mxu0
      %v1132 = vadd.f32 %v311, %v1131
      %1133 = vmatmul.bf16.gmra.mxu0 %v679
      %v1134 = vpop.f32.mrf.mxu0
      %v1135 = vadd.f32 %v311, %v1134
      %v1136 = vpop.f32.mrf.mxu0
      %v1137 = vadd.f32 %v311, %v1136
      %1138 = vmatmul.bf16.gmra.mxu0 %v681
      %v1139 = vpop.f32.mrf.mxu0
      %v1140 = vadd.f32 %v311, %v1139
      %v1141 = vpop.f32.mrf.mxu0
      %v1142 = vadd.f32 %v311, %v1141
      %1143 = vmatmul.bf16.gmra.mxu0 %v683
      %v1144 = vpop.f32.mrf.mxu0
      %v1145 = vadd.f32 %v311, %v1144
      %v1146 = vpop.f32.mrf.mxu0
      %v1147 = vadd.f32 %v311, %v1146
      %1148 = vmatmul.bf16.gmra.mxu0 %v685
      %v1149 = vpop.f32.mrf.mxu0
      %v1150 = vadd.f32 %v311, %v1149
      %v1151 = vpop.f32.mrf.mxu0
      %v1152 = vadd.f32 %v311, %v1151
      %1153 = vmatmul.bf16.gmra.mxu0 %v687
      %v1154 = vpop.f32.mrf.mxu0
      %v1155 = vadd.f32 %v311, %v1154
      %v1156 = vpop.f32.mrf.mxu0
      %v1157 = vadd.f32 %v311, %v1156
      %1158 = vmatmul.bf16.gmra.mxu0 %v689
      %v1159 = vpop.f32.mrf.mxu0
      %v1160 = vadd.f32 %v311, %v1159
      %v1161 = vpop.f32.mrf.mxu0
      %v1162 = vadd.f32 %v311, %v1161
      %1163 = vmatmul.bf16.gmra.mxu0 %v691
      %v1164 = vpop.f32.mrf.mxu0
      %v1165 = vadd.f32 %v311, %v1164
      %v1166 = vpop.f32.mrf.mxu0
      %v1167 = vadd.f32 %v311, %v1166
      %1168 = vmatmul.bf16.gmra.mxu0 %v693
      %v1169 = vpop.f32.mrf.mxu0
      %v1170 = vadd.f32 %v311, %v1169
      %v1171 = vpop.f32.mrf.mxu0
      %v1172 = vadd.f32 %v311, %v1171
      %1173 = vmatmul.bf16.gmra.mxu0 %v695
      %v1174 = vpop.f32.mrf.mxu0
      %v1175 = vadd.f32 %v311, %v1174
      %v1176 = vpop.f32.mrf.mxu0
      %v1177 = vadd.f32 %v311, %v1176
      %1178 = vmatmul.bf16.gmra.mxu0 %v697
      %v1179 = vpop.f32.mrf.mxu0
      %v1180 = vadd.f32 %v311, %v1179
      %v1181 = vpop.f32.mrf.mxu0
      %v1182 = vadd.f32 %v311, %v1181
      %1183 = vmatmul.bf16.gmra.mxu0 %v699
      %v1184 = vpop.f32.mrf.mxu0
      %v1185 = vadd.f32 %v311, %v1184
      %v1186 = vpop.f32.mrf.mxu0
      %v1187 = vadd.f32 %v311, %v1186
      %1188 = vmatmul.bf16.gmra.mxu0 %v701
      %v1189 = vpop.f32.mrf.mxu0
      %v1190 = vadd.f32 %v311, %v1189
      %v1191 = vpop.f32.mrf.mxu0
      %v1192 = vadd.f32 %v311, %v1191
      %1193 = vmatmul.bf16.gmra.mxu0 %v703
      %v1194 = vpop.f32.mrf.mxu0
      %v1195 = vadd.f32 %v311, %v1194
      %v1196 = vpop.f32.mrf.mxu0
      %v1197 = vadd.f32 %v311, %v1196
      %1198 = vmatmul.bf16.gmra.mxu0 %v705
      %v1199 = vpop.f32.mrf.mxu0
      %v1200 = vadd.f32 %v311, %v1199
      %v1201 = vpop.f32.mrf.mxu0
      %v1202 = vadd.f32 %v311, %v1201
      %1203 = vmatmul.bf16.gmra.mxu0 %v707
      %v1204 = vpop.f32.mrf.mxu0
      %v1205 = vadd.f32 %v311, %v1204
      %v1206 = vpop.f32.mrf.mxu0
      %v1207 = vadd.f32 %v311, %v1206
      %1208 = vmatmul.bf16.gmra.mxu0 %v709
      %v1209 = vpop.f32.mrf.mxu0
      %v1210 = vadd.f32 %v311, %v1209
      %v1211 = vpop.f32.mrf.mxu0
      %v1212 = vadd.f32 %v311, %v1211
      %1213 = vmatmul.bf16.gmra.mxu0 %v711
      %v1214 = vpop.f32.mrf.mxu0
      %v1215 = vadd.f32 %v311, %v1214
      %v1216 = vpop.f32.mrf.mxu0
      %v1217 = vadd.f32 %v311, %v1216
      %1218 = vmatmul.bf16.gmra.mxu0 %v713
      %v1219 = vpop.f32.mrf.mxu0
      %v1220 = vadd.f32 %v311, %v1219
      %v1221 = vpop.f32.mrf.mxu0
      %v1222 = vadd.f32 %v311, %v1221
      %1223 = vmatmul.bf16.gmra.mxu0 %v715
      %v1224 = vpop.f32.mrf.mxu0
      %v1225 = vadd.f32 %v311, %v1224
      %v1226 = vpop.f32.mrf.mxu0
      %v1227 = vadd.f32 %v311, %v1226
      %1228 = vmatmul.bf16.gmra.mxu0 %v717
      %v1229 = vpop.f32.mrf.mxu0
      %v1230 = vadd.f32 %v311, %v1229
      %v1231 = vpop.f32.mrf.mxu0
      %v1232 = vadd.f32 %v311, %v1231
      %1233 = vmatmul.bf16.gmra.mxu0 %v719
      %v1234 = vpop.f32.mrf.mxu0
      %v1235 = vadd.f32 %v311, %v1234
      %v1236 = vpop.f32.mrf.mxu0
      %v1237 = vadd.f32 %v311, %v1236
      %1238 = vmatmul.bf16.gmra.mxu0 %v721
      %v1239 = vpop.f32.mrf.mxu0
      %v1240 = vadd.f32 %v311, %v1239
      %v1241 = vpop.f32.mrf.mxu0
      %v1242 = vadd.f32 %v311, %v1241
      %1243 = vmatmul.bf16.gmra.mxu0 %v723
      %v1244 = vpop.f32.mrf.mxu0
      %v1245 = vadd.f32 %v311, %v1244
      %v1246 = vpop.f32.mrf.mxu0
      %v1247 = vadd.f32 %v311, %v1246
      %1248 = vmatmul.bf16.gmra.mxu0 %v725
      %v1249 = vpop.f32.mrf.mxu0
      %v1250 = vadd.f32 %v311, %v1249
      %v1251 = vpop.f32.mrf.mxu0
      %v1252 = vadd.f32 %v311, %v1251
      %1253 = vmatmul.bf16.gmra.mxu0 %v727
      %v1254 = vpop.f32.mrf.mxu0
      %v1255 = vadd.f32 %v311, %v1254
      %v1256 = vpop.f32.mrf.mxu0
      %v1257 = vadd.f32 %v311, %v1256
      %1258 = vmatmul.bf16.gmra.mxu0 %v729
      %v1259 = vpop.f32.mrf.mxu0
      %v1260 = vadd.f32 %v311, %v1259
      %v1261 = vpop.f32.mrf.mxu0
      %v1262 = vadd.f32 %v311, %v1261
      %1263 = vmatmul.bf16.gmra.mxu0 %v731
      %v1264 = vpop.f32.mrf.mxu0
      %v1265 = vadd.f32 %v311, %v1264
      %v1266 = vpop.f32.mrf.mxu0
      %v1267 = vadd.f32 %v311, %v1266
      %1268 = vmatmul.bf16.gmra.mxu0 %v733
      %v1269 = vpop.f32.mrf.mxu0
      %v1270 = vadd.f32 %v311, %v1269
      %v1271 = vpop.f32.mrf.mxu0
      %v1272 = vadd.f32 %v311, %v1271
      %1273 = vmatmul.bf16.gmra.mxu0 %v735
      %v1274 = vpop.f32.mrf.mxu0
      %v1275 = vadd.f32 %v311, %v1274
      %v1276 = vpop.f32.mrf.mxu0
      %v1277 = vadd.f32 %v311, %v1276
      %1278 = vmatmul.bf16.gmra.mxu0 %v737
      %v1279 = vpop.f32.mrf.mxu0
      %v1280 = vadd.f32 %v311, %v1279
      %v1281 = vpop.f32.mrf.mxu0
      %v1282 = vadd.f32 %v311, %v1281
      %1283 = vmatmul.bf16.gmra.mxu0 %v739
      %v1284 = vpop.f32.mrf.mxu0
      %v1285 = vadd.f32 %v311, %v1284
      %v1286 = vpop.f32.mrf.mxu0
      %v1287 = vadd.f32 %v311, %v1286
      %1288 = vmatmul.bf16.gmra.mxu0 %v741
      %v1289 = vpop.f32.mrf.mxu0
      %v1290 = vadd.f32 %v311, %v1289
      %v1291 = vpop.f32.mrf.mxu0
      %v1292 = vadd.f32 %v311, %v1291
      %1293 = vmatmul.bf16.gmra.mxu0 %v743
      %v1294 = vpop.f32.mrf.mxu0
      %v1295 = vadd.f32 %v311, %v1294
      %v1296 = vpop.f32.mrf.mxu0
      %v1297 = vadd.f32 %v311, %v1296
      %1298 = vmatmul.bf16.gmra.mxu0 %v745
      %v1299 = vpop.f32.mrf.mxu0
      %v1300 = vadd.f32 %v311, %v1299
      %v1301 = vpop.f32.mrf.mxu0
      %v1302 = vadd.f32 %v311, %v1301
      %1303 = vmatmul.bf16.gmra.mxu0 %v747
      %v1304 = vpop.f32.mrf.mxu0
      %v1305 = vadd.f32 %v311, %v1304
      %v1306 = vpop.f32.mrf.mxu0
      %v1307 = vadd.f32 %v311, %v1306
      %1308 = vmatmul.bf16.gmra.mxu0 %v749
      %v1309 = vpop.f32.mrf.mxu0
      %v1310 = vadd.f32 %v311, %v1309
      %v1311 = vpop.f32.mrf.mxu0
      %v1312 = vadd.f32 %v311, %v1311
      %1313 = vmatmul.bf16.gmra.mxu0 %v751
      %v1314 = vpop.f32.mrf.mxu0
      %v1315 = vadd.f32 %v311, %v1314
      %v1316 = vpop.f32.mrf.mxu0
      %v1317 = vadd.f32 %v311, %v1316
      %1318 = vmatmul.bf16.gmra.mxu0 %v753
      %v1319 = vpop.f32.mrf.mxu0
      %v1320 = vadd.f32 %v311, %v1319
      %v1321 = vpop.f32.mrf.mxu0
      %v1322 = vadd.f32 %v311, %v1321
      %1323 = vmatmul.bf16.gmra.mxu0 %v755
      %v1324 = vpop.f32.mrf.mxu0
      %v1325 = vadd.f32 %v311, %v1324
      %v1326 = vpop.f32.mrf.mxu0
      %v1327 = vadd.f32 %v311, %v1326
      %1328 = vmatmul.bf16.gmra.mxu0 %v757
      %v1329 = vpop.f32.mrf.mxu0
      %v1330 = vadd.f32 %v311, %v1329
      %v1331 = vpop.f32.mrf.mxu0
      %v1332 = vadd.f32 %v311, %v1331
      %1333 = vmatmul.bf16.gmra.mxu0 %v759
      %v1334 = vpop.f32.mrf.mxu0
      %v1335 = vadd.f32 %v311, %v1334
      %v1336 = vpop.f32.mrf.mxu0
      %v1337 = vadd.f32 %v311, %v1336
      %1338 = vdwg.mxu0
      %1339 = vmatpush.bf16.msra.mxu0 0
      %1340 = vmatpush.bf16.msra.mxu0 0
      %1341 = vmatpush.bf16.msra.mxu0 0
      %1342 = vmatpush.bf16.msra.mxu0 0
      %1343 = vmatpush.bf16.msra.mxu0 0
      %1344 = vmatpush.bf16.msra.mxu0 0
      %1345 = vmatpush.bf16.msra.mxu0 %v1048
      %1346 = vmatpush.bf16.msra.mxu0 %v863
      %1347 = vmatmul.bf16.gmra.mxu0 %v876
      %v1348 = vpop.f32.mrf.mxu0
      %v1349 = vadd.f32 %v1060, %v1348
      %v1350 = vpop.f32.mrf.mxu0
      %v1351 = vadd.f32 %v1062, %v1350
      %1352 = vmatmul.bf16.gmra.mxu0 %v879
      %v1353 = vpop.f32.mrf.mxu0
      %v1354 = vadd.f32 %v1065, %v1353
      %v1355 = vpop.f32.mrf.mxu0
      %v1356 = vadd.f32 %v1067, %v1355
      %1357 = vmatmul.bf16.gmra.mxu0 %v882
      %v1358 = vpop.f32.mrf.mxu0
      %v1359 = vadd.f32 %v1070, %v1358
      %v1360 = vpop.f32.mrf.mxu0
      %v1361 = vadd.f32 %v1072, %v1360
      %1362 = vmatmul.bf16.gmra.mxu0 %v885
      %v1363 = vpop.f32.mrf.mxu0
      %v1364 = vadd.f32 %v1075, %v1363
      %v1365 = vpop.f32.mrf.mxu0
      %v1366 = vadd.f32 %v1077, %v1365
      %1367 = vmatmul.bf16.gmra.mxu0 %v888
      %v1368 = vpop.f32.mrf.mxu0
      %v1369 = vadd.f32 %v1080, %v1368
      %v1370 = vpop.f32.mrf.mxu0
      %v1371 = vadd.f32 %v1082, %v1370
      %1372 = vmatmul.bf16.gmra.mxu0 %v891
      %v1373 = vpop.f32.mrf.mxu0
      %v1374 = vadd.f32 %v1085, %v1373
      %v1375 = vpop.f32.mrf.mxu0
      %v1376 = vadd.f32 %v1087, %v1375
      %1377 = vmatmul.bf16.gmra.mxu0 %v894
      %v1378 = vpop.f32.mrf.mxu0
      %v1379 = vadd.f32 %v1090, %v1378
      %v1380 = vpop.f32.mrf.mxu0
      %v1381 = vadd.f32 %v1092, %v1380
      %1382 = vmatmul.bf16.gmra.mxu0 %v897
      %v1383 = vpop.f32.mrf.mxu0
      %v1384 = vadd.f32 %v1095, %v1383
      %v1385 = vpop.f32.mrf.mxu0
      %v1386 = vadd.f32 %v1097, %v1385
      %1387 = vmatmul.bf16.gmra.mxu0 %v900
      %v1388 = vpop.f32.mrf.mxu0
      %v1389 = vadd.f32 %v1100, %v1388
      %v1390 = vpop.f32.mrf.mxu0
      %v1391 = vadd.f32 %v1102, %v1390
      %1392 = vmatmul.bf16.gmra.mxu0 %v903
      %v1393 = vpop.f32.mrf.mxu0
      %v1394 = vadd.f32 %v1105, %v1393
      %v1395 = vpop.f32.mrf.mxu0
      %v1396 = vadd.f32 %v1107, %v1395
      %1397 = vmatmul.bf16.gmra.mxu0 %v906
      %v1398 = vpop.f32.mrf.mxu0
      %v1399 = vadd.f32 %v1110, %v1398
      %v1400 = vpop.f32.mrf.mxu0
      %v1401 = vadd.f32 %v1112, %v1400
      %1402 = vmatmul.bf16.gmra.mxu0 %v909
      %v1403 = vpop.f32.mrf.mxu0
      %v1404 = vadd.f32 %v1115, %v1403
      %v1405 = vpop.f32.mrf.mxu0
      %v1406 = vadd.f32 %v1117, %v1405
      %1407 = vmatmul.bf16.gmra.mxu0 %v912
      %v1408 = vpop.f32.mrf.mxu0
      %v1409 = vadd.f32 %v1120, %v1408
      %v1410 = vpop.f32.mrf.mxu0
      %v1411 = vadd.f32 %v1122, %v1410
      %1412 = vmatmul.bf16.gmra.mxu0 %v915
      %v1413 = vpop.f32.mrf.mxu0
      %v1414 = vadd.f32 %v1125, %v1413
      %v1415 = vpop.f32.mrf.mxu0
      %v1416 = vadd.f32 %v1127, %v1415
      %1417 = vmatmul.bf16.gmra.mxu0 %v918
      %v1418 = vpop.f32.mrf.mxu0
      %v1419 = vadd.f32 %v1130, %v1418
      %v1420 = vpop.f32.mrf.mxu0
      %v1421 = vadd.f32 %v1132, %v1420
      %1422 = vmatmul.bf16.gmra.mxu0 %v921
      %v1423 = vpop.f32.mrf.mxu0
      %v1424 = vadd.f32 %v1135, %v1423
      %v1425 = vpop.f32.mrf.mxu0
      %v1426 = vadd.f32 %v1137, %v1425
      %1427 = vmatmul.bf16.gmra.mxu0 %v924
      %v1428 = vpop.f32.mrf.mxu0
      %v1429 = vadd.f32 %v1140, %v1428
      %v1430 = vpop.f32.mrf.mxu0
      %v1431 = vadd.f32 %v1142, %v1430
      %1432 = vmatmul.bf16.gmra.mxu0 %v927
      %v1433 = vpop.f32.mrf.mxu0
      %v1434 = vadd.f32 %v1145, %v1433
      %v1435 = vpop.f32.mrf.mxu0
      %v1436 = vadd.f32 %v1147, %v1435
      %1437 = vmatmul.bf16.gmra.mxu0 %v930
      %v1438 = vpop.f32.mrf.mxu0
      %v1439 = vadd.f32 %v1150, %v1438
      %v1440 = vpop.f32.mrf.mxu0
      %v1441 = vadd.f32 %v1152, %v1440
      %1442 = vmatmul.bf16.gmra.mxu0 %v933
      %v1443 = vpop.f32.mrf.mxu0
      %v1444 = vadd.f32 %v1155, %v1443
      %v1445 = vpop.f32.mrf.mxu0
      %v1446 = vadd.f32 %v1157, %v1445
      %1447 = vmatmul.bf16.gmra.mxu0 %v936
      %v1448 = vpop.f32.mrf.mxu0
      %v1449 = vadd.f32 %v1160, %v1448
      %v1450 = vpop.f32.mrf.mxu0
      %v1451 = vadd.f32 %v1162, %v1450
      %1452 = vmatmul.bf16.gmra.mxu0 %v939
      %v1453 = vpop.f32.mrf.mxu0
      %v1454 = vadd.f32 %v1165, %v1453
      %v1455 = vpop.f32.mrf.mxu0
      %v1456 = vadd.f32 %v1167, %v1455
      %1457 = vmatmul.bf16.gmra.mxu0 %v942
      %v1458 = vpop.f32.mrf.mxu0
      %v1459 = vadd.f32 %v1170, %v1458
      %v1460 = vpop.f32.mrf.mxu0
      %v1461 = vadd.f32 %v1172, %v1460
      %1462 = vmatmul.bf16.gmra.mxu0 %v945
      %v1463 = vpop.f32.mrf.mxu0
      %v1464 = vadd.f32 %v1175, %v1463
      %v1465 = vpop.f32.mrf.mxu0
      %v1466 = vadd.f32 %v1177, %v1465
      %1467 = vmatmul.bf16.gmra.mxu0 %v948
      %v1468 = vpop.f32.mrf.mxu0
      %v1469 = vadd.f32 %v1180, %v1468
      %v1470 = vpop.f32.mrf.mxu0
      %v1471 = vadd.f32 %v1182, %v1470
      %1472 = vmatmul.bf16.gmra.mxu0 %v951
      %v1473 = vpop.f32.mrf.mxu0
      %v1474 = vadd.f32 %v1185, %v1473
      %v1475 = vpop.f32.mrf.mxu0
      %v1476 = vadd.f32 %v1187, %v1475
      %1477 = vmatmul.bf16.gmra.mxu0 %v954
      %v1478 = vpop.f32.mrf.mxu0
      %v1479 = vadd.f32 %v1190, %v1478
      %v1480 = vpop.f32.mrf.mxu0
      %v1481 = vadd.f32 %v1192, %v1480
      %1482 = vmatmul.bf16.gmra.mxu0 %v957
      %v1483 = vpop.f32.mrf.mxu0
      %v1484 = vadd.f32 %v1195, %v1483
      %v1485 = vpop.f32.mrf.mxu0
      %v1486 = vadd.f32 %v1197, %v1485
      %1487 = vmatmul.bf16.gmra.mxu0 %v960
      %v1488 = vpop.f32.mrf.mxu0
      %v1489 = vadd.f32 %v1200, %v1488
      %v1490 = vpop.f32.mrf.mxu0
      %v1491 = vadd.f32 %v1202, %v1490
      %1492 = vmatmul.bf16.gmra.mxu0 %v963
      %v1493 = vpop.f32.mrf.mxu0
      %v1494 = vadd.f32 %v1205, %v1493
      %v1495 = vpop.f32.mrf.mxu0
      %v1496 = vadd.f32 %v1207, %v1495
      %1497 = vmatmul.bf16.gmra.mxu0 %v966
      %v1498 = vpop.f32.mrf.mxu0
      %v1499 = vadd.f32 %v1210, %v1498
      %v1500 = vpop.f32.mrf.mxu0
      %v1501 = vadd.f32 %v1212, %v1500
      %1502 = vmatmul.bf16.gmra.mxu0 %v969
      %v1503 = vpop.f32.mrf.mxu0
      %v1504 = vadd.f32 %v1215, %v1503
      %v1505 = vpop.f32.mrf.mxu0
      %v1506 = vadd.f32 %v1217, %v1505
      %1507 = vmatmul.bf16.gmra.mxu0 %v972
      %v1508 = vpop.f32.mrf.mxu0
      %v1509 = vadd.f32 %v1220, %v1508
      %v1510 = vpop.f32.mrf.mxu0
      %v1511 = vadd.f32 %v1222, %v1510
      %1512 = vmatmul.bf16.gmra.mxu0 %v975
      %v1513 = vpop.f32.mrf.mxu0
      %v1514 = vadd.f32 %v1225, %v1513
      %v1515 = vpop.f32.mrf.mxu0
      %v1516 = vadd.f32 %v1227, %v1515
      %1517 = vmatmul.bf16.gmra.mxu0 %v978
      %v1518 = vpop.f32.mrf.mxu0
      %v1519 = vadd.f32 %v1230, %v1518
      %v1520 = vpop.f32.mrf.mxu0
      %v1521 = vadd.f32 %v1232, %v1520
      %1522 = vmatmul.bf16.gmra.mxu0 %v981
      %v1523 = vpop.f32.mrf.mxu0
      %v1524 = vadd.f32 %v1235, %v1523
      %v1525 = vpop.f32.mrf.mxu0
      %v1526 = vadd.f32 %v1237, %v1525
      %1527 = vmatmul.bf16.gmra.mxu0 %v984
      %v1528 = vpop.f32.mrf.mxu0
      %v1529 = vadd.f32 %v1240, %v1528
      %v1530 = vpop.f32.mrf.mxu0
      %v1531 = vadd.f32 %v1242, %v1530
      %1532 = vmatmul.bf16.gmra.mxu0 %v987
      %v1533 = vpop.f32.mrf.mxu0
      %v1534 = vadd.f32 %v1245, %v1533
      %v1535 = vpop.f32.mrf.mxu0
      %v1536 = vadd.f32 %v1247, %v1535
      %1537 = vmatmul.bf16.gmra.mxu0 %v990
      %v1538 = vpop.f32.mrf.mxu0
      %v1539 = vadd.f32 %v1250, %v1538
      %v1540 = vpop.f32.mrf.mxu0
      %v1541 = vadd.f32 %v1252, %v1540
      %1542 = vmatmul.bf16.gmra.mxu0 %v993
      %v1543 = vpop.f32.mrf.mxu0
      %v1544 = vadd.f32 %v1255, %v1543
      %v1545 = vpop.f32.mrf.mxu0
      %v1546 = vadd.f32 %v1257, %v1545
      %1547 = vmatmul.bf16.gmra.mxu0 %v996
      %v1548 = vpop.f32.mrf.mxu0
      %v1549 = vadd.f32 %v1260, %v1548
      %v1550 = vpop.f32.mrf.mxu0
      %v1551 = vadd.f32 %v1262, %v1550
      %1552 = vmatmul.bf16.gmra.mxu0 %v999
      %v1553 = vpop.f32.mrf.mxu0
      %v1554 = vadd.f32 %v1265, %v1553
      %v1555 = vpop.f32.mrf.mxu0
      %v1556 = vadd.f32 %v1267, %v1555
      %1557 = vmatmul.bf16.gmra.mxu0 %v1002
      %v1558 = vpop.f32.mrf.mxu0
      %v1559 = vadd.f32 %v1270, %v1558
      %v1560 = vpop.f32.mrf.mxu0
      %v1561 = vadd.f32 %v1272, %v1560
      %1562 = vmatmul.bf16.gmra.mxu0 %v1005
      %v1563 = vpop.f32.mrf.mxu0
      %v1564 = vadd.f32 %v1275, %v1563
      %v1565 = vpop.f32.mrf.mxu0
      %v1566 = vadd.f32 %v1277, %v1565
      %1567 = vmatmul.bf16.gmra.mxu0 %v1008
      %v1568 = vpop.f32.mrf.mxu0
      %v1569 = vadd.f32 %v1280, %v1568
      %v1570 = vpop.f32.mrf.mxu0
      %v1571 = vadd.f32 %v1282, %v1570
      %1572 = vmatmul.bf16.gmra.mxu0 %v1011
      %v1573 = vpop.f32.mrf.mxu0
      %v1574 = vadd.f32 %v1285, %v1573
      %v1575 = vpop.f32.mrf.mxu0
      %v1576 = vadd.f32 %v1287, %v1575
      %1577 = vmatmul.bf16.gmra.mxu0 %v1014
      %v1578 = vpop.f32.mrf.mxu0
      %v1579 = vadd.f32 %v1290, %v1578
      %v1580 = vpop.f32.mrf.mxu0
      %v1581 = vadd.f32 %v1292, %v1580
      %1582 = vmatmul.bf16.gmra.mxu0 %v1017
      %v1583 = vpop.f32.mrf.mxu0
      %v1584 = vadd.f32 %v1295, %v1583
      %v1585 = vpop.f32.mrf.mxu0
      %v1586 = vadd.f32 %v1297, %v1585
      %1587 = vmatmul.bf16.gmra.mxu0 %v1020
      %v1588 = vpop.f32.mrf.mxu0
      %v1589 = vadd.f32 %v1300, %v1588
      %v1590 = vpop.f32.mrf.mxu0
      %v1591 = vadd.f32 %v1302, %v1590
      %1592 = vmatmul.bf16.gmra.mxu0 %v1023
      %v1593 = vpop.f32.mrf.mxu0
      %v1594 = vadd.f32 %v1305, %v1593
      %v1595 = vpop.f32.mrf.mxu0
      %v1596 = vadd.f32 %v1307, %v1595
      %1597 = vmatmul.bf16.gmra.mxu0 %v1026
      %v1598 = vpop.f32.mrf.mxu0
      %v1599 = vadd.f32 %v1310, %v1598
      %v1600 = vpop.f32.mrf.mxu0
      %v1601 = vadd.f32 %v1312, %v1600
      %1602 = vmatmul.bf16.gmra.mxu0 %v1029
      %v1603 = vpop.f32.mrf.mxu0
      %v1604 = vadd.f32 %v1315, %v1603
      %v1605 = vpop.f32.mrf.mxu0
      %v1606 = vadd.f32 %v1317, %v1605
      %1607 = vmatmul.bf16.gmra.mxu0 %v1032
      %v1608 = vpop.f32.mrf.mxu0
      %v1609 = vadd.f32 %v1320, %v1608
      %v1610 = vpop.f32.mrf.mxu0
      %v1611 = vadd.f32 %v1322, %v1610
      %1612 = vmatmul.bf16.gmra.mxu0 %v1035
      %v1613 = vpop.f32.mrf.mxu0
      %v1614 = vadd.f32 %v1325, %v1613
      %v1615 = vpop.f32.mrf.mxu0
      %v1616 = vadd.f32 %v1327, %v1615
      %1617 = vmatmul.bf16.gmra.mxu0 %v1038
      %v1618 = vpop.f32.mrf.mxu0
      %v1619 = vadd.f32 %v1330, %v1618
      %v1620 = vpop.f32.mrf.mxu0
      %v1621 = vadd.f32 %v1332, %v1620
      %1622 = vmatmul.bf16.gmra.mxu0 %v1041
      %v1623 = vpop.f32.mrf.mxu0
      %v1624 = vadd.f32 %v1335, %v1623
      %v1625 = vpop.f32.mrf.mxu0
      %v1626 = vadd.f32 %v1337, %v1625
      %1627 = vdwg.mxu0
      %v1628 = vmax.f32 %v1349, 0.0
      %v1629 = vmax.f32 %v1351, 0.0
      %v1630 = vmax.f32 %v1354, 0.0
      %v1631 = vmax.f32 %v1356, 0.0
      %v1632 = vmax.f32 %v1359, 0.0
      %v1633 = vmax.f32 %v1361, 0.0
      %v1634 = vmax.f32 %v1364, 0.0
      %v1635 = vmax.f32 %v1366, 0.0
      %v1636 = vmax.f32 %v1369, 0.0
      %v1637 = vmax.f32 %v1371, 0.0
      %v1638 = vmax.f32 %v1374, 0.0
      %v1639 = vmax.f32 %v1376, 0.0
      %v1640 = vmax.f32 %v1379, 0.0
      %v1641 = vmax.f32 %v1381, 0.0
      %v1642 = vmax.f32 %v1384, 0.0
      %v1643 = vmax.f32 %v1386, 0.0
      %v1644 = vmax.f32 %v1389, 0.0
      %v1645 = vmax.f32 %v1391, 0.0
      %v1646 = vmax.f32 %v1394, 0.0
      %v1647 = vmax.f32 %v1396, 0.0
      %v1648 = vmax.f32 %v1399, 0.0
      %v1649 = vmax.f32 %v1401, 0.0
      %v1650 = vmax.f32 %v1404, 0.0
      %v1651 = vmax.f32 %v1406, 0.0
      %v1652 = vmax.f32 %v1409, 0.0
      %v1653 = vmax.f32 %v1411, 0.0
      %v1654 = vmax.f32 %v1414, 0.0
      %v1655 = vmax.f32 %v1416, 0.0
      %v1656 = vmax.f32 %v1419, 0.0
      %v1657 = vmax.f32 %v1421, 0.0
      %v1658 = vmax.f32 %v1424, 0.0
      %v1659 = vmax.f32 %v1426, 0.0
      %v1660 = vmax.f32 %v1429, 0.0
      %v1661 = vmax.f32 %v1431, 0.0
      %v1662 = vmax.f32 %v1434, 0.0
      %v1663 = vmax.f32 %v1436, 0.0
      %v1664 = vmax.f32 %v1439, 0.0
      %v1665 = vmax.f32 %v1441, 0.0
      %v1666 = vmax.f32 %v1444, 0.0
      %v1667 = vmax.f32 %v1446, 0.0
      %v1668 = vmax.f32 %v1449, 0.0
      %v1669 = vmax.f32 %v1451, 0.0
      %v1670 = vmax.f32 %v1454, 0.0
      %v1671 = vmax.f32 %v1456, 0.0
      %v1672 = vmax.f32 %v1459, 0.0
      %v1673 = vmax.f32 %v1461, 0.0
      %v1674 = vmax.f32 %v1464, 0.0
      %v1675 = vmax.f32 %v1466, 0.0
      %v1676 = vmax.f32 %v1469, 0.0
      %v1677 = vmax.f32 %v1471, 0.0
      %v1678 = vmax.f32 %v1474, 0.0
      %v1679 = vmax.f32 %v1476, 0.0
      %v1680 = vmax.f32 %v1479, 0.0
      %v1681 = vmax.f32 %v1481, 0.0
      %v1682 = vmax.f32 %v1484, 0.0
      %v1683 = vmax.f32 %v1486, 0.0
      %v1684 = vmax.f32 %v1489, 0.0
      %v1685 = vmax.f32 %v1491, 0.0
      %v1686 = vmax.f32 %v1494, 0.0
      %v1687 = vmax.f32 %v1496, 0.0
      %v1688 = vmax.f32 %v1499, 0.0
      %v1689 = vmax.f32 %v1501, 0.0
      %v1690 = vmax.f32 %v1504, 0.0
      %v1691 = vmax.f32 %v1506, 0.0
      %v1692 = vmax.f32 %v1509, 0.0
      %v1693 = vmax.f32 %v1511, 0.0
      %v1694 = vmax.f32 %v1514, 0.0
      %v1695 = vmax.f32 %v1516, 0.0
      %v1696 = vmax.f32 %v1519, 0.0
      %v1697 = vmax.f32 %v1521, 0.0
      %v1698 = vmax.f32 %v1524, 0.0
      %v1699 = vmax.f32 %v1526, 0.0
      %v1700 = vmax.f32 %v1529, 0.0
      %v1701 = vmax.f32 %v1531, 0.0
      %v1702 = vmax.f32 %v1534, 0.0
      %v1703 = vmax.f32 %v1536, 0.0
      %v1704 = vmax.f32 %v1539, 0.0
      %v1705 = vmax.f32 %v1541, 0.0
      %v1706 = vmax.f32 %v1544, 0.0
      %v1707 = vmax.f32 %v1546, 0.0
      %v1708 = vmax.f32 %v1549, 0.0
      %v1709 = vmax.f32 %v1551, 0.0
      %v1710 = vmax.f32 %v1554, 0.0
      %v1711 = vmax.f32 %v1556, 0.0
      %v1712 = vmax.f32 %v1559, 0.0
      %v1713 = vmax.f32 %v1561, 0.0
      %v1714 = vmax.f32 %v1564, 0.0
      %v1715 = vmax.f32 %v1566, 0.0
      %v1716 = vmax.f32 %v1569, 0.0
      %v1717 = vmax.f32 %v1571, 0.0
      %v1718 = vmax.f32 %v1574, 0.0
      %v1719 = vmax.f32 %v1576, 0.0
      %v1720 = vmax.f32 %v1579, 0.0
      %v1721 = vmax.f32 %v1581, 0.0
      %v1722 = vmax.f32 %v1584, 0.0
      %v1723 = vmax.f32 %v1586, 0.0
      %v1724 = vmax.f32 %v1589, 0.0
      %v1725 = vmax.f32 %v1591, 0.0
      %v1726 = vmax.f32 %v1594, 0.0
      %v1727 = vmax.f32 %v1596, 0.0
      %v1728 = vmax.f32 %v1599, 0.0
      %v1729 = vmax.f32 %v1601, 0.0
      %v1730 = vmax.f32 %v1604, 0.0
      %v1731 = vmax.f32 %v1606, 0.0
      %v1732 = vmax.f32 %v1609, 0.0
      %v1733 = vmax.f32 %v1611, 0.0
      %v1734 = vmax.f32 %v1614, 0.0
      %v1735 = vmax.f32 %v1616, 0.0
      %v1736 = vmax.f32 %v1619, 0.0
      %v1737 = vmax.f32 %v1621, 0.0
      %v1738 = vmax.f32 %v1624, 0.0
      %v1739 = vmax.f32 %v1626, 0.0
      %v1740 = vpack.c.bf16 %v1628, %v1628
      %v1741 = vpack.c.bf16 %v1629, %v1629
      %v1742 = vpack.c.bf16 %v1630, %v1630
      %v1743 = vpack.c.bf16 %v1631, %v1631
      %v1744 = vpack.c.bf16 %v1632, %v1632
      %v1745 = vpack.c.bf16 %v1633, %v1633
      %v1746 = vpack.c.bf16 %v1634, %v1634
      %v1747 = vpack.c.bf16 %v1635, %v1635
      %v1748 = vpack.c.bf16 %v1636, %v1636
      %v1749 = vpack.c.bf16 %v1637, %v1637
      %v1750 = vpack.c.bf16 %v1638, %v1638
      %v1751 = vpack.c.bf16 %v1639, %v1639
      %v1752 = vpack.c.bf16 %v1640, %v1640
      %v1753 = vpack.c.bf16 %v1641, %v1641
      %v1754 = vpack.c.bf16 %v1642, %v1642
      %v1755 = vpack.c.bf16 %v1643, %v1643
      %v1756 = vpack.c.bf16 %v1644, %v1644
      %v1757 = vpack.c.bf16 %v1645, %v1645
      %v1758 = vpack.c.bf16 %v1646, %v1646
      %v1759 = vpack.c.bf16 %v1647, %v1647
      %v1760 = vpack.c.bf16 %v1648, %v1648
      %v1761 = vpack.c.bf16 %v1649, %v1649
      %v1762 = vpack.c.bf16 %v1650, %v1650
      %v1763 = vpack.c.bf16 %v1651, %v1651
      %v1764 = vpack.c.bf16 %v1652, %v1652
      %v1765 = vpack.c.bf16 %v1653, %v1653
      %v1766 = vpack.c.bf16 %v1654, %v1654
      %v1767 = vpack.c.bf16 %v1655, %v1655
      %v1768 = vpack.c.bf16 %v1656, %v1656
      %v1769 = vpack.c.bf16 %v1657, %v1657
      %v1770 = vpack.c.bf16 %v1658, %v1658
      %v1771 = vpack.c.bf16 %v1659, %v1659
      %v1772 = vpack.c.bf16 %v1660, %v1660
      %v1773 = vpack.c.bf16 %v1661, %v1661
      %v1774 = vpack.c.bf16 %v1662, %v1662
      %v1775 = vpack.c.bf16 %v1663, %v1663
      %v1776 = vpack.c.bf16 %v1664, %v1664
      %v1777 = vpack.c.bf16 %v1665, %v1665
      %v1778 = vpack.c.bf16 %v1666, %v1666
      %v1779 = vpack.c.bf16 %v1667, %v1667
      %v1780 = vpack.c.bf16 %v1668, %v1668
      %v1781 = vpack.c.bf16 %v1669, %v1669
      %v1782 = vpack.c.bf16 %v1670, %v1670
      %v1783 = vpack.c.bf16 %v1671, %v1671
      %v1784 = vpack.c.bf16 %v1672, %v1672
      %v1785 = vpack.c.bf16 %v1673, %v1673
      %v1786 = vpack.c.bf16 %v1674, %v1674
      %v1787 = vpack.c.bf16 %v1675, %v1675
      %v1788 = vpack.c.bf16 %v1676, %v1676
      %v1789 = vpack.c.bf16 %v1677, %v1677
      %v1790 = vpack.c.bf16 %v1678, %v1678
      %v1791 = vpack.c.bf16 %v1679, %v1679
      %v1792 = vpack.c.bf16 %v1680, %v1680
      %v1793 = vpack.c.bf16 %v1681, %v1681
      %v1794 = vpack.c.bf16 %v1682, %v1682
      %v1795 = vpack.c.bf16 %v1683, %v1683
      %v1796 = vpack.c.bf16 %v1684, %v1684
      %v1797 = vpack.c.bf16 %v1685, %v1685
      %v1798 = vpack.c.bf16 %v1686, %v1686
      %v1799 = vpack.c.bf16 %v1687, %v1687
      %v1800 = vpack.c.bf16 %v1688, %v1688
      %v1801 = vpack.c.bf16 %v1689, %v1689
      %v1802 = vpack.c.bf16 %v1690, %v1690
      %v1803 = vpack.c.bf16 %v1691, %v1691
      %v1804 = vpack.c.bf16 %v1692, %v1692
      %v1805 = vpack.c.bf16 %v1693, %v1693
      %v1806 = vpack.c.bf16 %v1694, %v1694
      %v1807 = vpack.c.bf16 %v1695, %v1695
      %v1808 = vpack.c.bf16 %v1696, %v1696
      %v1809 = vpack.c.bf16 %v1697, %v1697
      %v1810 = vpack.c.bf16 %v1698, %v1698
      %v1811 = vpack.c.bf16 %v1699, %v1699
      %v1812 = vpack.c.bf16 %v1700, %v1700
      %v1813 = vpack.c.bf16 %v1701, %v1701
      %v1814 = vpack.c.bf16 %v1702, %v1702
      %v1815 = vpack.c.bf16 %v1703, %v1703
      %v1816 = vpack.c.bf16 %v1704, %v1704
      %v1817 = vpack.c.bf16 %v1705, %v1705
      %v1818 = vpack.c.bf16 %v1706, %v1706
      %v1819 = vpack.c.bf16 %v1707, %v1707
      %v1820 = vpack.c.bf16 %v1708, %v1708
      %v1821 = vpack.c.bf16 %v1709, %v1709
      %v1822 = vpack.c.bf16 %v1710, %v1710
      %v1823 = vpack.c.bf16 %v1711, %v1711
      %v1824 = vpack.c.bf16 %v1712, %v1712
      %v1825 = vpack.c.bf16 %v1713, %v1713
      %v1826 = vpack.c.bf16 %v1714, %v1714
      %v1827 = vpack.c.bf16 %v1715, %v1715
      %v1828 = vpack.c.bf16 %v1716, %v1716
      %v1829 = vpack.c.bf16 %v1717, %v1717
      %v1830 = vpack.c.bf16 %v1718, %v1718
      %v1831 = vpack.c.bf16 %v1719, %v1719
      %v1832 = vpack.c.bf16 %v1720, %v1720
      %v1833 = vpack.c.bf16 %v1721, %v1721
      %v1834 = vpack.c.bf16 %v1722, %v1722
      %v1835 = vpack.c.bf16 %v1723, %v1723
      %v1836 = vpack.c.bf16 %v1724, %v1724
      %v1837 = vpack.c.bf16 %v1725, %v1725
      %v1838 = vpack.c.bf16 %v1726, %v1726
      %v1839 = vpack.c.bf16 %v1727, %v1727
      %v1840 = vpack.c.bf16 %v1728, %v1728
      %v1841 = vpack.c.bf16 %v1729, %v1729
      %v1842 = vpack.c.bf16 %v1730, %v1730
      %v1843 = vpack.c.bf16 %v1731, %v1731
      %v1844 = vpack.c.bf16 %v1732, %v1732
      %v1845 = vpack.c.bf16 %v1733, %v1733
      %v1846 = vpack.c.bf16 %v1734, %v1734
      %v1847 = vpack.c.bf16 %v1735, %v1735
      %v1848 = vpack.c.bf16 %v1736, %v1736
      %v1849 = vpack.c.bf16 %v1737, %v1737
      %v1850 = vpack.c.bf16 %v1738, %v1738
      %v1851 = vpack.c.bf16 %v1739, %v1739
      %1852 = vst [vmem:[%s175] sm:$0xf] %v1740
      %1853 = vst [vmem:[%s175 + $0x4] sm:$0xf] %v1741
      %1854 = vst [vmem:[%s175 + $0x8] sm:$0xf] %v1742
      %1855 = vst [vmem:[%s175 + $0xc] sm:$0xf] %v1743
      %1856 = vst [vmem:[%s175 + $0x10] sm:$0xf] %v1744
      %1857 = vst [vmem:[%s175 + $0x14] sm:$0xf] %v1745
      %1858 = vst [vmem:[%s175 + $0x18] sm:$0xf] %v1746
      %1859 = vst [vmem:[%s175 + $0x1c] sm:$0xf] %v1747
      %1860 = vst [vmem:[%s175 + $0x20] sm:$0xf] %v1748
      %1861 = vst [vmem:[%s175 + $0x24] sm:$0xf] %v1749
      %1862 = vst [vmem:[%s175 + $0x28] sm:$0xf] %v1750
      %1863 = vst [vmem:[%s175 + $0x2c] sm:$0xf] %v1751
      %1864 = vst [vmem:[%s175 + $0x30] sm:$0xf] %v1752
      %1865 = vst [vmem:[%s175 + $0x34] sm:$0xf] %v1753
      %1866 = vst [vmem:[%s175 + $0x38] sm:$0xf] %v1754
      %1867 = vst [vmem:[%s175 + $0x3c] sm:$0xf] %v1755
      %1868 = vst [vmem:[%s175 + $0x40] sm:$0xf] %v1756
      %1869 = vst [vmem:[%s175 + $0x44] sm:$0xf] %v1757
      %1870 = vst [vmem:[%s175 + $0x48] sm:$0xf] %v1758
      %1871 = vst [vmem:[%s175 + $0x4c] sm:$0xf] %v1759
      %1872 = vst [vmem:[%s175 + $0x50] sm:$0xf] %v1760
      %1873 = vst [vmem:[%s175 + $0x54] sm:$0xf] %v1761
      %1874 = vst [vmem:[%s175 + $0x58] sm:$0xf] %v1762
      %1875 = vst [vmem:[%s175 + $0x5c] sm:$0xf] %v1763
      %1876 = vst [vmem:[%s175 + $0x60] sm:$0xf] %v1764
      %1877 = vst [vmem:[%s175 + $0x64] sm:$0xf] %v1765
      %1878 = vst [vmem:[%s175 + $0x68] sm:$0xf] %v1766
      %1879 = vst [vmem:[%s175 + $0x6c] sm:$0xf] %v1767
      %1880 = vst [vmem:[%s175 + $0x70] sm:$0xf] %v1768
      %1881 = vst [vmem:[%s175 + $0x74] sm:$0xf] %v1769
      %1882 = vst [vmem:[%s175 + $0x78] sm:$0xf] %v1770
      %1883 = vst [vmem:[%s175 + $0x7c] sm:$0xf] %v1771
      %1884 = vst [vmem:[%s175 + $0x80] sm:$0xf] %v1772
      %1885 = vst [vmem:[%s175 + $0x84] sm:$0xf] %v1773
      %1886 = vst [vmem:[%s175 + $0x88] sm:$0xf] %v1774
      %1887 = vst [vmem:[%s175 + $0x8c] sm:$0xf] %v1775
      %1888 = vst [vmem:[%s175 + $0x90] sm:$0xf] %v1776
      %1889 = vst [vmem:[%s175 + $0x94] sm:$0xf] %v1777
      %1890 = vst [vmem:[%s175 + $0x98] sm:$0xf] %v1778
      %1891 = vst [vmem:[%s175 + $0x9c] sm:$0xf] %v1779
      %1892 = vst [vmem:[%s175 + $0xa0] sm:$0xf] %v1780
      %1893 = vst [vmem:[%s175 + $0xa4] sm:$0xf] %v1781
      %1894 = vst [vmem:[%s175 + $0xa8] sm:$0xf] %v1782
      %1895 = vst [vmem:[%s175 + $0xac] sm:$0xf] %v1783
      %1896 = vst [vmem:[%s175 + $0xb0] sm:$0xf] %v1784
      %1897 = vst [vmem:[%s175 + $0xb4] sm:$0xf] %v1785
      %1898 = vst [vmem:[%s175 + $0xb8] sm:$0xf] %v1786
      %1899 = vst [vmem:[%s175 + $0xbc] sm:$0xf] %v1787
      %1900 = vst [vmem:[%s175 + $0xc0] sm:$0xf] %v1788
      %1901 = vst [vmem:[%s175 + $0xc4] sm:$0xf] %v1789
      %1902 = vst [vmem:[%s175 + $0xc8] sm:$0xf] %v1790
      %1903 = vst [vmem:[%s175 + $0xcc] sm:$0xf] %v1791
      %1904 = vst [vmem:[%s175 + $0xd0] sm:$0xf] %v1792
      %1905 = vst [vmem:[%s175 + $0xd4] sm:$0xf] %v1793
      %1906 = vst [vmem:[%s175 + $0xd8] sm:$0xf] %v1794
      %1907 = vst [vmem:[%s175 + $0xdc] sm:$0xf] %v1795
      %1908 = vst [vmem:[%s175 + $0xe0] sm:$0xf] %v1796
      %1909 = vst [vmem:[%s175 + $0xe4] sm:$0xf] %v1797
      %1910 = vst [vmem:[%s175 + $0xe8] sm:$0xf] %v1798
      %1911 = vst [vmem:[%s175 + $0xec] sm:$0xf] %v1799
      %1912 = vst [vmem:[%s175 + $0xf0] sm:$0xf] %v1800
      %1913 = vst [vmem:[%s175 + $0xf4] sm:$0xf] %v1801
      %1914 = vst [vmem:[%s175 + $0xf8] sm:$0xf] %v1802
      %1915 = vst [vmem:[%s175 + $0xfc] sm:$0xf] %v1803
      %1916 = vst [vmem:[%s175 + $0x100] sm:$0xf] %v1804
      %1917 = vst [vmem:[%s175 + $0x104] sm:$0xf] %v1805
      %1918 = vst [vmem:[%s175 + $0x108] sm:$0xf] %v1806
      %1919 = vst [vmem:[%s175 + $0x10c] sm:$0xf] %v1807
      %1920 = vst [vmem:[%s175 + $0x110] sm:$0xf] %v1808
      %1921 = vst [vmem:[%s175 + $0x114] sm:$0xf] %v1809
      %1922 = vst [vmem:[%s175 + $0x118] sm:$0xf] %v1810
      %1923 = vst [vmem:[%s175 + $0x11c] sm:$0xf] %v1811
      %1924 = vst [vmem:[%s175 + $0x120] sm:$0xf] %v1812
      %1925 = vst [vmem:[%s175 + $0x124] sm:$0xf] %v1813
      %1926 = vst [vmem:[%s175 + $0x128] sm:$0xf] %v1814
      %1927 = vst [vmem:[%s175 + $0x12c] sm:$0xf] %v1815
      %1928 = vst [vmem:[%s175 + $0x130] sm:$0xf] %v1816
      %1929 = vst [vmem:[%s175 + $0x134] sm:$0xf] %v1817
      %1930 = vst [vmem:[%s175 + $0x138] sm:$0xf] %v1818
      %1931 = vst [vmem:[%s175 + $0x13c] sm:$0xf] %v1819
      %1932 = vst [vmem:[%s175 + $0x140] sm:$0xf] %v1820
      %1933 = vst [vmem:[%s175 + $0x144] sm:$0xf] %v1821
      %1934 = vst [vmem:[%s175 + $0x148] sm:$0xf] %v1822
      %1935 = vst [vmem:[%s175 + $0x14c] sm:$0xf] %v1823
      %1936 = vst [vmem:[%s175 + $0x150] sm:$0xf] %v1824
      %1937 = vst [vmem:[%s175 + $0x154] sm:$0xf] %v1825
      %1938 = vst [vmem:[%s175 + $0x158] sm:$0xf] %v1826
      %1939 = vst [vmem:[%s175 + $0x15c] sm:$0xf] %v1827
      %1940 = vst [vmem:[%s175 + $0x160] sm:$0xf] %v1828
      %1941 = vst [vmem:[%s175 + $0x164] sm:$0xf] %v1829
      %1942 = vst [vmem:[%s175 + $0x168] sm:$0xf] %v1830
      %1943 = vst [vmem:[%s175 + $0x16c] sm:$0xf] %v1831
      %1944 = vst [vmem:[%s175 + $0x170] sm:$0xf] %v1832
      %1945 = vst [vmem:[%s175 + $0x174] sm:$0xf] %v1833
      %1946 = vst [vmem:[%s175 + $0x178] sm:$0xf] %v1834
      %1947 = vst [vmem:[%s175 + $0x17c] sm:$0xf] %v1835
      %1948 = vst [vmem:[%s175 + $0x180] sm:$0xf] %v1836
      %1949 = vst [vmem:[%s175 + $0x184] sm:$0xf] %v1837
      %1950 = vst [vmem:[%s175 + $0x188] sm:$0xf] %v1838
      %1951 = vst [vmem:[%s175 + $0x18c] sm:$0xf] %v1839
      %1952 = vst [vmem:[%s175 + $0x190] sm:$0xf] %v1840
      %1953 = vst [vmem:[%s175 + $0x194] sm:$0xf] %v1841
      %1954 = vst [vmem:[%s175 + $0x198] sm:$0xf] %v1842
      %1955 = vst [vmem:[%s175 + $0x19c] sm:$0xf] %v1843
      %1956 = vst [vmem:[%s175 + $0x1a0] sm:$0xf] %v1844
      %1957 = vst [vmem:[%s175 + $0x1a4] sm:$0xf] %v1845
      %1958 = vst [vmem:[%s175 + $0x1a8] sm:$0xf] %v1846
      %1959 = vst [vmem:[%s175 + $0x1ac] sm:$0xf] %v1847
      %1960 = vst [vmem:[%s175 + $0x1b0] sm:$0xf] %v1848
      %1961 = vst [vmem:[%s175 + $0x1b4] sm:$0xf] %v1849
      %1962 = vst [vmem:[%s175 + $0x1b8] sm:$0xf] %v1850
      %1963 = vst [vmem:[%s175 + $0x1bc] sm:$0xf] %v1851
      %s1964 = smul.u32 112, %s14
      %p1965 = scmp.lt.s32.totalorder %s1964, 3135
      %s1966 = scalar_select %p1965, %s1964, 3135
      %s1967 = smul.addr %s1966, 4
      %s1968 = scalar_lea.vmem %s3, %s1967
      // Predicated region
      $region33: #{neural_net_forward.9} parent=31 // pred_check
        %p1969 = pneg %p100
      $region34: #{neural_net_forward.9} parent=31 // pred_check_branch
        %1971 = sbr.rel (%p1969) target = $region36
      $region35: #{neural_net_forward.9} parent=31 // pred_region
        %s1972 = smul.u32 112, %s14
      $region36: #{neural_net_forward.9} parent=31 // pred_fallthru
        _
    $region32: #{neural_net_forward.9} parent=5 // pred_fallthru
      _
    %p1973 = scmp.le.s32.totalorder 2, %s9
    // Predicated region
    $region37: #{neural_net_forward.9} parent=5 // pred_check
      %p1974 = pneg %p1973
    $region38: #{neural_net_forward.9} parent=5 // pred_check_branch
      %1976 = sbr.rel (%p1974) target = $region40
    $region39: #{neural_net_forward.9} parent=5 // pred_region
      %s1977 = ssub.s32 %s9, 2
      // Predicated region
      $region41: #{neural_net_forward.9} parent=39 // pred_check
        %p1978 = pneg %p106
      $region42: #{neural_net_forward.9} parent=39 // pred_check_branch
        %1980 = sbr.rel (%p1978) target = $region44
      $region43: #{neural_net_forward.9} parent=39 // pred_region
        %s1981 = smul.u32 112, %s15
        %p1982 = scmp.lt.s32.totalorder %s1981, 3135
        %s1983 = scalar_select %p1982, %s1981, 3135
        %s1984 = smul.addr %s1983, 4
        %s1985 = scalar_lea.vmem %s3, %s1984
      $region44: #{neural_net_forward.9} parent=39 // pred_fallthru
        _
    $region40: #{neural_net_forward.9} parent=5 // pred_fallthru
      _
  $region6: #{neural_net_forward.9} parent=0 // loop_footer
    %s13 = sadd.s32 1, %s9
  $region7: #{neural_net_forward.9} parent=0 // loop_footer_branch
    %8 = sbr.rel target = $region3
  $region8: #{neural_net_forward.9} parent=0 // loop_exit
    _

// kernel: neural_net_forward.10
$region0: #{neural_net_forward.10}
  #allocation0 [shape = 'u32[]', space=smem, size = 0x4, offset = 0x4, fixed_abs, tag = 'smem constant byte address 0x4 - core index']
  #allocation1 [shape = 'u32[72,128]{1,0:T(1,128)}', space=vmem, size = 0x9000, scoped, tag = 'internal scratch']
  %s0 = inlined_call_operand.vmem [shape: bf16[6272,288], index: 0, kind: input, shape index: {}]
  %s1 = inlined_call_operand.vmem [shape: bf16[288,128], index: 1, kind: input, shape index: {}]
  %s2 = inlined_call_operand.vmem [shape: f32[1,128], index: 2, kind: input, shape index: {}]
  %s3 = inlined_call_operand.vmem [shape: bf16[6272,128], index: 3, kind: output, shape index: {}]
  %s4 = sld [smem:[#allocation0]]
  $region45: #{neural_net_forward.10} parent=0
    _
  %s6 = ssub.s32 1, %s4
  %s7 = scalar_select 0, %s6, %s4
  loop: start=0, step=1, limit=10
  $region2: #{neural_net_forward.10} parent=0 // loop_pre_header
    _
  $region3: #{neural_net_forward.10} parent=0 // loop_header
    %s9 = sphi 0, %s13
    %p10 = scmp.ge.s32.totalorder %s9, 10
    %s19 = sphi 0, %s21
    %s22 = sphi 0, %s19
    %s23 = sphi 0, %s22
    %s39 = sphi 0, %s23
    %s43 = sphi 0, %s43
    %s45 = sphi 0, %s43
    %s46 = sphi 0, %s45
    %s60 = sphi 0, %s46
    %s64 = sphi 0, %s64
    %s66 = sphi 0, %s64
    %s67 = sphi 0, %s66
    %s81 = sphi 0, %s67
    %s87 = sphi 0, %s89
    %s90 = sphi 0, %s87
    %s91 = sphi 0, %s90
    %s107 = sphi 0, %s91
  $region4: #{neural_net_forward.10} parent=0 // loop_header_branch
    %12 = sbr.rel (%p10) target = $region8
  $region5: #{neural_net_forward.10} parent=0 // loop_body
    %s14 = ssub.s32 %s9, 1
    %s15 = ssub.s32 %s9, 2
    %s16 = sadd.s32 %s9, 1
    %s17 = ssub.s32 %s9, %s16
    %p18 = scmp.eq.s32.totalorder %s17, 0
    %s20 = sadd.s32 %s19, 1
    %s21 = scalar_select %p18, %s19, %s20
    %p24 = pneg %p18
    %p25 = scmp.eq.s32.totalorder %s9, 7
    %p26 = por %p24, %p25
    %p27 = scmp.ne.s32.totalorder %s19, %s22
    %p28 = scmp.eq.s32.totalorder %s9, 0
    %p29 = por %p27, %p28
    %p30 = scmp.ne.s32.totalorder %s19, %s22
    %p31 = scmp.eq.s32.totalorder %s14, 7
    %p32 = por %p30, %p31
    %p33 = scmp.ne.s32.totalorder %s22, %s23
    %p34 = scmp.eq.s32.totalorder %s14, 0
    %p35 = por %p33, %p34
    %p36 = scmp.ne.s32.totalorder %s22, %s23
    %p37 = scmp.eq.s32.totalorder %s15, 7
    %p38 = por %p36, %p37
    %p40 = scmp.ne.s32.totalorder %s23, %s39
    %p41 = scmp.eq.s32.totalorder %s15, 0
    %p42 = por %p40, %p41
    %s44 = sadd.s32 %s43, 1
    %p47 = scmp.eq.s32.totalorder %s9, 7
    %p48 = scmp.ne.s32.totalorder %s43, %s45
    %p49 = scmp.eq.s32.totalorder %s9, 0
    %p50 = por %p48, %p49
    %p51 = scmp.ne.s32.totalorder %s43, %s45
    %p52 = scmp.eq.s32.totalorder %s14, 7
    %p53 = por %p51, %p52
    %p54 = scmp.ne.s32.totalorder %s45, %s46
    %p55 = scmp.eq.s32.totalorder %s14, 0
    %p56 = por %p54, %p55
    %p57 = scmp.ne.s32.totalorder %s45, %s46
    %p58 = scmp.eq.s32.totalorder %s15, 7
    %p59 = por %p57, %p58
    %p61 = scmp.ne.s32.totalorder %s46, %s60
    %p62 = scmp.eq.s32.totalorder %s15, 0
    %p63 = por %p61, %p62
    %s65 = sadd.s32 %s64, 1
    %p68 = scmp.eq.s32.totalorder %s9, 7
    %p69 = scmp.ne.s32.totalorder %s64, %s66
    %p70 = scmp.eq.s32.totalorder %s9, 0
    %p71 = por %p69, %p70
    %p72 = scmp.ne.s32.totalorder %s64, %s66
    %p73 = scmp.eq.s32.totalorder %s14, 7
    %p74 = por %p72, %p73
    %p75 = scmp.ne.s32.totalorder %s66, %s67
    %p76 = scmp.eq.s32.totalorder %s14, 0
    %p77 = por %p75, %p76
    %p78 = scmp.ne.s32.totalorder %s66, %s67
    %p79 = scmp.eq.s32.totalorder %s15, 7
    %p80 = por %p78, %p79
    %p82 = scmp.ne.s32.totalorder %s67, %s81
    %p83 = scmp.eq.s32.totalorder %s15, 0
    %p84 = por %p82, %p83
    %s85 = ssub.s32 %s9, %s16
    %p86 = scmp.eq.s32.totalorder %s85, 0
    %s88 = sadd.s32 %s87, 1
    %s89 = scalar_select %p86, %s87, %s88
    %p92 = pneg %p86
    %p93 = scmp.eq.s32.totalorder %s9, 7
    %p94 = por %p92, %p93
    %p95 = scmp.ne.s32.totalorder %s87, %s90
    %p96 = scmp.eq.s32.totalorder %s9, 0
    %p97 = por %p95, %p96
    %p98 = scmp.ne.s32.totalorder %s87, %s90
    %p99 = scmp.eq.s32.totalorder %s14, 7
    %p100 = por %p98, %p99
    %p101 = scmp.ne.s32.totalorder %s90, %s91
    %p102 = scmp.eq.s32.totalorder %s14, 0
    %p103 = por %p101, %p102
    %p104 = scmp.ne.s32.totalorder %s90, %s91
    %p105 = scmp.eq.s32.totalorder %s15, 7
    %p106 = por %p104, %p105
    %p108 = scmp.ne.s32.totalorder %s91, %s107
    %p109 = scmp.eq.s32.totalorder %s15, 0
    %p110 = por %p108, %p109
    %p111 = scmp.le.s32.totalorder 1, %s9
    %p112 = scmp.lt.s32.totalorder %s9, 9
    %p113 = pnand %p111, %p112
    %p114 = pneg %p113
    // Predicated region
    $region9: #{neural_net_forward.10} parent=5 // pred_check
      _
    $region10: #{neural_net_forward.10} parent=5 // pred_check_branch
      %116 = sbr.rel (%p113) target = $region12
    $region11: #{neural_net_forward.10} parent=5 // pred_region
      %s117 = ssub.s32 %s9, 1
      // Predicated region
      $region13: #{neural_net_forward.10} parent=11 // pred_check
        %p118 = pneg %p56
      $region14: #{neural_net_forward.10} parent=11 // pred_check_branch
        %120 = sbr.rel (%p118) target = $region16
      $region15: #{neural_net_forward.10} parent=11 // pred_region
        _
      $region16: #{neural_net_forward.10} parent=11 // pred_fallthru
        _
      // Predicated region
      $region17: #{neural_net_forward.10} parent=11 // pred_check
        %p121 = pneg %p77
      $region18: #{neural_net_forward.10} parent=11 // pred_check_branch
        %123 = sbr.rel (%p121) target = $region20
      $region19: #{neural_net_forward.10} parent=11 // pred_region
        _
      $region20: #{neural_net_forward.10} parent=11 // pred_fallthru
        _
    $region12: #{neural_net_forward.10} parent=5 // pred_fallthru
      _
    %p124 = scmp.lt.s32.totalorder %s9, 8
    // Predicated region
    $region21: #{neural_net_forward.10} parent=5 // pred_check
      %p125 = pneg %p124
    $region22: #{neural_net_forward.10} parent=5 // pred_check_branch
      %127 = sbr.rel (%p125) target = $region24
    $region23: #{neural_net_forward.10} parent=5 // pred_region
      // Predicated region
      $region25: #{neural_net_forward.10} parent=23 // pred_check
        %p128 = pneg %p29
      $region26: #{neural_net_forward.10} parent=23 // pred_check_branch
        %130 = sbr.rel (%p128) target = $region28
      $region27: #{neural_net_forward.10} parent=23 // pred_region
        %s131 = smul.u32 98, %s9
        %p132 = scmp.lt.s32.totalorder %s131, 783
        %s133 = scalar_select %p132, %s131, 783
        %s134 = smul.addr %s133, 3
        %s135 = smul.addr %s134, 4
        %s136 = scalar_lea.vmem %s0, %s135
        %s137 = smul.u32 98, %s9
      $region28: #{neural_net_forward.10} parent=23 // pred_fallthru
        _
    $region24: #{neural_net_forward.10} parent=5 // pred_fallthru
      _
    %p138 = scmp.le.s32.totalorder 1, %s9
    %p139 = scmp.lt.s32.totalorder %s9, 9
    %p140 = pnand %p138, %p139
    %p141 = pneg %p140
    // Predicated region
    $region29: #{neural_net_forward.10} parent=5 // pred_check
      _
    $region30: #{neural_net_forward.10} parent=5 // pred_check_branch
      %143 = sbr.rel (%p140) target = $region32
    $region31: #{neural_net_forward.10} parent=5 // pred_region
      %s144 = ssub.s32 %s9, 1
      %s145 = smul.u32 98, %s14
      %p146 = scmp.lt.s32.totalorder %s145, 783
      %s147 = scalar_select %p146, %s145, 783
      %s148 = smul.addr %s147, 3
      %s149 = smul.addr %s148, 4
      %s150 = scalar_lea.vmem %s0, %s149
      %p151 = pneg %p35
      %p152 = pneg %p32
      %p153 = pneg %p56
      %p154 = pneg %p53
      %p155 = pneg %p77
      %p156 = pneg %p74
      %p157 = pneg %p103
      %p158 = pneg %p100
      %s159 = smul.u32 98, %s14
      %p160 = scmp.lt.s32.totalorder %s159, 783
      %s161 = scalar_select %p160, %s159, 783
      %s162 = smul.addr %s161, 4
      %s163 = scalar_lea.vmem %s3, %s162
      %s164 = smul.u32 98, %s14
      %p165 = scmp.lt.s32.totalorder %s164, 783
      %s166 = scalar_select %p165, %s164, 783
      %s167 = smul.addr %s166, 3
      %s168 = smul.addr %s167, 4
      %s169 = scalar_lea.vmem %s0, %s168
      %s170 = smul.u32 98, %s14
      %s171 = smul.u32 98, %s14
      %p172 = scmp.lt.s32.totalorder %s171, 783
      %s173 = scalar_select %p172, %s171, 783
      %s174 = smul.addr %s173, 4
      %s175 = scalar_lea.vmem %s3, %s174
      %s176 = smul.u32 98, %s14
      %v178 = vld [vmem:[%s169] sm:$0xff]
      %v179 = vld [vmem:[%s169 + $0x8] sm:$0xf]
      %v180 = vld [vmem:[%s169 + $0xc] sm:$0xff]
      %v181 = vld [vmem:[%s169 + $0x14] sm:$0xf]
      %v182 = vld [vmem:[%s169 + $0x18] sm:$0xff]
      %v183 = vld [vmem:[%s169 + $0x20] sm:$0xf]
      %v184 = vld [vmem:[%s169 + $0x24] sm:$0xff]
      %v185 = vld [vmem:[%s169 + $0x2c] sm:$0xf]
      %v186 = vld [vmem:[%s169 + $0x30] sm:$0xff]
      %v187 = vld [vmem:[%s169 + $0x38] sm:$0xf]
      %v188 = vld [vmem:[%s169 + $0x3c] sm:$0xff]
      %v189 = vld [vmem:[%s169 + $0x44] sm:$0xf]
      %v190 = vld [vmem:[%s169 + $0x48] sm:$0xff]
      %v191 = vld [vmem:[%s169 + $0x50] sm:$0xf]
      %v192 = vld [vmem:[%s169 + $0x54] sm:$0xff]
      %v193 = vld [vmem:[%s169 + $0x5c] sm:$0xf]
      %v194 = vld [vmem:[%s169 + $0x60] sm:$0xff]
      %v195 = vld [vmem:[%s169 + $0x68] sm:$0xf]
      %v196 = vld [vmem:[%s169 + $0x6c] sm:$0xff]
      %v197 = vld [vmem:[%s169 + $0x74] sm:$0xf]
      %v198 = vld [vmem:[%s169 + $0x78] sm:$0xff]
      %v199 = vld [vmem:[%s169 + $0x80] sm:$0xf]
      %v200 = vld [vmem:[%s169 + $0x84] sm:$0xff]
      %v201 = vld [vmem:[%s169 + $0x8c] sm:$0xf]
      %v202 = vld [vmem:[%s169 + $0x90] sm:$0xff]
      %v203 = vld [vmem:[%s169 + $0x98] sm:$0xf]
      %v204 = vld [vmem:[%s169 + $0x9c] sm:$0xff]
      %v205 = vld [vmem:[%s169 + $0xa4] sm:$0xf]
      %v206 = vld [vmem:[%s169 + $0xa8] sm:$0xff]
      %v207 = vld [vmem:[%s169 + $0xb0] sm:$0xf]
      %v208 = vld [vmem:[%s169 + $0xb4] sm:$0xff]
      %v209 = vld [vmem:[%s169 + $0xbc] sm:$0xf]
      %v210 = vld [vmem:[%s169 + $0xc0] sm:$0xff]
      %v211 = vld [vmem:[%s169 + $0xc8] sm:$0xf]
      %v212 = vld [vmem:[%s169 + $0xcc] sm:$0xff]
      %v213 = vld [vmem:[%s169 + $0xd4] sm:$0xf]
      %v214 = vld [vmem:[%s169 + $0xd8] sm:$0xff]
      %v215 = vld [vmem:[%s169 + $0xe0] sm:$0xf]
      %v216 = vld [vmem:[%s169 + $0xe4] sm:$0xff]
      %v217 = vld [vmem:[%s169 + $0xec] sm:$0xf]
      %v218 = vld [vmem:[%s169 + $0xf0] sm:$0xff]
      %v219 = vld [vmem:[%s169 + $0xf8] sm:$0xf]
      %v220 = vld [vmem:[%s169 + $0xfc] sm:$0xff]
      %v221 = vld [vmem:[%s169 + $0x104] sm:$0xf]
      %v222 = vld [vmem:[%s169 + $0x108] sm:$0xff]
      %v223 = vld [vmem:[%s169 + $0x110] sm:$0xf]
      %v224 = vld [vmem:[%s169 + $0x114] sm:$0xff]
      %v225 = vld [vmem:[%s169 + $0x11c] sm:$0xf]
      %v226 = vld [vmem:[%s169 + $0x120] sm:$0xff]
      %v227 = vld [vmem:[%s169 + $0x128] sm:$0xf]
      %v228 = vld [vmem:[%s169 + $0x12c] sm:$0xff]
      %v229 = vld [vmem:[%s169 + $0x134] sm:$0xf]
      %v230 = vld [vmem:[%s169 + $0x138] sm:$0xff]
      %v231 = vld [vmem:[%s169 + $0x140] sm:$0xf]
      %v232 = vld [vmem:[%s169 + $0x144] sm:$0xff]
      %v233 = vld [vmem:[%s169 + $0x14c] sm:$0xf]
      %v234 = vld [vmem:[%s169 + $0x150] sm:$0xff]
      %v235 = vld [vmem:[%s169 + $0x158] sm:$0xf]
      %v236 = vld [vmem:[%s169 + $0x15c] sm:$0xff]
      %v237 = vld [vmem:[%s169 + $0x164] sm:$0xf]
      %v238 = vld [vmem:[%s169 + $0x168] sm:$0xff]
      %v239 = vld [vmem:[%s169 + $0x170] sm:$0xf]
      %v240 = vld [vmem:[%s169 + $0x174] sm:$0xff]
      %v241 = vld [vmem:[%s169 + $0x17c] sm:$0xf]
      %v242 = vld [vmem:[%s169 + $0x180] sm:$0xff]
      %v243 = vld [vmem:[%s169 + $0x188] sm:$0xf]
      %v244 = vld [vmem:[%s169 + $0x18c] sm:$0xff]
      %v245 = vld [vmem:[%s169 + $0x194] sm:$0xf]
      %v246 = vld [vmem:[%s169 + $0x198] sm:$0xff]
      %v247 = vld [vmem:[%s169 + $0x1a0] sm:$0xf]
      %v248 = vld [vmem:[%s169 + $0x1a4] sm:$0xff]
      %v249 = vld [vmem:[%s169 + $0x1ac] sm:$0xf]
      %v250 = vld [vmem:[%s169 + $0x1b0] sm:$0xff]
      %v251 = vld [vmem:[%s169 + $0x1b8] sm:$0xf]
      %v252 = vld [vmem:[%s169 + $0x1bc] sm:$0xff]
      %v253 = vld [vmem:[%s169 + $0x1c4] sm:$0xf]
      %v254 = vld [vmem:[%s169 + $0x1c8] sm:$0xff]
      %v255 = vld [vmem:[%s169 + $0x1d0] sm:$0xf]
      %v256 = vld [vmem:[%s169 + $0x1d4] sm:$0xff]
      %v257 = vld [vmem:[%s169 + $0x1dc] sm:$0xf]
      %v258 = vld [vmem:[%s169 + $0x1e0] sm:$0xff]
      %v259 = vld [vmem:[%s169 + $0x1e8] sm:$0xf]
      %v260 = vld [vmem:[%s169 + $0x1ec] sm:$0xff]
      %v261 = vld [vmem:[%s169 + $0x1f4] sm:$0xf]
      %v262 = vld [vmem:[%s169 + $0x1f8] sm:$0xff]
      %v263 = vld [vmem:[%s169 + $0x200] sm:$0xf]
      %v264 = vld [vmem:[%s169 + $0x204] sm:$0xff]
      %v265 = vld [vmem:[%s169 + $0x20c] sm:$0xf]
      %v266 = vld [vmem:[%s169 + $0x210] sm:$0xff]
      %v267 = vld [vmem:[%s169 + $0x218] sm:$0xf]
      %v268 = vld [vmem:[%s169 + $0x21c] sm:$0xff]
      %v269 = vld [vmem:[%s169 + $0x224] sm:$0xf]
      %v270 = vld [vmem:[%s169 + $0x228] sm:$0xff]
      %v271 = vld [vmem:[%s169 + $0x230] sm:$0xf]
      %v272 = vld [vmem:[%s169 + $0x234] sm:$0xff]
      %v273 = vld [vmem:[%s169 + $0x23c] sm:$0xf]
      %v274 = vld [vmem:[%s169 + $0x240] sm:$0xff]
      %v275 = vld [vmem:[%s169 + $0x248] sm:$0xf]
      %v276 = vld [vmem:[%s169 + $0x24c] sm:$0xff]
      %v277 = vld [vmem:[%s169 + $0x254] sm:$0xf]
      %v278 = vld [vmem:[%s169 + $0x258] sm:$0xff]
      %v279 = vld [vmem:[%s169 + $0x260] sm:$0xf]
      %v280 = vld [vmem:[%s169 + $0x264] sm:$0xff]
      %v281 = vld [vmem:[%s169 + $0x26c] sm:$0xf]
      %v282 = vld [vmem:[%s169 + $0x270] sm:$0xff]
      %v283 = vld [vmem:[%s169 + $0x278] sm:$0xf]
      %v284 = vld [vmem:[%s169 + $0x27c] sm:$0xff]
      %v285 = vld [vmem:[%s169 + $0x284] sm:$0xf]
      %v286 = vld [vmem:[%s169 + $0x288] sm:$0xff]
      %v287 = vld [vmem:[%s169 + $0x290] sm:$0xf]
      %v288 = vld [vmem:[%s169 + $0x294] sm:$0xff]
      %v289 = vld [vmem:[%s169 + $0x29c] sm:$0xf]
      %v290 = vld [vmem:[%s169 + $0x2a0] sm:$0xff]
      %v291 = vld [vmem:[%s169 + $0x2a8] sm:$0xf]
      %v292 = vld [vmem:[%s169 + $0x2ac] sm:$0xff]
      %v293 = vld [vmem:[%s169 + $0x2b4] sm:$0xf]
      %v294 = vld [vmem:[%s169 + $0x2b8] sm:$0xff]
      %v295 = vld [vmem:[%s169 + $0x2c0] sm:$0xf]
      %v296 = vld [vmem:[%s169 + $0x2c4] sm:$0xff]
      %v297 = vld [vmem:[%s169 + $0x2cc] sm:$0xf]
      %v298 = vld [vmem:[%s169 + $0x2d0] sm:$0xff]
      %v299 = vld [vmem:[%s169 + $0x2d8] sm:$0xf]
      %v300 = vld [vmem:[%s169 + $0x2dc] sm:$0xff]
      %v301 = vld [vmem:[%s169 + $0x2e4] sm:$0xf]
      %v302 = vld [vmem:[%s169 + $0x2e8] sm:$0xff]
      %v303 = vld [vmem:[%s169 + $0x2f0] sm:$0xf]
      %v304 = vld [vmem:[%s169 + $0x2f4] sm:$0xff]
      %v305 = vld [vmem:[%s169 + $0x2fc] sm:$0xf]
      %v306 = vld [vmem:[%s169 + $0x300] sm:$0xff]
      %v307 = vld [vmem:[%s169 + $0x308] sm:$0xf]
      %v308 = vld [vmem:[%s169 + $0x30c] sm:$0xff]
      %v309 = vld [vmem:[%s169 + $0x314] sm:$0xf]
      %v310 = vld [vmem:[%s169 + $0x318] sm:$0xff]
      %v311 = vld [vmem:[%s169 + $0x320] sm:$0xf]
      %v312 = vld [vmem:[%s169 + $0x324] sm:$0xff]
      %v313 = vld [vmem:[%s169 + $0x32c] sm:$0xf]
      %v314 = vld [vmem:[%s169 + $0x330] sm:$0xff]
      %v315 = vld [vmem:[%s169 + $0x338] sm:$0xf]
      %v316 = vld [vmem:[%s169 + $0x33c] sm:$0xff]
      %v317 = vld [vmem:[%s169 + $0x344] sm:$0xf]
      %v318 = vld [vmem:[%s169 + $0x348] sm:$0xff]
      %v319 = vld [vmem:[%s169 + $0x350] sm:$0xf]
      %v320 = vld [vmem:[%s169 + $0x354] sm:$0xff]
      %v321 = vld [vmem:[%s169 + $0x35c] sm:$0xf]
      %v322 = vld [vmem:[%s169 + $0x360] sm:$0xff]
      %v323 = vld [vmem:[%s169 + $0x368] sm:$0xf]
      %v324 = vld [vmem:[%s169 + $0x36c] sm:$0xff]
      %v325 = vld [vmem:[%s169 + $0x374] sm:$0xf]
      %v326 = vld [vmem:[%s169 + $0x378] sm:$0xff]
      %v327 = vld [vmem:[%s169 + $0x380] sm:$0xf]
      %v328 = vld [vmem:[%s169 + $0x384] sm:$0xff]
      %v329 = vld [vmem:[%s169 + $0x38c] sm:$0xf]
      %v330 = vld [vmem:[%s169 + $0x390] sm:$0xff]
      %v331 = vld [vmem:[%s169 + $0x398] sm:$0xf]
      %v332 = vld [vmem:[%s169 + $0x39c] sm:$0xff]
      %v333 = vld [vmem:[%s169 + $0x3a4] sm:$0xf]
      %v334 = vld [vmem:[%s169 + $0x3a8] sm:$0xff]
      %v335 = vld [vmem:[%s169 + $0x3b0] sm:$0xf]
      %v336 = vld [vmem:[%s169 + $0x3b4] sm:$0xff]
      %v337 = vld [vmem:[%s169 + $0x3bc] sm:$0xf]
      %v338 = vld [vmem:[%s169 + $0x3c0] sm:$0xff]
      %v339 = vld [vmem:[%s169 + $0x3c8] sm:$0xf]
      %v340 = vld [vmem:[%s169 + $0x3cc] sm:$0xff]
      %v341 = vld [vmem:[%s169 + $0x3d4] sm:$0xf]
      %v342 = vld [vmem:[%s169 + $0x3d8] sm:$0xff]
      %v343 = vld [vmem:[%s169 + $0x3e0] sm:$0xf]
      %v344 = vld [vmem:[%s169 + $0x3e4] sm:$0xff]
      %v345 = vld [vmem:[%s169 + $0x3ec] sm:$0xf]
      %v346 = vld [vmem:[%s169 + $0x3f0] sm:$0xff]
      %v347 = vld [vmem:[%s169 + $0x3f8] sm:$0xf]
      %v348 = vld [vmem:[%s169 + $0x3fc] sm:$0xff]
      %v349 = vld [vmem:[%s169 + $0x404] sm:$0xf]
      %v350 = vld [vmem:[%s169 + $0x408] sm:$0xff]
      %v351 = vld [vmem:[%s169 + $0x410] sm:$0xf]
      %v352 = vld [vmem:[%s169 + $0x414] sm:$0xff]
      %v353 = vld [vmem:[%s169 + $0x41c] sm:$0xf]
      %v354 = vld [vmem:[%s169 + $0x420] sm:$0xff]
      %v355 = vld [vmem:[%s169 + $0x428] sm:$0xf]
      %v356 = vld [vmem:[%s169 + $0x42c] sm:$0xff]
      %v357 = vld [vmem:[%s169 + $0x434] sm:$0xf]
      %v358 = vld [vmem:[%s169 + $0x438] sm:$0xff]
      %v359 = vld [vmem:[%s169 + $0x440] sm:$0xf]
      %v360 = vld [vmem:[%s169 + $0x444] sm:$0xff]
      %v361 = vld [vmem:[%s169 + $0x44c] sm:$0xf]
      %v362 = vld [vmem:[%s169 + $0x450] sm:$0xff]
      %v363 = vld [vmem:[%s169 + $0x458] sm:$0xf]
      %v364 = vld [vmem:[%s169 + $0x45c] sm:$0xff]
      %v365 = vld [vmem:[%s169 + $0x464] sm:$0xf]
      %v366 = vld [vmem:[%s169 + $0x468] sm:$0xff]
      %v367 = vld [vmem:[%s169 + $0x470] sm:$0xf]
      %v368 = vld [vmem:[%s169 + $0x474] sm:$0xff]
      %v369 = vld [vmem:[%s169 + $0x47c] sm:$0xf]
      %v370 = vld [vmem:[%s169 + $0x480] sm:$0xff]
      %v371 = vld [vmem:[%s169 + $0x488] sm:$0xf]
      %v372 = vld [vmem:[%s169 + $0x48c] sm:$0xff]
      %v373 = vld [vmem:[%s169 + $0x494] sm:$0xf]
      %v374 = vld [vmem:[%s1] sm:$0xf]
      %v375 = vld [vmem:[%s1 + $0x4] sm:$0xf]
      %v376 = vld [vmem:[%s1 + $0x8] sm:$0xf]
      %v377 = vld [vmem:[%s1 + $0xc] sm:$0xf]
      %v378 = vld [vmem:[%s1 + $0x10] sm:$0xf]
      %v379 = vld [vmem:[%s1 + $0x14] sm:$0xf]
      %v380 = vld [vmem:[%s1 + $0x18] sm:$0xf]
      %v381 = vld [vmem:[%s1 + $0x1c] sm:$0xf]
      %v382 = vld [vmem:[%s1 + $0x20] sm:$0xf]
      %v383 = vld [vmem:[%s1 + $0x24] sm:$0xf]
      %v384 = vld [vmem:[%s1 + $0x28] sm:$0xf]
      %v385 = vld [vmem:[%s1 + $0x2c] sm:$0xf]
      %v386 = vld [vmem:[%s1 + $0x30] sm:$0xf]
      %v387 = vld [vmem:[%s1 + $0x34] sm:$0xf]
      %v388 = vld [vmem:[%s1 + $0x38] sm:$0xf]
      %v389 = vld [vmem:[%s1 + $0x3c] sm:$0xf]
      %v390 = vld [vmem:[%s1 + $0x40] sm:$0xf]
      %v391 = vld [vmem:[%s1 + $0x44] sm:$0xf]
      %v392 = vld [vmem:[%s1 + $0x48] sm:$0xf]
      %v393 = vld [vmem:[%s1 + $0x4c] sm:$0xf]
      %v394 = vld [vmem:[%s1 + $0x50] sm:$0xf]
      %v395 = vld [vmem:[%s1 + $0x54] sm:$0xf]
      %v396 = vld [vmem:[%s1 + $0x58] sm:$0xf]
      %v397 = vld [vmem:[%s1 + $0x5c] sm:$0xf]
      %v398 = vld [vmem:[%s1 + $0x60] sm:$0xf]
      %v399 = vld [vmem:[%s1 + $0x64] sm:$0xf]
      %v400 = vld [vmem:[%s1 + $0x68] sm:$0xf]
      %v401 = vld [vmem:[%s1 + $0x6c] sm:$0xf]
      %v402 = vld [vmem:[%s1 + $0x70] sm:$0xf]
      %v403 = vld [vmem:[%s1 + $0x74] sm:$0xf]
      %v404 = vld [vmem:[%s1 + $0x78] sm:$0xf]
      %v405 = vld [vmem:[%s1 + $0x7c] sm:$0xf]
      %v406 = vld [vmem:[%s1 + $0x80] sm:$0xf]
      %v407 = vld [vmem:[%s1 + $0x84] sm:$0xf]
      %v408 = vld [vmem:[%s1 + $0x88] sm:$0xf]
      %v409 = vld [vmem:[%s1 + $0x8c] sm:$0xf]
      %v410 = vld [vmem:[%s2] sm:$0x1]
      %v412 = vperm.slane %v410, 0
      %v610 = vunpack.c.l.b16 %v178
      %v611 = vunpack.c.h.b16 %v178
      %v612 = vunpack.c.l.b16 %v179
      %v613 = vunpack.c.l.b16 %v180
      %v614 = vunpack.c.h.b16 %v180
      %v615 = vunpack.c.l.b16 %v181
      %v616 = vunpack.c.l.b16 %v182
      %v617 = vunpack.c.h.b16 %v182
      %v618 = vunpack.c.l.b16 %v183
      %v619 = vunpack.c.l.b16 %v184
      %v620 = vunpack.c.h.b16 %v184
      %v621 = vunpack.c.l.b16 %v185
      %v622 = vunpack.c.l.b16 %v186
      %v623 = vunpack.c.h.b16 %v186
      %v624 = vunpack.c.l.b16 %v187
      %v625 = vunpack.c.l.b16 %v188
      %v626 = vunpack.c.h.b16 %v188
      %v627 = vunpack.c.l.b16 %v189
      %v628 = vunpack.c.l.b16 %v190
      %v629 = vunpack.c.h.b16 %v190
      %v630 = vunpack.c.l.b16 %v191
      %v631 = vunpack.c.l.b16 %v192
      %v632 = vunpack.c.h.b16 %v192
      %v633 = vunpack.c.l.b16 %v193
      %v634 = vunpack.c.l.b16 %v194
      %v635 = vunpack.c.h.b16 %v194
      %v636 = vunpack.c.l.b16 %v195
      %v637 = vunpack.c.l.b16 %v196
      %v638 = vunpack.c.h.b16 %v196
      %v639 = vunpack.c.l.b16 %v197
      %v640 = vunpack.c.l.b16 %v198
      %v641 = vunpack.c.h.b16 %v198
      %v642 = vunpack.c.l.b16 %v199
      %v643 = vunpack.c.l.b16 %v200
      %v644 = vunpack.c.h.b16 %v200
      %v645 = vunpack.c.l.b16 %v201
      %v646 = vunpack.c.l.b16 %v202
      %v647 = vunpack.c.h.b16 %v202
      %v648 = vunpack.c.l.b16 %v203
      %v649 = vunpack.c.l.b16 %v204
      %v650 = vunpack.c.h.b16 %v204
      %v651 = vunpack.c.l.b16 %v205
      %v652 = vunpack.c.l.b16 %v206
      %v653 = vunpack.c.h.b16 %v206
      %v654 = vunpack.c.l.b16 %v207
      %v655 = vunpack.c.l.b16 %v208
      %v656 = vunpack.c.h.b16 %v208
      %v657 = vunpack.c.l.b16 %v209
      %v658 = vunpack.c.l.b16 %v210
      %v659 = vunpack.c.h.b16 %v210
      %v660 = vunpack.c.l.b16 %v211
      %v661 = vunpack.c.l.b16 %v212
      %v662 = vunpack.c.h.b16 %v212
      %v663 = vunpack.c.l.b16 %v213
      %v664 = vunpack.c.l.b16 %v214
      %v665 = vunpack.c.h.b16 %v214
      %v666 = vunpack.c.l.b16 %v215
      %v667 = vunpack.c.l.b16 %v216
      %v668 = vunpack.c.h.b16 %v216
      %v669 = vunpack.c.l.b16 %v217
      %v670 = vunpack.c.l.b16 %v218
      %v671 = vunpack.c.h.b16 %v218
      %v672 = vunpack.c.l.b16 %v219
      %v673 = vunpack.c.l.b16 %v220
      %v674 = vunpack.c.h.b16 %v220
      %v675 = vunpack.c.l.b16 %v221
      %v676 = vunpack.c.l.b16 %v222
      %v677 = vunpack.c.h.b16 %v222
      %v678 = vunpack.c.l.b16 %v223
      %v679 = vunpack.c.l.b16 %v224
      %v680 = vunpack.c.h.b16 %v224
      %v681 = vunpack.c.l.b16 %v225
      %v682 = vunpack.c.l.b16 %v226
      %v683 = vunpack.c.h.b16 %v226
      %v684 = vunpack.c.l.b16 %v227
      %v685 = vunpack.c.l.b16 %v228
      %v686 = vunpack.c.h.b16 %v228
      %v687 = vunpack.c.l.b16 %v229
      %v688 = vunpack.c.l.b16 %v230
      %v689 = vunpack.c.h.b16 %v230
      %v690 = vunpack.c.l.b16 %v231
      %v691 = vunpack.c.l.b16 %v232
      %v692 = vunpack.c.h.b16 %v232
      %v693 = vunpack.c.l.b16 %v233
      %v694 = vunpack.c.l.b16 %v234
      %v695 = vunpack.c.h.b16 %v234
      %v696 = vunpack.c.l.b16 %v235
      %v697 = vunpack.c.l.b16 %v236
      %v698 = vunpack.c.h.b16 %v236
      %v699 = vunpack.c.l.b16 %v237
      %v700 = vunpack.c.l.b16 %v238
      %v701 = vunpack.c.h.b16 %v238
      %v702 = vunpack.c.l.b16 %v239
      %v703 = vunpack.c.l.b16 %v240
      %v704 = vunpack.c.h.b16 %v240
      %v705 = vunpack.c.l.b16 %v241
      %v706 = vunpack.c.l.b16 %v242
      %v707 = vunpack.c.h.b16 %v242
      %v708 = vunpack.c.l.b16 %v243
      %v709 = vunpack.c.l.b16 %v244
      %v710 = vunpack.c.h.b16 %v244
      %v711 = vunpack.c.l.b16 %v245
      %v712 = vunpack.c.l.b16 %v246
      %v713 = vunpack.c.h.b16 %v246
      %v714 = vunpack.c.l.b16 %v247
      %v715 = vunpack.c.l.b16 %v248
      %v716 = vunpack.c.h.b16 %v248
      %v717 = vunpack.c.l.b16 %v249
      %v718 = vunpack.c.l.b16 %v250
      %v719 = vunpack.c.h.b16 %v250
      %v720 = vunpack.c.l.b16 %v251
      %v721 = vunpack.c.l.b16 %v252
      %v722 = vunpack.c.h.b16 %v252
      %v723 = vunpack.c.l.b16 %v253
      %v724 = vunpack.c.l.b16 %v254
      %v725 = vunpack.c.h.b16 %v254
      %v726 = vunpack.c.l.b16 %v255
      %v727 = vunpack.c.l.b16 %v256
      %v728 = vunpack.c.h.b16 %v256
      %v729 = vunpack.c.l.b16 %v257
      %v730 = vunpack.c.l.b16 %v258
      %v731 = vunpack.c.h.b16 %v258
      %v732 = vunpack.c.l.b16 %v259
      %v733 = vunpack.c.l.b16 %v260
      %v734 = vunpack.c.h.b16 %v260
      %v735 = vunpack.c.l.b16 %v261
      %v736 = vunpack.c.l.b16 %v262
      %v737 = vunpack.c.h.b16 %v262
      %v738 = vunpack.c.l.b16 %v263
      %v739 = vunpack.c.l.b16 %v264
      %v740 = vunpack.c.h.b16 %v264
      %v741 = vunpack.c.l.b16 %v265
      %v742 = vunpack.c.l.b16 %v266
      %v743 = vunpack.c.h.b16 %v266
      %v744 = vunpack.c.l.b16 %v267
      %v745 = vunpack.c.l.b16 %v268
      %v746 = vunpack.c.h.b16 %v268
      %v747 = vunpack.c.l.b16 %v269
      %v748 = vunpack.c.l.b16 %v270
      %v749 = vunpack.c.h.b16 %v270
      %v750 = vunpack.c.l.b16 %v271
      %v751 = vunpack.c.l.b16 %v272
      %v752 = vunpack.c.h.b16 %v272
      %v753 = vunpack.c.l.b16 %v273
      %v754 = vunpack.c.l.b16 %v274
      %v755 = vunpack.c.h.b16 %v274
      %v756 = vunpack.c.l.b16 %v275
      %v757 = vunpack.c.l.b16 %v276
      %v758 = vunpack.c.h.b16 %v276
      %v759 = vunpack.c.l.b16 %v277
      %v760 = vunpack.c.l.b16 %v278
      %v761 = vunpack.c.h.b16 %v278
      %v762 = vunpack.c.l.b16 %v279
      %v763 = vunpack.c.l.b16 %v280
      %v764 = vunpack.c.h.b16 %v280
      %v765 = vunpack.c.l.b16 %v281
      %v766 = vunpack.c.l.b16 %v282
      %v767 = vunpack.c.h.b16 %v282
      %v768 = vunpack.c.l.b16 %v283
      %v769 = vunpack.c.l.b16 %v284
      %v770 = vunpack.c.h.b16 %v284
      %v771 = vunpack.c.l.b16 %v285
      %v772 = vunpack.c.l.b16 %v286
      %v773 = vunpack.c.h.b16 %v286
      %v774 = vunpack.c.l.b16 %v287
      %v775 = vunpack.c.l.b16 %v288
      %v776 = vunpack.c.h.b16 %v288
      %v777 = vunpack.c.l.b16 %v289
      %v778 = vunpack.c.l.b16 %v290
      %v779 = vunpack.c.h.b16 %v290
      %v780 = vunpack.c.l.b16 %v291
      %v781 = vunpack.c.l.b16 %v292
      %v782 = vunpack.c.h.b16 %v292
      %v783 = vunpack.c.l.b16 %v293
      %v784 = vunpack.c.l.b16 %v294
      %v785 = vunpack.c.h.b16 %v294
      %v786 = vunpack.c.l.b16 %v295
      %v787 = vunpack.c.l.b16 %v296
      %v788 = vunpack.c.h.b16 %v296
      %v789 = vunpack.c.l.b16 %v297
      %v790 = vunpack.c.l.b16 %v298
      %v791 = vunpack.c.h.b16 %v298
      %v792 = vunpack.c.l.b16 %v299
      %v793 = vunpack.c.l.b16 %v300
      %v794 = vunpack.c.h.b16 %v300
      %v795 = vunpack.c.l.b16 %v301
      %v796 = vunpack.c.l.b16 %v302
      %v797 = vunpack.c.h.b16 %v302
      %v798 = vunpack.c.l.b16 %v303
      %v799 = vunpack.c.l.b16 %v304
      %v800 = vunpack.c.h.b16 %v304
      %v801 = vunpack.c.l.b16 %v305
      %v802 = vunpack.c.l.b16 %v306
      %v803 = vunpack.c.h.b16 %v306
      %v804 = vunpack.c.l.b16 %v307
      %v805 = vunpack.c.l.b16 %v308
      %v806 = vunpack.c.h.b16 %v308
      %v807 = vunpack.c.l.b16 %v309
      %v808 = vunpack.c.l.b16 %v310
      %v809 = vunpack.c.h.b16 %v310
      %v810 = vunpack.c.l.b16 %v311
      %v811 = vunpack.c.l.b16 %v312
      %v812 = vunpack.c.h.b16 %v312
      %v813 = vunpack.c.l.b16 %v313
      %v814 = vunpack.c.l.b16 %v314
      %v815 = vunpack.c.h.b16 %v314
      %v816 = vunpack.c.l.b16 %v315
      %v817 = vunpack.c.l.b16 %v316
      %v818 = vunpack.c.h.b16 %v316
      %v819 = vunpack.c.l.b16 %v317
      %v820 = vunpack.c.l.b16 %v318
      %v821 = vunpack.c.h.b16 %v318
      %v822 = vunpack.c.l.b16 %v319
      %v823 = vunpack.c.l.b16 %v320
      %v824 = vunpack.c.h.b16 %v320
      %v825 = vunpack.c.l.b16 %v321
      %v826 = vunpack.c.l.b16 %v322
      %v827 = vunpack.c.h.b16 %v322
      %v828 = vunpack.c.l.b16 %v323
      %v829 = vunpack.c.l.b16 %v324
      %v830 = vunpack.c.h.b16 %v324
      %v831 = vunpack.c.l.b16 %v325
      %v832 = vunpack.c.l.b16 %v326
      %v833 = vunpack.c.h.b16 %v326
      %v834 = vunpack.c.l.b16 %v327
      %v835 = vunpack.c.l.b16 %v328
      %v836 = vunpack.c.h.b16 %v328
      %v837 = vunpack.c.l.b16 %v329
      %v838 = vunpack.c.l.b16 %v330
      %v839 = vunpack.c.h.b16 %v330
      %v840 = vunpack.c.l.b16 %v331
      %v841 = vunpack.c.l.b16 %v332
      %v842 = vunpack.c.h.b16 %v332
      %v843 = vunpack.c.l.b16 %v333
      %v844 = vunpack.c.l.b16 %v334
      %v845 = vunpack.c.h.b16 %v334
      %v846 = vunpack.c.l.b16 %v335
      %v847 = vunpack.c.l.b16 %v336
      %v848 = vunpack.c.h.b16 %v336
      %v849 = vunpack.c.l.b16 %v337
      %v850 = vunpack.c.l.b16 %v338
      %v851 = vunpack.c.h.b16 %v338
      %v852 = vunpack.c.l.b16 %v339
      %v853 = vunpack.c.l.b16 %v340
      %v854 = vunpack.c.h.b16 %v340
      %v855 = vunpack.c.l.b16 %v341
      %v856 = vunpack.c.l.b16 %v342
      %v857 = vunpack.c.h.b16 %v342
      %v858 = vunpack.c.l.b16 %v343
      %v859 = vunpack.c.l.b16 %v344
      %v860 = vunpack.c.h.b16 %v344
      %v861 = vunpack.c.l.b16 %v345
      %v862 = vunpack.c.l.b16 %v346
      %v863 = vunpack.c.h.b16 %v346
      %v864 = vunpack.c.l.b16 %v347
      %v865 = vunpack.c.l.b16 %v348
      %v866 = vunpack.c.h.b16 %v348
      %v867 = vunpack.c.l.b16 %v349
      %v868 = vunpack.c.l.b16 %v350
      %v869 = vunpack.c.h.b16 %v350
      %v870 = vunpack.c.l.b16 %v351
      %v871 = vunpack.c.l.b16 %v352
      %v872 = vunpack.c.h.b16 %v352
      %v873 = vunpack.c.l.b16 %v353
      %v874 = vunpack.c.l.b16 %v354
      %v875 = vunpack.c.h.b16 %v354
      %v876 = vunpack.c.l.b16 %v355
      %v877 = vunpack.c.l.b16 %v356
      %v878 = vunpack.c.h.b16 %v356
      %v879 = vunpack.c.l.b16 %v357
      %v880 = vunpack.c.l.b16 %v358
      %v881 = vunpack.c.h.b16 %v358
      %v882 = vunpack.c.l.b16 %v359
      %v883 = vunpack.c.l.b16 %v360
      %v884 = vunpack.c.h.b16 %v360
      %v885 = vunpack.c.l.b16 %v361
      %v886 = vunpack.c.l.b16 %v362
      %v887 = vunpack.c.h.b16 %v362
      %v888 = vunpack.c.l.b16 %v363
      %v889 = vunpack.c.l.b16 %v364
      %v890 = vunpack.c.h.b16 %v364
      %v891 = vunpack.c.l.b16 %v365
      %v892 = vunpack.c.l.b16 %v366
      %v893 = vunpack.c.h.b16 %v366
      %v894 = vunpack.c.l.b16 %v367
      %v895 = vunpack.c.l.b16 %v368
      %v896 = vunpack.c.h.b16 %v368
      %v897 = vunpack.c.l.b16 %v369
      %v898 = vunpack.c.l.b16 %v370
      %v899 = vunpack.c.h.b16 %v370
      %v900 = vunpack.c.l.b16 %v371
      %v901 = vunpack.c.l.b16 %v372
      %v902 = vunpack.c.h.b16 %v372
      %v903 = vunpack.c.l.b16 %v373
      %v904 = vpack.c.b16 %v613, %v610
      %v905 = vpack.c.b16 %v614, %v611
      %v906 = vpack.c.b16 %v615, %v612
      %v907 = vpack.c.b16 %v619, %v616
      %v908 = vpack.c.b16 %v620, %v617
      %v909 = vpack.c.b16 %v621, %v618
      %v910 = vpack.c.b16 %v625, %v622
      %v911 = vpack.c.b16 %v626, %v623
      %v912 = vpack.c.b16 %v627, %v624
      %v913 = vpack.c.b16 %v631, %v628
      %v914 = vpack.c.b16 %v632, %v629
      %v915 = vpack.c.b16 %v633, %v630
      %v916 = vpack.c.b16 %v637, %v634
      %v917 = vpack.c.b16 %v638, %v635
      %v918 = vpack.c.b16 %v639, %v636
      %v919 = vpack.c.b16 %v643, %v640
      %v920 = vpack.c.b16 %v644, %v641
      %v921 = vpack.c.b16 %v645, %v642
      %v922 = vpack.c.b16 %v649, %v646
      %v923 = vpack.c.b16 %v650, %v647
      %v924 = vpack.c.b16 %v651, %v648
      %v925 = vpack.c.b16 %v655, %v652
      %v926 = vpack.c.b16 %v656, %v653
      %v927 = vpack.c.b16 %v657, %v654
      %v928 = vpack.c.b16 %v661, %v658
      %v929 = vpack.c.b16 %v662, %v659
      %v930 = vpack.c.b16 %v663, %v660
      %v931 = vpack.c.b16 %v667, %v664
      %v932 = vpack.c.b16 %v668, %v665
      %v933 = vpack.c.b16 %v669, %v666
      %v934 = vpack.c.b16 %v673, %v670
      %v935 = vpack.c.b16 %v674, %v671
      %v936 = vpack.c.b16 %v675, %v672
      %v937 = vpack.c.b16 %v679, %v676
      %v938 = vpack.c.b16 %v680, %v677
      %v939 = vpack.c.b16 %v681, %v678
      %v940 = vpack.c.b16 %v685, %v682
      %v941 = vpack.c.b16 %v686, %v683
      %v942 = vpack.c.b16 %v687, %v684
      %v943 = vpack.c.b16 %v691, %v688
      %v944 = vpack.c.b16 %v692, %v689
      %v945 = vpack.c.b16 %v693, %v690
      %v946 = vpack.c.b16 %v697, %v694
      %v947 = vpack.c.b16 %v698, %v695
      %v948 = vpack.c.b16 %v699, %v696
      %v949 = vpack.c.b16 %v703, %v700
      %v950 = vpack.c.b16 %v704, %v701
      %v951 = vpack.c.b16 %v705, %v702
      %v952 = vpack.c.b16 %v709, %v706
      %v953 = vpack.c.b16 %v710, %v707
      %v954 = vpack.c.b16 %v711, %v708
      %v955 = vpack.c.b16 %v715, %v712
      %v956 = vpack.c.b16 %v716, %v713
      %v957 = vpack.c.b16 %v717, %v714
      %v958 = vpack.c.b16 %v721, %v718
      %v959 = vpack.c.b16 %v722, %v719
      %v960 = vpack.c.b16 %v723, %v720
      %v961 = vpack.c.b16 %v727, %v724
      %v962 = vpack.c.b16 %v728, %v725
      %v963 = vpack.c.b16 %v729, %v726
      %v964 = vpack.c.b16 %v733, %v730
      %v965 = vpack.c.b16 %v734, %v731
      %v966 = vpack.c.b16 %v735, %v732
      %v967 = vpack.c.b16 %v739, %v736
      %v968 = vpack.c.b16 %v740, %v737
      %v969 = vpack.c.b16 %v741, %v738
      %v970 = vpack.c.b16 %v745, %v742
      %v971 = vpack.c.b16 %v746, %v743
      %v972 = vpack.c.b16 %v747, %v744
      %v973 = vpack.c.b16 %v751, %v748
      %v974 = vpack.c.b16 %v752, %v749
      %v975 = vpack.c.b16 %v753, %v750
      %v976 = vpack.c.b16 %v757, %v754
      %v977 = vpack.c.b16 %v758, %v755
      %v978 = vpack.c.b16 %v759, %v756
      %v979 = vpack.c.b16 %v763, %v760
      %v980 = vpack.c.b16 %v764, %v761
      %v981 = vpack.c.b16 %v765, %v762
      %v982 = vpack.c.b16 %v769, %v766
      %v983 = vpack.c.b16 %v770, %v767
      %v984 = vpack.c.b16 %v771, %v768
      %v985 = vpack.c.b16 %v775, %v772
      %v986 = vpack.c.b16 %v776, %v773
      %v987 = vpack.c.b16 %v777, %v774
      %v988 = vpack.c.b16 %v781, %v778
      %v989 = vpack.c.b16 %v782, %v779
      %v990 = vpack.c.b16 %v783, %v780
      %v991 = vpack.c.b16 %v787, %v784
      %v992 = vpack.c.b16 %v788, %v785
      %v993 = vpack.c.b16 %v789, %v786
      %v994 = vpack.c.b16 %v793, %v790
      %v995 = vpack.c.b16 %v794, %v791
      %v996 = vpack.c.b16 %v795, %v792
      %v997 = vpack.c.b16 %v799, %v796
      %v998 = vpack.c.b16 %v800, %v797
      %v999 = vpack.c.b16 %v801, %v798
      %v1000 = vpack.c.b16 %v805, %v802
      %v1001 = vpack.c.b16 %v806, %v803
      %v1002 = vpack.c.b16 %v807, %v804
      %v1003 = vpack.c.b16 %v811, %v808
      %v1004 = vpack.c.b16 %v812, %v809
      %v1005 = vpack.c.b16 %v813, %v810
      %v1006 = vpack.c.b16 %v817, %v814
      %v1007 = vpack.c.b16 %v818, %v815
      %v1008 = vpack.c.b16 %v819, %v816
      %v1009 = vpack.c.b16 %v823, %v820
      %v1010 = vpack.c.b16 %v824, %v821
      %v1011 = vpack.c.b16 %v825, %v822
      %v1012 = vpack.c.b16 %v829, %v826
      %v1013 = vpack.c.b16 %v830, %v827
      %v1014 = vpack.c.b16 %v831, %v828
      %v1015 = vpack.c.b16 %v835, %v832
      %v1016 = vpack.c.b16 %v836, %v833
      %v1017 = vpack.c.b16 %v837, %v834
      %v1018 = vpack.c.b16 %v841, %v838
      %v1019 = vpack.c.b16 %v842, %v839
      %v1020 = vpack.c.b16 %v843, %v840
      %v1021 = vpack.c.b16 %v847, %v844
      %v1022 = vpack.c.b16 %v848, %v845
      %v1023 = vpack.c.b16 %v849, %v846
      %v1024 = vpack.c.b16 %v853, %v850
      %v1025 = vpack.c.b16 %v854, %v851
      %v1026 = vpack.c.b16 %v855, %v852
      %v1027 = vpack.c.b16 %v859, %v856
      %v1028 = vpack.c.b16 %v860, %v857
      %v1029 = vpack.c.b16 %v861, %v858
      %v1030 = vpack.c.b16 %v865, %v862
      %v1031 = vpack.c.b16 %v866, %v863
      %v1032 = vpack.c.b16 %v867, %v864
      %v1033 = vpack.c.b16 %v871, %v868
      %v1034 = vpack.c.b16 %v872, %v869
      %v1035 = vpack.c.b16 %v873, %v870
      %v1036 = vpack.c.b16 %v877, %v874
      %v1037 = vpack.c.b16 %v878, %v875
      %v1038 = vpack.c.b16 %v879, %v876
      %v1039 = vpack.c.b16 %v883, %v880
      %v1040 = vpack.c.b16 %v884, %v881
      %v1041 = vpack.c.b16 %v885, %v882
      %v1042 = vpack.c.b16 %v889, %v886
      %v1043 = vpack.c.b16 %v890, %v887
      %v1044 = vpack.c.b16 %v891, %v888
      %v1045 = vpack.c.b16 %v895, %v892
      %v1046 = vpack.c.b16 %v896, %v893
      %v1047 = vpack.c.b16 %v897, %v894
      %v1048 = vpack.c.b16 %v901, %v898
      %v1049 = vpack.c.b16 %v902, %v899
      %v1050 = vpack.c.b16 %v903, %v900
      %v1185 = vunpack.c.l.b16 %v374
      %v1186 = vunpack.c.l.b16 %v375
      %v1187 = vunpack.c.l.b16 %v376
      %v1188 = vunpack.c.l.b16 %v377
      %v1189 = vunpack.c.l.b16 %v378
      %v1190 = vunpack.c.l.b16 %v379
      %v1191 = vunpack.c.l.b16 %v380
      %v1192 = vunpack.c.l.b16 %v381
      %v1193 = vunpack.c.l.b16 %v382
      %v1194 = vunpack.c.l.b16 %v383
      %v1195 = vunpack.c.l.b16 %v384
      %v1196 = vunpack.c.l.b16 %v385
      %v1197 = vunpack.c.l.b16 %v386
      %v1198 = vunpack.c.l.b16 %v387
      %v1199 = vunpack.c.l.b16 %v388
      %v1200 = vunpack.c.l.b16 %v389
      %v1201 = vunpack.c.l.b16 %v390
      %v1202 = vunpack.c.l.b16 %v391
      %v1203 = vunpack.c.l.b16 %v392
      %v1204 = vunpack.c.l.b16 %v393
      %v1205 = vunpack.c.l.b16 %v394
      %v1206 = vunpack.c.l.b16 %v395
      %v1207 = vunpack.c.l.b16 %v396
      %v1208 = vunpack.c.l.b16 %v397
      %v1209 = vunpack.c.l.b16 %v398
      %v1210 = vunpack.c.l.b16 %v399
      %v1211 = vunpack.c.l.b16 %v400
      %v1212 = vunpack.c.l.b16 %v401
      %v1213 = vunpack.c.l.b16 %v402
      %v1214 = vunpack.c.l.b16 %v403
      %v1215 = vunpack.c.l.b16 %v404
      %v1216 = vunpack.c.l.b16 %v405
      %v1217 = vunpack.c.l.b16 %v406
      %v1218 = vunpack.c.l.b16 %v407
      %v1219 = vunpack.c.l.b16 %v408
      %v1220 = vunpack.c.l.b16 %v409
      %v1221 = vpack.c.b16 %v1186, %v1185
      %v1222 = vpack.c.b16 %v1188, %v1187
      %v1223 = vpack.c.b16 %v1190, %v1189
      %v1224 = vpack.c.b16 %v1192, %v1191
      %v1225 = vpack.c.b16 %v1194, %v1193
      %v1226 = vpack.c.b16 %v1196, %v1195
      %v1227 = vpack.c.b16 %v1198, %v1197
      %v1228 = vpack.c.b16 %v1200, %v1199
      %v1229 = vpack.c.b16 %v1202, %v1201
      %v1230 = vpack.c.b16 %v1204, %v1203
      %v1231 = vpack.c.b16 %v1206, %v1205
      %v1232 = vpack.c.b16 %v1208, %v1207
      %v1233 = vpack.c.b16 %v1210, %v1209
      %v1234 = vpack.c.b16 %v1212, %v1211
      %v1235 = vpack.c.b16 %v1214, %v1213
      %v1236 = vpack.c.b16 %v1216, %v1215
      %v1237 = vpack.c.b16 %v1218, %v1217
      %v1238 = vpack.c.b16 %v1220, %v1219
      %vm1257 = vcmask 261120
      %v1259 = vsel %vm1257, %v906, 0
      %v1262 = vsel %vm1257, %v909, 0
      %v1265 = vsel %vm1257, %v912, 0
      %v1268 = vsel %vm1257, %v915, 0
      %v1271 = vsel %vm1257, %v918, 0
      %v1274 = vsel %vm1257, %v921, 0
      %v1277 = vsel %vm1257, %v924, 0
      %v1280 = vsel %vm1257, %v927, 0
      %v1283 = vsel %vm1257, %v930, 0
      %v1286 = vsel %vm1257, %v933, 0
      %v1289 = vsel %vm1257, %v936, 0
      %v1292 = vsel %vm1257, %v939, 0
      %v1295 = vsel %vm1257, %v942, 0
      %v1298 = vsel %vm1257, %v945, 0
      %v1301 = vsel %vm1257, %v948, 0
      %v1304 = vsel %vm1257, %v951, 0
      %v1307 = vsel %vm1257, %v954, 0
      %v1310 = vsel %vm1257, %v957, 0
      %v1313 = vsel %vm1257, %v960, 0
      %v1316 = vsel %vm1257, %v963, 0
      %v1319 = vsel %vm1257, %v966, 0
      %v1322 = vsel %vm1257, %v969, 0
      %v1325 = vsel %vm1257, %v972, 0
      %v1328 = vsel %vm1257, %v975, 0
      %v1331 = vsel %vm1257, %v978, 0
      %v1334 = vsel %vm1257, %v981, 0
      %v1337 = vsel %vm1257, %v984, 0
      %v1340 = vsel %vm1257, %v987, 0
      %v1343 = vsel %vm1257, %v990, 0
      %v1346 = vsel %vm1257, %v993, 0
      %v1349 = vsel %vm1257, %v996, 0
      %v1352 = vsel %vm1257, %v999, 0
      %v1355 = vsel %vm1257, %v1002, 0
      %v1358 = vsel %vm1257, %v1005, 0
      %v1361 = vsel %vm1257, %v1008, 0
      %v1364 = vsel %vm1257, %v1011, 0
      %v1367 = vsel %vm1257, %v1014, 0
      %v1370 = vsel %vm1257, %v1017, 0
      %v1373 = vsel %vm1257, %v1020, 0
      %v1376 = vsel %vm1257, %v1023, 0
      %v1379 = vsel %vm1257, %v1026, 0
      %v1382 = vsel %vm1257, %v1029, 0
      %v1385 = vsel %vm1257, %v1032, 0
      %v1388 = vsel %vm1257, %v1035, 0
      %v1391 = vsel %vm1257, %v1038, 0
      %v1394 = vsel %vm1257, %v1041, 0
      %v1397 = vsel %vm1257, %v1044, 0
      %v1400 = vsel %vm1257, %v1047, 0
      %v1403 = vsel %vm1257, %v1050, 0
      %1405 = vmatpush.bf16.msra.mxu0 %v1228
      %1406 = vmatpush.bf16.msra.mxu0 %v1227
      %1407 = vmatpush.bf16.msra.mxu0 %v1226
      %1408 = vmatpush.bf16.msra.mxu0 %v1225
      %1409 = vmatpush.bf16.msra.mxu0 %v1224
      %1410 = vmatpush.bf16.msra.mxu0 %v1223
      %1411 = vmatpush.bf16.msra.mxu0 %v1222
      %1412 = vmatpush.bf16.msra.mxu0 %v1221
      %1413 = vmatmul.bf16.gmra.mxu0 %v904
      %v1414 = vpop.f32.mrf.mxu0
      %v1415 = vadd.f32 %v412, %v1414
      %v1416 = vpop.f32.mrf.mxu0
      %v1417 = vadd.f32 %v412, %v1416
      %1418 = vmatmul.bf16.gmra.mxu0 %v907
      %v1419 = vpop.f32.mrf.mxu0
      %v1420 = vadd.f32 %v412, %v1419
      %v1421 = vpop.f32.mrf.mxu0
      %v1422 = vadd.f32 %v412, %v1421
      %1423 = vmatmul.bf16.gmra.mxu0 %v910
      %v1424 = vpop.f32.mrf.mxu0
      %v1425 = vadd.f32 %v412, %v1424
      %v1426 = vpop.f32.mrf.mxu0
      %v1427 = vadd.f32 %v412, %v1426
      %1428 = vmatmul.bf16.gmra.mxu0 %v913
      %v1429 = vpop.f32.mrf.mxu0
      %v1430 = vadd.f32 %v412, %v1429
      %v1431 = vpop.f32.mrf.mxu0
      %v1432 = vadd.f32 %v412, %v1431
      %1433 = vmatmul.bf16.gmra.mxu0 %v916
      %v1434 = vpop.f32.mrf.mxu0
      %v1435 = vadd.f32 %v412, %v1434
      %v1436 = vpop.f32.mrf.mxu0
      %v1437 = vadd.f32 %v412, %v1436
      %1438 = vmatmul.bf16.gmra.mxu0 %v919
      %v1439 = vpop.f32.mrf.mxu0
      %v1440 = vadd.f32 %v412, %v1439
      %v1441 = vpop.f32.mrf.mxu0
      %v1442 = vadd.f32 %v412, %v1441
      %1443 = vmatmul.bf16.gmra.mxu0 %v922
      %v1444 = vpop.f32.mrf.mxu0
      %v1445 = vadd.f32 %v412, %v1444
      %v1446 = vpop.f32.mrf.mxu0
      %v1447 = vadd.f32 %v412, %v1446
      %1448 = vmatmul.bf16.gmra.mxu0 %v925
      %v1449 = vpop.f32.mrf.mxu0
      %v1450 = vadd.f32 %v412, %v1449
      %v1451 = vpop.f32.mrf.mxu0
      %v1452 = vadd.f32 %v412, %v1451
      %1453 = vmatmul.bf16.gmra.mxu0 %v928
      %v1454 = vpop.f32.mrf.mxu0
      %v1455 = vadd.f32 %v412, %v1454
      %v1456 = vpop.f32.mrf.mxu0
      %v1457 = vadd.f32 %v412, %v1456
      %1458 = vmatmul.bf16.gmra.mxu0 %v931
      %v1459 = vpop.f32.mrf.mxu0
      %v1460 = vadd.f32 %v412, %v1459
      %v1461 = vpop.f32.mrf.mxu0
      %v1462 = vadd.f32 %v412, %v1461
      %1463 = vmatmul.bf16.gmra.mxu0 %v934
      %v1464 = vpop.f32.mrf.mxu0
      %v1465 = vadd.f32 %v412, %v1464
      %v1466 = vpop.f32.mrf.mxu0
      %v1467 = vadd.f32 %v412, %v1466
      %1468 = vmatmul.bf16.gmra.mxu0 %v937
      %v1469 = vpop.f32.mrf.mxu0
      %v1470 = vadd.f32 %v412, %v1469
      %v1471 = vpop.f32.mrf.mxu0
      %v1472 = vadd.f32 %v412, %v1471
      %1473 = vmatmul.bf16.gmra.mxu0 %v940
      %v1474 = vpop.f32.mrf.mxu0
      %v1475 = vadd.f32 %v412, %v1474
      %v1476 = vpop.f32.mrf.mxu0
      %v1477 = vadd.f32 %v412, %v1476
      %1478 = vmatmul.bf16.gmra.mxu0 %v943
      %v1479 = vpop.f32.mrf.mxu0
      %v1480 = vadd.f32 %v412, %v1479
      %v1481 = vpop.f32.mrf.mxu0
      %v1482 = vadd.f32 %v412, %v1481
      %1483 = vmatmul.bf16.gmra.mxu0 %v946
      %v1484 = vpop.f32.mrf.mxu0
      %v1485 = vadd.f32 %v412, %v1484
      %v1486 = vpop.f32.mrf.mxu0
      %v1487 = vadd.f32 %v412, %v1486
      %1488 = vmatmul.bf16.gmra.mxu0 %v949
      %v1489 = vpop.f32.mrf.mxu0
      %v1490 = vadd.f32 %v412, %v1489
      %v1491 = vpop.f32.mrf.mxu0
      %v1492 = vadd.f32 %v412, %v1491
      %1493 = vmatmul.bf16.gmra.mxu0 %v952
      %v1494 = vpop.f32.mrf.mxu0
      %v1495 = vadd.f32 %v412, %v1494
      %v1496 = vpop.f32.mrf.mxu0
      %v1497 = vadd.f32 %v412, %v1496
      %1498 = vmatmul.bf16.gmra.mxu0 %v955
      %v1499 = vpop.f32.mrf.mxu0
      %v1500 = vadd.f32 %v412, %v1499
      %v1501 = vpop.f32.mrf.mxu0
      %v1502 = vadd.f32 %v412, %v1501
      %1503 = vmatmul.bf16.gmra.mxu0 %v958
      %v1504 = vpop.f32.mrf.mxu0
      %v1505 = vadd.f32 %v412, %v1504
      %v1506 = vpop.f32.mrf.mxu0
      %v1507 = vadd.f32 %v412, %v1506
      %1508 = vmatmul.bf16.gmra.mxu0 %v961
      %v1509 = vpop.f32.mrf.mxu0
      %v1510 = vadd.f32 %v412, %v1509
      %v1511 = vpop.f32.mrf.mxu0
      %v1512 = vadd.f32 %v412, %v1511
      %1513 = vmatmul.bf16.gmra.mxu0 %v964
      %v1514 = vpop.f32.mrf.mxu0
      %v1515 = vadd.f32 %v412, %v1514
      %v1516 = vpop.f32.mrf.mxu0
      %v1517 = vadd.f32 %v412, %v1516
      %1518 = vmatmul.bf16.gmra.mxu0 %v967
      %v1519 = vpop.f32.mrf.mxu0
      %v1520 = vadd.f32 %v412, %v1519
      %v1521 = vpop.f32.mrf.mxu0
      %v1522 = vadd.f32 %v412, %v1521
      %1523 = vmatmul.bf16.gmra.mxu0 %v970
      %v1524 = vpop.f32.mrf.mxu0
      %v1525 = vadd.f32 %v412, %v1524
      %v1526 = vpop.f32.mrf.mxu0
      %v1527 = vadd.f32 %v412, %v1526
      %1528 = vmatmul.bf16.gmra.mxu0 %v973
      %v1529 = vpop.f32.mrf.mxu0
      %v1530 = vadd.f32 %v412, %v1529
      %v1531 = vpop.f32.mrf.mxu0
      %v1532 = vadd.f32 %v412, %v1531
      %1533 = vmatmul.bf16.gmra.mxu0 %v976
      %v1534 = vpop.f32.mrf.mxu0
      %v1535 = vadd.f32 %v412, %v1534
      %v1536 = vpop.f32.mrf.mxu0
      %v1537 = vadd.f32 %v412, %v1536
      %1538 = vmatmul.bf16.gmra.mxu0 %v979
      %v1539 = vpop.f32.mrf.mxu0
      %v1540 = vadd.f32 %v412, %v1539
      %v1541 = vpop.f32.mrf.mxu0
      %v1542 = vadd.f32 %v412, %v1541
      %1543 = vmatmul.bf16.gmra.mxu0 %v982
      %v1544 = vpop.f32.mrf.mxu0
      %v1545 = vadd.f32 %v412, %v1544
      %v1546 = vpop.f32.mrf.mxu0
      %v1547 = vadd.f32 %v412, %v1546
      %1548 = vmatmul.bf16.gmra.mxu0 %v985
      %v1549 = vpop.f32.mrf.mxu0
      %v1550 = vadd.f32 %v412, %v1549
      %v1551 = vpop.f32.mrf.mxu0
      %v1552 = vadd.f32 %v412, %v1551
      %1553 = vmatmul.bf16.gmra.mxu0 %v988
      %v1554 = vpop.f32.mrf.mxu0
      %v1555 = vadd.f32 %v412, %v1554
      %v1556 = vpop.f32.mrf.mxu0
      %v1557 = vadd.f32 %v412, %v1556
      %1558 = vmatmul.bf16.gmra.mxu0 %v991
      %v1559 = vpop.f32.mrf.mxu0
      %v1560 = vadd.f32 %v412, %v1559
      %v1561 = vpop.f32.mrf.mxu0
      %v1562 = vadd.f32 %v412, %v1561
      %1563 = vmatmul.bf16.gmra.mxu0 %v994
      %v1564 = vpop.f32.mrf.mxu0
      %v1565 = vadd.f32 %v412, %v1564
      %v1566 = vpop.f32.mrf.mxu0
      %v1567 = vadd.f32 %v412, %v1566
      %1568 = vmatmul.bf16.gmra.mxu0 %v997
      %v1569 = vpop.f32.mrf.mxu0
      %v1570 = vadd.f32 %v412, %v1569
      %v1571 = vpop.f32.mrf.mxu0
      %v1572 = vadd.f32 %v412, %v1571
      %1573 = vmatmul.bf16.gmra.mxu0 %v1000
      %v1574 = vpop.f32.mrf.mxu0
      %v1575 = vadd.f32 %v412, %v1574
      %v1576 = vpop.f32.mrf.mxu0
      %v1577 = vadd.f32 %v412, %v1576
      %1578 = vmatmul.bf16.gmra.mxu0 %v1003
      %v1579 = vpop.f32.mrf.mxu0
      %v1580 = vadd.f32 %v412, %v1579
      %v1581 = vpop.f32.mrf.mxu0
      %v1582 = vadd.f32 %v412, %v1581
      %1583 = vmatmul.bf16.gmra.mxu0 %v1006
      %v1584 = vpop.f32.mrf.mxu0
      %v1585 = vadd.f32 %v412, %v1584
      %v1586 = vpop.f32.mrf.mxu0
      %v1587 = vadd.f32 %v412, %v1586
      %1588 = vmatmul.bf16.gmra.mxu0 %v1009
      %v1589 = vpop.f32.mrf.mxu0
      %v1590 = vadd.f32 %v412, %v1589
      %v1591 = vpop.f32.mrf.mxu0
      %v1592 = vadd.f32 %v412, %v1591
      %1593 = vmatmul.bf16.gmra.mxu0 %v1012
      %v1594 = vpop.f32.mrf.mxu0
      %v1595 = vadd.f32 %v412, %v1594
      %v1596 = vpop.f32.mrf.mxu0
      %v1597 = vadd.f32 %v412, %v1596
      %1598 = vmatmul.bf16.gmra.mxu0 %v1015
      %v1599 = vpop.f32.mrf.mxu0
      %v1600 = vadd.f32 %v412, %v1599
      %v1601 = vpop.f32.mrf.mxu0
      %v1602 = vadd.f32 %v412, %v1601
      %1603 = vmatmul.bf16.gmra.mxu0 %v1018
      %v1604 = vpop.f32.mrf.mxu0
      %v1605 = vadd.f32 %v412, %v1604
      %v1606 = vpop.f32.mrf.mxu0
      %v1607 = vadd.f32 %v412, %v1606
      %1608 = vmatmul.bf16.gmra.mxu0 %v1021
      %v1609 = vpop.f32.mrf.mxu0
      %v1610 = vadd.f32 %v412, %v1609
      %v1611 = vpop.f32.mrf.mxu0
      %v1612 = vadd.f32 %v412, %v1611
      %1613 = vmatmul.bf16.gmra.mxu0 %v1024
      %v1614 = vpop.f32.mrf.mxu0
      %v1615 = vadd.f32 %v412, %v1614
      %v1616 = vpop.f32.mrf.mxu0
      %v1617 = vadd.f32 %v412, %v1616
      %1618 = vmatmul.bf16.gmra.mxu0 %v1027
      %v1619 = vpop.f32.mrf.mxu0
      %v1620 = vadd.f32 %v412, %v1619
      %v1621 = vpop.f32.mrf.mxu0
      %v1622 = vadd.f32 %v412, %v1621
      %1623 = vmatmul.bf16.gmra.mxu0 %v1030
      %v1624 = vpop.f32.mrf.mxu0
      %v1625 = vadd.f32 %v412, %v1624
      %v1626 = vpop.f32.mrf.mxu0
      %v1627 = vadd.f32 %v412, %v1626
      %1628 = vmatmul.bf16.gmra.mxu0 %v1033
      %v1629 = vpop.f32.mrf.mxu0
      %v1630 = vadd.f32 %v412, %v1629
      %v1631 = vpop.f32.mrf.mxu0
      %v1632 = vadd.f32 %v412, %v1631
      %1633 = vmatmul.bf16.gmra.mxu0 %v1036
      %v1634 = vpop.f32.mrf.mxu0
      %v1635 = vadd.f32 %v412, %v1634
      %v1636 = vpop.f32.mrf.mxu0
      %v1637 = vadd.f32 %v412, %v1636
      %1638 = vmatmul.bf16.gmra.mxu0 %v1039
      %v1639 = vpop.f32.mrf.mxu0
      %v1640 = vadd.f32 %v412, %v1639
      %v1641 = vpop.f32.mrf.mxu0
      %v1642 = vadd.f32 %v412, %v1641
      %1643 = vmatmul.bf16.gmra.mxu0 %v1042
      %v1644 = vpop.f32.mrf.mxu0
      %v1645 = vadd.f32 %v412, %v1644
      %v1646 = vpop.f32.mrf.mxu0
      %v1647 = vadd.f32 %v412, %v1646
      %1648 = vmatmul.bf16.gmra.mxu0 %v1045
      %v1649 = vpop.f32.mrf.mxu0
      %v1650 = vadd.f32 %v412, %v1649
      %v1651 = vpop.f32.mrf.mxu0
      %v1652 = vadd.f32 %v412, %v1651
      %1653 = vmatmul.bf16.gmra.mxu0 %v1048
      %v1654 = vpop.f32.mrf.mxu0
      %v1655 = vadd.f32 %v412, %v1654
      %v1656 = vpop.f32.mrf.mxu0
      %v1657 = vadd.f32 %v412, %v1656
      %1658 = vdwg.mxu0
      %1659 = vmatpush.bf16.msra.mxu0 %v1236
      %1660 = vmatpush.bf16.msra.mxu0 %v1235
      %1661 = vmatpush.bf16.msra.mxu0 %v1234
      %1662 = vmatpush.bf16.msra.mxu0 %v1233
      %1663 = vmatpush.bf16.msra.mxu0 %v1232
      %1664 = vmatpush.bf16.msra.mxu0 %v1231
      %1665 = vmatpush.bf16.msra.mxu0 %v1230
      %1666 = vmatpush.bf16.msra.mxu0 %v1229
      %1667 = vmatmul.bf16.gmra.mxu0 %v905
      %v1668 = vpop.f32.mrf.mxu0
      %v1669 = vadd.f32 %v1415, %v1668
      %v1670 = vpop.f32.mrf.mxu0
      %v1671 = vadd.f32 %v1417, %v1670
      %1672 = vmatmul.bf16.gmra.mxu0 %v908
      %v1673 = vpop.f32.mrf.mxu0
      %v1674 = vadd.f32 %v1420, %v1673
      %v1675 = vpop.f32.mrf.mxu0
      %v1676 = vadd.f32 %v1422, %v1675
      %1677 = vmatmul.bf16.gmra.mxu0 %v911
      %v1678 = vpop.f32.mrf.mxu0
      %v1679 = vadd.f32 %v1425, %v1678
      %v1680 = vpop.f32.mrf.mxu0
      %v1681 = vadd.f32 %v1427, %v1680
      %1682 = vmatmul.bf16.gmra.mxu0 %v914
      %v1683 = vpop.f32.mrf.mxu0
      %v1684 = vadd.f32 %v1430, %v1683
      %v1685 = vpop.f32.mrf.mxu0
      %v1686 = vadd.f32 %v1432, %v1685
      %1687 = vmatmul.bf16.gmra.mxu0 %v917
      %v1688 = vpop.f32.mrf.mxu0
      %v1689 = vadd.f32 %v1435, %v1688
      %v1690 = vpop.f32.mrf.mxu0
      %v1691 = vadd.f32 %v1437, %v1690
      %1692 = vmatmul.bf16.gmra.mxu0 %v920
      %v1693 = vpop.f32.mrf.mxu0
      %v1694 = vadd.f32 %v1440, %v1693
      %v1695 = vpop.f32.mrf.mxu0
      %v1696 = vadd.f32 %v1442, %v1695
      %1697 = vmatmul.bf16.gmra.mxu0 %v923
      %v1698 = vpop.f32.mrf.mxu0
      %v1699 = vadd.f32 %v1445, %v1698
      %v1700 = vpop.f32.mrf.mxu0
      %v1701 = vadd.f32 %v1447, %v1700
      %1702 = vmatmul.bf16.gmra.mxu0 %v926
      %v1703 = vpop.f32.mrf.mxu0
      %v1704 = vadd.f32 %v1450, %v1703
      %v1705 = vpop.f32.mrf.mxu0
      %v1706 = vadd.f32 %v1452, %v1705
      %1707 = vmatmul.bf16.gmra.mxu0 %v929
      %v1708 = vpop.f32.mrf.mxu0
      %v1709 = vadd.f32 %v1455, %v1708
      %v1710 = vpop.f32.mrf.mxu0
      %v1711 = vadd.f32 %v1457, %v1710
      %1712 = vmatmul.bf16.gmra.mxu0 %v932
      %v1713 = vpop.f32.mrf.mxu0
      %v1714 = vadd.f32 %v1460, %v1713
      %v1715 = vpop.f32.mrf.mxu0
      %v1716 = vadd.f32 %v1462, %v1715
      %1717 = vmatmul.bf16.gmra.mxu0 %v935
      %v1718 = vpop.f32.mrf.mxu0
      %v1719 = vadd.f32 %v1465, %v1718
      %v1720 = vpop.f32.mrf.mxu0
      %v1721 = vadd.f32 %v1467, %v1720
      %1722 = vmatmul.bf16.gmra.mxu0 %v938
      %v1723 = vpop.f32.mrf.mxu0
      %v1724 = vadd.f32 %v1470, %v1723
      %v1725 = vpop.f32.mrf.mxu0
      %v1726 = vadd.f32 %v1472, %v1725
      %1727 = vmatmul.bf16.gmra.mxu0 %v941
      %v1728 = vpop.f32.mrf.mxu0
      %v1729 = vadd.f32 %v1475, %v1728
      %v1730 = vpop.f32.mrf.mxu0
      %v1731 = vadd.f32 %v1477, %v1730
      %1732 = vmatmul.bf16.gmra.mxu0 %v944
      %v1733 = vpop.f32.mrf.mxu0
      %v1734 = vadd.f32 %v1480, %v1733
      %v1735 = vpop.f32.mrf.mxu0
      %v1736 = vadd.f32 %v1482, %v1735
      %1737 = vmatmul.bf16.gmra.mxu0 %v947
      %v1738 = vpop.f32.mrf.mxu0
      %v1739 = vadd.f32 %v1485, %v1738
      %v1740 = vpop.f32.mrf.mxu0
      %v1741 = vadd.f32 %v1487, %v1740
      %1742 = vmatmul.bf16.gmra.mxu0 %v950
      %v1743 = vpop.f32.mrf.mxu0
      %v1744 = vadd.f32 %v1490, %v1743
      %v1745 = vpop.f32.mrf.mxu0
      %v1746 = vadd.f32 %v1492, %v1745
      %1747 = vmatmul.bf16.gmra.mxu0 %v953
      %v1748 = vpop.f32.mrf.mxu0
      %v1749 = vadd.f32 %v1495, %v1748
      %v1750 = vpop.f32.mrf.mxu0
      %v1751 = vadd.f32 %v1497, %v1750
      %1752 = vmatmul.bf16.gmra.mxu0 %v956
      %v1753 = vpop.f32.mrf.mxu0
      %v1754 = vadd.f32 %v1500, %v1753
      %v1755 = vpop.f32.mrf.mxu0
      %v1756 = vadd.f32 %v1502, %v1755
      %1757 = vmatmul.bf16.gmra.mxu0 %v959
      %v1758 = vpop.f32.mrf.mxu0
      %v1759 = vadd.f32 %v1505, %v1758
      %v1760 = vpop.f32.mrf.mxu0
      %v1761 = vadd.f32 %v1507, %v1760
      %1762 = vmatmul.bf16.gmra.mxu0 %v962
      %v1763 = vpop.f32.mrf.mxu0
      %v1764 = vadd.f32 %v1510, %v1763
      %v1765 = vpop.f32.mrf.mxu0
      %v1766 = vadd.f32 %v1512, %v1765
      %1767 = vmatmul.bf16.gmra.mxu0 %v965
      %v1768 = vpop.f32.mrf.mxu0
      %v1769 = vadd.f32 %v1515, %v1768
      %v1770 = vpop.f32.mrf.mxu0
      %v1771 = vadd.f32 %v1517, %v1770
      %1772 = vmatmul.bf16.gmra.mxu0 %v968
      %v1773 = vpop.f32.mrf.mxu0
      %v1774 = vadd.f32 %v1520, %v1773
      %v1775 = vpop.f32.mrf.mxu0
      %v1776 = vadd.f32 %v1522, %v1775
      %1777 = vmatmul.bf16.gmra.mxu0 %v971
      %v1778 = vpop.f32.mrf.mxu0
      %v1779 = vadd.f32 %v1525, %v1778
      %v1780 = vpop.f32.mrf.mxu0
      %v1781 = vadd.f32 %v1527, %v1780
      %1782 = vmatmul.bf16.gmra.mxu0 %v974
      %v1783 = vpop.f32.mrf.mxu0
      %v1784 = vadd.f32 %v1530, %v1783
      %v1785 = vpop.f32.mrf.mxu0
      %v1786 = vadd.f32 %v1532, %v1785
      %1787 = vmatmul.bf16.gmra.mxu0 %v977
      %v1788 = vpop.f32.mrf.mxu0
      %v1789 = vadd.f32 %v1535, %v1788
      %v1790 = vpop.f32.mrf.mxu0
      %v1791 = vadd.f32 %v1537, %v1790
      %1792 = vmatmul.bf16.gmra.mxu0 %v980
      %v1793 = vpop.f32.mrf.mxu0
      %v1794 = vadd.f32 %v1540, %v1793
      %v1795 = vpop.f32.mrf.mxu0
      %v1796 = vadd.f32 %v1542, %v1795
      %1797 = vmatmul.bf16.gmra.mxu0 %v983
      %v1798 = vpop.f32.mrf.mxu0
      %v1799 = vadd.f32 %v1545, %v1798
      %v1800 = vpop.f32.mrf.mxu0
      %v1801 = vadd.f32 %v1547, %v1800
      %1802 = vmatmul.bf16.gmra.mxu0 %v986
      %v1803 = vpop.f32.mrf.mxu0
      %v1804 = vadd.f32 %v1550, %v1803
      %v1805 = vpop.f32.mrf.mxu0
      %v1806 = vadd.f32 %v1552, %v1805
      %1807 = vmatmul.bf16.gmra.mxu0 %v989
      %v1808 = vpop.f32.mrf.mxu0
      %v1809 = vadd.f32 %v1555, %v1808
      %v1810 = vpop.f32.mrf.mxu0
      %v1811 = vadd.f32 %v1557, %v1810
      %1812 = vmatmul.bf16.gmra.mxu0 %v992
      %v1813 = vpop.f32.mrf.mxu0
      %v1814 = vadd.f32 %v1560, %v1813
      %v1815 = vpop.f32.mrf.mxu0
      %v1816 = vadd.f32 %v1562, %v1815
      %1817 = vmatmul.bf16.gmra.mxu0 %v995
      %v1818 = vpop.f32.mrf.mxu0
      %v1819 = vadd.f32 %v1565, %v1818
      %v1820 = vpop.f32.mrf.mxu0
      %v1821 = vadd.f32 %v1567, %v1820
      %1822 = vmatmul.bf16.gmra.mxu0 %v998
      %v1823 = vpop.f32.mrf.mxu0
      %v1824 = vadd.f32 %v1570, %v1823
      %v1825 = vpop.f32.mrf.mxu0
      %v1826 = vadd.f32 %v1572, %v1825
      %1827 = vmatmul.bf16.gmra.mxu0 %v1001
      %v1828 = vpop.f32.mrf.mxu0
      %v1829 = vadd.f32 %v1575, %v1828
      %v1830 = vpop.f32.mrf.mxu0
      %v1831 = vadd.f32 %v1577, %v1830
      %1832 = vmatmul.bf16.gmra.mxu0 %v1004
      %v1833 = vpop.f32.mrf.mxu0
      %v1834 = vadd.f32 %v1580, %v1833
      %v1835 = vpop.f32.mrf.mxu0
      %v1836 = vadd.f32 %v1582, %v1835
      %1837 = vmatmul.bf16.gmra.mxu0 %v1007
      %v1838 = vpop.f32.mrf.mxu0
      %v1839 = vadd.f32 %v1585, %v1838
      %v1840 = vpop.f32.mrf.mxu0
      %v1841 = vadd.f32 %v1587, %v1840
      %1842 = vmatmul.bf16.gmra.mxu0 %v1010
      %v1843 = vpop.f32.mrf.mxu0
      %v1844 = vadd.f32 %v1590, %v1843
      %v1845 = vpop.f32.mrf.mxu0
      %v1846 = vadd.f32 %v1592, %v1845
      %1847 = vmatmul.bf16.gmra.mxu0 %v1013
      %v1848 = vpop.f32.mrf.mxu0
      %v1849 = vadd.f32 %v1595, %v1848
      %v1850 = vpop.f32.mrf.mxu0
      %v1851 = vadd.f32 %v1597, %v1850
      %1852 = vmatmul.bf16.gmra.mxu0 %v1016
      %v1853 = vpop.f32.mrf.mxu0
      %v1854 = vadd.f32 %v1600, %v1853
      %v1855 = vpop.f32.mrf.mxu0
      %v1856 = vadd.f32 %v1602, %v1855
      %1857 = vmatmul.bf16.gmra.mxu0 %v1019
      %v1858 = vpop.f32.mrf.mxu0
      %v1859 = vadd.f32 %v1605, %v1858
      %v1860 = vpop.f32.mrf.mxu0
      %v1861 = vadd.f32 %v1607, %v1860
      %1862 = vmatmul.bf16.gmra.mxu0 %v1022
      %v1863 = vpop.f32.mrf.mxu0
      %v1864 = vadd.f32 %v1610, %v1863
      %v1865 = vpop.f32.mrf.mxu0
      %v1866 = vadd.f32 %v1612, %v1865
      %1867 = vmatmul.bf16.gmra.mxu0 %v1025
      %v1868 = vpop.f32.mrf.mxu0
      %v1869 = vadd.f32 %v1615, %v1868
      %v1870 = vpop.f32.mrf.mxu0
      %v1871 = vadd.f32 %v1617, %v1870
      %1872 = vmatmul.bf16.gmra.mxu0 %v1028
      %v1873 = vpop.f32.mrf.mxu0
      %v1874 = vadd.f32 %v1620, %v1873
      %v1875 = vpop.f32.mrf.mxu0
      %v1876 = vadd.f32 %v1622, %v1875
      %1877 = vmatmul.bf16.gmra.mxu0 %v1031
      %v1878 = vpop.f32.mrf.mxu0
      %v1879 = vadd.f32 %v1625, %v1878
      %v1880 = vpop.f32.mrf.mxu0
      %v1881 = vadd.f32 %v1627, %v1880
      %1882 = vmatmul.bf16.gmra.mxu0 %v1034
      %v1883 = vpop.f32.mrf.mxu0
      %v1884 = vadd.f32 %v1630, %v1883
      %v1885 = vpop.f32.mrf.mxu0
      %v1886 = vadd.f32 %v1632, %v1885
      %1887 = vmatmul.bf16.gmra.mxu0 %v1037
      %v1888 = vpop.f32.mrf.mxu0
      %v1889 = vadd.f32 %v1635, %v1888
      %v1890 = vpop.f32.mrf.mxu0
      %v1891 = vadd.f32 %v1637, %v1890
      %1892 = vmatmul.bf16.gmra.mxu0 %v1040
      %v1893 = vpop.f32.mrf.mxu0
      %v1894 = vadd.f32 %v1640, %v1893
      %v1895 = vpop.f32.mrf.mxu0
      %v1896 = vadd.f32 %v1642, %v1895
      %1897 = vmatmul.bf16.gmra.mxu0 %v1043
      %v1898 = vpop.f32.mrf.mxu0
      %v1899 = vadd.f32 %v1645, %v1898
      %v1900 = vpop.f32.mrf.mxu0
      %v1901 = vadd.f32 %v1647, %v1900
      %1902 = vmatmul.bf16.gmra.mxu0 %v1046
      %v1903 = vpop.f32.mrf.mxu0
      %v1904 = vadd.f32 %v1650, %v1903
      %v1905 = vpop.f32.mrf.mxu0
      %v1906 = vadd.f32 %v1652, %v1905
      %1907 = vmatmul.bf16.gmra.mxu0 %v1049
      %v1908 = vpop.f32.mrf.mxu0
      %v1909 = vadd.f32 %v1655, %v1908
      %v1910 = vpop.f32.mrf.mxu0
      %v1911 = vadd.f32 %v1657, %v1910
      %1912 = vdwg.mxu0
      %1913 = vmatpush.bf16.msra.mxu0 0
      %1914 = vmatpush.bf16.msra.mxu0 0
      %1915 = vmatpush.bf16.msra.mxu0 0
      %1916 = vmatpush.bf16.msra.mxu0 0
      %1917 = vmatpush.bf16.msra.mxu0 0
      %1918 = vmatpush.bf16.msra.mxu0 0
      %1919 = vmatpush.bf16.msra.mxu0 %v1238
      %1920 = vmatpush.bf16.msra.mxu0 %v1237
      %1921 = vmatmul.bf16.gmra.mxu0 %v1259
      %v1922 = vpop.f32.mrf.mxu0
      %v1923 = vadd.f32 %v1669, %v1922
      %v1924 = vpop.f32.mrf.mxu0
      %v1925 = vadd.f32 %v1671, %v1924
      %1926 = vmatmul.bf16.gmra.mxu0 %v1262
      %v1927 = vpop.f32.mrf.mxu0
      %v1928 = vadd.f32 %v1674, %v1927
      %v1929 = vpop.f32.mrf.mxu0
      %v1930 = vadd.f32 %v1676, %v1929
      %1931 = vmatmul.bf16.gmra.mxu0 %v1265
      %v1932 = vpop.f32.mrf.mxu0
      %v1933 = vadd.f32 %v1679, %v1932
      %v1934 = vpop.f32.mrf.mxu0
      %v1935 = vadd.f32 %v1681, %v1934
      %1936 = vmatmul.bf16.gmra.mxu0 %v1268
      %v1937 = vpop.f32.mrf.mxu0
      %v1938 = vadd.f32 %v1684, %v1937
      %v1939 = vpop.f32.mrf.mxu0
      %v1940 = vadd.f32 %v1686, %v1939
      %1941 = vmatmul.bf16.gmra.mxu0 %v1271
      %v1942 = vpop.f32.mrf.mxu0
      %v1943 = vadd.f32 %v1689, %v1942
      %v1944 = vpop.f32.mrf.mxu0
      %v1945 = vadd.f32 %v1691, %v1944
      %1946 = vmatmul.bf16.gmra.mxu0 %v1274
      %v1947 = vpop.f32.mrf.mxu0
      %v1948 = vadd.f32 %v1694, %v1947
      %v1949 = vpop.f32.mrf.mxu0
      %v1950 = vadd.f32 %v1696, %v1949
      %1951 = vmatmul.bf16.gmra.mxu0 %v1277
      %v1952 = vpop.f32.mrf.mxu0
      %v1953 = vadd.f32 %v1699, %v1952
      %v1954 = vpop.f32.mrf.mxu0
      %v1955 = vadd.f32 %v1701, %v1954
      %1956 = vmatmul.bf16.gmra.mxu0 %v1280
      %v1957 = vpop.f32.mrf.mxu0
      %v1958 = vadd.f32 %v1704, %v1957
      %v1959 = vpop.f32.mrf.mxu0
      %v1960 = vadd.f32 %v1706, %v1959
      %1961 = vmatmul.bf16.gmra.mxu0 %v1283
      %v1962 = vpop.f32.mrf.mxu0
      %v1963 = vadd.f32 %v1709, %v1962
      %v1964 = vpop.f32.mrf.mxu0
      %v1965 = vadd.f32 %v1711, %v1964
      %1966 = vmatmul.bf16.gmra.mxu0 %v1286
      %v1967 = vpop.f32.mrf.mxu0
      %v1968 = vadd.f32 %v1714, %v1967
      %v1969 = vpop.f32.mrf.mxu0
      %v1970 = vadd.f32 %v1716, %v1969
      %1971 = vmatmul.bf16.gmra.mxu0 %v1289
      %v1972 = vpop.f32.mrf.mxu0
      %v1973 = vadd.f32 %v1719, %v1972
      %v1974 = vpop.f32.mrf.mxu0
      %v1975 = vadd.f32 %v1721, %v1974
      %1976 = vmatmul.bf16.gmra.mxu0 %v1292
      %v1977 = vpop.f32.mrf.mxu0
      %v1978 = vadd.f32 %v1724, %v1977
      %v1979 = vpop.f32.mrf.mxu0
      %v1980 = vadd.f32 %v1726, %v1979
      %1981 = vmatmul.bf16.gmra.mxu0 %v1295
      %v1982 = vpop.f32.mrf.mxu0
      %v1983 = vadd.f32 %v1729, %v1982
      %v1984 = vpop.f32.mrf.mxu0
      %v1985 = vadd.f32 %v1731, %v1984
      %1986 = vmatmul.bf16.gmra.mxu0 %v1298
      %v1987 = vpop.f32.mrf.mxu0
      %v1988 = vadd.f32 %v1734, %v1987
      %v1989 = vpop.f32.mrf.mxu0
      %v1990 = vadd.f32 %v1736, %v1989
      %1991 = vmatmul.bf16.gmra.mxu0 %v1301
      %v1992 = vpop.f32.mrf.mxu0
      %v1993 = vadd.f32 %v1739, %v1992
      %v1994 = vpop.f32.mrf.mxu0
      %v1995 = vadd.f32 %v1741, %v1994
      %1996 = vmatmul.bf16.gmra.mxu0 %v1304
      %v1997 = vpop.f32.mrf.mxu0
      %v1998 = vadd.f32 %v1744, %v1997
      %v1999 = vpop.f32.mrf.mxu0
      %v2000 = vadd.f32 %v1746, %v1999
      %2001 = vmatmul.bf16.gmra.mxu0 %v1307
      %v2002 = vpop.f32.mrf.mxu0
      %v2003 = vadd.f32 %v1749, %v2002
      %v2004 = vpop.f32.mrf.mxu0
      %v2005 = vadd.f32 %v1751, %v2004
      %2006 = vmatmul.bf16.gmra.mxu0 %v1310
      %v2007 = vpop.f32.mrf.mxu0
      %v2008 = vadd.f32 %v1754, %v2007
      %v2009 = vpop.f32.mrf.mxu0
      %v2010 = vadd.f32 %v1756, %v2009
      %2011 = vmatmul.bf16.gmra.mxu0 %v1313
      %v2012 = vpop.f32.mrf.mxu0
      %v2013 = vadd.f32 %v1759, %v2012
      %v2014 = vpop.f32.mrf.mxu0
      %v2015 = vadd.f32 %v1761, %v2014
      %2016 = vmatmul.bf16.gmra.mxu0 %v1316
      %v2017 = vpop.f32.mrf.mxu0
      %v2018 = vadd.f32 %v1764, %v2017
      %v2019 = vpop.f32.mrf.mxu0
      %v2020 = vadd.f32 %v1766, %v2019
      %2021 = vmatmul.bf16.gmra.mxu0 %v1319
      %v2022 = vpop.f32.mrf.mxu0
      %v2023 = vadd.f32 %v1769, %v2022
      %v2024 = vpop.f32.mrf.mxu0
      %v2025 = vadd.f32 %v1771, %v2024
      %2026 = vmatmul.bf16.gmra.mxu0 %v1322
      %v2027 = vpop.f32.mrf.mxu0
      %v2028 = vadd.f32 %v1774, %v2027
      %v2029 = vpop.f32.mrf.mxu0
      %v2030 = vadd.f32 %v1776, %v2029
      %2031 = vmatmul.bf16.gmra.mxu0 %v1325
      %v2032 = vpop.f32.mrf.mxu0
      %v2033 = vadd.f32 %v1779, %v2032
      %v2034 = vpop.f32.mrf.mxu0
      %v2035 = vadd.f32 %v1781, %v2034
      %2036 = vmatmul.bf16.gmra.mxu0 %v1328
      %v2037 = vpop.f32.mrf.mxu0
      %v2038 = vadd.f32 %v1784, %v2037
      %v2039 = vpop.f32.mrf.mxu0
      %v2040 = vadd.f32 %v1786, %v2039
      %2041 = vmatmul.bf16.gmra.mxu0 %v1331
      %v2042 = vpop.f32.mrf.mxu0
      %v2043 = vadd.f32 %v1789, %v2042
      %v2044 = vpop.f32.mrf.mxu0
      %v2045 = vadd.f32 %v1791, %v2044
      %2046 = vmatmul.bf16.gmra.mxu0 %v1334
      %v2047 = vpop.f32.mrf.mxu0
      %v2048 = vadd.f32 %v1794, %v2047
      %v2049 = vpop.f32.mrf.mxu0
      %v2050 = vadd.f32 %v1796, %v2049
      %2051 = vmatmul.bf16.gmra.mxu0 %v1337
      %v2052 = vpop.f32.mrf.mxu0
      %v2053 = vadd.f32 %v1799, %v2052
      %v2054 = vpop.f32.mrf.mxu0
      %v2055 = vadd.f32 %v1801, %v2054
      %2056 = vmatmul.bf16.gmra.mxu0 %v1340
      %v2057 = vpop.f32.mrf.mxu0
      %v2058 = vadd.f32 %v1804, %v2057
      %v2059 = vpop.f32.mrf.mxu0
      %v2060 = vadd.f32 %v1806, %v2059
      %2061 = vmatmul.bf16.gmra.mxu0 %v1343
      %v2062 = vpop.f32.mrf.mxu0
      %v2063 = vadd.f32 %v1809, %v2062
      %v2064 = vpop.f32.mrf.mxu0
      %v2065 = vadd.f32 %v1811, %v2064
      %2066 = vmatmul.bf16.gmra.mxu0 %v1346
      %v2067 = vpop.f32.mrf.mxu0
      %v2068 = vadd.f32 %v1814, %v2067
      %v2069 = vpop.f32.mrf.mxu0
      %v2070 = vadd.f32 %v1816, %v2069
      %2071 = vmatmul.bf16.gmra.mxu0 %v1349
      %v2072 = vpop.f32.mrf.mxu0
      %v2073 = vadd.f32 %v1819, %v2072
      %v2074 = vpop.f32.mrf.mxu0
      %v2075 = vadd.f32 %v1821, %v2074
      %2076 = vmatmul.bf16.gmra.mxu0 %v1352
      %v2077 = vpop.f32.mrf.mxu0
      %v2078 = vadd.f32 %v1824, %v2077
      %v2079 = vpop.f32.mrf.mxu0
      %v2080 = vadd.f32 %v1826, %v2079
      %2081 = vmatmul.bf16.gmra.mxu0 %v1355
      %v2082 = vpop.f32.mrf.mxu0
      %v2083 = vadd.f32 %v1829, %v2082
      %v2084 = vpop.f32.mrf.mxu0
      %v2085 = vadd.f32 %v1831, %v2084
      %2086 = vmatmul.bf16.gmra.mxu0 %v1358
      %v2087 = vpop.f32.mrf.mxu0
      %v2088 = vadd.f32 %v1834, %v2087
      %v2089 = vpop.f32.mrf.mxu0
      %v2090 = vadd.f32 %v1836, %v2089
      %2091 = vmatmul.bf16.gmra.mxu0 %v1361
      %v2092 = vpop.f32.mrf.mxu0
      %v2093 = vadd.f32 %v1839, %v2092
      %v2094 = vpop.f32.mrf.mxu0
      %v2095 = vadd.f32 %v1841, %v2094
      %2096 = vmatmul.bf16.gmra.mxu0 %v1364
      %v2097 = vpop.f32.mrf.mxu0
      %v2098 = vadd.f32 %v1844, %v2097
      %v2099 = vpop.f32.mrf.mxu0
      %v2100 = vadd.f32 %v1846, %v2099
      %2101 = vmatmul.bf16.gmra.mxu0 %v1367
      %v2102 = vpop.f32.mrf.mxu0
      %v2103 = vadd.f32 %v1849, %v2102
      %v2104 = vpop.f32.mrf.mxu0
      %v2105 = vadd.f32 %v1851, %v2104
      %2106 = vmatmul.bf16.gmra.mxu0 %v1370
      %v2107 = vpop.f32.mrf.mxu0
      %v2108 = vadd.f32 %v1854, %v2107
      %v2109 = vpop.f32.mrf.mxu0
      %v2110 = vadd.f32 %v1856, %v2109
      %2111 = vmatmul.bf16.gmra.mxu0 %v1373
      %v2112 = vpop.f32.mrf.mxu0
      %v2113 = vadd.f32 %v1859, %v2112
      %v2114 = vpop.f32.mrf.mxu0
      %v2115 = vadd.f32 %v1861, %v2114
      %2116 = vmatmul.bf16.gmra.mxu0 %v1376
      %v2117 = vpop.f32.mrf.mxu0
      %v2118 = vadd.f32 %v1864, %v2117
      %v2119 = vpop.f32.mrf.mxu0
      %v2120 = vadd.f32 %v1866, %v2119
      %2121 = vmatmul.bf16.gmra.mxu0 %v1379
      %v2122 = vpop.f32.mrf.mxu0
      %v2123 = vadd.f32 %v1869, %v2122
      %v2124 = vpop.f32.mrf.mxu0
      %v2125 = vadd.f32 %v1871, %v2124
      %2126 = vmatmul.bf16.gmra.mxu0 %v1382
      %v2127 = vpop.f32.mrf.mxu0
      %v2128 = vadd.f32 %v1874, %v2127
      %v2129 = vpop.f32.mrf.mxu0
      %v2130 = vadd.f32 %v1876, %v2129
      %2131 = vmatmul.bf16.gmra.mxu0 %v1385
      %v2132 = vpop.f32.mrf.mxu0
      %v2133 = vadd.f32 %v1879, %v2132
      %v2134 = vpop.f32.mrf.mxu0
      %v2135 = vadd.f32 %v1881, %v2134
      %2136 = vmatmul.bf16.gmra.mxu0 %v1388
      %v2137 = vpop.f32.mrf.mxu0
      %v2138 = vadd.f32 %v1884, %v2137
      %v2139 = vpop.f32.mrf.mxu0
      %v2140 = vadd.f32 %v1886, %v2139
      %2141 = vmatmul.bf16.gmra.mxu0 %v1391
      %v2142 = vpop.f32.mrf.mxu0
      %v2143 = vadd.f32 %v1889, %v2142
      %v2144 = vpop.f32.mrf.mxu0
      %v2145 = vadd.f32 %v1891, %v2144
      %2146 = vmatmul.bf16.gmra.mxu0 %v1394
      %v2147 = vpop.f32.mrf.mxu0
      %v2148 = vadd.f32 %v1894, %v2147
      %v2149 = vpop.f32.mrf.mxu0
      %v2150 = vadd.f32 %v1896, %v2149
      %2151 = vmatmul.bf16.gmra.mxu0 %v1397
      %v2152 = vpop.f32.mrf.mxu0
      %v2153 = vadd.f32 %v1899, %v2152
      %v2154 = vpop.f32.mrf.mxu0
      %v2155 = vadd.f32 %v1901, %v2154
      %2156 = vmatmul.bf16.gmra.mxu0 %v1400
      %v2157 = vpop.f32.mrf.mxu0
      %v2158 = vadd.f32 %v1904, %v2157
      %v2159 = vpop.f32.mrf.mxu0
      %v2160 = vadd.f32 %v1906, %v2159
      %2161 = vmatmul.bf16.gmra.mxu0 %v1403
      %v2162 = vpop.f32.mrf.mxu0
      %v2163 = vadd.f32 %v1909, %v2162
      %v2164 = vpop.f32.mrf.mxu0
      %v2165 = vadd.f32 %v1911, %v2164
      %2166 = vdwg.mxu0
      %v2167 = vmax.f32 %v1923, 0.0
      %v2168 = vmax.f32 %v1925, 0.0
      %v2169 = vmax.f32 %v1928, 0.0
      %v2170 = vmax.f32 %v1930, 0.0
      %v2171 = vmax.f32 %v1933, 0.0
      %v2172 = vmax.f32 %v1935, 0.0
      %v2173 = vmax.f32 %v1938, 0.0
      %v2174 = vmax.f32 %v1940, 0.0
      %v2175 = vmax.f32 %v1943, 0.0
      %v2176 = vmax.f32 %v1945, 0.0
      %v2177 = vmax.f32 %v1948, 0.0
      %v2178 = vmax.f32 %v1950, 0.0
      %v2179 = vmax.f32 %v1953, 0.0
      %v2180 = vmax.f32 %v1955, 0.0
      %v2181 = vmax.f32 %v1958, 0.0
      %v2182 = vmax.f32 %v1960, 0.0
      %v2183 = vmax.f32 %v1963, 0.0
      %v2184 = vmax.f32 %v1965, 0.0
      %v2185 = vmax.f32 %v1968, 0.0
      %v2186 = vmax.f32 %v1970, 0.0
      %v2187 = vmax.f32 %v1973, 0.0
      %v2188 = vmax.f32 %v1975, 0.0
      %v2189 = vmax.f32 %v1978, 0.0
      %v2190 = vmax.f32 %v1980, 0.0
      %v2191 = vmax.f32 %v1983, 0.0
      %v2192 = vmax.f32 %v1985, 0.0
      %v2193 = vmax.f32 %v1988, 0.0
      %v2194 = vmax.f32 %v1990, 0.0
      %v2195 = vmax.f32 %v1993, 0.0
      %v2196 = vmax.f32 %v1995, 0.0
      %v2197 = vmax.f32 %v1998, 0.0
      %v2198 = vmax.f32 %v2000, 0.0
      %v2199 = vmax.f32 %v2003, 0.0
      %v2200 = vmax.f32 %v2005, 0.0
      %v2201 = vmax.f32 %v2008, 0.0
      %v2202 = vmax.f32 %v2010, 0.0
      %v2203 = vmax.f32 %v2013, 0.0
      %v2204 = vmax.f32 %v2015, 0.0
      %v2205 = vmax.f32 %v2018, 0.0
      %v2206 = vmax.f32 %v2020, 0.0
      %v2207 = vmax.f32 %v2023, 0.0
      %v2208 = vmax.f32 %v2025, 0.0
      %v2209 = vmax.f32 %v2028, 0.0
      %v2210 = vmax.f32 %v2030, 0.0
      %v2211 = vmax.f32 %v2033, 0.0
      %v2212 = vmax.f32 %v2035, 0.0
      %v2213 = vmax.f32 %v2038, 0.0
      %v2214 = vmax.f32 %v2040, 0.0
      %v2215 = vmax.f32 %v2043, 0.0
      %v2216 = vmax.f32 %v2045, 0.0
      %v2217 = vmax.f32 %v2048, 0.0
      %v2218 = vmax.f32 %v2050, 0.0
      %v2219 = vmax.f32 %v2053, 0.0
      %v2220 = vmax.f32 %v2055, 0.0
      %v2221 = vmax.f32 %v2058, 0.0
      %v2222 = vmax.f32 %v2060, 0.0
      %v2223 = vmax.f32 %v2063, 0.0
      %v2224 = vmax.f32 %v2065, 0.0
      %v2225 = vmax.f32 %v2068, 0.0
      %v2226 = vmax.f32 %v2070, 0.0
      %v2227 = vmax.f32 %v2073, 0.0
      %v2228 = vmax.f32 %v2075, 0.0
      %v2229 = vmax.f32 %v2078, 0.0
      %v2230 = vmax.f32 %v2080, 0.0
      %v2231 = vmax.f32 %v2083, 0.0
      %v2232 = vmax.f32 %v2085, 0.0
      %v2233 = vmax.f32 %v2088, 0.0
      %v2234 = vmax.f32 %v2090, 0.0
      %v2235 = vmax.f32 %v2093, 0.0
      %v2236 = vmax.f32 %v2095, 0.0
      %v2237 = vmax.f32 %v2098, 0.0
      %v2238 = vmax.f32 %v2100, 0.0
      %v2239 = vmax.f32 %v2103, 0.0
      %v2240 = vmax.f32 %v2105, 0.0
      %v2241 = vmax.f32 %v2108, 0.0
      %v2242 = vmax.f32 %v2110, 0.0
      %v2243 = vmax.f32 %v2113, 0.0
      %v2244 = vmax.f32 %v2115, 0.0
      %v2245 = vmax.f32 %v2118, 0.0
      %v2246 = vmax.f32 %v2120, 0.0
      %v2247 = vmax.f32 %v2123, 0.0
      %v2248 = vmax.f32 %v2125, 0.0
      %v2249 = vmax.f32 %v2128, 0.0
      %v2250 = vmax.f32 %v2130, 0.0
      %v2251 = vmax.f32 %v2133, 0.0
      %v2252 = vmax.f32 %v2135, 0.0
      %v2253 = vmax.f32 %v2138, 0.0
      %v2254 = vmax.f32 %v2140, 0.0
      %v2255 = vmax.f32 %v2143, 0.0
      %v2256 = vmax.f32 %v2145, 0.0
      %v2257 = vmax.f32 %v2148, 0.0
      %v2258 = vmax.f32 %v2150, 0.0
      %v2259 = vmax.f32 %v2153, 0.0
      %v2260 = vmax.f32 %v2155, 0.0
      %v2261 = vmax.f32 %v2158, 0.0
      %v2262 = vmax.f32 %v2160, 0.0
      %v2263 = vmax.f32 %v2163, 0.0
      %v2264 = vmax.f32 %v2165, 0.0
      %v2265 = vpack.c.bf16 %v2167, %v2167
      %v2266 = vpack.c.bf16 %v2168, %v2168
      %v2267 = vpack.c.bf16 %v2169, %v2169
      %v2268 = vpack.c.bf16 %v2170, %v2170
      %v2269 = vpack.c.bf16 %v2171, %v2171
      %v2270 = vpack.c.bf16 %v2172, %v2172
      %v2271 = vpack.c.bf16 %v2173, %v2173
      %v2272 = vpack.c.bf16 %v2174, %v2174
      %v2273 = vpack.c.bf16 %v2175, %v2175
      %v2274 = vpack.c.bf16 %v2176, %v2176
      %v2275 = vpack.c.bf16 %v2177, %v2177
      %v2276 = vpack.c.bf16 %v2178, %v2178
      %v2277 = vpack.c.bf16 %v2179, %v2179
      %v2278 = vpack.c.bf16 %v2180, %v2180
      %v2279 = vpack.c.bf16 %v2181, %v2181
      %v2280 = vpack.c.bf16 %v2182, %v2182
      %v2281 = vpack.c.bf16 %v2183, %v2183
      %v2282 = vpack.c.bf16 %v2184, %v2184
      %v2283 = vpack.c.bf16 %v2185, %v2185
      %v2284 = vpack.c.bf16 %v2186, %v2186
      %v2285 = vpack.c.bf16 %v2187, %v2187
      %v2286 = vpack.c.bf16 %v2188, %v2188
      %v2287 = vpack.c.bf16 %v2189, %v2189
      %v2288 = vpack.c.bf16 %v2190, %v2190
      %v2289 = vpack.c.bf16 %v2191, %v2191
      %v2290 = vpack.c.bf16 %v2192, %v2192
      %v2291 = vpack.c.bf16 %v2193, %v2193
      %v2292 = vpack.c.bf16 %v2194, %v2194
      %v2293 = vpack.c.bf16 %v2195, %v2195
      %v2294 = vpack.c.bf16 %v2196, %v2196
      %v2295 = vpack.c.bf16 %v2197, %v2197
      %v2296 = vpack.c.bf16 %v2198, %v2198
      %v2297 = vpack.c.bf16 %v2199, %v2199
      %v2298 = vpack.c.bf16 %v2200, %v2200
      %v2299 = vpack.c.bf16 %v2201, %v2201
      %v2300 = vpack.c.bf16 %v2202, %v2202
      %v2301 = vpack.c.bf16 %v2203, %v2203
      %v2302 = vpack.c.bf16 %v2204, %v2204
      %v2303 = vpack.c.bf16 %v2205, %v2205
      %v2304 = vpack.c.bf16 %v2206, %v2206
      %v2305 = vpack.c.bf16 %v2207, %v2207
      %v2306 = vpack.c.bf16 %v2208, %v2208
      %v2307 = vpack.c.bf16 %v2209, %v2209
      %v2308 = vpack.c.bf16 %v2210, %v2210
      %v2309 = vpack.c.bf16 %v2211, %v2211
      %v2310 = vpack.c.bf16 %v2212, %v2212
      %v2311 = vpack.c.bf16 %v2213, %v2213
      %v2312 = vpack.c.bf16 %v2214, %v2214
      %v2313 = vpack.c.bf16 %v2215, %v2215
      %v2314 = vpack.c.bf16 %v2216, %v2216
      %v2315 = vpack.c.bf16 %v2217, %v2217
      %v2316 = vpack.c.bf16 %v2218, %v2218
      %v2317 = vpack.c.bf16 %v2219, %v2219
      %v2318 = vpack.c.bf16 %v2220, %v2220
      %v2319 = vpack.c.bf16 %v2221, %v2221
      %v2320 = vpack.c.bf16 %v2222, %v2222
      %v2321 = vpack.c.bf16 %v2223, %v2223
      %v2322 = vpack.c.bf16 %v2224, %v2224
      %v2323 = vpack.c.bf16 %v2225, %v2225
      %v2324 = vpack.c.bf16 %v2226, %v2226
      %v2325 = vpack.c.bf16 %v2227, %v2227
      %v2326 = vpack.c.bf16 %v2228, %v2228
      %v2327 = vpack.c.bf16 %v2229, %v2229
      %v2328 = vpack.c.bf16 %v2230, %v2230
      %v2329 = vpack.c.bf16 %v2231, %v2231
      %v2330 = vpack.c.bf16 %v2232, %v2232
      %v2331 = vpack.c.bf16 %v2233, %v2233
      %v2332 = vpack.c.bf16 %v2234, %v2234
      %v2333 = vpack.c.bf16 %v2235, %v2235
      %v2334 = vpack.c.bf16 %v2236, %v2236
      %v2335 = vpack.c.bf16 %v2237, %v2237
      %v2336 = vpack.c.bf16 %v2238, %v2238
      %v2337 = vpack.c.bf16 %v2239, %v2239
      %v2338 = vpack.c.bf16 %v2240, %v2240
      %v2339 = vpack.c.bf16 %v2241, %v2241
      %v2340 = vpack.c.bf16 %v2242, %v2242
      %v2341 = vpack.c.bf16 %v2243, %v2243
      %v2342 = vpack.c.bf16 %v2244, %v2244
      %v2343 = vpack.c.bf16 %v2245, %v2245
      %v2344 = vpack.c.bf16 %v2246, %v2246
      %v2345 = vpack.c.bf16 %v2247, %v2247
      %v2346 = vpack.c.bf16 %v2248, %v2248
      %v2347 = vpack.c.bf16 %v2249, %v2249
      %v2348 = vpack.c.bf16 %v2250, %v2250
      %v2349 = vpack.c.bf16 %v2251, %v2251
      %v2350 = vpack.c.bf16 %v2252, %v2252
      %v2351 = vpack.c.bf16 %v2253, %v2253
      %v2352 = vpack.c.bf16 %v2254, %v2254
      %v2353 = vpack.c.bf16 %v2255, %v2255
      %v2354 = vpack.c.bf16 %v2256, %v2256
      %v2355 = vpack.c.bf16 %v2257, %v2257
      %v2356 = vpack.c.bf16 %v2258, %v2258
      %v2357 = vpack.c.bf16 %v2259, %v2259
      %v2358 = vpack.c.bf16 %v2260, %v2260
      %v2359 = vpack.c.bf16 %v2261, %v2261
      %v2360 = vpack.c.bf16 %v2262, %v2262
      %v2361 = vpack.c.bf16 %v2263, %v2263
      %v2362 = vpack.c.bf16 %v2264, %v2264
      %2363 = vst [vmem:[%s175] sm:$0xf] %v2265
      %2364 = vst [vmem:[%s175 + $0x4] sm:$0xf] %v2266
      %2365 = vst [vmem:[%s175 + $0x8] sm:$0xf] %v2267
      %2366 = vst [vmem:[%s175 + $0xc] sm:$0xf] %v2268
      %2367 = vst [vmem:[%s175 + $0x10] sm:$0xf] %v2269
      %2368 = vst [vmem:[%s175 + $0x14] sm:$0xf] %v2270
      %2369 = vst [vmem:[%s175 + $0x18] sm:$0xf] %v2271
      %2370 = vst [vmem:[%s175 + $0x1c] sm:$0xf] %v2272
      %2371 = vst [vmem:[%s175 + $0x20] sm:$0xf] %v2273
      %2372 = vst [vmem:[%s175 + $0x24] sm:$0xf] %v2274
      %2373 = vst [vmem:[%s175 + $0x28] sm:$0xf] %v2275
      %2374 = vst [vmem:[%s175 + $0x2c] sm:$0xf] %v2276
      %2375 = vst [vmem:[%s175 + $0x30] sm:$0xf] %v2277
      %2376 = vst [vmem:[%s175 + $0x34] sm:$0xf] %v2278
      %2377 = vst [vmem:[%s175 + $0x38] sm:$0xf] %v2279
      %2378 = vst [vmem:[%s175 + $0x3c] sm:$0xf] %v2280
      %2379 = vst [vmem:[%s175 + $0x40] sm:$0xf] %v2281
      %2380 = vst [vmem:[%s175 + $0x44] sm:$0xf] %v2282
      %2381 = vst [vmem:[%s175 + $0x48] sm:$0xf] %v2283
      %2382 = vst [vmem:[%s175 + $0x4c] sm:$0xf] %v2284
      %2383 = vst [vmem:[%s175 + $0x50] sm:$0xf] %v2285
      %2384 = vst [vmem:[%s175 + $0x54] sm:$0xf] %v2286
      %2385 = vst [vmem:[%s175 + $0x58] sm:$0xf] %v2287
      %2386 = vst [vmem:[%s175 + $0x5c] sm:$0xf] %v2288
      %2387 = vst [vmem:[%s175 + $0x60] sm:$0xf] %v2289
      %2388 = vst [vmem:[%s175 + $0x64] sm:$0xf] %v2290
      %2389 = vst [vmem:[%s175 + $0x68] sm:$0xf] %v2291
      %2390 = vst [vmem:[%s175 + $0x6c] sm:$0xf] %v2292
      %2391 = vst [vmem:[%s175 + $0x70] sm:$0xf] %v2293
      %2392 = vst [vmem:[%s175 + $0x74] sm:$0xf] %v2294
      %2393 = vst [vmem:[%s175 + $0x78] sm:$0xf] %v2295
      %2394 = vst [vmem:[%s175 + $0x7c] sm:$0xf] %v2296
      %2395 = vst [vmem:[%s175 + $0x80] sm:$0xf] %v2297
      %2396 = vst [vmem:[%s175 + $0x84] sm:$0xf] %v2298
      %2397 = vst [vmem:[%s175 + $0x88] sm:$0xf] %v2299
      %2398 = vst [vmem:[%s175 + $0x8c] sm:$0xf] %v2300
      %2399 = vst [vmem:[%s175 + $0x90] sm:$0xf] %v2301
      %2400 = vst [vmem:[%s175 + $0x94] sm:$0xf] %v2302
      %2401 = vst [vmem:[%s175 + $0x98] sm:$0xf] %v2303
      %2402 = vst [vmem:[%s175 + $0x9c] sm:$0xf] %v2304
      %2403 = vst [vmem:[%s175 + $0xa0] sm:$0xf] %v2305
      %2404 = vst [vmem:[%s175 + $0xa4] sm:$0xf] %v2306
      %2405 = vst [vmem:[%s175 + $0xa8] sm:$0xf] %v2307
      %2406 = vst [vmem:[%s175 + $0xac] sm:$0xf] %v2308
      %2407 = vst [vmem:[%s175 + $0xb0] sm:$0xf] %v2309
      %2408 = vst [vmem:[%s175 + $0xb4] sm:$0xf] %v2310
      %2409 = vst [vmem:[%s175 + $0xb8] sm:$0xf] %v2311
      %2410 = vst [vmem:[%s175 + $0xbc] sm:$0xf] %v2312
      %2411 = vst [vmem:[%s175 + $0xc0] sm:$0xf] %v2313
      %2412 = vst [vmem:[%s175 + $0xc4] sm:$0xf] %v2314
      %2413 = vst [vmem:[%s175 + $0xc8] sm:$0xf] %v2315
      %2414 = vst [vmem:[%s175 + $0xcc] sm:$0xf] %v2316
      %2415 = vst [vmem:[%s175 + $0xd0] sm:$0xf] %v2317
      %2416 = vst [vmem:[%s175 + $0xd4] sm:$0xf] %v2318
      %2417 = vst [vmem:[%s175 + $0xd8] sm:$0xf] %v2319
      %2418 = vst [vmem:[%s175 + $0xdc] sm:$0xf] %v2320
      %2419 = vst [vmem:[%s175 + $0xe0] sm:$0xf] %v2321
      %2420 = vst [vmem:[%s175 + $0xe4] sm:$0xf] %v2322
      %2421 = vst [vmem:[%s175 + $0xe8] sm:$0xf] %v2323
      %2422 = vst [vmem:[%s175 + $0xec] sm:$0xf] %v2324
      %2423 = vst [vmem:[%s175 + $0xf0] sm:$0xf] %v2325
      %2424 = vst [vmem:[%s175 + $0xf4] sm:$0xf] %v2326
      %2425 = vst [vmem:[%s175 + $0xf8] sm:$0xf] %v2327
      %2426 = vst [vmem:[%s175 + $0xfc] sm:$0xf] %v2328
      %2427 = vst [vmem:[%s175 + $0x100] sm:$0xf] %v2329
      %2428 = vst [vmem:[%s175 + $0x104] sm:$0xf] %v2330
      %2429 = vst [vmem:[%s175 + $0x108] sm:$0xf] %v2331
      %2430 = vst [vmem:[%s175 + $0x10c] sm:$0xf] %v2332
      %2431 = vst [vmem:[%s175 + $0x110] sm:$0xf] %v2333
      %2432 = vst [vmem:[%s175 + $0x114] sm:$0xf] %v2334
      %2433 = vst [vmem:[%s175 + $0x118] sm:$0xf] %v2335
      %2434 = vst [vmem:[%s175 + $0x11c] sm:$0xf] %v2336
      %2435 = vst [vmem:[%s175 + $0x120] sm:$0xf] %v2337
      %2436 = vst [vmem:[%s175 + $0x124] sm:$0xf] %v2338
      %2437 = vst [vmem:[%s175 + $0x128] sm:$0xf] %v2339
      %2438 = vst [vmem:[%s175 + $0x12c] sm:$0xf] %v2340
      %2439 = vst [vmem:[%s175 + $0x130] sm:$0xf] %v2341
      %2440 = vst [vmem:[%s175 + $0x134] sm:$0xf] %v2342
      %2441 = vst [vmem:[%s175 + $0x138] sm:$0xf] %v2343
      %2442 = vst [vmem:[%s175 + $0x13c] sm:$0xf] %v2344
      %2443 = vst [vmem:[%s175 + $0x140] sm:$0xf] %v2345
      %2444 = vst [vmem:[%s175 + $0x144] sm:$0xf] %v2346
      %2445 = vst [vmem:[%s175 + $0x148] sm:$0xf] %v2347
      %2446 = vst [vmem:[%s175 + $0x14c] sm:$0xf] %v2348
      %2447 = vst [vmem:[%s175 + $0x150] sm:$0xf] %v2349
      %2448 = vst [vmem:[%s175 + $0x154] sm:$0xf] %v2350
      %2449 = vst [vmem:[%s175 + $0x158] sm:$0xf] %v2351
      %2450 = vst [vmem:[%s175 + $0x15c] sm:$0xf] %v2352
      %2451 = vst [vmem:[%s175 + $0x160] sm:$0xf] %v2353
      %2452 = vst [vmem:[%s175 + $0x164] sm:$0xf] %v2354
      %2453 = vst [vmem:[%s175 + $0x168] sm:$0xf] %v2355
      %2454 = vst [vmem:[%s175 + $0x16c] sm:$0xf] %v2356
      %2455 = vst [vmem:[%s175 + $0x170] sm:$0xf] %v2357
      %2456 = vst [vmem:[%s175 + $0x174] sm:$0xf] %v2358
      %2457 = vst [vmem:[%s175 + $0x178] sm:$0xf] %v2359
      %2458 = vst [vmem:[%s175 + $0x17c] sm:$0xf] %v2360
      %2459 = vst [vmem:[%s175 + $0x180] sm:$0xf] %v2361
      %2460 = vst [vmem:[%s175 + $0x184] sm:$0xf] %v2362
      %s2461 = smul.u32 98, %s14
      %p2462 = scmp.lt.s32.totalorder %s2461, 783
      %s2463 = scalar_select %p2462, %s2461, 783
      %s2464 = smul.addr %s2463, 4
      %s2465 = scalar_lea.vmem %s3, %s2464
      // Predicated region
      $region33: #{neural_net_forward.10} parent=31 // pred_check
        %p2466 = pneg %p100
      $region34: #{neural_net_forward.10} parent=31 // pred_check_branch
        %2468 = sbr.rel (%p2466) target = $region36
      $region35: #{neural_net_forward.10} parent=31 // pred_region
        %s2469 = smul.u32 98, %s14
      $region36: #{neural_net_forward.10} parent=31 // pred_fallthru
        _
    $region32: #{neural_net_forward.10} parent=5 // pred_fallthru
      _
    %p2470 = scmp.le.s32.totalorder 2, %s9
    // Predicated region
    $region37: #{neural_net_forward.10} parent=5 // pred_check
      %p2471 = pneg %p2470
    $region38: #{neural_net_forward.10} parent=5 // pred_check_branch
      %2473 = sbr.rel (%p2471) target = $region40
    $region39: #{neural_net_forward.10} parent=5 // pred_region
      %s2474 = ssub.s32 %s9, 2
      // Predicated region
      $region41: #{neural_net_forward.10} parent=39 // pred_check
        %p2475 = pneg %p106
      $region42: #{neural_net_forward.10} parent=39 // pred_check_branch
        %2477 = sbr.rel (%p2475) target = $region44
      $region43: #{neural_net_forward.10} parent=39 // pred_region
        %s2478 = smul.u32 98, %s15
        %p2479 = scmp.lt.s32.totalorder %s2478, 783
        %s2480 = scalar_select %p2479, %s2478, 783
        %s2481 = smul.addr %s2480, 4
        %s2482 = scalar_lea.vmem %s3, %s2481
      $region44: #{neural_net_forward.10} parent=39 // pred_fallthru
        _
    $region40: #{neural_net_forward.10} parent=5 // pred_fallthru
      _
  $region6: #{neural_net_forward.10} parent=0 // loop_footer
    %s13 = sadd.s32 1, %s9
  $region7: #{neural_net_forward.10} parent=0 // loop_footer_branch
    %8 = sbr.rel target = $region3
  $region8: #{neural_net_forward.10} parent=0 // loop_exit
    _

// kernel: neural_net_forward.11
$region0: #{neural_net_forward.11}
  #allocation0 [shape = 'u32[]', space=smem, size = 0x4, offset = 0x4, fixed_abs, tag = 'smem constant byte address 0x4 - core index']
  #allocation1 [shape = 'u32[72,128]{1,0:T(1,128)}', space=vmem, size = 0x9000, scoped, tag = 'internal scratch']
  %s0 = inlined_call_operand.vmem [shape: bf16[1568,64], index: 0, kind: input, shape index: {}]
  %s1 = inlined_call_operand.vmem [shape: bf16[64,128], index: 1, kind: input, shape index: {}]
  %s2 = inlined_call_operand.vmem [shape: f32[1,128], index: 2, kind: input, shape index: {}]
  %s3 = inlined_call_operand.vmem [shape: bf16[1568,128], index: 3, kind: output, shape index: {}]
  %s4 = sld [smem:[#allocation0]]
  $region45: #{neural_net_forward.11} parent=0
    _
  %s6 = ssub.s32 1, %s4
  %s7 = scalar_select 0, %s6, %s4
  loop: start=0, step=1, limit=6
  $region2: #{neural_net_forward.11} parent=0 // loop_pre_header
    _
  $region3: #{neural_net_forward.11} parent=0 // loop_header
    %s9 = sphi 0, %s13
    %p10 = scmp.ge.s32.totalorder %s9, 6
    %s19 = sphi 0, %s21
    %s22 = sphi 0, %s19
    %s23 = sphi 0, %s22
    %s39 = sphi 0, %s23
    %s43 = sphi 0, %s43
    %s45 = sphi 0, %s43
    %s46 = sphi 0, %s45
    %s60 = sphi 0, %s46
    %s64 = sphi 0, %s64
    %s66 = sphi 0, %s64
    %s67 = sphi 0, %s66
    %s81 = sphi 0, %s67
    %s87 = sphi 0, %s89
    %s90 = sphi 0, %s87
    %s91 = sphi 0, %s90
    %s107 = sphi 0, %s91
  $region4: #{neural_net_forward.11} parent=0 // loop_header_branch
    %12 = sbr.rel (%p10) target = $region8
  $region5: #{neural_net_forward.11} parent=0 // loop_body
    %s14 = ssub.s32 %s9, 1
    %s15 = ssub.s32 %s9, 2
    %s16 = sadd.s32 %s9, 1
    %s17 = ssub.s32 %s9, %s16
    %p18 = scmp.eq.s32.totalorder %s17, 0
    %s20 = sadd.s32 %s19, 1
    %s21 = scalar_select %p18, %s19, %s20
    %p24 = pneg %p18
    %p25 = scmp.eq.s32.totalorder %s9, 3
    %p26 = por %p24, %p25
    %p27 = scmp.ne.s32.totalorder %s19, %s22
    %p28 = scmp.eq.s32.totalorder %s9, 0
    %p29 = por %p27, %p28
    %p30 = scmp.ne.s32.totalorder %s19, %s22
    %p31 = scmp.eq.s32.totalorder %s14, 3
    %p32 = por %p30, %p31
    %p33 = scmp.ne.s32.totalorder %s22, %s23
    %p34 = scmp.eq.s32.totalorder %s14, 0
    %p35 = por %p33, %p34
    %p36 = scmp.ne.s32.totalorder %s22, %s23
    %p37 = scmp.eq.s32.totalorder %s15, 3
    %p38 = por %p36, %p37
    %p40 = scmp.ne.s32.totalorder %s23, %s39
    %p41 = scmp.eq.s32.totalorder %s15, 0
    %p42 = por %p40, %p41
    %s44 = sadd.s32 %s43, 1
    %p47 = scmp.eq.s32.totalorder %s9, 3
    %p48 = scmp.ne.s32.totalorder %s43, %s45
    %p49 = scmp.eq.s32.totalorder %s9, 0
    %p50 = por %p48, %p49
    %p51 = scmp.ne.s32.totalorder %s43, %s45
    %p52 = scmp.eq.s32.totalorder %s14, 3
    %p53 = por %p51, %p52
    %p54 = scmp.ne.s32.totalorder %s45, %s46
    %p55 = scmp.eq.s32.totalorder %s14, 0
    %p56 = por %p54, %p55
    %p57 = scmp.ne.s32.totalorder %s45, %s46
    %p58 = scmp.eq.s32.totalorder %s15, 3
    %p59 = por %p57, %p58
    %p61 = scmp.ne.s32.totalorder %s46, %s60
    %p62 = scmp.eq.s32.totalorder %s15, 0
    %p63 = por %p61, %p62
    %s65 = sadd.s32 %s64, 1
    %p68 = scmp.eq.s32.totalorder %s9, 3
    %p69 = scmp.ne.s32.totalorder %s64, %s66
    %p70 = scmp.eq.s32.totalorder %s9, 0
    %p71 = por %p69, %p70
    %p72 = scmp.ne.s32.totalorder %s64, %s66
    %p73 = scmp.eq.s32.totalorder %s14, 3
    %p74 = por %p72, %p73
    %p75 = scmp.ne.s32.totalorder %s66, %s67
    %p76 = scmp.eq.s32.totalorder %s14, 0
    %p77 = por %p75, %p76
    %p78 = scmp.ne.s32.totalorder %s66, %s67
    %p79 = scmp.eq.s32.totalorder %s15, 3
    %p80 = por %p78, %p79
    %p82 = scmp.ne.s32.totalorder %s67, %s81
    %p83 = scmp.eq.s32.totalorder %s15, 0
    %p84 = por %p82, %p83
    %s85 = ssub.s32 %s9, %s16
    %p86 = scmp.eq.s32.totalorder %s85, 0
    %s88 = sadd.s32 %s87, 1
    %s89 = scalar_select %p86, %s87, %s88
    %p92 = pneg %p86
    %p93 = scmp.eq.s32.totalorder %s9, 3
    %p94 = por %p92, %p93
    %p95 = scmp.ne.s32.totalorder %s87, %s90
    %p96 = scmp.eq.s32.totalorder %s9, 0
    %p97 = por %p95, %p96
    %p98 = scmp.ne.s32.totalorder %s87, %s90
    %p99 = scmp.eq.s32.totalorder %s14, 3
    %p100 = por %p98, %p99
    %p101 = scmp.ne.s32.totalorder %s90, %s91
    %p102 = scmp.eq.s32.totalorder %s14, 0
    %p103 = por %p101, %p102
    %p104 = scmp.ne.s32.totalorder %s90, %s91
    %p105 = scmp.eq.s32.totalorder %s15, 3
    %p106 = por %p104, %p105
    %p108 = scmp.ne.s32.totalorder %s91, %s107
    %p109 = scmp.eq.s32.totalorder %s15, 0
    %p110 = por %p108, %p109
    %p111 = scmp.le.s32.totalorder 1, %s9
    %p112 = scmp.lt.s32.totalorder %s9, 5
    %p113 = pnand %p111, %p112
    %p114 = pneg %p113
    // Predicated region
    $region9: #{neural_net_forward.11} parent=5 // pred_check
      _
    $region10: #{neural_net_forward.11} parent=5 // pred_check_branch
      %116 = sbr.rel (%p113) target = $region12
    $region11: #{neural_net_forward.11} parent=5 // pred_region
      %s117 = ssub.s32 %s9, 1
      // Predicated region
      $region13: #{neural_net_forward.11} parent=11 // pred_check
        %p118 = pneg %p56
      $region14: #{neural_net_forward.11} parent=11 // pred_check_branch
        %120 = sbr.rel (%p118) target = $region16
      $region15: #{neural_net_forward.11} parent=11 // pred_region
        _
      $region16: #{neural_net_forward.11} parent=11 // pred_fallthru
        _
      // Predicated region
      $region17: #{neural_net_forward.11} parent=11 // pred_check
        %p121 = pneg %p77
      $region18: #{neural_net_forward.11} parent=11 // pred_check_branch
        %123 = sbr.rel (%p121) target = $region20
      $region19: #{neural_net_forward.11} parent=11 // pred_region
        _
      $region20: #{neural_net_forward.11} parent=11 // pred_fallthru
        _
    $region12: #{neural_net_forward.11} parent=5 // pred_fallthru
      _
    %p124 = scmp.lt.s32.totalorder %s9, 4
    // Predicated region
    $region21: #{neural_net_forward.11} parent=5 // pred_check
      %p125 = pneg %p124
    $region22: #{neural_net_forward.11} parent=5 // pred_check_branch
      %127 = sbr.rel (%p125) target = $region24
    $region23: #{neural_net_forward.11} parent=5 // pred_region
      // Predicated region
      $region25: #{neural_net_forward.11} parent=23 // pred_check
        %p128 = pneg %p29
      $region26: #{neural_net_forward.11} parent=23 // pred_check_branch
        %130 = sbr.rel (%p128) target = $region28
      $region27: #{neural_net_forward.11} parent=23 // pred_region
        %s131 = smul.u32 49, %s9
        %p132 = scmp.lt.s32.totalorder %s131, 195
        %s133 = scalar_select %p132, %s131, 195
        %s134 = smul.addr %s133, 4
        %s135 = scalar_lea.vmem %s0, %s134
        %s136 = smul.u32 49, %s9
      $region28: #{neural_net_forward.11} parent=23 // pred_fallthru
        _
    $region24: #{neural_net_forward.11} parent=5 // pred_fallthru
      _
    %p137 = scmp.le.s32.totalorder 1, %s9
    %p138 = scmp.lt.s32.totalorder %s9, 5
    %p139 = pnand %p137, %p138
    %p140 = pneg %p139
    // Predicated region
    $region29: #{neural_net_forward.11} parent=5 // pred_check
      _
    $region30: #{neural_net_forward.11} parent=5 // pred_check_branch
      %142 = sbr.rel (%p139) target = $region32
    $region31: #{neural_net_forward.11} parent=5 // pred_region
      %s143 = ssub.s32 %s9, 1
      %s144 = smul.u32 49, %s14
      %p145 = scmp.lt.s32.totalorder %s144, 195
      %s146 = scalar_select %p145, %s144, 195
      %s147 = smul.addr %s146, 4
      %s148 = scalar_lea.vmem %s0, %s147
      %p149 = pneg %p35
      %p150 = pneg %p32
      %p151 = pneg %p56
      %p152 = pneg %p53
      %p153 = pneg %p77
      %p154 = pneg %p74
      %p155 = pneg %p103
      %p156 = pneg %p100
      %s157 = smul.u32 49, %s14
      %p158 = scmp.lt.s32.totalorder %s157, 195
      %s159 = scalar_select %p158, %s157, 195
      %s160 = smul.addr %s159, 4
      %s161 = scalar_lea.vmem %s3, %s160
      %s162 = smul.u32 49, %s14
      %p163 = scmp.lt.s32.totalorder %s162, 195
      %s164 = scalar_select %p163, %s162, 195
      %s165 = smul.addr %s164, 4
      %s166 = scalar_lea.vmem %s0, %s165
      %s167 = smul.u32 49, %s14
      %s168 = smul.u32 49, %s14
      %p169 = scmp.lt.s32.totalorder %s168, 195
      %s170 = scalar_select %p169, %s168, 195
      %s171 = smul.addr %s170, 4
      %s172 = scalar_lea.vmem %s3, %s171
      %s173 = smul.u32 49, %s14
      %v175 = vld [vmem:[%s166] sm:$0xf]
      %v176 = vld [vmem:[%s166 + $0x4] sm:$0xf]
      %v177 = vld [vmem:[%s166 + $0x8] sm:$0xf]
      %v178 = vld [vmem:[%s166 + $0xc] sm:$0xf]
      %v179 = vld [vmem:[%s166 + $0x10] sm:$0xf]
      %v180 = vld [vmem:[%s166 + $0x14] sm:$0xf]
      %v181 = vld [vmem:[%s166 + $0x18] sm:$0xf]
      %v182 = vld [vmem:[%s166 + $0x1c] sm:$0xf]
      %v183 = vld [vmem:[%s166 + $0x20] sm:$0xf]
      %v184 = vld [vmem:[%s166 + $0x24] sm:$0xf]
      %v185 = vld [vmem:[%s166 + $0x28] sm:$0xf]
      %v186 = vld [vmem:[%s166 + $0x2c] sm:$0xf]
      %v187 = vld [vmem:[%s166 + $0x30] sm:$0xf]
      %v188 = vld [vmem:[%s166 + $0x34] sm:$0xf]
      %v189 = vld [vmem:[%s166 + $0x38] sm:$0xf]
      %v190 = vld [vmem:[%s166 + $0x3c] sm:$0xf]
      %v191 = vld [vmem:[%s166 + $0x40] sm:$0xf]
      %v192 = vld [vmem:[%s166 + $0x44] sm:$0xf]
      %v193 = vld [vmem:[%s166 + $0x48] sm:$0xf]
      %v194 = vld [vmem:[%s166 + $0x4c] sm:$0xf]
      %v195 = vld [vmem:[%s166 + $0x50] sm:$0xf]
      %v196 = vld [vmem:[%s166 + $0x54] sm:$0xf]
      %v197 = vld [vmem:[%s166 + $0x58] sm:$0xf]
      %v198 = vld [vmem:[%s166 + $0x5c] sm:$0xf]
      %v199 = vld [vmem:[%s166 + $0x60] sm:$0xf]
      %v200 = vld [vmem:[%s166 + $0x64] sm:$0xf]
      %v201 = vld [vmem:[%s166 + $0x68] sm:$0xf]
      %v202 = vld [vmem:[%s166 + $0x6c] sm:$0xf]
      %v203 = vld [vmem:[%s166 + $0x70] sm:$0xf]
      %v204 = vld [vmem:[%s166 + $0x74] sm:$0xf]
      %v205 = vld [vmem:[%s166 + $0x78] sm:$0xf]
      %v206 = vld [vmem:[%s166 + $0x7c] sm:$0xf]
      %v207 = vld [vmem:[%s166 + $0x80] sm:$0xf]
      %v208 = vld [vmem:[%s166 + $0x84] sm:$0xf]
      %v209 = vld [vmem:[%s166 + $0x88] sm:$0xf]
      %v210 = vld [vmem:[%s166 + $0x8c] sm:$0xf]
      %v211 = vld [vmem:[%s166 + $0x90] sm:$0xf]
      %v212 = vld [vmem:[%s166 + $0x94] sm:$0xf]
      %v213 = vld [vmem:[%s166 + $0x98] sm:$0xf]
      %v214 = vld [vmem:[%s166 + $0x9c] sm:$0xf]
      %v215 = vld [vmem:[%s166 + $0xa0] sm:$0xf]
      %v216 = vld [vmem:[%s166 + $0xa4] sm:$0xf]
      %v217 = vld [vmem:[%s166 + $0xa8] sm:$0xf]
      %v218 = vld [vmem:[%s166 + $0xac] sm:$0xf]
      %v219 = vld [vmem:[%s166 + $0xb0] sm:$0xf]
      %v220 = vld [vmem:[%s166 + $0xb4] sm:$0xf]
      %v221 = vld [vmem:[%s166 + $0xb8] sm:$0xf]
      %v222 = vld [vmem:[%s166 + $0xbc] sm:$0xf]
      %v223 = vld [vmem:[%s166 + $0xc0] sm:$0xf]
      %v224 = vld [vmem:[%s1] sm:$0xf]
      %v225 = vld [vmem:[%s1 + $0x4] sm:$0xf]
      %v226 = vld [vmem:[%s1 + $0x8] sm:$0xf]
      %v227 = vld [vmem:[%s1 + $0xc] sm:$0xf]
      %v228 = vld [vmem:[%s1 + $0x10] sm:$0xf]
      %v229 = vld [vmem:[%s1 + $0x14] sm:$0xf]
      %v230 = vld [vmem:[%s1 + $0x18] sm:$0xf]
      %v231 = vld [vmem:[%s1 + $0x1c] sm:$0xf]
      %v232 = vld [vmem:[%s2] sm:$0x1]
      %v234 = vperm.slane %v232, 0
      %v285 = vunpack.c.l.b16 %v175
      %v286 = vunpack.c.l.b16 %v176
      %v287 = vunpack.c.l.b16 %v177
      %v288 = vunpack.c.l.b16 %v178
      %v289 = vunpack.c.l.b16 %v179
      %v290 = vunpack.c.l.b16 %v180
      %v291 = vunpack.c.l.b16 %v181
      %v292 = vunpack.c.l.b16 %v182
      %v293 = vunpack.c.l.b16 %v183
      %v294 = vunpack.c.l.b16 %v184
      %v295 = vunpack.c.l.b16 %v185
      %v296 = vunpack.c.l.b16 %v186
      %v297 = vunpack.c.l.b16 %v187
      %v298 = vunpack.c.l.b16 %v188
      %v299 = vunpack.c.l.b16 %v189
      %v300 = vunpack.c.l.b16 %v190
      %v301 = vunpack.c.l.b16 %v191
      %v302 = vunpack.c.l.b16 %v192
      %v303 = vunpack.c.l.b16 %v193
      %v304 = vunpack.c.l.b16 %v194
      %v305 = vunpack.c.l.b16 %v195
      %v306 = vunpack.c.l.b16 %v196
      %v307 = vunpack.c.l.b16 %v197
      %v308 = vunpack.c.l.b16 %v198
      %v309 = vunpack.c.l.b16 %v199
      %v310 = vunpack.c.l.b16 %v200
      %v311 = vunpack.c.l.b16 %v201
      %v312 = vunpack.c.l.b16 %v202
      %v313 = vunpack.c.l.b16 %v203
      %v314 = vunpack.c.l.b16 %v204
      %v315 = vunpack.c.l.b16 %v205
      %v316 = vunpack.c.l.b16 %v206
      %v317 = vunpack.c.l.b16 %v207
      %v318 = vunpack.c.l.b16 %v208
      %v319 = vunpack.c.l.b16 %v209
      %v320 = vunpack.c.l.b16 %v210
      %v321 = vunpack.c.l.b16 %v211
      %v322 = vunpack.c.l.b16 %v212
      %v323 = vunpack.c.l.b16 %v213
      %v324 = vunpack.c.l.b16 %v214
      %v325 = vunpack.c.l.b16 %v215
      %v326 = vunpack.c.l.b16 %v216
      %v327 = vunpack.c.l.b16 %v217
      %v328 = vunpack.c.l.b16 %v218
      %v329 = vunpack.c.l.b16 %v219
      %v330 = vunpack.c.l.b16 %v220
      %v331 = vunpack.c.l.b16 %v221
      %v332 = vunpack.c.l.b16 %v222
      %v333 = vunpack.c.l.b16 %v223
      %v334 = vpack.c.b16 %v286, %v285
      %v335 = vpack.c.b16 %v288, %v287
      %v336 = vpack.c.b16 %v290, %v289
      %v337 = vpack.c.b16 %v292, %v291
      %v338 = vpack.c.b16 %v294, %v293
      %v339 = vpack.c.b16 %v296, %v295
      %v340 = vpack.c.b16 %v298, %v297
      %v341 = vpack.c.b16 %v300, %v299
      %v342 = vpack.c.b16 %v302, %v301
      %v343 = vpack.c.b16 %v304, %v303
      %v344 = vpack.c.b16 %v306, %v305
      %v345 = vpack.c.b16 %v308, %v307
      %v346 = vpack.c.b16 %v310, %v309
      %v347 = vpack.c.b16 %v312, %v311
      %v348 = vpack.c.b16 %v314, %v313
      %v349 = vpack.c.b16 %v316, %v315
      %v350 = vpack.c.b16 %v318, %v317
      %v351 = vpack.c.b16 %v320, %v319
      %v352 = vpack.c.b16 %v322, %v321
      %v353 = vpack.c.b16 %v324, %v323
      %v354 = vpack.c.b16 %v326, %v325
      %v355 = vpack.c.b16 %v328, %v327
      %v356 = vpack.c.b16 %v330, %v329
      %v357 = vpack.c.b16 %v332, %v331
      %v358 = vpack.c.b16 %v333, %v333
      %v367 = vunpack.c.l.b16 %v224
      %v368 = vunpack.c.l.b16 %v225
      %v369 = vunpack.c.l.b16 %v226
      %v370 = vunpack.c.l.b16 %v227
      %v371 = vunpack.c.l.b16 %v228
      %v372 = vunpack.c.l.b16 %v229
      %v373 = vunpack.c.l.b16 %v230
      %v374 = vunpack.c.l.b16 %v231
      %v375 = vpack.c.b16 %v368, %v367
      %v376 = vpack.c.b16 %v370, %v369
      %v377 = vpack.c.b16 %v372, %v371
      %v378 = vpack.c.b16 %v374, %v373
      %vm383 = vcmask 523264
      %v385 = vsel %vm383, %v334, 0
      %v388 = vsel %vm383, %v335, 0
      %v391 = vsel %vm383, %v336, 0
      %v394 = vsel %vm383, %v337, 0
      %v397 = vsel %vm383, %v338, 0
      %v400 = vsel %vm383, %v339, 0
      %v403 = vsel %vm383, %v340, 0
      %v406 = vsel %vm383, %v341, 0
      %v409 = vsel %vm383, %v342, 0
      %v412 = vsel %vm383, %v343, 0
      %v415 = vsel %vm383, %v344, 0
      %v418 = vsel %vm383, %v345, 0
      %v421 = vsel %vm383, %v346, 0
      %v424 = vsel %vm383, %v347, 0
      %v427 = vsel %vm383, %v348, 0
      %v430 = vsel %vm383, %v349, 0
      %v433 = vsel %vm383, %v350, 0
      %v436 = vsel %vm383, %v351, 0
      %v439 = vsel %vm383, %v352, 0
      %v442 = vsel %vm383, %v353, 0
      %v445 = vsel %vm383, %v354, 0
      %v448 = vsel %vm383, %v355, 0
      %v451 = vsel %vm383, %v356, 0
      %v454 = vsel %vm383, %v357, 0
      %v457 = vsel %vm383, %v358, 0
      %459 = vmatpush.bf16.msra.mxu0 0
      %460 = vmatpush.bf16.msra.mxu0 0
      %461 = vmatpush.bf16.msra.mxu0 0
      %462 = vmatpush.bf16.msra.mxu0 0
      %463 = vmatpush.bf16.msra.mxu0 %v378
      %464 = vmatpush.bf16.msra.mxu0 %v377
      %465 = vmatpush.bf16.msra.mxu0 %v376
      %466 = vmatpush.bf16.msra.mxu0 %v375
      %467 = vmatmul.bf16.gmra.mxu0 %v385
      %v468 = vpop.f32.mrf.mxu0
      %v469 = vadd.f32 %v234, %v468
      %v470 = vpop.f32.mrf.mxu0
      %v471 = vadd.f32 %v234, %v470
      %472 = vmatmul.bf16.gmra.mxu0 %v388
      %v473 = vpop.f32.mrf.mxu0
      %v474 = vadd.f32 %v234, %v473
      %v475 = vpop.f32.mrf.mxu0
      %v476 = vadd.f32 %v234, %v475
      %477 = vmatmul.bf16.gmra.mxu0 %v391
      %v478 = vpop.f32.mrf.mxu0
      %v479 = vadd.f32 %v234, %v478
      %v480 = vpop.f32.mrf.mxu0
      %v481 = vadd.f32 %v234, %v480
      %482 = vmatmul.bf16.gmra.mxu0 %v394
      %v483 = vpop.f32.mrf.mxu0
      %v484 = vadd.f32 %v234, %v483
      %v485 = vpop.f32.mrf.mxu0
      %v486 = vadd.f32 %v234, %v485
      %487 = vmatmul.bf16.gmra.mxu0 %v397
      %v488 = vpop.f32.mrf.mxu0
      %v489 = vadd.f32 %v234, %v488
      %v490 = vpop.f32.mrf.mxu0
      %v491 = vadd.f32 %v234, %v490
      %492 = vmatmul.bf16.gmra.mxu0 %v400
      %v493 = vpop.f32.mrf.mxu0
      %v494 = vadd.f32 %v234, %v493
      %v495 = vpop.f32.mrf.mxu0
      %v496 = vadd.f32 %v234, %v495
      %497 = vmatmul.bf16.gmra.mxu0 %v403
      %v498 = vpop.f32.mrf.mxu0
      %v499 = vadd.f32 %v234, %v498
      %v500 = vpop.f32.mrf.mxu0
      %v501 = vadd.f32 %v234, %v500
      %502 = vmatmul.bf16.gmra.mxu0 %v406
      %v503 = vpop.f32.mrf.mxu0
      %v504 = vadd.f32 %v234, %v503
      %v505 = vpop.f32.mrf.mxu0
      %v506 = vadd.f32 %v234, %v505
      %507 = vmatmul.bf16.gmra.mxu0 %v409
      %v508 = vpop.f32.mrf.mxu0
      %v509 = vadd.f32 %v234, %v508
      %v510 = vpop.f32.mrf.mxu0
      %v511 = vadd.f32 %v234, %v510
      %512 = vmatmul.bf16.gmra.mxu0 %v412
      %v513 = vpop.f32.mrf.mxu0
      %v514 = vadd.f32 %v234, %v513
      %v515 = vpop.f32.mrf.mxu0
      %v516 = vadd.f32 %v234, %v515
      %517 = vmatmul.bf16.gmra.mxu0 %v415
      %v518 = vpop.f32.mrf.mxu0
      %v519 = vadd.f32 %v234, %v518
      %v520 = vpop.f32.mrf.mxu0
      %v521 = vadd.f32 %v234, %v520
      %522 = vmatmul.bf16.gmra.mxu0 %v418
      %v523 = vpop.f32.mrf.mxu0
      %v524 = vadd.f32 %v234, %v523
      %v525 = vpop.f32.mrf.mxu0
      %v526 = vadd.f32 %v234, %v525
      %527 = vmatmul.bf16.gmra.mxu0 %v421
      %v528 = vpop.f32.mrf.mxu0
      %v529 = vadd.f32 %v234, %v528
      %v530 = vpop.f32.mrf.mxu0
      %v531 = vadd.f32 %v234, %v530
      %532 = vmatmul.bf16.gmra.mxu0 %v424
      %v533 = vpop.f32.mrf.mxu0
      %v534 = vadd.f32 %v234, %v533
      %v535 = vpop.f32.mrf.mxu0
      %v536 = vadd.f32 %v234, %v535
      %537 = vmatmul.bf16.gmra.mxu0 %v427
      %v538 = vpop.f32.mrf.mxu0
      %v539 = vadd.f32 %v234, %v538
      %v540 = vpop.f32.mrf.mxu0
      %v541 = vadd.f32 %v234, %v540
      %542 = vmatmul.bf16.gmra.mxu0 %v430
      %v543 = vpop.f32.mrf.mxu0
      %v544 = vadd.f32 %v234, %v543
      %v545 = vpop.f32.mrf.mxu0
      %v546 = vadd.f32 %v234, %v545
      %547 = vmatmul.bf16.gmra.mxu0 %v433
      %v548 = vpop.f32.mrf.mxu0
      %v549 = vadd.f32 %v234, %v548
      %v550 = vpop.f32.mrf.mxu0
      %v551 = vadd.f32 %v234, %v550
      %552 = vmatmul.bf16.gmra.mxu0 %v436
      %v553 = vpop.f32.mrf.mxu0
      %v554 = vadd.f32 %v234, %v553
      %v555 = vpop.f32.mrf.mxu0
      %v556 = vadd.f32 %v234, %v555
      %557 = vmatmul.bf16.gmra.mxu0 %v439
      %v558 = vpop.f32.mrf.mxu0
      %v559 = vadd.f32 %v234, %v558
      %v560 = vpop.f32.mrf.mxu0
      %v561 = vadd.f32 %v234, %v560
      %562 = vmatmul.bf16.gmra.mxu0 %v442
      %v563 = vpop.f32.mrf.mxu0
      %v564 = vadd.f32 %v234, %v563
      %v565 = vpop.f32.mrf.mxu0
      %v566 = vadd.f32 %v234, %v565
      %567 = vmatmul.bf16.gmra.mxu0 %v445
      %v568 = vpop.f32.mrf.mxu0
      %v569 = vadd.f32 %v234, %v568
      %v570 = vpop.f32.mrf.mxu0
      %v571 = vadd.f32 %v234, %v570
      %572 = vmatmul.bf16.gmra.mxu0 %v448
      %v573 = vpop.f32.mrf.mxu0
      %v574 = vadd.f32 %v234, %v573
      %v575 = vpop.f32.mrf.mxu0
      %v576 = vadd.f32 %v234, %v575
      %577 = vmatmul.bf16.gmra.mxu0 %v451
      %v578 = vpop.f32.mrf.mxu0
      %v579 = vadd.f32 %v234, %v578
      %v580 = vpop.f32.mrf.mxu0
      %v581 = vadd.f32 %v234, %v580
      %582 = vmatmul.bf16.gmra.mxu0 %v454
      %v583 = vpop.f32.mrf.mxu0
      %v584 = vadd.f32 %v234, %v583
      %v585 = vpop.f32.mrf.mxu0
      %v586 = vadd.f32 %v234, %v585
      %587 = vmatmul.bf16.gmra.mxu0 %v457
      %v588 = vpop.f32.mrf.mxu0
      %v589 = vadd.f32 %v234, %v588
      %v590 = vpop.f32.mrf.mxu0
      %591 = vdwg.mxu0
      %v592 = vmax.f32 %v469, 0.0
      %v593 = vmax.f32 %v471, 0.0
      %v594 = vmax.f32 %v474, 0.0
      %v595 = vmax.f32 %v476, 0.0
      %v596 = vmax.f32 %v479, 0.0
      %v597 = vmax.f32 %v481, 0.0
      %v598 = vmax.f32 %v484, 0.0
      %v599 = vmax.f32 %v486, 0.0
      %v600 = vmax.f32 %v489, 0.0
      %v601 = vmax.f32 %v491, 0.0
      %v602 = vmax.f32 %v494, 0.0
      %v603 = vmax.f32 %v496, 0.0
      %v604 = vmax.f32 %v499, 0.0
      %v605 = vmax.f32 %v501, 0.0
      %v606 = vmax.f32 %v504, 0.0
      %v607 = vmax.f32 %v506, 0.0
      %v608 = vmax.f32 %v509, 0.0
      %v609 = vmax.f32 %v511, 0.0
      %v610 = vmax.f32 %v514, 0.0
      %v611 = vmax.f32 %v516, 0.0
      %v612 = vmax.f32 %v519, 0.0
      %v613 = vmax.f32 %v521, 0.0
      %v614 = vmax.f32 %v524, 0.0
      %v615 = vmax.f32 %v526, 0.0
      %v616 = vmax.f32 %v529, 0.0
      %v617 = vmax.f32 %v531, 0.0
      %v618 = vmax.f32 %v534, 0.0
      %v619 = vmax.f32 %v536, 0.0
      %v620 = vmax.f32 %v539, 0.0
      %v621 = vmax.f32 %v541, 0.0
      %v622 = vmax.f32 %v544, 0.0
      %v623 = vmax.f32 %v546, 0.0
      %v624 = vmax.f32 %v549, 0.0
      %v625 = vmax.f32 %v551, 0.0
      %v626 = vmax.f32 %v554, 0.0
      %v627 = vmax.f32 %v556, 0.0
      %v628 = vmax.f32 %v559, 0.0
      %v629 = vmax.f32 %v561, 0.0
      %v630 = vmax.f32 %v564, 0.0
      %v631 = vmax.f32 %v566, 0.0
      %v632 = vmax.f32 %v569, 0.0
      %v633 = vmax.f32 %v571, 0.0
      %v634 = vmax.f32 %v574, 0.0
      %v635 = vmax.f32 %v576, 0.0
      %v636 = vmax.f32 %v579, 0.0
      %v637 = vmax.f32 %v581, 0.0
      %v638 = vmax.f32 %v584, 0.0
      %v639 = vmax.f32 %v586, 0.0
      %v640 = vmax.f32 %v589, 0.0
      %v641 = vpack.c.bf16 %v592, %v592
      %v642 = vpack.c.bf16 %v593, %v593
      %v643 = vpack.c.bf16 %v594, %v594
      %v644 = vpack.c.bf16 %v595, %v595
      %v645 = vpack.c.bf16 %v596, %v596
      %v646 = vpack.c.bf16 %v597, %v597
      %v647 = vpack.c.bf16 %v598, %v598
      %v648 = vpack.c.bf16 %v599, %v599
      %v649 = vpack.c.bf16 %v600, %v600
      %v650 = vpack.c.bf16 %v601, %v601
      %v651 = vpack.c.bf16 %v602, %v602
      %v652 = vpack.c.bf16 %v603, %v603
      %v653 = vpack.c.bf16 %v604, %v604
      %v654 = vpack.c.bf16 %v605, %v605
      %v655 = vpack.c.bf16 %v606, %v606
      %v656 = vpack.c.bf16 %v607, %v607
      %v657 = vpack.c.bf16 %v608, %v608
      %v658 = vpack.c.bf16 %v609, %v609
      %v659 = vpack.c.bf16 %v610, %v610
      %v660 = vpack.c.bf16 %v611, %v611
      %v661 = vpack.c.bf16 %v612, %v612
      %v662 = vpack.c.bf16 %v613, %v613
      %v663 = vpack.c.bf16 %v614, %v614
      %v664 = vpack.c.bf16 %v615, %v615
      %v665 = vpack.c.bf16 %v616, %v616
      %v666 = vpack.c.bf16 %v617, %v617
      %v667 = vpack.c.bf16 %v618, %v618
      %v668 = vpack.c.bf16 %v619, %v619
      %v669 = vpack.c.bf16 %v620, %v620
      %v670 = vpack.c.bf16 %v621, %v621
      %v671 = vpack.c.bf16 %v622, %v622
      %v672 = vpack.c.bf16 %v623, %v623
      %v673 = vpack.c.bf16 %v624, %v624
      %v674 = vpack.c.bf16 %v625, %v625
      %v675 = vpack.c.bf16 %v626, %v626
      %v676 = vpack.c.bf16 %v627, %v627
      %v677 = vpack.c.bf16 %v628, %v628
      %v678 = vpack.c.bf16 %v629, %v629
      %v679 = vpack.c.bf16 %v630, %v630
      %v680 = vpack.c.bf16 %v631, %v631
      %v681 = vpack.c.bf16 %v632, %v632
      %v682 = vpack.c.bf16 %v633, %v633
      %v683 = vpack.c.bf16 %v634, %v634
      %v684 = vpack.c.bf16 %v635, %v635
      %v685 = vpack.c.bf16 %v636, %v636
      %v686 = vpack.c.bf16 %v637, %v637
      %v687 = vpack.c.bf16 %v638, %v638
      %v688 = vpack.c.bf16 %v639, %v639
      %v689 = vpack.c.bf16 %v640, %v640
      %690 = vst [vmem:[%s172] sm:$0xf] %v641
      %691 = vst [vmem:[%s172 + $0x4] sm:$0xf] %v642
      %692 = vst [vmem:[%s172 + $0x8] sm:$0xf] %v643
      %693 = vst [vmem:[%s172 + $0xc] sm:$0xf] %v644
      %694 = vst [vmem:[%s172 + $0x10] sm:$0xf] %v645
      %695 = vst [vmem:[%s172 + $0x14] sm:$0xf] %v646
      %696 = vst [vmem:[%s172 + $0x18] sm:$0xf] %v647
      %697 = vst [vmem:[%s172 + $0x1c] sm:$0xf] %v648
      %698 = vst [vmem:[%s172 + $0x20] sm:$0xf] %v649
      %699 = vst [vmem:[%s172 + $0x24] sm:$0xf] %v650
      %700 = vst [vmem:[%s172 + $0x28] sm:$0xf] %v651
      %701 = vst [vmem:[%s172 + $0x2c] sm:$0xf] %v652
      %702 = vst [vmem:[%s172 + $0x30] sm:$0xf] %v653
      %703 = vst [vmem:[%s172 + $0x34] sm:$0xf] %v654
      %704 = vst [vmem:[%s172 + $0x38] sm:$0xf] %v655
      %705 = vst [vmem:[%s172 + $0x3c] sm:$0xf] %v656
      %706 = vst [vmem:[%s172 + $0x40] sm:$0xf] %v657
      %707 = vst [vmem:[%s172 + $0x44] sm:$0xf] %v658
      %708 = vst [vmem:[%s172 + $0x48] sm:$0xf] %v659
      %709 = vst [vmem:[%s172 + $0x4c] sm:$0xf] %v660
      %710 = vst [vmem:[%s172 + $0x50] sm:$0xf] %v661
      %711 = vst [vmem:[%s172 + $0x54] sm:$0xf] %v662
      %712 = vst [vmem:[%s172 + $0x58] sm:$0xf] %v663
      %713 = vst [vmem:[%s172 + $0x5c] sm:$0xf] %v664
      %714 = vst [vmem:[%s172 + $0x60] sm:$0xf] %v665
      %715 = vst [vmem:[%s172 + $0x64] sm:$0xf] %v666
      %716 = vst [vmem:[%s172 + $0x68] sm:$0xf] %v667
      %717 = vst [vmem:[%s172 + $0x6c] sm:$0xf] %v668
      %718 = vst [vmem:[%s172 + $0x70] sm:$0xf] %v669
      %719 = vst [vmem:[%s172 + $0x74] sm:$0xf] %v670
      %720 = vst [vmem:[%s172 + $0x78] sm:$0xf] %v671
      %721 = vst [vmem:[%s172 + $0x7c] sm:$0xf] %v672
      %722 = vst [vmem:[%s172 + $0x80] sm:$0xf] %v673
      %723 = vst [vmem:[%s172 + $0x84] sm:$0xf] %v674
      %724 = vst [vmem:[%s172 + $0x88] sm:$0xf] %v675
      %725 = vst [vmem:[%s172 + $0x8c] sm:$0xf] %v676
      %726 = vst [vmem:[%s172 + $0x90] sm:$0xf] %v677
      %727 = vst [vmem:[%s172 + $0x94] sm:$0xf] %v678
      %728 = vst [vmem:[%s172 + $0x98] sm:$0xf] %v679
      %729 = vst [vmem:[%s172 + $0x9c] sm:$0xf] %v680
      %730 = vst [vmem:[%s172 + $0xa0] sm:$0xf] %v681
      %731 = vst [vmem:[%s172 + $0xa4] sm:$0xf] %v682
      %732 = vst [vmem:[%s172 + $0xa8] sm:$0xf] %v683
      %733 = vst [vmem:[%s172 + $0xac] sm:$0xf] %v684
      %734 = vst [vmem:[%s172 + $0xb0] sm:$0xf] %v685
      %735 = vst [vmem:[%s172 + $0xb4] sm:$0xf] %v686
      %736 = vst [vmem:[%s172 + $0xb8] sm:$0xf] %v687
      %737 = vst [vmem:[%s172 + $0xbc] sm:$0xf] %v688
      %738 = vst [vmem:[%s172 + $0xc0] sm:$0xf] %v689
      %s739 = smul.u32 49, %s14
      %p740 = scmp.lt.s32.totalorder %s739, 195
      %s741 = scalar_select %p740, %s739, 195
      %s742 = smul.addr %s741, 4
      %s743 = scalar_lea.vmem %s3, %s742
      // Predicated region
      $region33: #{neural_net_forward.11} parent=31 // pred_check
        %p744 = pneg %p100
      $region34: #{neural_net_forward.11} parent=31 // pred_check_branch
        %746 = sbr.rel (%p744) target = $region36
      $region35: #{neural_net_forward.11} parent=31 // pred_region
        %s747 = smul.u32 49, %s14
      $region36: #{neural_net_forward.11} parent=31 // pred_fallthru
        _
    $region32: #{neural_net_forward.11} parent=5 // pred_fallthru
      _
    %p748 = scmp.le.s32.totalorder 2, %s9
    // Predicated region
    $region37: #{neural_net_forward.11} parent=5 // pred_check
      %p749 = pneg %p748
    $region38: #{neural_net_forward.11} parent=5 // pred_check_branch
      %751 = sbr.rel (%p749) target = $region40
    $region39: #{neural_net_forward.11} parent=5 // pred_region
      %s752 = ssub.s32 %s9, 2
      // Predicated region
      $region41: #{neural_net_forward.11} parent=39 // pred_check
        %p753 = pneg %p106
      $region42: #{neural_net_forward.11} parent=39 // pred_check_branch
        %755 = sbr.rel (%p753) target = $region44
      $region43: #{neural_net_forward.11} parent=39 // pred_region
        %s756 = smul.u32 49, %s15
        %p757 = scmp.lt.s32.totalorder %s756, 195
        %s758 = scalar_select %p757, %s756, 195
        %s759 = smul.addr %s758, 4
        %s760 = scalar_lea.vmem %s3, %s759
      $region44: #{neural_net_forward.11} parent=39 // pred_fallthru
        _
    $region40: #{neural_net_forward.11} parent=5 // pred_fallthru
      _
  $region6: #{neural_net_forward.11} parent=0 // loop_footer
    %s13 = sadd.s32 1, %s9
  $region7: #{neural_net_forward.11} parent=0 // loop_footer_branch
    %8 = sbr.rel target = $region3
  $region8: #{neural_net_forward.11} parent=0 // loop_exit
    _

// kernel: neural_net_forward.12
$region0: #{neural_net_forward.12}
  #allocation0 [shape = 'u32[]', space=smem, size = 0x4, offset = 0x4, fixed_abs, tag = 'smem constant byte address 0x4 - core index']
  #allocation1 [shape = 'u32[72,128]{1,0:T(1,128)}', space=vmem, size = 0x9000, scoped, tag = 'internal scratch']
  %s0 = inlined_call_operand.vmem [shape: bf16[1568,752], index: 0, kind: input, shape index: {}]
  %s1 = inlined_call_operand.vmem [shape: bf16[752,128], index: 1, kind: input, shape index: {}]
  %s2 = inlined_call_operand.vmem [shape: f32[1,128], index: 2, kind: input, shape index: {}]
  %s3 = inlined_call_operand.vmem [shape: bf16[1568,128], index: 3, kind: output, shape index: {}]
  %s4 = sld [smem:[#allocation0]]
  $region45: #{neural_net_forward.12} parent=0
    _
  %s6 = ssub.s32 1, %s4
  %s7 = scalar_select 0, %s6, %s4
  loop: start=0, step=1, limit=6
  $region2: #{neural_net_forward.12} parent=0 // loop_pre_header
    _
  $region3: #{neural_net_forward.12} parent=0 // loop_header
    %s9 = sphi 0, %s13
    %p10 = scmp.ge.s32.totalorder %s9, 6
    %s19 = sphi 0, %s21
    %s22 = sphi 0, %s19
    %s23 = sphi 0, %s22
    %s39 = sphi 0, %s23
    %s43 = sphi 0, %s43
    %s45 = sphi 0, %s43
    %s46 = sphi 0, %s45
    %s60 = sphi 0, %s46
    %s64 = sphi 0, %s64
    %s66 = sphi 0, %s64
    %s67 = sphi 0, %s66
    %s81 = sphi 0, %s67
    %s87 = sphi 0, %s89
    %s90 = sphi 0, %s87
    %s91 = sphi 0, %s90
    %s107 = sphi 0, %s91
  $region4: #{neural_net_forward.12} parent=0 // loop_header_branch
    %12 = sbr.rel (%p10) target = $region8
  $region5: #{neural_net_forward.12} parent=0 // loop_body
    %s14 = ssub.s32 %s9, 1
    %s15 = ssub.s32 %s9, 2
    %s16 = sadd.s32 %s9, 1
    %s17 = ssub.s32 %s9, %s16
    %p18 = scmp.eq.s32.totalorder %s17, 0
    %s20 = sadd.s32 %s19, 1
    %s21 = scalar_select %p18, %s19, %s20
    %p24 = pneg %p18
    %p25 = scmp.eq.s32.totalorder %s9, 3
    %p26 = por %p24, %p25
    %p27 = scmp.ne.s32.totalorder %s19, %s22
    %p28 = scmp.eq.s32.totalorder %s9, 0
    %p29 = por %p27, %p28
    %p30 = scmp.ne.s32.totalorder %s19, %s22
    %p31 = scmp.eq.s32.totalorder %s14, 3
    %p32 = por %p30, %p31
    %p33 = scmp.ne.s32.totalorder %s22, %s23
    %p34 = scmp.eq.s32.totalorder %s14, 0
    %p35 = por %p33, %p34
    %p36 = scmp.ne.s32.totalorder %s22, %s23
    %p37 = scmp.eq.s32.totalorder %s15, 3
    %p38 = por %p36, %p37
    %p40 = scmp.ne.s32.totalorder %s23, %s39
    %p41 = scmp.eq.s32.totalorder %s15, 0
    %p42 = por %p40, %p41
    %s44 = sadd.s32 %s43, 1
    %p47 = scmp.eq.s32.totalorder %s9, 3
    %p48 = scmp.ne.s32.totalorder %s43, %s45
    %p49 = scmp.eq.s32.totalorder %s9, 0
    %p50 = por %p48, %p49
    %p51 = scmp.ne.s32.totalorder %s43, %s45
    %p52 = scmp.eq.s32.totalorder %s14, 3
    %p53 = por %p51, %p52
    %p54 = scmp.ne.s32.totalorder %s45, %s46
    %p55 = scmp.eq.s32.totalorder %s14, 0
    %p56 = por %p54, %p55
    %p57 = scmp.ne.s32.totalorder %s45, %s46
    %p58 = scmp.eq.s32.totalorder %s15, 3
    %p59 = por %p57, %p58
    %p61 = scmp.ne.s32.totalorder %s46, %s60
    %p62 = scmp.eq.s32.totalorder %s15, 0
    %p63 = por %p61, %p62
    %s65 = sadd.s32 %s64, 1
    %p68 = scmp.eq.s32.totalorder %s9, 3
    %p69 = scmp.ne.s32.totalorder %s64, %s66
    %p70 = scmp.eq.s32.totalorder %s9, 0
    %p71 = por %p69, %p70
    %p72 = scmp.ne.s32.totalorder %s64, %s66
    %p73 = scmp.eq.s32.totalorder %s14, 3
    %p74 = por %p72, %p73
    %p75 = scmp.ne.s32.totalorder %s66, %s67
    %p76 = scmp.eq.s32.totalorder %s14, 0
    %p77 = por %p75, %p76
    %p78 = scmp.ne.s32.totalorder %s66, %s67
    %p79 = scmp.eq.s32.totalorder %s15, 3
    %p80 = por %p78, %p79
    %p82 = scmp.ne.s32.totalorder %s67, %s81
    %p83 = scmp.eq.s32.totalorder %s15, 0
    %p84 = por %p82, %p83
    %s85 = ssub.s32 %s9, %s16
    %p86 = scmp.eq.s32.totalorder %s85, 0
    %s88 = sadd.s32 %s87, 1
    %s89 = scalar_select %p86, %s87, %s88
    %p92 = pneg %p86
    %p93 = scmp.eq.s32.totalorder %s9, 3
    %p94 = por %p92, %p93
    %p95 = scmp.ne.s32.totalorder %s87, %s90
    %p96 = scmp.eq.s32.totalorder %s9, 0
    %p97 = por %p95, %p96
    %p98 = scmp.ne.s32.totalorder %s87, %s90
    %p99 = scmp.eq.s32.totalorder %s14, 3
    %p100 = por %p98, %p99
    %p101 = scmp.ne.s32.totalorder %s90, %s91
    %p102 = scmp.eq.s32.totalorder %s14, 0
    %p103 = por %p101, %p102
    %p104 = scmp.ne.s32.totalorder %s90, %s91
    %p105 = scmp.eq.s32.totalorder %s15, 3
    %p106 = por %p104, %p105
    %p108 = scmp.ne.s32.totalorder %s91, %s107
    %p109 = scmp.eq.s32.totalorder %s15, 0
    %p110 = por %p108, %p109
    %p111 = scmp.le.s32.totalorder 1, %s9
    %p112 = scmp.lt.s32.totalorder %s9, 5
    %p113 = pnand %p111, %p112
    %p114 = pneg %p113
    // Predicated region
    $region9: #{neural_net_forward.12} parent=5 // pred_check
      _
    $region10: #{neural_net_forward.12} parent=5 // pred_check_branch
      %116 = sbr.rel (%p113) target = $region12
    $region11: #{neural_net_forward.12} parent=5 // pred_region
      %s117 = ssub.s32 %s9, 1
      // Predicated region
      $region13: #{neural_net_forward.12} parent=11 // pred_check
        %p118 = pneg %p56
      $region14: #{neural_net_forward.12} parent=11 // pred_check_branch
        %120 = sbr.rel (%p118) target = $region16
      $region15: #{neural_net_forward.12} parent=11 // pred_region
        _
      $region16: #{neural_net_forward.12} parent=11 // pred_fallthru
        _
      // Predicated region
      $region17: #{neural_net_forward.12} parent=11 // pred_check
        %p121 = pneg %p77
      $region18: #{neural_net_forward.12} parent=11 // pred_check_branch
        %123 = sbr.rel (%p121) target = $region20
      $region19: #{neural_net_forward.12} parent=11 // pred_region
        _
      $region20: #{neural_net_forward.12} parent=11 // pred_fallthru
        _
    $region12: #{neural_net_forward.12} parent=5 // pred_fallthru
      _
    %p124 = scmp.lt.s32.totalorder %s9, 4
    // Predicated region
    $region21: #{neural_net_forward.12} parent=5 // pred_check
      %p125 = pneg %p124
    $region22: #{neural_net_forward.12} parent=5 // pred_check_branch
      %127 = sbr.rel (%p125) target = $region24
    $region23: #{neural_net_forward.12} parent=5 // pred_region
      // Predicated region
      $region25: #{neural_net_forward.12} parent=23 // pred_check
        %p128 = pneg %p29
      $region26: #{neural_net_forward.12} parent=23 // pred_check_branch
        %130 = sbr.rel (%p128) target = $region28
      $region27: #{neural_net_forward.12} parent=23 // pred_region
        %s131 = smul.u32 49, %s9
        %p132 = scmp.lt.s32.totalorder %s131, 195
        %s133 = scalar_select %p132, %s131, 195
        %s134 = smul.addr %s133, 6
        %s135 = smul.addr %s134, 4
        %s136 = scalar_lea.vmem %s0, %s135
        %s137 = smul.u32 49, %s9
      $region28: #{neural_net_forward.12} parent=23 // pred_fallthru
        _
    $region24: #{neural_net_forward.12} parent=5 // pred_fallthru
      _
    %p138 = scmp.le.s32.totalorder 1, %s9
    %p139 = scmp.lt.s32.totalorder %s9, 5
    %p140 = pnand %p138, %p139
    %p141 = pneg %p140
    // Predicated region
    $region29: #{neural_net_forward.12} parent=5 // pred_check
      _
    $region30: #{neural_net_forward.12} parent=5 // pred_check_branch
      %143 = sbr.rel (%p140) target = $region32
    $region31: #{neural_net_forward.12} parent=5 // pred_region
      %s144 = ssub.s32 %s9, 1
      %s145 = smul.u32 49, %s14
      %p146 = scmp.lt.s32.totalorder %s145, 195
      %s147 = scalar_select %p146, %s145, 195
      %s148 = smul.addr %s147, 6
      %s149 = smul.addr %s148, 4
      %s150 = scalar_lea.vmem %s0, %s149
      %p151 = pneg %p35
      %p152 = pneg %p32
      %p153 = pneg %p56
      %p154 = pneg %p53
      %p155 = pneg %p77
      %p156 = pneg %p74
      %p157 = pneg %p103
      %p158 = pneg %p100
      %s159 = smul.u32 49, %s14
      %p160 = scmp.lt.s32.totalorder %s159, 195
      %s161 = scalar_select %p160, %s159, 195
      %s162 = smul.addr %s161, 4
      %s163 = scalar_lea.vmem %s3, %s162
      %s164 = smul.u32 49, %s14
      %p165 = scmp.lt.s32.totalorder %s164, 195
      %s166 = scalar_select %p165, %s164, 195
      %s167 = smul.addr %s166, 6
      %s168 = smul.addr %s167, 4
      %s169 = scalar_lea.vmem %s0, %s168
      %s170 = smul.u32 49, %s14
      %s171 = smul.u32 49, %s14
      %p172 = scmp.lt.s32.totalorder %s171, 195
      %s173 = scalar_select %p172, %s171, 195
      %s174 = smul.addr %s173, 4
      %s175 = scalar_lea.vmem %s3, %s174
      %s176 = smul.u32 49, %s14
      %v178 = vld [vmem:[%s169] sm:$0xff]
      %v179 = vld [vmem:[%s169 + $0x8] sm:$0xff]
      %v180 = vld [vmem:[%s169 + $0x10] sm:$0xff]
      %v181 = vld [vmem:[%s169 + $0x18] sm:$0xff]
      %v182 = vld [vmem:[%s169 + $0x20] sm:$0xff]
      %v183 = vld [vmem:[%s169 + $0x28] sm:$0xff]
      %v184 = vld [vmem:[%s169 + $0x30] sm:$0xff]
      %v185 = vld [vmem:[%s169 + $0x38] sm:$0xff]
      %v186 = vld [vmem:[%s169 + $0x40] sm:$0xff]
      %v187 = vld [vmem:[%s169 + $0x48] sm:$0xff]
      %v188 = vld [vmem:[%s169 + $0x50] sm:$0xff]
      %v189 = vld [vmem:[%s169 + $0x58] sm:$0xff]
      %v190 = vld [vmem:[%s169 + $0x60] sm:$0xff]
      %v191 = vld [vmem:[%s169 + $0x68] sm:$0xff]
      %v192 = vld [vmem:[%s169 + $0x70] sm:$0xff]
      %v193 = vld [vmem:[%s169 + $0x78] sm:$0xff]
      %v194 = vld [vmem:[%s169 + $0x80] sm:$0xff]
      %v195 = vld [vmem:[%s169 + $0x88] sm:$0xff]
      %v196 = vld [vmem:[%s169 + $0x90] sm:$0xff]
      %v197 = vld [vmem:[%s169 + $0x98] sm:$0xff]
      %v198 = vld [vmem:[%s169 + $0xa0] sm:$0xff]
      %v199 = vld [vmem:[%s169 + $0xa8] sm:$0xff]
      %v200 = vld [vmem:[%s169 + $0xb0] sm:$0xff]
      %v201 = vld [vmem:[%s169 + $0xb8] sm:$0xff]
      %v202 = vld [vmem:[%s169 + $0xc0] sm:$0xff]
      %v203 = vld [vmem:[%s169 + $0xc8] sm:$0xff]
      %v204 = vld [vmem:[%s169 + $0xd0] sm:$0xff]
      %v205 = vld [vmem:[%s169 + $0xd8] sm:$0xff]
      %v206 = vld [vmem:[%s169 + $0xe0] sm:$0xff]
      %v207 = vld [vmem:[%s169 + $0xe8] sm:$0xff]
      %v208 = vld [vmem:[%s169 + $0xf0] sm:$0xff]
      %v209 = vld [vmem:[%s169 + $0xf8] sm:$0xff]
      %v210 = vld [vmem:[%s169 + $0x100] sm:$0xff]
      %v211 = vld [vmem:[%s169 + $0x108] sm:$0xff]
      %v212 = vld [vmem:[%s169 + $0x110] sm:$0xff]
      %v213 = vld [vmem:[%s169 + $0x118] sm:$0xff]
      %v214 = vld [vmem:[%s169 + $0x120] sm:$0xff]
      %v215 = vld [vmem:[%s169 + $0x128] sm:$0xff]
      %v216 = vld [vmem:[%s169 + $0x130] sm:$0xff]
      %v217 = vld [vmem:[%s169 + $0x138] sm:$0xff]
      %v218 = vld [vmem:[%s169 + $0x140] sm:$0xff]
      %v219 = vld [vmem:[%s169 + $0x148] sm:$0xff]
      %v220 = vld [vmem:[%s169 + $0x150] sm:$0xff]
      %v221 = vld [vmem:[%s169 + $0x158] sm:$0xff]
      %v222 = vld [vmem:[%s169 + $0x160] sm:$0xff]
      %v223 = vld [vmem:[%s169 + $0x168] sm:$0xff]
      %v224 = vld [vmem:[%s169 + $0x170] sm:$0xff]
      %v225 = vld [vmem:[%s169 + $0x178] sm:$0xff]
      %v226 = vld [vmem:[%s169 + $0x180] sm:$0xff]
      %v227 = vld [vmem:[%s169 + $0x188] sm:$0xff]
      %v228 = vld [vmem:[%s169 + $0x190] sm:$0xff]
      %v229 = vld [vmem:[%s169 + $0x198] sm:$0xff]
      %v230 = vld [vmem:[%s169 + $0x1a0] sm:$0xff]
      %v231 = vld [vmem:[%s169 + $0x1a8] sm:$0xff]
      %v232 = vld [vmem:[%s169 + $0x1b0] sm:$0xff]
      %v233 = vld [vmem:[%s169 + $0x1b8] sm:$0xff]
      %v234 = vld [vmem:[%s169 + $0x1c0] sm:$0xff]
      %v235 = vld [vmem:[%s169 + $0x1c8] sm:$0xff]
      %v236 = vld [vmem:[%s169 + $0x1d0] sm:$0xff]
      %v237 = vld [vmem:[%s169 + $0x1d8] sm:$0xff]
      %v238 = vld [vmem:[%s169 + $0x1e0] sm:$0xff]
      %v239 = vld [vmem:[%s169 + $0x1e8] sm:$0xff]
      %v240 = vld [vmem:[%s169 + $0x1f0] sm:$0xff]
      %v241 = vld [vmem:[%s169 + $0x1f8] sm:$0xff]
      %v242 = vld [vmem:[%s169 + $0x200] sm:$0xff]
      %v243 = vld [vmem:[%s169 + $0x208] sm:$0xff]
      %v244 = vld [vmem:[%s169 + $0x210] sm:$0xff]
      %v245 = vld [vmem:[%s169 + $0x218] sm:$0xff]
      %v246 = vld [vmem:[%s169 + $0x220] sm:$0xff]
      %v247 = vld [vmem:[%s169 + $0x228] sm:$0xff]
      %v248 = vld [vmem:[%s169 + $0x230] sm:$0xff]
      %v249 = vld [vmem:[%s169 + $0x238] sm:$0xff]
      %v250 = vld [vmem:[%s169 + $0x240] sm:$0xff]
      %v251 = vld [vmem:[%s169 + $0x248] sm:$0xff]
      %v252 = vld [vmem:[%s169 + $0x250] sm:$0xff]
      %v253 = vld [vmem:[%s169 + $0x258] sm:$0xff]
      %v254 = vld [vmem:[%s169 + $0x260] sm:$0xff]
      %v255 = vld [vmem:[%s169 + $0x268] sm:$0xff]
      %v256 = vld [vmem:[%s169 + $0x270] sm:$0xff]
      %v257 = vld [vmem:[%s169 + $0x278] sm:$0xff]
      %v258 = vld [vmem:[%s169 + $0x280] sm:$0xff]
      %v259 = vld [vmem:[%s169 + $0x288] sm:$0xff]
      %v260 = vld [vmem:[%s169 + $0x290] sm:$0xff]
      %v261 = vld [vmem:[%s169 + $0x298] sm:$0xff]
      %v262 = vld [vmem:[%s169 + $0x2a0] sm:$0xff]
      %v263 = vld [vmem:[%s169 + $0x2a8] sm:$0xff]
      %v264 = vld [vmem:[%s169 + $0x2b0] sm:$0xff]
      %v265 = vld [vmem:[%s169 + $0x2b8] sm:$0xff]
      %v266 = vld [vmem:[%s169 + $0x2c0] sm:$0xff]
      %v267 = vld [vmem:[%s169 + $0x2c8] sm:$0xff]
      %v268 = vld [vmem:[%s169 + $0x2d0] sm:$0xff]
      %v269 = vld [vmem:[%s169 + $0x2d8] sm:$0xff]
      %v270 = vld [vmem:[%s169 + $0x2e0] sm:$0xff]
      %v271 = vld [vmem:[%s169 + $0x2e8] sm:$0xff]
      %v272 = vld [vmem:[%s169 + $0x2f0] sm:$0xff]
      %v273 = vld [vmem:[%s169 + $0x2f8] sm:$0xff]
      %v274 = vld [vmem:[%s169 + $0x300] sm:$0xff]
      %v275 = vld [vmem:[%s169 + $0x308] sm:$0xff]
      %v276 = vld [vmem:[%s169 + $0x310] sm:$0xff]
      %v277 = vld [vmem:[%s169 + $0x318] sm:$0xff]
      %v278 = vld [vmem:[%s169 + $0x320] sm:$0xff]
      %v279 = vld [vmem:[%s169 + $0x328] sm:$0xff]
      %v280 = vld [vmem:[%s169 + $0x330] sm:$0xff]
      %v281 = vld [vmem:[%s169 + $0x338] sm:$0xff]
      %v282 = vld [vmem:[%s169 + $0x340] sm:$0xff]
      %v283 = vld [vmem:[%s169 + $0x348] sm:$0xff]
      %v284 = vld [vmem:[%s169 + $0x350] sm:$0xff]
      %v285 = vld [vmem:[%s169 + $0x358] sm:$0xff]
      %v286 = vld [vmem:[%s169 + $0x360] sm:$0xff]
      %v287 = vld [vmem:[%s169 + $0x368] sm:$0xff]
      %v288 = vld [vmem:[%s169 + $0x370] sm:$0xff]
      %v289 = vld [vmem:[%s169 + $0x378] sm:$0xff]
      %v290 = vld [vmem:[%s169 + $0x380] sm:$0xff]
      %v291 = vld [vmem:[%s169 + $0x388] sm:$0xff]
      %v292 = vld [vmem:[%s169 + $0x390] sm:$0xff]
      %v293 = vld [vmem:[%s169 + $0x398] sm:$0xff]
      %v294 = vld [vmem:[%s169 + $0x3a0] sm:$0xff]
      %v295 = vld [vmem:[%s169 + $0x3a8] sm:$0xff]
      %v296 = vld [vmem:[%s169 + $0x3b0] sm:$0xff]
      %v297 = vld [vmem:[%s169 + $0x3b8] sm:$0xff]
      %v298 = vld [vmem:[%s169 + $0x3c0] sm:$0xff]
      %v299 = vld [vmem:[%s169 + $0x3c8] sm:$0xff]
      %v300 = vld [vmem:[%s169 + $0x3d0] sm:$0xff]
      %v301 = vld [vmem:[%s169 + $0x3d8] sm:$0xff]
      %v302 = vld [vmem:[%s169 + $0x3e0] sm:$0xff]
      %v303 = vld [vmem:[%s169 + $0x3e8] sm:$0xff]
      %v304 = vld [vmem:[%s169 + $0x3f0] sm:$0xff]
      %v305 = vld [vmem:[%s169 + $0x3f8] sm:$0xff]
      %v306 = vld [vmem:[%s169 + $0x400] sm:$0xff]
      %v307 = vld [vmem:[%s169 + $0x408] sm:$0xff]
      %v308 = vld [vmem:[%s169 + $0x410] sm:$0xff]
      %v309 = vld [vmem:[%s169 + $0x418] sm:$0xff]
      %v310 = vld [vmem:[%s169 + $0x420] sm:$0xff]
      %v311 = vld [vmem:[%s169 + $0x428] sm:$0xff]
      %v312 = vld [vmem:[%s169 + $0x430] sm:$0xff]
      %v313 = vld [vmem:[%s169 + $0x438] sm:$0xff]
      %v314 = vld [vmem:[%s169 + $0x440] sm:$0xff]
      %v315 = vld [vmem:[%s169 + $0x448] sm:$0xff]
      %v316 = vld [vmem:[%s169 + $0x450] sm:$0xff]
      %v317 = vld [vmem:[%s169 + $0x458] sm:$0xff]
      %v318 = vld [vmem:[%s169 + $0x460] sm:$0xff]
      %v319 = vld [vmem:[%s169 + $0x468] sm:$0xff]
      %v320 = vld [vmem:[%s169 + $0x470] sm:$0xff]
      %v321 = vld [vmem:[%s169 + $0x478] sm:$0xff]
      %v322 = vld [vmem:[%s169 + $0x480] sm:$0xff]
      %v323 = vld [vmem:[%s169 + $0x488] sm:$0xff]
      %v324 = vld [vmem:[%s169 + $0x490] sm:$0xff]
      %v325 = vld [vmem:[%s1] sm:$0xf]
      %v326 = vld [vmem:[%s1 + $0x4] sm:$0xf]
      %v327 = vld [vmem:[%s1 + $0x8] sm:$0xf]
      %v328 = vld [vmem:[%s1 + $0xc] sm:$0xf]
      %v329 = vld [vmem:[%s1 + $0x10] sm:$0xf]
      %v330 = vld [vmem:[%s1 + $0x14] sm:$0xf]
      %v331 = vld [vmem:[%s1 + $0x18] sm:$0xf]
      %v332 = vld [vmem:[%s1 + $0x1c] sm:$0xf]
      %v333 = vld [vmem:[%s1 + $0x20] sm:$0xf]
      %v334 = vld [vmem:[%s1 + $0x24] sm:$0xf]
      %v335 = vld [vmem:[%s1 + $0x28] sm:$0xf]
      %v336 = vld [vmem:[%s1 + $0x2c] sm:$0xf]
      %v337 = vld [vmem:[%s1 + $0x30] sm:$0xf]
      %v338 = vld [vmem:[%s1 + $0x34] sm:$0xf]
      %v339 = vld [vmem:[%s1 + $0x38] sm:$0xf]
      %v340 = vld [vmem:[%s1 + $0x3c] sm:$0xf]
      %v341 = vld [vmem:[%s1 + $0x40] sm:$0xf]
      %v342 = vld [vmem:[%s1 + $0x44] sm:$0xf]
      %v343 = vld [vmem:[%s1 + $0x48] sm:$0xf]
      %v344 = vld [vmem:[%s1 + $0x4c] sm:$0xf]
      %v345 = vld [vmem:[%s1 + $0x50] sm:$0xf]
      %v346 = vld [vmem:[%s1 + $0x54] sm:$0xf]
      %v347 = vld [vmem:[%s1 + $0x58] sm:$0xf]
      %v348 = vld [vmem:[%s1 + $0x5c] sm:$0xf]
      %v349 = vld [vmem:[%s1 + $0x60] sm:$0xf]
      %v350 = vld [vmem:[%s1 + $0x64] sm:$0xf]
      %v351 = vld [vmem:[%s1 + $0x68] sm:$0xf]
      %v352 = vld [vmem:[%s1 + $0x6c] sm:$0xf]
      %v353 = vld [vmem:[%s1 + $0x70] sm:$0xf]
      %v354 = vld [vmem:[%s1 + $0x74] sm:$0xf]
      %v355 = vld [vmem:[%s1 + $0x78] sm:$0xf]
      %v356 = vld [vmem:[%s1 + $0x7c] sm:$0xf]
      %v357 = vld [vmem:[%s1 + $0x80] sm:$0xf]
      %v358 = vld [vmem:[%s1 + $0x84] sm:$0xf]
      %v359 = vld [vmem:[%s1 + $0x88] sm:$0xf]
      %v360 = vld [vmem:[%s1 + $0x8c] sm:$0xf]
      %v361 = vld [vmem:[%s1 + $0x90] sm:$0xf]
      %v362 = vld [vmem:[%s1 + $0x94] sm:$0xf]
      %v363 = vld [vmem:[%s1 + $0x98] sm:$0xf]
      %v364 = vld [vmem:[%s1 + $0x9c] sm:$0xf]
      %v365 = vld [vmem:[%s1 + $0xa0] sm:$0xf]
      %v366 = vld [vmem:[%s1 + $0xa4] sm:$0xf]
      %v367 = vld [vmem:[%s1 + $0xa8] sm:$0xf]
      %v368 = vld [vmem:[%s1 + $0xac] sm:$0xf]
      %v369 = vld [vmem:[%s1 + $0xb0] sm:$0xf]
      %v370 = vld [vmem:[%s1 + $0xb4] sm:$0xf]
      %v371 = vld [vmem:[%s1 + $0xb8] sm:$0xf]
      %v372 = vld [vmem:[%s1 + $0xbc] sm:$0xf]
      %v373 = vld [vmem:[%s1 + $0xc0] sm:$0xf]
      %v374 = vld [vmem:[%s1 + $0xc4] sm:$0xf]
      %v375 = vld [vmem:[%s1 + $0xc8] sm:$0xf]
      %v376 = vld [vmem:[%s1 + $0xcc] sm:$0xf]
      %v377 = vld [vmem:[%s1 + $0xd0] sm:$0xf]
      %v378 = vld [vmem:[%s1 + $0xd4] sm:$0xf]
      %v379 = vld [vmem:[%s1 + $0xd8] sm:$0xf]
      %v380 = vld [vmem:[%s1 + $0xdc] sm:$0xf]
      %v381 = vld [vmem:[%s1 + $0xe0] sm:$0xf]
      %v382 = vld [vmem:[%s1 + $0xe4] sm:$0xf]
      %v383 = vld [vmem:[%s1 + $0xe8] sm:$0xf]
      %v384 = vld [vmem:[%s1 + $0xec] sm:$0xf]
      %v385 = vld [vmem:[%s1 + $0xf0] sm:$0xf]
      %v386 = vld [vmem:[%s1 + $0xf4] sm:$0xf]
      %v387 = vld [vmem:[%s1 + $0xf8] sm:$0xf]
      %v388 = vld [vmem:[%s1 + $0xfc] sm:$0xf]
      %v389 = vld [vmem:[%s1 + $0x100] sm:$0xf]
      %v390 = vld [vmem:[%s1 + $0x104] sm:$0xf]
      %v391 = vld [vmem:[%s1 + $0x108] sm:$0xf]
      %v392 = vld [vmem:[%s1 + $0x10c] sm:$0xf]
      %v393 = vld [vmem:[%s1 + $0x110] sm:$0xf]
      %v394 = vld [vmem:[%s1 + $0x114] sm:$0xf]
      %v395 = vld [vmem:[%s1 + $0x118] sm:$0xf]
      %v396 = vld [vmem:[%s1 + $0x11c] sm:$0xf]
      %v397 = vld [vmem:[%s1 + $0x120] sm:$0xf]
      %v398 = vld [vmem:[%s1 + $0x124] sm:$0xf]
      %v399 = vld [vmem:[%s1 + $0x128] sm:$0xf]
      %v400 = vld [vmem:[%s1 + $0x12c] sm:$0xf]
      %v401 = vld [vmem:[%s1 + $0x130] sm:$0xf]
      %v402 = vld [vmem:[%s1 + $0x134] sm:$0xf]
      %v403 = vld [vmem:[%s1 + $0x138] sm:$0xf]
      %v404 = vld [vmem:[%s1 + $0x13c] sm:$0xf]
      %v405 = vld [vmem:[%s1 + $0x140] sm:$0xf]
      %v406 = vld [vmem:[%s1 + $0x144] sm:$0xf]
      %v407 = vld [vmem:[%s1 + $0x148] sm:$0xf]
      %v408 = vld [vmem:[%s1 + $0x14c] sm:$0xf]
      %v409 = vld [vmem:[%s1 + $0x150] sm:$0xf]
      %v410 = vld [vmem:[%s1 + $0x154] sm:$0xf]
      %v411 = vld [vmem:[%s1 + $0x158] sm:$0xf]
      %v412 = vld [vmem:[%s1 + $0x15c] sm:$0xf]
      %v413 = vld [vmem:[%s1 + $0x160] sm:$0xf]
      %v414 = vld [vmem:[%s1 + $0x164] sm:$0xf]
      %v415 = vld [vmem:[%s1 + $0x168] sm:$0xf]
      %v416 = vld [vmem:[%s1 + $0x16c] sm:$0xf]
      %v417 = vld [vmem:[%s1 + $0x170] sm:$0xf]
      %v418 = vld [vmem:[%s1 + $0x174] sm:$0xf]
      %v419 = vld [vmem:[%s2] sm:$0x1]
      %v421 = vperm.slane %v419, 0
      %v570 = vunpack.c.l.b16 %v178
      %v571 = vunpack.c.h.b16 %v178
      %v572 = vunpack.c.l.b16 %v179
      %v573 = vunpack.c.h.b16 %v179
      %v574 = vunpack.c.l.b16 %v180
      %v575 = vunpack.c.h.b16 %v180
      %v576 = vunpack.c.l.b16 %v181
      %v577 = vunpack.c.h.b16 %v181
      %v578 = vunpack.c.l.b16 %v182
      %v579 = vunpack.c.h.b16 %v182
      %v580 = vunpack.c.l.b16 %v183
      %v581 = vunpack.c.h.b16 %v183
      %v582 = vunpack.c.l.b16 %v184
      %v583 = vunpack.c.h.b16 %v184
      %v584 = vunpack.c.l.b16 %v185
      %v585 = vunpack.c.h.b16 %v185
      %v586 = vunpack.c.l.b16 %v186
      %v587 = vunpack.c.h.b16 %v186
      %v588 = vunpack.c.l.b16 %v187
      %v589 = vunpack.c.h.b16 %v187
      %v590 = vunpack.c.l.b16 %v188
      %v591 = vunpack.c.h.b16 %v188
      %v592 = vunpack.c.l.b16 %v189
      %v593 = vunpack.c.h.b16 %v189
      %v594 = vunpack.c.l.b16 %v190
      %v595 = vunpack.c.h.b16 %v190
      %v596 = vunpack.c.l.b16 %v191
      %v597 = vunpack.c.h.b16 %v191
      %v598 = vunpack.c.l.b16 %v192
      %v599 = vunpack.c.h.b16 %v192
      %v600 = vunpack.c.l.b16 %v193
      %v601 = vunpack.c.h.b16 %v193
      %v602 = vunpack.c.l.b16 %v194
      %v603 = vunpack.c.h.b16 %v194
      %v604 = vunpack.c.l.b16 %v195
      %v605 = vunpack.c.h.b16 %v195
      %v606 = vunpack.c.l.b16 %v196
      %v607 = vunpack.c.h.b16 %v196
      %v608 = vunpack.c.l.b16 %v197
      %v609 = vunpack.c.h.b16 %v197
      %v610 = vunpack.c.l.b16 %v198
      %v611 = vunpack.c.h.b16 %v198
      %v612 = vunpack.c.l.b16 %v199
      %v613 = vunpack.c.h.b16 %v199
      %v614 = vunpack.c.l.b16 %v200
      %v615 = vunpack.c.h.b16 %v200
      %v616 = vunpack.c.l.b16 %v201
      %v617 = vunpack.c.h.b16 %v201
      %v618 = vunpack.c.l.b16 %v202
      %v619 = vunpack.c.h.b16 %v202
      %v620 = vunpack.c.l.b16 %v203
      %v621 = vunpack.c.h.b16 %v203
      %v622 = vunpack.c.l.b16 %v204
      %v623 = vunpack.c.h.b16 %v204
      %v624 = vunpack.c.l.b16 %v205
      %v625 = vunpack.c.h.b16 %v205
      %v626 = vunpack.c.l.b16 %v206
      %v627 = vunpack.c.h.b16 %v206
      %v628 = vunpack.c.l.b16 %v207
      %v629 = vunpack.c.h.b16 %v207
      %v630 = vunpack.c.l.b16 %v208
      %v631 = vunpack.c.h.b16 %v208
      %v632 = vunpack.c.l.b16 %v209
      %v633 = vunpack.c.h.b16 %v209
      %v634 = vunpack.c.l.b16 %v210
      %v635 = vunpack.c.h.b16 %v210
      %v636 = vunpack.c.l.b16 %v211
      %v637 = vunpack.c.h.b16 %v211
      %v638 = vunpack.c.l.b16 %v212
      %v639 = vunpack.c.h.b16 %v212
      %v640 = vunpack.c.l.b16 %v213
      %v641 = vunpack.c.h.b16 %v213
      %v642 = vunpack.c.l.b16 %v214
      %v643 = vunpack.c.h.b16 %v214
      %v644 = vunpack.c.l.b16 %v215
      %v645 = vunpack.c.h.b16 %v215
      %v646 = vunpack.c.l.b16 %v216
      %v647 = vunpack.c.h.b16 %v216
      %v648 = vunpack.c.l.b16 %v217
      %v649 = vunpack.c.h.b16 %v217
      %v650 = vunpack.c.l.b16 %v218
      %v651 = vunpack.c.h.b16 %v218
      %v652 = vunpack.c.l.b16 %v219
      %v653 = vunpack.c.h.b16 %v219
      %v654 = vunpack.c.l.b16 %v220
      %v655 = vunpack.c.h.b16 %v220
      %v656 = vunpack.c.l.b16 %v221
      %v657 = vunpack.c.h.b16 %v221
      %v658 = vunpack.c.l.b16 %v222
      %v659 = vunpack.c.h.b16 %v222
      %v660 = vunpack.c.l.b16 %v223
      %v661 = vunpack.c.h.b16 %v223
      %v662 = vunpack.c.l.b16 %v224
      %v663 = vunpack.c.h.b16 %v224
      %v664 = vunpack.c.l.b16 %v225
      %v665 = vunpack.c.h.b16 %v225
      %v666 = vunpack.c.l.b16 %v226
      %v667 = vunpack.c.h.b16 %v226
      %v668 = vunpack.c.l.b16 %v227
      %v669 = vunpack.c.h.b16 %v227
      %v670 = vunpack.c.l.b16 %v228
      %v671 = vunpack.c.h.b16 %v228
      %v672 = vunpack.c.l.b16 %v229
      %v673 = vunpack.c.h.b16 %v229
      %v674 = vunpack.c.l.b16 %v230
      %v675 = vunpack.c.h.b16 %v230
      %v676 = vunpack.c.l.b16 %v231
      %v677 = vunpack.c.h.b16 %v231
      %v678 = vunpack.c.l.b16 %v232
      %v679 = vunpack.c.h.b16 %v232
      %v680 = vunpack.c.l.b16 %v233
      %v681 = vunpack.c.h.b16 %v233
      %v682 = vunpack.c.l.b16 %v234
      %v683 = vunpack.c.h.b16 %v234
      %v684 = vunpack.c.l.b16 %v235
      %v685 = vunpack.c.h.b16 %v235
      %v686 = vunpack.c.l.b16 %v236
      %v687 = vunpack.c.h.b16 %v236
      %v688 = vunpack.c.l.b16 %v237
      %v689 = vunpack.c.h.b16 %v237
      %v690 = vunpack.c.l.b16 %v238
      %v691 = vunpack.c.h.b16 %v238
      %v692 = vunpack.c.l.b16 %v239
      %v693 = vunpack.c.h.b16 %v239
      %v694 = vunpack.c.l.b16 %v240
      %v695 = vunpack.c.h.b16 %v240
      %v696 = vunpack.c.l.b16 %v241
      %v697 = vunpack.c.h.b16 %v241
      %v698 = vunpack.c.l.b16 %v242
      %v699 = vunpack.c.h.b16 %v242
      %v700 = vunpack.c.l.b16 %v243
      %v701 = vunpack.c.h.b16 %v243
      %v702 = vunpack.c.l.b16 %v244
      %v703 = vunpack.c.h.b16 %v244
      %v704 = vunpack.c.l.b16 %v245
      %v705 = vunpack.c.h.b16 %v245
      %v706 = vunpack.c.l.b16 %v246
      %v707 = vunpack.c.h.b16 %v246
      %v708 = vunpack.c.l.b16 %v247
      %v709 = vunpack.c.h.b16 %v247
      %v710 = vunpack.c.l.b16 %v248
      %v711 = vunpack.c.h.b16 %v248
      %v712 = vunpack.c.l.b16 %v249
      %v713 = vunpack.c.h.b16 %v249
      %v714 = vunpack.c.l.b16 %v250
      %v715 = vunpack.c.h.b16 %v250
      %v716 = vunpack.c.l.b16 %v251
      %v717 = vunpack.c.h.b16 %v251
      %v718 = vunpack.c.l.b16 %v252
      %v719 = vunpack.c.h.b16 %v252
      %v720 = vunpack.c.l.b16 %v253
      %v721 = vunpack.c.h.b16 %v253
      %v722 = vunpack.c.l.b16 %v254
      %v723 = vunpack.c.h.b16 %v254
      %v724 = vunpack.c.l.b16 %v255
      %v725 = vunpack.c.h.b16 %v255
      %v726 = vunpack.c.l.b16 %v256
      %v727 = vunpack.c.h.b16 %v256
      %v728 = vunpack.c.l.b16 %v257
      %v729 = vunpack.c.h.b16 %v257
      %v730 = vunpack.c.l.b16 %v258
      %v731 = vunpack.c.h.b16 %v258
      %v732 = vunpack.c.l.b16 %v259
      %v733 = vunpack.c.h.b16 %v259
      %v734 = vunpack.c.l.b16 %v260
      %v735 = vunpack.c.h.b16 %v260
      %v736 = vunpack.c.l.b16 %v261
      %v737 = vunpack.c.h.b16 %v261
      %v738 = vunpack.c.l.b16 %v262
      %v739 = vunpack.c.h.b16 %v262
      %v740 = vunpack.c.l.b16 %v263
      %v741 = vunpack.c.h.b16 %v263
      %v742 = vunpack.c.l.b16 %v264
      %v743 = vunpack.c.h.b16 %v264
      %v744 = vunpack.c.l.b16 %v265
      %v745 = vunpack.c.h.b16 %v265
      %v746 = vunpack.c.l.b16 %v266
      %v747 = vunpack.c.h.b16 %v266
      %v748 = vunpack.c.l.b16 %v267
      %v749 = vunpack.c.h.b16 %v267
      %v750 = vunpack.c.l.b16 %v268
      %v751 = vunpack.c.h.b16 %v268
      %v752 = vunpack.c.l.b16 %v269
      %v753 = vunpack.c.h.b16 %v269
      %v754 = vunpack.c.l.b16 %v270
      %v755 = vunpack.c.h.b16 %v270
      %v756 = vunpack.c.l.b16 %v271
      %v757 = vunpack.c.h.b16 %v271
      %v758 = vunpack.c.l.b16 %v272
      %v759 = vunpack.c.h.b16 %v272
      %v760 = vunpack.c.l.b16 %v273
      %v761 = vunpack.c.h.b16 %v273
      %v762 = vunpack.c.l.b16 %v274
      %v763 = vunpack.c.h.b16 %v274
      %v764 = vunpack.c.l.b16 %v275
      %v765 = vunpack.c.h.b16 %v275
      %v766 = vunpack.c.l.b16 %v276
      %v767 = vunpack.c.h.b16 %v276
      %v768 = vunpack.c.l.b16 %v277
      %v769 = vunpack.c.h.b16 %v277
      %v770 = vunpack.c.l.b16 %v278
      %v771 = vunpack.c.h.b16 %v278
      %v772 = vunpack.c.l.b16 %v279
      %v773 = vunpack.c.h.b16 %v279
      %v774 = vunpack.c.l.b16 %v280
      %v775 = vunpack.c.h.b16 %v280
      %v776 = vunpack.c.l.b16 %v281
      %v777 = vunpack.c.h.b16 %v281
      %v778 = vunpack.c.l.b16 %v282
      %v779 = vunpack.c.h.b16 %v282
      %v780 = vunpack.c.l.b16 %v283
      %v781 = vunpack.c.h.b16 %v283
      %v782 = vunpack.c.l.b16 %v284
      %v783 = vunpack.c.h.b16 %v284
      %v784 = vunpack.c.l.b16 %v285
      %v785 = vunpack.c.h.b16 %v285
      %v786 = vunpack.c.l.b16 %v286
      %v787 = vunpack.c.h.b16 %v286
      %v788 = vunpack.c.l.b16 %v287
      %v789 = vunpack.c.h.b16 %v287
      %v790 = vunpack.c.l.b16 %v288
      %v791 = vunpack.c.h.b16 %v288
      %v792 = vunpack.c.l.b16 %v289
      %v793 = vunpack.c.h.b16 %v289
      %v794 = vunpack.c.l.b16 %v290
      %v795 = vunpack.c.h.b16 %v290
      %v796 = vunpack.c.l.b16 %v291
      %v797 = vunpack.c.h.b16 %v291
      %v798 = vunpack.c.l.b16 %v292
      %v799 = vunpack.c.h.b16 %v292
      %v800 = vunpack.c.l.b16 %v293
      %v801 = vunpack.c.h.b16 %v293
      %v802 = vunpack.c.l.b16 %v294
      %v803 = vunpack.c.h.b16 %v294
      %v804 = vunpack.c.l.b16 %v295
      %v805 = vunpack.c.h.b16 %v295
      %v806 = vunpack.c.l.b16 %v296
      %v807 = vunpack.c.h.b16 %v296
      %v808 = vunpack.c.l.b16 %v297
      %v809 = vunpack.c.h.b16 %v297
      %v810 = vunpack.c.l.b16 %v298
      %v811 = vunpack.c.h.b16 %v298
      %v812 = vunpack.c.l.b16 %v299
      %v813 = vunpack.c.h.b16 %v299
      %v814 = vunpack.c.l.b16 %v300
      %v815 = vunpack.c.h.b16 %v300
      %v816 = vunpack.c.l.b16 %v301
      %v817 = vunpack.c.h.b16 %v301
      %v818 = vunpack.c.l.b16 %v302
      %v819 = vunpack.c.h.b16 %v302
      %v820 = vunpack.c.l.b16 %v303
      %v821 = vunpack.c.h.b16 %v303
      %v822 = vunpack.c.l.b16 %v304
      %v823 = vunpack.c.h.b16 %v304
      %v824 = vunpack.c.l.b16 %v305
      %v825 = vunpack.c.h.b16 %v305
      %v826 = vunpack.c.l.b16 %v306
      %v827 = vunpack.c.h.b16 %v306
      %v828 = vunpack.c.l.b16 %v307
      %v829 = vunpack.c.h.b16 %v307
      %v830 = vunpack.c.l.b16 %v308
      %v831 = vunpack.c.h.b16 %v308
      %v832 = vunpack.c.l.b16 %v309
      %v833 = vunpack.c.h.b16 %v309
      %v834 = vunpack.c.l.b16 %v310
      %v835 = vunpack.c.h.b16 %v310
      %v836 = vunpack.c.l.b16 %v311
      %v837 = vunpack.c.h.b16 %v311
      %v838 = vunpack.c.l.b16 %v312
      %v839 = vunpack.c.h.b16 %v312
      %v840 = vunpack.c.l.b16 %v313
      %v841 = vunpack.c.h.b16 %v313
      %v842 = vunpack.c.l.b16 %v314
      %v843 = vunpack.c.h.b16 %v314
      %v844 = vunpack.c.l.b16 %v315
      %v845 = vunpack.c.h.b16 %v315
      %v846 = vunpack.c.l.b16 %v316
      %v847 = vunpack.c.h.b16 %v316
      %v848 = vunpack.c.l.b16 %v317
      %v849 = vunpack.c.h.b16 %v317
      %v850 = vunpack.c.l.b16 %v318
      %v851 = vunpack.c.h.b16 %v318
      %v852 = vunpack.c.l.b16 %v319
      %v853 = vunpack.c.h.b16 %v319
      %v854 = vunpack.c.l.b16 %v320
      %v855 = vunpack.c.h.b16 %v320
      %v856 = vunpack.c.l.b16 %v321
      %v857 = vunpack.c.h.b16 %v321
      %v858 = vunpack.c.l.b16 %v322
      %v859 = vunpack.c.h.b16 %v322
      %v860 = vunpack.c.l.b16 %v323
      %v861 = vunpack.c.h.b16 %v323
      %v862 = vunpack.c.l.b16 %v324
      %v863 = vunpack.c.h.b16 %v324
      %v864 = vpack.c.b16 %v576, %v570
      %v865 = vpack.c.b16 %v577, %v571
      %v866 = vpack.c.b16 %v578, %v572
      %v867 = vpack.c.b16 %v579, %v573
      %v868 = vpack.c.b16 %v580, %v574
      %v869 = vpack.c.b16 %v581, %v575
      %v870 = vpack.c.b16 %v588, %v582
      %v871 = vpack.c.b16 %v589, %v583
      %v872 = vpack.c.b16 %v590, %v584
      %v873 = vpack.c.b16 %v591, %v585
      %v874 = vpack.c.b16 %v592, %v586
      %v875 = vpack.c.b16 %v593, %v587
      %v876 = vpack.c.b16 %v600, %v594
      %v877 = vpack.c.b16 %v601, %v595
      %v878 = vpack.c.b16 %v602, %v596
      %v879 = vpack.c.b16 %v603, %v597
      %v880 = vpack.c.b16 %v604, %v598
      %v881 = vpack.c.b16 %v605, %v599
      %v882 = vpack.c.b16 %v612, %v606
      %v883 = vpack.c.b16 %v613, %v607
      %v884 = vpack.c.b16 %v614, %v608
      %v885 = vpack.c.b16 %v615, %v609
      %v886 = vpack.c.b16 %v616, %v610
      %v887 = vpack.c.b16 %v617, %v611
      %v888 = vpack.c.b16 %v624, %v618
      %v889 = vpack.c.b16 %v625, %v619
      %v890 = vpack.c.b16 %v626, %v620
      %v891 = vpack.c.b16 %v627, %v621
      %v892 = vpack.c.b16 %v628, %v622
      %v893 = vpack.c.b16 %v629, %v623
      %v894 = vpack.c.b16 %v636, %v630
      %v895 = vpack.c.b16 %v637, %v631
      %v896 = vpack.c.b16 %v638, %v632
      %v897 = vpack.c.b16 %v639, %v633
      %v898 = vpack.c.b16 %v640, %v634
      %v899 = vpack.c.b16 %v641, %v635
      %v900 = vpack.c.b16 %v648, %v642
      %v901 = vpack.c.b16 %v649, %v643
      %v902 = vpack.c.b16 %v650, %v644
      %v903 = vpack.c.b16 %v651, %v645
      %v904 = vpack.c.b16 %v652, %v646
      %v905 = vpack.c.b16 %v653, %v647
      %v906 = vpack.c.b16 %v660, %v654
      %v907 = vpack.c.b16 %v661, %v655
      %v908 = vpack.c.b16 %v662, %v656
      %v909 = vpack.c.b16 %v663, %v657
      %v910 = vpack.c.b16 %v664, %v658
      %v911 = vpack.c.b16 %v665, %v659
      %v912 = vpack.c.b16 %v672, %v666
      %v913 = vpack.c.b16 %v673, %v667
      %v914 = vpack.c.b16 %v674, %v668
      %v915 = vpack.c.b16 %v675, %v669
      %v916 = vpack.c.b16 %v676, %v670
      %v917 = vpack.c.b16 %v677, %v671
      %v918 = vpack.c.b16 %v684, %v678
      %v919 = vpack.c.b16 %v685, %v679
      %v920 = vpack.c.b16 %v686, %v680
      %v921 = vpack.c.b16 %v687, %v681
      %v922 = vpack.c.b16 %v688, %v682
      %v923 = vpack.c.b16 %v689, %v683
      %v924 = vpack.c.b16 %v696, %v690
      %v925 = vpack.c.b16 %v697, %v691
      %v926 = vpack.c.b16 %v698, %v692
      %v927 = vpack.c.b16 %v699, %v693
      %v928 = vpack.c.b16 %v700, %v694
      %v929 = vpack.c.b16 %v701, %v695
      %v930 = vpack.c.b16 %v708, %v702
      %v931 = vpack.c.b16 %v709, %v703
      %v932 = vpack.c.b16 %v710, %v704
      %v933 = vpack.c.b16 %v711, %v705
      %v934 = vpack.c.b16 %v712, %v706
      %v935 = vpack.c.b16 %v713, %v707
      %v936 = vpack.c.b16 %v720, %v714
      %v937 = vpack.c.b16 %v721, %v715
      %v938 = vpack.c.b16 %v722, %v716
      %v939 = vpack.c.b16 %v723, %v717
      %v940 = vpack.c.b16 %v724, %v718
      %v941 = vpack.c.b16 %v725, %v719
      %v942 = vpack.c.b16 %v732, %v726
      %v943 = vpack.c.b16 %v733, %v727
      %v944 = vpack.c.b16 %v734, %v728
      %v945 = vpack.c.b16 %v735, %v729
      %v946 = vpack.c.b16 %v736, %v730
      %v947 = vpack.c.b16 %v737, %v731
      %v948 = vpack.c.b16 %v744, %v738
      %v949 = vpack.c.b16 %v745, %v739
      %v950 = vpack.c.b16 %v746, %v740
      %v951 = vpack.c.b16 %v747, %v741
      %v952 = vpack.c.b16 %v748, %v742
      %v953 = vpack.c.b16 %v749, %v743
      %v954 = vpack.c.b16 %v756, %v750
      %v955 = vpack.c.b16 %v757, %v751
      %v956 = vpack.c.b16 %v758, %v752
      %v957 = vpack.c.b16 %v759, %v753
      %v958 = vpack.c.b16 %v760, %v754
      %v959 = vpack.c.b16 %v761, %v755
      %v960 = vpack.c.b16 %v768, %v762
      %v961 = vpack.c.b16 %v769, %v763
      %v962 = vpack.c.b16 %v770, %v764
      %v963 = vpack.c.b16 %v771, %v765
      %v964 = vpack.c.b16 %v772, %v766
      %v965 = vpack.c.b16 %v773, %v767
      %v966 = vpack.c.b16 %v780, %v774
      %v967 = vpack.c.b16 %v781, %v775
      %v968 = vpack.c.b16 %v782, %v776
      %v969 = vpack.c.b16 %v783, %v777
      %v970 = vpack.c.b16 %v784, %v778
      %v971 = vpack.c.b16 %v785, %v779
      %v972 = vpack.c.b16 %v792, %v786
      %v973 = vpack.c.b16 %v793, %v787
      %v974 = vpack.c.b16 %v794, %v788
      %v975 = vpack.c.b16 %v795, %v789
      %v976 = vpack.c.b16 %v796, %v790
      %v977 = vpack.c.b16 %v797, %v791
      %v978 = vpack.c.b16 %v804, %v798
      %v979 = vpack.c.b16 %v805, %v799
      %v980 = vpack.c.b16 %v806, %v800
      %v981 = vpack.c.b16 %v807, %v801
      %v982 = vpack.c.b16 %v808, %v802
      %v983 = vpack.c.b16 %v809, %v803
      %v984 = vpack.c.b16 %v816, %v810
      %v985 = vpack.c.b16 %v817, %v811
      %v986 = vpack.c.b16 %v818, %v812
      %v987 = vpack.c.b16 %v819, %v813
      %v988 = vpack.c.b16 %v820, %v814
      %v989 = vpack.c.b16 %v821, %v815
      %v990 = vpack.c.b16 %v828, %v822
      %v991 = vpack.c.b16 %v829, %v823
      %v992 = vpack.c.b16 %v830, %v824
      %v993 = vpack.c.b16 %v831, %v825
      %v994 = vpack.c.b16 %v832, %v826
      %v995 = vpack.c.b16 %v833, %v827
      %v996 = vpack.c.b16 %v840, %v834
      %v997 = vpack.c.b16 %v841, %v835
      %v998 = vpack.c.b16 %v842, %v836
      %v999 = vpack.c.b16 %v843, %v837
      %v1000 = vpack.c.b16 %v844, %v838
      %v1001 = vpack.c.b16 %v845, %v839
      %v1002 = vpack.c.b16 %v852, %v846
      %v1003 = vpack.c.b16 %v853, %v847
      %v1004 = vpack.c.b16 %v854, %v848
      %v1005 = vpack.c.b16 %v855, %v849
      %v1006 = vpack.c.b16 %v856, %v850
      %v1007 = vpack.c.b16 %v857, %v851
      %v1008 = vpack.c.b16 %v858, %v858
      %v1009 = vpack.c.b16 %v859, %v859
      %v1010 = vpack.c.b16 %v860, %v860
      %v1011 = vpack.c.b16 %v861, %v861
      %v1012 = vpack.c.b16 %v862, %v862
      %v1013 = vpack.c.b16 %v863, %v863
      %v1233 = vunpack.c.l.b16 %v325
      %v1234 = vunpack.c.l.b16 %v326
      %v1235 = vunpack.c.l.b16 %v327
      %v1236 = vunpack.c.l.b16 %v328
      %v1237 = vunpack.c.l.b16 %v329
      %v1238 = vunpack.c.l.b16 %v330
      %v1239 = vunpack.c.l.b16 %v331
      %v1240 = vunpack.c.l.b16 %v332
      %v1241 = vunpack.c.l.b16 %v333
      %v1242 = vunpack.c.l.b16 %v334
      %v1243 = vunpack.c.l.b16 %v335
      %v1244 = vunpack.c.l.b16 %v336
      %v1245 = vunpack.c.l.b16 %v337
      %v1246 = vunpack.c.l.b16 %v338
      %v1247 = vunpack.c.l.b16 %v339
      %v1248 = vunpack.c.l.b16 %v340
      %v1249 = vunpack.c.l.b16 %v341
      %v1250 = vunpack.c.l.b16 %v342
      %v1251 = vunpack.c.l.b16 %v343
      %v1252 = vunpack.c.l.b16 %v344
      %v1253 = vunpack.c.l.b16 %v345
      %v1254 = vunpack.c.l.b16 %v346
      %v1255 = vunpack.c.l.b16 %v347
      %v1256 = vunpack.c.l.b16 %v348
      %v1257 = vunpack.c.l.b16 %v349
      %v1258 = vunpack.c.l.b16 %v350
      %v1259 = vunpack.c.l.b16 %v351
      %v1260 = vunpack.c.l.b16 %v352
      %v1261 = vunpack.c.l.b16 %v353
      %v1262 = vunpack.c.l.b16 %v354
      %v1263 = vunpack.c.l.b16 %v355
      %v1264 = vunpack.c.l.b16 %v356
      %v1265 = vunpack.c.l.b16 %v357
      %v1266 = vunpack.c.l.b16 %v358
      %v1267 = vunpack.c.l.b16 %v359
      %v1268 = vunpack.c.l.b16 %v360
      %v1269 = vunpack.c.l.b16 %v361
      %v1270 = vunpack.c.l.b16 %v362
      %v1271 = vunpack.c.l.b16 %v363
      %v1272 = vunpack.c.l.b16 %v364
      %v1273 = vunpack.c.l.b16 %v365
      %v1274 = vunpack.c.l.b16 %v366
      %v1275 = vunpack.c.l.b16 %v367
      %v1276 = vunpack.c.l.b16 %v368
      %v1277 = vunpack.c.l.b16 %v369
      %v1278 = vunpack.c.l.b16 %v370
      %v1279 = vunpack.c.l.b16 %v371
      %v1280 = vunpack.c.l.b16 %v372
      %v1281 = vunpack.c.l.b16 %v373
      %v1282 = vunpack.c.l.b16 %v374
      %v1283 = vunpack.c.l.b16 %v375
      %v1284 = vunpack.c.l.b16 %v376
      %v1285 = vunpack.c.l.b16 %v377
      %v1286 = vunpack.c.l.b16 %v378
      %v1287 = vunpack.c.l.b16 %v379
      %v1288 = vunpack.c.l.b16 %v380
      %v1289 = vunpack.c.l.b16 %v381
      %v1290 = vunpack.c.l.b16 %v382
      %v1291 = vunpack.c.l.b16 %v383
      %v1292 = vunpack.c.l.b16 %v384
      %v1293 = vunpack.c.l.b16 %v385
      %v1294 = vunpack.c.l.b16 %v386
      %v1295 = vunpack.c.l.b16 %v387
      %v1296 = vunpack.c.l.b16 %v388
      %v1297 = vunpack.c.l.b16 %v389
      %v1298 = vunpack.c.l.b16 %v390
      %v1299 = vunpack.c.l.b16 %v391
      %v1300 = vunpack.c.l.b16 %v392
      %v1301 = vunpack.c.l.b16 %v393
      %v1302 = vunpack.c.l.b16 %v394
      %v1303 = vunpack.c.l.b16 %v395
      %v1304 = vunpack.c.l.b16 %v396
      %v1305 = vunpack.c.l.b16 %v397
      %v1306 = vunpack.c.l.b16 %v398
      %v1307 = vunpack.c.l.b16 %v399
      %v1308 = vunpack.c.l.b16 %v400
      %v1309 = vunpack.c.l.b16 %v401
      %v1310 = vunpack.c.l.b16 %v402
      %v1311 = vunpack.c.l.b16 %v403
      %v1312 = vunpack.c.l.b16 %v404
      %v1313 = vunpack.c.l.b16 %v405
      %v1314 = vunpack.c.l.b16 %v406
      %v1315 = vunpack.c.l.b16 %v407
      %v1316 = vunpack.c.l.b16 %v408
      %v1317 = vunpack.c.l.b16 %v409
      %v1318 = vunpack.c.l.b16 %v410
      %v1319 = vunpack.c.l.b16 %v411
      %v1320 = vunpack.c.l.b16 %v412
      %v1321 = vunpack.c.l.b16 %v413
      %v1322 = vunpack.c.l.b16 %v414
      %v1323 = vunpack.c.l.b16 %v415
      %v1324 = vunpack.c.l.b16 %v416
      %v1325 = vunpack.c.l.b16 %v417
      %v1326 = vunpack.c.l.b16 %v418
      %v1327 = vpack.c.b16 %v1234, %v1233
      %v1328 = vpack.c.b16 %v1236, %v1235
      %v1329 = vpack.c.b16 %v1238, %v1237
      %v1330 = vpack.c.b16 %v1240, %v1239
      %v1331 = vpack.c.b16 %v1242, %v1241
      %v1332 = vpack.c.b16 %v1244, %v1243
      %v1333 = vpack.c.b16 %v1246, %v1245
      %v1334 = vpack.c.b16 %v1248, %v1247
      %v1335 = vpack.c.b16 %v1250, %v1249
      %v1336 = vpack.c.b16 %v1252, %v1251
      %v1337 = vpack.c.b16 %v1254, %v1253
      %v1338 = vpack.c.b16 %v1256, %v1255
      %v1339 = vpack.c.b16 %v1258, %v1257
      %v1340 = vpack.c.b16 %v1260, %v1259
      %v1341 = vpack.c.b16 %v1262, %v1261
      %v1342 = vpack.c.b16 %v1264, %v1263
      %v1343 = vpack.c.b16 %v1266, %v1265
      %v1344 = vpack.c.b16 %v1268, %v1267
      %v1345 = vpack.c.b16 %v1270, %v1269
      %v1346 = vpack.c.b16 %v1272, %v1271
      %v1347 = vpack.c.b16 %v1274, %v1273
      %v1348 = vpack.c.b16 %v1276, %v1275
      %v1349 = vpack.c.b16 %v1278, %v1277
      %v1350 = vpack.c.b16 %v1280, %v1279
      %v1351 = vpack.c.b16 %v1282, %v1281
      %v1352 = vpack.c.b16 %v1284, %v1283
      %v1353 = vpack.c.b16 %v1286, %v1285
      %v1354 = vpack.c.b16 %v1288, %v1287
      %v1355 = vpack.c.b16 %v1290, %v1289
      %v1356 = vpack.c.b16 %v1292, %v1291
      %v1357 = vpack.c.b16 %v1294, %v1293
      %v1358 = vpack.c.b16 %v1296, %v1295
      %v1359 = vpack.c.b16 %v1298, %v1297
      %v1360 = vpack.c.b16 %v1300, %v1299
      %v1361 = vpack.c.b16 %v1302, %v1301
      %v1362 = vpack.c.b16 %v1304, %v1303
      %v1363 = vpack.c.b16 %v1306, %v1305
      %v1364 = vpack.c.b16 %v1308, %v1307
      %v1365 = vpack.c.b16 %v1310, %v1309
      %v1366 = vpack.c.b16 %v1312, %v1311
      %v1367 = vpack.c.b16 %v1314, %v1313
      %v1368 = vpack.c.b16 %v1316, %v1315
      %v1369 = vpack.c.b16 %v1318, %v1317
      %v1370 = vpack.c.b16 %v1320, %v1319
      %v1371 = vpack.c.b16 %v1322, %v1321
      %v1372 = vpack.c.b16 %v1324, %v1323
      %v1373 = vpack.c.b16 %v1326, %v1325
      %vm1421 = vcmask 916480
      %v1423 = vsel %vm1421, %v869, 0
      %v1426 = vsel %vm1421, %v875, 0
      %v1429 = vsel %vm1421, %v881, 0
      %v1432 = vsel %vm1421, %v887, 0
      %v1435 = vsel %vm1421, %v893, 0
      %v1438 = vsel %vm1421, %v899, 0
      %v1441 = vsel %vm1421, %v905, 0
      %v1444 = vsel %vm1421, %v911, 0
      %v1447 = vsel %vm1421, %v917, 0
      %v1450 = vsel %vm1421, %v923, 0
      %v1453 = vsel %vm1421, %v929, 0
      %v1456 = vsel %vm1421, %v935, 0
      %v1459 = vsel %vm1421, %v941, 0
      %v1462 = vsel %vm1421, %v947, 0
      %v1465 = vsel %vm1421, %v953, 0
      %v1468 = vsel %vm1421, %v959, 0
      %v1471 = vsel %vm1421, %v965, 0
      %v1474 = vsel %vm1421, %v971, 0
      %v1477 = vsel %vm1421, %v977, 0
      %v1480 = vsel %vm1421, %v983, 0
      %v1483 = vsel %vm1421, %v989, 0
      %v1486 = vsel %vm1421, %v995, 0
      %v1489 = vsel %vm1421, %v1001, 0
      %v1492 = vsel %vm1421, %v1007, 0
      %v1495 = vsel %vm1421, %v1013, 0
      %1497 = vmatpush.bf16.msra.mxu0 %v1334
      %1498 = vmatpush.bf16.msra.mxu0 %v1333
      %1499 = vmatpush.bf16.msra.mxu0 %v1332
      %1500 = vmatpush.bf16.msra.mxu0 %v1331
      %1501 = vmatpush.bf16.msra.mxu0 %v1330
      %1502 = vmatpush.bf16.msra.mxu0 %v1329
      %1503 = vmatpush.bf16.msra.mxu0 %v1328
      %1504 = vmatpush.bf16.msra.mxu0 %v1327
      %1505 = vmatmul.bf16.gmra.mxu0 %v864
      %v1506 = vpop.f32.mrf.mxu0
      %v1507 = vadd.f32 %v421, %v1506
      %v1508 = vpop.f32.mrf.mxu0
      %v1509 = vadd.f32 %v421, %v1508
      %1510 = vmatmul.bf16.gmra.mxu0 %v870
      %v1511 = vpop.f32.mrf.mxu0
      %v1512 = vadd.f32 %v421, %v1511
      %v1513 = vpop.f32.mrf.mxu0
      %v1514 = vadd.f32 %v421, %v1513
      %1515 = vmatmul.bf16.gmra.mxu0 %v876
      %v1516 = vpop.f32.mrf.mxu0
      %v1517 = vadd.f32 %v421, %v1516
      %v1518 = vpop.f32.mrf.mxu0
      %v1519 = vadd.f32 %v421, %v1518
      %1520 = vmatmul.bf16.gmra.mxu0 %v882
      %v1521 = vpop.f32.mrf.mxu0
      %v1522 = vadd.f32 %v421, %v1521
      %v1523 = vpop.f32.mrf.mxu0
      %v1524 = vadd.f32 %v421, %v1523
      %1525 = vmatmul.bf16.gmra.mxu0 %v888
      %v1526 = vpop.f32.mrf.mxu0
      %v1527 = vadd.f32 %v421, %v1526
      %v1528 = vpop.f32.mrf.mxu0
      %v1529 = vadd.f32 %v421, %v1528
      %1530 = vmatmul.bf16.gmra.mxu0 %v894
      %v1531 = vpop.f32.mrf.mxu0
      %v1532 = vadd.f32 %v421, %v1531
      %v1533 = vpop.f32.mrf.mxu0
      %v1534 = vadd.f32 %v421, %v1533
      %1535 = vmatmul.bf16.gmra.mxu0 %v900
      %v1536 = vpop.f32.mrf.mxu0
      %v1537 = vadd.f32 %v421, %v1536
      %v1538 = vpop.f32.mrf.mxu0
      %v1539 = vadd.f32 %v421, %v1538
      %1540 = vmatmul.bf16.gmra.mxu0 %v906
      %v1541 = vpop.f32.mrf.mxu0
      %v1542 = vadd.f32 %v421, %v1541
      %v1543 = vpop.f32.mrf.mxu0
      %v1544 = vadd.f32 %v421, %v1543
      %1545 = vmatmul.bf16.gmra.mxu0 %v912
      %v1546 = vpop.f32.mrf.mxu0
      %v1547 = vadd.f32 %v421, %v1546
      %v1548 = vpop.f32.mrf.mxu0
      %v1549 = vadd.f32 %v421, %v1548
      %1550 = vmatmul.bf16.gmra.mxu0 %v918
      %v1551 = vpop.f32.mrf.mxu0
      %v1552 = vadd.f32 %v421, %v1551
      %v1553 = vpop.f32.mrf.mxu0
      %v1554 = vadd.f32 %v421, %v1553
      %1555 = vmatmul.bf16.gmra.mxu0 %v924
      %v1556 = vpop.f32.mrf.mxu0
      %v1557 = vadd.f32 %v421, %v1556
      %v1558 = vpop.f32.mrf.mxu0
      %v1559 = vadd.f32 %v421, %v1558
      %1560 = vmatmul.bf16.gmra.mxu0 %v930
      %v1561 = vpop.f32.mrf.mxu0
      %v1562 = vadd.f32 %v421, %v1561
      %v1563 = vpop.f32.mrf.mxu0
      %v1564 = vadd.f32 %v421, %v1563
      %1565 = vmatmul.bf16.gmra.mxu0 %v936
      %v1566 = vpop.f32.mrf.mxu0
      %v1567 = vadd.f32 %v421, %v1566
      %v1568 = vpop.f32.mrf.mxu0
      %v1569 = vadd.f32 %v421, %v1568
      %1570 = vmatmul.bf16.gmra.mxu0 %v942
      %v1571 = vpop.f32.mrf.mxu0
      %v1572 = vadd.f32 %v421, %v1571
      %v1573 = vpop.f32.mrf.mxu0
      %v1574 = vadd.f32 %v421, %v1573
      %1575 = vmatmul.bf16.gmra.mxu0 %v948
      %v1576 = vpop.f32.mrf.mxu0
      %v1577 = vadd.f32 %v421, %v1576
      %v1578 = vpop.f32.mrf.mxu0
      %v1579 = vadd.f32 %v421, %v1578
      %1580 = vmatmul.bf16.gmra.mxu0 %v954
      %v1581 = vpop.f32.mrf.mxu0
      %v1582 = vadd.f32 %v421, %v1581
      %v1583 = vpop.f32.mrf.mxu0
      %v1584 = vadd.f32 %v421, %v1583
      %1585 = vmatmul.bf16.gmra.mxu0 %v960
      %v1586 = vpop.f32.mrf.mxu0
      %v1587 = vadd.f32 %v421, %v1586
      %v1588 = vpop.f32.mrf.mxu0
      %v1589 = vadd.f32 %v421, %v1588
      %1590 = vmatmul.bf16.gmra.mxu0 %v966
      %v1591 = vpop.f32.mrf.mxu0
      %v1592 = vadd.f32 %v421, %v1591
      %v1593 = vpop.f32.mrf.mxu0
      %v1594 = vadd.f32 %v421, %v1593
      %1595 = vmatmul.bf16.gmra.mxu0 %v972
      %v1596 = vpop.f32.mrf.mxu0
      %v1597 = vadd.f32 %v421, %v1596
      %v1598 = vpop.f32.mrf.mxu0
      %v1599 = vadd.f32 %v421, %v1598
      %1600 = vmatmul.bf16.gmra.mxu0 %v978
      %v1601 = vpop.f32.mrf.mxu0
      %v1602 = vadd.f32 %v421, %v1601
      %v1603 = vpop.f32.mrf.mxu0
      %v1604 = vadd.f32 %v421, %v1603
      %1605 = vmatmul.bf16.gmra.mxu0 %v984
      %v1606 = vpop.f32.mrf.mxu0
      %v1607 = vadd.f32 %v421, %v1606
      %v1608 = vpop.f32.mrf.mxu0
      %v1609 = vadd.f32 %v421, %v1608
      %1610 = vmatmul.bf16.gmra.mxu0 %v990
      %v1611 = vpop.f32.mrf.mxu0
      %v1612 = vadd.f32 %v421, %v1611
      %v1613 = vpop.f32.mrf.mxu0
      %v1614 = vadd.f32 %v421, %v1613
      %1615 = vmatmul.bf16.gmra.mxu0 %v996
      %v1616 = vpop.f32.mrf.mxu0
      %v1617 = vadd.f32 %v421, %v1616
      %v1618 = vpop.f32.mrf.mxu0
      %v1619 = vadd.f32 %v421, %v1618
      %1620 = vmatmul.bf16.gmra.mxu0 %v1002
      %v1621 = vpop.f32.mrf.mxu0
      %v1622 = vadd.f32 %v421, %v1621
      %v1623 = vpop.f32.mrf.mxu0
      %v1624 = vadd.f32 %v421, %v1623
      %1625 = vmatmul.bf16.gmra.mxu0 %v1008
      %v1626 = vpop.f32.mrf.mxu0
      %v1627 = vadd.f32 %v421, %v1626
      %v1628 = vpop.f32.mrf.mxu0
      %1629 = vdwg.mxu0
      %1630 = vmatpush.bf16.msra.mxu0 %v1342
      %1631 = vmatpush.bf16.msra.mxu0 %v1341
      %1632 = vmatpush.bf16.msra.mxu0 %v1340
      %1633 = vmatpush.bf16.msra.mxu0 %v1339
      %1634 = vmatpush.bf16.msra.mxu0 %v1338
      %1635 = vmatpush.bf16.msra.mxu0 %v1337
      %1636 = vmatpush.bf16.msra.mxu0 %v1336
      %1637 = vmatpush.bf16.msra.mxu0 %v1335
      %1638 = vmatmul.bf16.gmra.mxu0 %v865
      %v1639 = vpop.f32.mrf.mxu0
      %v1640 = vadd.f32 %v1507, %v1639
      %v1641 = vpop.f32.mrf.mxu0
      %v1642 = vadd.f32 %v1509, %v1641
      %1643 = vmatmul.bf16.gmra.mxu0 %v871
      %v1644 = vpop.f32.mrf.mxu0
      %v1645 = vadd.f32 %v1512, %v1644
      %v1646 = vpop.f32.mrf.mxu0
      %v1647 = vadd.f32 %v1514, %v1646
      %1648 = vmatmul.bf16.gmra.mxu0 %v877
      %v1649 = vpop.f32.mrf.mxu0
      %v1650 = vadd.f32 %v1517, %v1649
      %v1651 = vpop.f32.mrf.mxu0
      %v1652 = vadd.f32 %v1519, %v1651
      %1653 = vmatmul.bf16.gmra.mxu0 %v883
      %v1654 = vpop.f32.mrf.mxu0
      %v1655 = vadd.f32 %v1522, %v1654
      %v1656 = vpop.f32.mrf.mxu0
      %v1657 = vadd.f32 %v1524, %v1656
      %1658 = vmatmul.bf16.gmra.mxu0 %v889
      %v1659 = vpop.f32.mrf.mxu0
      %v1660 = vadd.f32 %v1527, %v1659
      %v1661 = vpop.f32.mrf.mxu0
      %v1662 = vadd.f32 %v1529, %v1661
      %1663 = vmatmul.bf16.gmra.mxu0 %v895
      %v1664 = vpop.f32.mrf.mxu0
      %v1665 = vadd.f32 %v1532, %v1664
      %v1666 = vpop.f32.mrf.mxu0
      %v1667 = vadd.f32 %v1534, %v1666
      %1668 = vmatmul.bf16.gmra.mxu0 %v901
      %v1669 = vpop.f32.mrf.mxu0
      %v1670 = vadd.f32 %v1537, %v1669
      %v1671 = vpop.f32.mrf.mxu0
      %v1672 = vadd.f32 %v1539, %v1671
      %1673 = vmatmul.bf16.gmra.mxu0 %v907
      %v1674 = vpop.f32.mrf.mxu0
      %v1675 = vadd.f32 %v1542, %v1674
      %v1676 = vpop.f32.mrf.mxu0
      %v1677 = vadd.f32 %v1544, %v1676
      %1678 = vmatmul.bf16.gmra.mxu0 %v913
      %v1679 = vpop.f32.mrf.mxu0
      %v1680 = vadd.f32 %v1547, %v1679
      %v1681 = vpop.f32.mrf.mxu0
      %v1682 = vadd.f32 %v1549, %v1681
      %1683 = vmatmul.bf16.gmra.mxu0 %v919
      %v1684 = vpop.f32.mrf.mxu0
      %v1685 = vadd.f32 %v1552, %v1684
      %v1686 = vpop.f32.mrf.mxu0
      %v1687 = vadd.f32 %v1554, %v1686
      %1688 = vmatmul.bf16.gmra.mxu0 %v925
      %v1689 = vpop.f32.mrf.mxu0
      %v1690 = vadd.f32 %v1557, %v1689
      %v1691 = vpop.f32.mrf.mxu0
      %v1692 = vadd.f32 %v1559, %v1691
      %1693 = vmatmul.bf16.gmra.mxu0 %v931
      %v1694 = vpop.f32.mrf.mxu0
      %v1695 = vadd.f32 %v1562, %v1694
      %v1696 = vpop.f32.mrf.mxu0
      %v1697 = vadd.f32 %v1564, %v1696
      %1698 = vmatmul.bf16.gmra.mxu0 %v937
      %v1699 = vpop.f32.mrf.mxu0
      %v1700 = vadd.f32 %v1567, %v1699
      %v1701 = vpop.f32.mrf.mxu0
      %v1702 = vadd.f32 %v1569, %v1701
      %1703 = vmatmul.bf16.gmra.mxu0 %v943
      %v1704 = vpop.f32.mrf.mxu0
      %v1705 = vadd.f32 %v1572, %v1704
      %v1706 = vpop.f32.mrf.mxu0
      %v1707 = vadd.f32 %v1574, %v1706
      %1708 = vmatmul.bf16.gmra.mxu0 %v949
      %v1709 = vpop.f32.mrf.mxu0
      %v1710 = vadd.f32 %v1577, %v1709
      %v1711 = vpop.f32.mrf.mxu0
      %v1712 = vadd.f32 %v1579, %v1711
      %1713 = vmatmul.bf16.gmra.mxu0 %v955
      %v1714 = vpop.f32.mrf.mxu0
      %v1715 = vadd.f32 %v1582, %v1714
      %v1716 = vpop.f32.mrf.mxu0
      %v1717 = vadd.f32 %v1584, %v1716
      %1718 = vmatmul.bf16.gmra.mxu0 %v961
      %v1719 = vpop.f32.mrf.mxu0
      %v1720 = vadd.f32 %v1587, %v1719
      %v1721 = vpop.f32.mrf.mxu0
      %v1722 = vadd.f32 %v1589, %v1721
      %1723 = vmatmul.bf16.gmra.mxu0 %v967
      %v1724 = vpop.f32.mrf.mxu0
      %v1725 = vadd.f32 %v1592, %v1724
      %v1726 = vpop.f32.mrf.mxu0
      %v1727 = vadd.f32 %v1594, %v1726
      %1728 = vmatmul.bf16.gmra.mxu0 %v973
      %v1729 = vpop.f32.mrf.mxu0
      %v1730 = vadd.f32 %v1597, %v1729
      %v1731 = vpop.f32.mrf.mxu0
      %v1732 = vadd.f32 %v1599, %v1731
      %1733 = vmatmul.bf16.gmra.mxu0 %v979
      %v1734 = vpop.f32.mrf.mxu0
      %v1735 = vadd.f32 %v1602, %v1734
      %v1736 = vpop.f32.mrf.mxu0
      %v1737 = vadd.f32 %v1604, %v1736
      %1738 = vmatmul.bf16.gmra.mxu0 %v985
      %v1739 = vpop.f32.mrf.mxu0
      %v1740 = vadd.f32 %v1607, %v1739
      %v1741 = vpop.f32.mrf.mxu0
      %v1742 = vadd.f32 %v1609, %v1741
      %1743 = vmatmul.bf16.gmra.mxu0 %v991
      %v1744 = vpop.f32.mrf.mxu0
      %v1745 = vadd.f32 %v1612, %v1744
      %v1746 = vpop.f32.mrf.mxu0
      %v1747 = vadd.f32 %v1614, %v1746
      %1748 = vmatmul.bf16.gmra.mxu0 %v997
      %v1749 = vpop.f32.mrf.mxu0
      %v1750 = vadd.f32 %v1617, %v1749
      %v1751 = vpop.f32.mrf.mxu0
      %v1752 = vadd.f32 %v1619, %v1751
      %1753 = vmatmul.bf16.gmra.mxu0 %v1003
      %v1754 = vpop.f32.mrf.mxu0
      %v1755 = vadd.f32 %v1622, %v1754
      %v1756 = vpop.f32.mrf.mxu0
      %v1757 = vadd.f32 %v1624, %v1756
      %1758 = vmatmul.bf16.gmra.mxu0 %v1009
      %v1759 = vpop.f32.mrf.mxu0
      %v1760 = vadd.f32 %v1627, %v1759
      %v1761 = vpop.f32.mrf.mxu0
      %1762 = vdwg.mxu0
      %1763 = vmatpush.bf16.msra.mxu0 %v1350
      %1764 = vmatpush.bf16.msra.mxu0 %v1349
      %1765 = vmatpush.bf16.msra.mxu0 %v1348
      %1766 = vmatpush.bf16.msra.mxu0 %v1347
      %1767 = vmatpush.bf16.msra.mxu0 %v1346
      %1768 = vmatpush.bf16.msra.mxu0 %v1345
      %1769 = vmatpush.bf16.msra.mxu0 %v1344
      %1770 = vmatpush.bf16.msra.mxu0 %v1343
      %1771 = vmatmul.bf16.gmra.mxu0 %v866
      %v1772 = vpop.f32.mrf.mxu0
      %v1773 = vadd.f32 %v1640, %v1772
      %v1774 = vpop.f32.mrf.mxu0
      %v1775 = vadd.f32 %v1642, %v1774
      %1776 = vmatmul.bf16.gmra.mxu0 %v872
      %v1777 = vpop.f32.mrf.mxu0
      %v1778 = vadd.f32 %v1645, %v1777
      %v1779 = vpop.f32.mrf.mxu0
      %v1780 = vadd.f32 %v1647, %v1779
      %1781 = vmatmul.bf16.gmra.mxu0 %v878
      %v1782 = vpop.f32.mrf.mxu0
      %v1783 = vadd.f32 %v1650, %v1782
      %v1784 = vpop.f32.mrf.mxu0
      %v1785 = vadd.f32 %v1652, %v1784
      %1786 = vmatmul.bf16.gmra.mxu0 %v884
      %v1787 = vpop.f32.mrf.mxu0
      %v1788 = vadd.f32 %v1655, %v1787
      %v1789 = vpop.f32.mrf.mxu0
      %v1790 = vadd.f32 %v1657, %v1789
      %1791 = vmatmul.bf16.gmra.mxu0 %v890
      %v1792 = vpop.f32.mrf.mxu0
      %v1793 = vadd.f32 %v1660, %v1792
      %v1794 = vpop.f32.mrf.mxu0
      %v1795 = vadd.f32 %v1662, %v1794
      %1796 = vmatmul.bf16.gmra.mxu0 %v896
      %v1797 = vpop.f32.mrf.mxu0
      %v1798 = vadd.f32 %v1665, %v1797
      %v1799 = vpop.f32.mrf.mxu0
      %v1800 = vadd.f32 %v1667, %v1799
      %1801 = vmatmul.bf16.gmra.mxu0 %v902
      %v1802 = vpop.f32.mrf.mxu0
      %v1803 = vadd.f32 %v1670, %v1802
      %v1804 = vpop.f32.mrf.mxu0
      %v1805 = vadd.f32 %v1672, %v1804
      %1806 = vmatmul.bf16.gmra.mxu0 %v908
      %v1807 = vpop.f32.mrf.mxu0
      %v1808 = vadd.f32 %v1675, %v1807
      %v1809 = vpop.f32.mrf.mxu0
      %v1810 = vadd.f32 %v1677, %v1809
      %1811 = vmatmul.bf16.gmra.mxu0 %v914
      %v1812 = vpop.f32.mrf.mxu0
      %v1813 = vadd.f32 %v1680, %v1812
      %v1814 = vpop.f32.mrf.mxu0
      %v1815 = vadd.f32 %v1682, %v1814
      %1816 = vmatmul.bf16.gmra.mxu0 %v920
      %v1817 = vpop.f32.mrf.mxu0
      %v1818 = vadd.f32 %v1685, %v1817
      %v1819 = vpop.f32.mrf.mxu0
      %v1820 = vadd.f32 %v1687, %v1819
      %1821 = vmatmul.bf16.gmra.mxu0 %v926
      %v1822 = vpop.f32.mrf.mxu0
      %v1823 = vadd.f32 %v1690, %v1822
      %v1824 = vpop.f32.mrf.mxu0
      %v1825 = vadd.f32 %v1692, %v1824
      %1826 = vmatmul.bf16.gmra.mxu0 %v932
      %v1827 = vpop.f32.mrf.mxu0
      %v1828 = vadd.f32 %v1695, %v1827
      %v1829 = vpop.f32.mrf.mxu0
      %v1830 = vadd.f32 %v1697, %v1829
      %1831 = vmatmul.bf16.gmra.mxu0 %v938
      %v1832 = vpop.f32.mrf.mxu0
      %v1833 = vadd.f32 %v1700, %v1832
      %v1834 = vpop.f32.mrf.mxu0
      %v1835 = vadd.f32 %v1702, %v1834
      %1836 = vmatmul.bf16.gmra.mxu0 %v944
      %v1837 = vpop.f32.mrf.mxu0
      %v1838 = vadd.f32 %v1705, %v1837
      %v1839 = vpop.f32.mrf.mxu0
      %v1840 = vadd.f32 %v1707, %v1839
      %1841 = vmatmul.bf16.gmra.mxu0 %v950
      %v1842 = vpop.f32.mrf.mxu0
      %v1843 = vadd.f32 %v1710, %v1842
      %v1844 = vpop.f32.mrf.mxu0
      %v1845 = vadd.f32 %v1712, %v1844
      %1846 = vmatmul.bf16.gmra.mxu0 %v956
      %v1847 = vpop.f32.mrf.mxu0
      %v1848 = vadd.f32 %v1715, %v1847
      %v1849 = vpop.f32.mrf.mxu0
      %v1850 = vadd.f32 %v1717, %v1849
      %1851 = vmatmul.bf16.gmra.mxu0 %v962
      %v1852 = vpop.f32.mrf.mxu0
      %v1853 = vadd.f32 %v1720, %v1852
      %v1854 = vpop.f32.mrf.mxu0
      %v1855 = vadd.f32 %v1722, %v1854
      %1856 = vmatmul.bf16.gmra.mxu0 %v968
      %v1857 = vpop.f32.mrf.mxu0
      %v1858 = vadd.f32 %v1725, %v1857
      %v1859 = vpop.f32.mrf.mxu0
      %v1860 = vadd.f32 %v1727, %v1859
      %1861 = vmatmul.bf16.gmra.mxu0 %v974
      %v1862 = vpop.f32.mrf.mxu0
      %v1863 = vadd.f32 %v1730, %v1862
      %v1864 = vpop.f32.mrf.mxu0
      %v1865 = vadd.f32 %v1732, %v1864
      %1866 = vmatmul.bf16.gmra.mxu0 %v980
      %v1867 = vpop.f32.mrf.mxu0
      %v1868 = vadd.f32 %v1735, %v1867
      %v1869 = vpop.f32.mrf.mxu0
      %v1870 = vadd.f32 %v1737, %v1869
      %1871 = vmatmul.bf16.gmra.mxu0 %v986
      %v1872 = vpop.f32.mrf.mxu0
      %v1873 = vadd.f32 %v1740, %v1872
      %v1874 = vpop.f32.mrf.mxu0
      %v1875 = vadd.f32 %v1742, %v1874
      %1876 = vmatmul.bf16.gmra.mxu0 %v992
      %v1877 = vpop.f32.mrf.mxu0
      %v1878 = vadd.f32 %v1745, %v1877
      %v1879 = vpop.f32.mrf.mxu0
      %v1880 = vadd.f32 %v1747, %v1879
      %1881 = vmatmul.bf16.gmra.mxu0 %v998
      %v1882 = vpop.f32.mrf.mxu0
      %v1883 = vadd.f32 %v1750, %v1882
      %v1884 = vpop.f32.mrf.mxu0
      %v1885 = vadd.f32 %v1752, %v1884
      %1886 = vmatmul.bf16.gmra.mxu0 %v1004
      %v1887 = vpop.f32.mrf.mxu0
      %v1888 = vadd.f32 %v1755, %v1887
      %v1889 = vpop.f32.mrf.mxu0
      %v1890 = vadd.f32 %v1757, %v1889
      %1891 = vmatmul.bf16.gmra.mxu0 %v1010
      %v1892 = vpop.f32.mrf.mxu0
      %v1893 = vadd.f32 %v1760, %v1892
      %v1894 = vpop.f32.mrf.mxu0
      %1895 = vdwg.mxu0
      %1896 = vmatpush.bf16.msra.mxu0 %v1358
      %1897 = vmatpush.bf16.msra.mxu0 %v1357
      %1898 = vmatpush.bf16.msra.mxu0 %v1356
      %1899 = vmatpush.bf16.msra.mxu0 %v1355
      %1900 = vmatpush.bf16.msra.mxu0 %v1354
      %1901 = vmatpush.bf16.msra.mxu0 %v1353
      %1902 = vmatpush.bf16.msra.mxu0 %v1352
      %1903 = vmatpush.bf16.msra.mxu0 %v1351
      %1904 = vmatmul.bf16.gmra.mxu0 %v867
      %v1905 = vpop.f32.mrf.mxu0
      %v1906 = vadd.f32 %v1773, %v1905
      %v1907 = vpop.f32.mrf.mxu0
      %v1908 = vadd.f32 %v1775, %v1907
      %1909 = vmatmul.bf16.gmra.mxu0 %v873
      %v1910 = vpop.f32.mrf.mxu0
      %v1911 = vadd.f32 %v1778, %v1910
      %v1912 = vpop.f32.mrf.mxu0
      %v1913 = vadd.f32 %v1780, %v1912
      %1914 = vmatmul.bf16.gmra.mxu0 %v879
      %v1915 = vpop.f32.mrf.mxu0
      %v1916 = vadd.f32 %v1783, %v1915
      %v1917 = vpop.f32.mrf.mxu0
      %v1918 = vadd.f32 %v1785, %v1917
      %1919 = vmatmul.bf16.gmra.mxu0 %v885
      %v1920 = vpop.f32.mrf.mxu0
      %v1921 = vadd.f32 %v1788, %v1920
      %v1922 = vpop.f32.mrf.mxu0
      %v1923 = vadd.f32 %v1790, %v1922
      %1924 = vmatmul.bf16.gmra.mxu0 %v891
      %v1925 = vpop.f32.mrf.mxu0
      %v1926 = vadd.f32 %v1793, %v1925
      %v1927 = vpop.f32.mrf.mxu0
      %v1928 = vadd.f32 %v1795, %v1927
      %1929 = vmatmul.bf16.gmra.mxu0 %v897
      %v1930 = vpop.f32.mrf.mxu0
      %v1931 = vadd.f32 %v1798, %v1930
      %v1932 = vpop.f32.mrf.mxu0
      %v1933 = vadd.f32 %v1800, %v1932
      %1934 = vmatmul.bf16.gmra.mxu0 %v903
      %v1935 = vpop.f32.mrf.mxu0
      %v1936 = vadd.f32 %v1803, %v1935
      %v1937 = vpop.f32.mrf.mxu0
      %v1938 = vadd.f32 %v1805, %v1937
      %1939 = vmatmul.bf16.gmra.mxu0 %v909
      %v1940 = vpop.f32.mrf.mxu0
      %v1941 = vadd.f32 %v1808, %v1940
      %v1942 = vpop.f32.mrf.mxu0
      %v1943 = vadd.f32 %v1810, %v1942
      %1944 = vmatmul.bf16.gmra.mxu0 %v915
      %v1945 = vpop.f32.mrf.mxu0
      %v1946 = vadd.f32 %v1813, %v1945
      %v1947 = vpop.f32.mrf.mxu0
      %v1948 = vadd.f32 %v1815, %v1947
      %1949 = vmatmul.bf16.gmra.mxu0 %v921
      %v1950 = vpop.f32.mrf.mxu0
      %v1951 = vadd.f32 %v1818, %v1950
      %v1952 = vpop.f32.mrf.mxu0
      %v1953 = vadd.f32 %v1820, %v1952
      %1954 = vmatmul.bf16.gmra.mxu0 %v927
      %v1955 = vpop.f32.mrf.mxu0
      %v1956 = vadd.f32 %v1823, %v1955
      %v1957 = vpop.f32.mrf.mxu0
      %v1958 = vadd.f32 %v1825, %v1957
      %1959 = vmatmul.bf16.gmra.mxu0 %v933
      %v1960 = vpop.f32.mrf.mxu0
      %v1961 = vadd.f32 %v1828, %v1960
      %v1962 = vpop.f32.mrf.mxu0
      %v1963 = vadd.f32 %v1830, %v1962
      %1964 = vmatmul.bf16.gmra.mxu0 %v939
      %v1965 = vpop.f32.mrf.mxu0
      %v1966 = vadd.f32 %v1833, %v1965
      %v1967 = vpop.f32.mrf.mxu0
      %v1968 = vadd.f32 %v1835, %v1967
      %1969 = vmatmul.bf16.gmra.mxu0 %v945
      %v1970 = vpop.f32.mrf.mxu0
      %v1971 = vadd.f32 %v1838, %v1970
      %v1972 = vpop.f32.mrf.mxu0
      %v1973 = vadd.f32 %v1840, %v1972
      %1974 = vmatmul.bf16.gmra.mxu0 %v951
      %v1975 = vpop.f32.mrf.mxu0
      %v1976 = vadd.f32 %v1843, %v1975
      %v1977 = vpop.f32.mrf.mxu0
      %v1978 = vadd.f32 %v1845, %v1977
      %1979 = vmatmul.bf16.gmra.mxu0 %v957
      %v1980 = vpop.f32.mrf.mxu0
      %v1981 = vadd.f32 %v1848, %v1980
      %v1982 = vpop.f32.mrf.mxu0
      %v1983 = vadd.f32 %v1850, %v1982
      %1984 = vmatmul.bf16.gmra.mxu0 %v963
      %v1985 = vpop.f32.mrf.mxu0
      %v1986 = vadd.f32 %v1853, %v1985
      %v1987 = vpop.f32.mrf.mxu0
      %v1988 = vadd.f32 %v1855, %v1987
      %1989 = vmatmul.bf16.gmra.mxu0 %v969
      %v1990 = vpop.f32.mrf.mxu0
      %v1991 = vadd.f32 %v1858, %v1990
      %v1992 = vpop.f32.mrf.mxu0
      %v1993 = vadd.f32 %v1860, %v1992
      %1994 = vmatmul.bf16.gmra.mxu0 %v975
      %v1995 = vpop.f32.mrf.mxu0
      %v1996 = vadd.f32 %v1863, %v1995
      %v1997 = vpop.f32.mrf.mxu0
      %v1998 = vadd.f32 %v1865, %v1997
      %1999 = vmatmul.bf16.gmra.mxu0 %v981
      %v2000 = vpop.f32.mrf.mxu0
      %v2001 = vadd.f32 %v1868, %v2000
      %v2002 = vpop.f32.mrf.mxu0
      %v2003 = vadd.f32 %v1870, %v2002
      %2004 = vmatmul.bf16.gmra.mxu0 %v987
      %v2005 = vpop.f32.mrf.mxu0
      %v2006 = vadd.f32 %v1873, %v2005
      %v2007 = vpop.f32.mrf.mxu0
      %v2008 = vadd.f32 %v1875, %v2007
      %2009 = vmatmul.bf16.gmra.mxu0 %v993
      %v2010 = vpop.f32.mrf.mxu0
      %v2011 = vadd.f32 %v1878, %v2010
      %v2012 = vpop.f32.mrf.mxu0
      %v2013 = vadd.f32 %v1880, %v2012
      %2014 = vmatmul.bf16.gmra.mxu0 %v999
      %v2015 = vpop.f32.mrf.mxu0
      %v2016 = vadd.f32 %v1883, %v2015
      %v2017 = vpop.f32.mrf.mxu0
      %v2018 = vadd.f32 %v1885, %v2017
      %2019 = vmatmul.bf16.gmra.mxu0 %v1005
      %v2020 = vpop.f32.mrf.mxu0
      %v2021 = vadd.f32 %v1888, %v2020
      %v2022 = vpop.f32.mrf.mxu0
      %v2023 = vadd.f32 %v1890, %v2022
      %2024 = vmatmul.bf16.gmra.mxu0 %v1011
      %v2025 = vpop.f32.mrf.mxu0
      %v2026 = vadd.f32 %v1893, %v2025
      %v2027 = vpop.f32.mrf.mxu0
      %2028 = vdwg.mxu0
      %2029 = vmatpush.bf16.msra.mxu0 %v1366
      %2030 = vmatpush.bf16.msra.mxu0 %v1365
      %2031 = vmatpush.bf16.msra.mxu0 %v1364
      %2032 = vmatpush.bf16.msra.mxu0 %v1363
      %2033 = vmatpush.bf16.msra.mxu0 %v1362
      %2034 = vmatpush.bf16.msra.mxu0 %v1361
      %2035 = vmatpush.bf16.msra.mxu0 %v1360
      %2036 = vmatpush.bf16.msra.mxu0 %v1359
      %2037 = vmatmul.bf16.gmra.mxu0 %v868
      %v2038 = vpop.f32.mrf.mxu0
      %v2039 = vadd.f32 %v1906, %v2038
      %v2040 = vpop.f32.mrf.mxu0
      %v2041 = vadd.f32 %v1908, %v2040
      %2042 = vmatmul.bf16.gmra.mxu0 %v874
      %v2043 = vpop.f32.mrf.mxu0
      %v2044 = vadd.f32 %v1911, %v2043
      %v2045 = vpop.f32.mrf.mxu0
      %v2046 = vadd.f32 %v1913, %v2045
      %2047 = vmatmul.bf16.gmra.mxu0 %v880
      %v2048 = vpop.f32.mrf.mxu0
      %v2049 = vadd.f32 %v1916, %v2048
      %v2050 = vpop.f32.mrf.mxu0
      %v2051 = vadd.f32 %v1918, %v2050
      %2052 = vmatmul.bf16.gmra.mxu0 %v886
      %v2053 = vpop.f32.mrf.mxu0
      %v2054 = vadd.f32 %v1921, %v2053
      %v2055 = vpop.f32.mrf.mxu0
      %v2056 = vadd.f32 %v1923, %v2055
      %2057 = vmatmul.bf16.gmra.mxu0 %v892
      %v2058 = vpop.f32.mrf.mxu0
      %v2059 = vadd.f32 %v1926, %v2058
      %v2060 = vpop.f32.mrf.mxu0
      %v2061 = vadd.f32 %v1928, %v2060
      %2062 = vmatmul.bf16.gmra.mxu0 %v898
      %v2063 = vpop.f32.mrf.mxu0
      %v2064 = vadd.f32 %v1931, %v2063
      %v2065 = vpop.f32.mrf.mxu0
      %v2066 = vadd.f32 %v1933, %v2065
      %2067 = vmatmul.bf16.gmra.mxu0 %v904
      %v2068 = vpop.f32.mrf.mxu0
      %v2069 = vadd.f32 %v1936, %v2068
      %v2070 = vpop.f32.mrf.mxu0
      %v2071 = vadd.f32 %v1938, %v2070
      %2072 = vmatmul.bf16.gmra.mxu0 %v910
      %v2073 = vpop.f32.mrf.mxu0
      %v2074 = vadd.f32 %v1941, %v2073
      %v2075 = vpop.f32.mrf.mxu0
      %v2076 = vadd.f32 %v1943, %v2075
      %2077 = vmatmul.bf16.gmra.mxu0 %v916
      %v2078 = vpop.f32.mrf.mxu0
      %v2079 = vadd.f32 %v1946, %v2078
      %v2080 = vpop.f32.mrf.mxu0
      %v2081 = vadd.f32 %v1948, %v2080
      %2082 = vmatmul.bf16.gmra.mxu0 %v922
      %v2083 = vpop.f32.mrf.mxu0
      %v2084 = vadd.f32 %v1951, %v2083
      %v2085 = vpop.f32.mrf.mxu0
      %v2086 = vadd.f32 %v1953, %v2085
      %2087 = vmatmul.bf16.gmra.mxu0 %v928
      %v2088 = vpop.f32.mrf.mxu0
      %v2089 = vadd.f32 %v1956, %v2088
      %v2090 = vpop.f32.mrf.mxu0
      %v2091 = vadd.f32 %v1958, %v2090
      %2092 = vmatmul.bf16.gmra.mxu0 %v934
      %v2093 = vpop.f32.mrf.mxu0
      %v2094 = vadd.f32 %v1961, %v2093
      %v2095 = vpop.f32.mrf.mxu0
      %v2096 = vadd.f32 %v1963, %v2095
      %2097 = vmatmul.bf16.gmra.mxu0 %v940
      %v2098 = vpop.f32.mrf.mxu0
      %v2099 = vadd.f32 %v1966, %v2098
      %v2100 = vpop.f32.mrf.mxu0
      %v2101 = vadd.f32 %v1968, %v2100
      %2102 = vmatmul.bf16.gmra.mxu0 %v946
      %v2103 = vpop.f32.mrf.mxu0
      %v2104 = vadd.f32 %v1971, %v2103
      %v2105 = vpop.f32.mrf.mxu0
      %v2106 = vadd.f32 %v1973, %v2105
      %2107 = vmatmul.bf16.gmra.mxu0 %v952
      %v2108 = vpop.f32.mrf.mxu0
      %v2109 = vadd.f32 %v1976, %v2108
      %v2110 = vpop.f32.mrf.mxu0
      %v2111 = vadd.f32 %v1978, %v2110
      %2112 = vmatmul.bf16.gmra.mxu0 %v958
      %v2113 = vpop.f32.mrf.mxu0
      %v2114 = vadd.f32 %v1981, %v2113
      %v2115 = vpop.f32.mrf.mxu0
      %v2116 = vadd.f32 %v1983, %v2115
      %2117 = vmatmul.bf16.gmra.mxu0 %v964
      %v2118 = vpop.f32.mrf.mxu0
      %v2119 = vadd.f32 %v1986, %v2118
      %v2120 = vpop.f32.mrf.mxu0
      %v2121 = vadd.f32 %v1988, %v2120
      %2122 = vmatmul.bf16.gmra.mxu0 %v970
      %v2123 = vpop.f32.mrf.mxu0
      %v2124 = vadd.f32 %v1991, %v2123
      %v2125 = vpop.f32.mrf.mxu0
      %v2126 = vadd.f32 %v1993, %v2125
      %2127 = vmatmul.bf16.gmra.mxu0 %v976
      %v2128 = vpop.f32.mrf.mxu0
      %v2129 = vadd.f32 %v1996, %v2128
      %v2130 = vpop.f32.mrf.mxu0
      %v2131 = vadd.f32 %v1998, %v2130
      %2132 = vmatmul.bf16.gmra.mxu0 %v982
      %v2133 = vpop.f32.mrf.mxu0
      %v2134 = vadd.f32 %v2001, %v2133
      %v2135 = vpop.f32.mrf.mxu0
      %v2136 = vadd.f32 %v2003, %v2135
      %2137 = vmatmul.bf16.gmra.mxu0 %v988
      %v2138 = vpop.f32.mrf.mxu0
      %v2139 = vadd.f32 %v2006, %v2138
      %v2140 = vpop.f32.mrf.mxu0
      %v2141 = vadd.f32 %v2008, %v2140
      %2142 = vmatmul.bf16.gmra.mxu0 %v994
      %v2143 = vpop.f32.mrf.mxu0
      %v2144 = vadd.f32 %v2011, %v2143
      %v2145 = vpop.f32.mrf.mxu0
      %v2146 = vadd.f32 %v2013, %v2145
      %2147 = vmatmul.bf16.gmra.mxu0 %v1000
      %v2148 = vpop.f32.mrf.mxu0
      %v2149 = vadd.f32 %v2016, %v2148
      %v2150 = vpop.f32.mrf.mxu0
      %v2151 = vadd.f32 %v2018, %v2150
      %2152 = vmatmul.bf16.gmra.mxu0 %v1006
      %v2153 = vpop.f32.mrf.mxu0
      %v2154 = vadd.f32 %v2021, %v2153
      %v2155 = vpop.f32.mrf.mxu0
      %v2156 = vadd.f32 %v2023, %v2155
      %2157 = vmatmul.bf16.gmra.mxu0 %v1012
      %v2158 = vpop.f32.mrf.mxu0
      %v2159 = vadd.f32 %v2026, %v2158
      %v2160 = vpop.f32.mrf.mxu0
      %2161 = vdwg.mxu0
      %2162 = vmatpush.bf16.msra.mxu0 0
      %2163 = vmatpush.bf16.msra.mxu0 %v1373
      %2164 = vmatpush.bf16.msra.mxu0 %v1372
      %2165 = vmatpush.bf16.msra.mxu0 %v1371
      %2166 = vmatpush.bf16.msra.mxu0 %v1370
      %2167 = vmatpush.bf16.msra.mxu0 %v1369
      %2168 = vmatpush.bf16.msra.mxu0 %v1368
      %2169 = vmatpush.bf16.msra.mxu0 %v1367
      %2170 = vmatmul.bf16.gmra.mxu0 %v1423
      %v2171 = vpop.f32.mrf.mxu0
      %v2172 = vadd.f32 %v2039, %v2171
      %v2173 = vpop.f32.mrf.mxu0
      %v2174 = vadd.f32 %v2041, %v2173
      %2175 = vmatmul.bf16.gmra.mxu0 %v1426
      %v2176 = vpop.f32.mrf.mxu0
      %v2177 = vadd.f32 %v2044, %v2176
      %v2178 = vpop.f32.mrf.mxu0
      %v2179 = vadd.f32 %v2046, %v2178
      %2180 = vmatmul.bf16.gmra.mxu0 %v1429
      %v2181 = vpop.f32.mrf.mxu0
      %v2182 = vadd.f32 %v2049, %v2181
      %v2183 = vpop.f32.mrf.mxu0
      %v2184 = vadd.f32 %v2051, %v2183
      %2185 = vmatmul.bf16.gmra.mxu0 %v1432
      %v2186 = vpop.f32.mrf.mxu0
      %v2187 = vadd.f32 %v2054, %v2186
      %v2188 = vpop.f32.mrf.mxu0
      %v2189 = vadd.f32 %v2056, %v2188
      %2190 = vmatmul.bf16.gmra.mxu0 %v1435
      %v2191 = vpop.f32.mrf.mxu0
      %v2192 = vadd.f32 %v2059, %v2191
      %v2193 = vpop.f32.mrf.mxu0
      %v2194 = vadd.f32 %v2061, %v2193
      %2195 = vmatmul.bf16.gmra.mxu0 %v1438
      %v2196 = vpop.f32.mrf.mxu0
      %v2197 = vadd.f32 %v2064, %v2196
      %v2198 = vpop.f32.mrf.mxu0
      %v2199 = vadd.f32 %v2066, %v2198
      %2200 = vmatmul.bf16.gmra.mxu0 %v1441
      %v2201 = vpop.f32.mrf.mxu0
      %v2202 = vadd.f32 %v2069, %v2201
      %v2203 = vpop.f32.mrf.mxu0
      %v2204 = vadd.f32 %v2071, %v2203
      %2205 = vmatmul.bf16.gmra.mxu0 %v1444
      %v2206 = vpop.f32.mrf.mxu0
      %v2207 = vadd.f32 %v2074, %v2206
      %v2208 = vpop.f32.mrf.mxu0
      %v2209 = vadd.f32 %v2076, %v2208
      %2210 = vmatmul.bf16.gmra.mxu0 %v1447
      %v2211 = vpop.f32.mrf.mxu0
      %v2212 = vadd.f32 %v2079, %v2211
      %v2213 = vpop.f32.mrf.mxu0
      %v2214 = vadd.f32 %v2081, %v2213
      %2215 = vmatmul.bf16.gmra.mxu0 %v1450
      %v2216 = vpop.f32.mrf.mxu0
      %v2217 = vadd.f32 %v2084, %v2216
      %v2218 = vpop.f32.mrf.mxu0
      %v2219 = vadd.f32 %v2086, %v2218
      %2220 = vmatmul.bf16.gmra.mxu0 %v1453
      %v2221 = vpop.f32.mrf.mxu0
      %v2222 = vadd.f32 %v2089, %v2221
      %v2223 = vpop.f32.mrf.mxu0
      %v2224 = vadd.f32 %v2091, %v2223
      %2225 = vmatmul.bf16.gmra.mxu0 %v1456
      %v2226 = vpop.f32.mrf.mxu0
      %v2227 = vadd.f32 %v2094, %v2226
      %v2228 = vpop.f32.mrf.mxu0
      %v2229 = vadd.f32 %v2096, %v2228
      %2230 = vmatmul.bf16.gmra.mxu0 %v1459
      %v2231 = vpop.f32.mrf.mxu0
      %v2232 = vadd.f32 %v2099, %v2231
      %v2233 = vpop.f32.mrf.mxu0
      %v2234 = vadd.f32 %v2101, %v2233
      %2235 = vmatmul.bf16.gmra.mxu0 %v1462
      %v2236 = vpop.f32.mrf.mxu0
      %v2237 = vadd.f32 %v2104, %v2236
      %v2238 = vpop.f32.mrf.mxu0
      %v2239 = vadd.f32 %v2106, %v2238
      %2240 = vmatmul.bf16.gmra.mxu0 %v1465
      %v2241 = vpop.f32.mrf.mxu0
      %v2242 = vadd.f32 %v2109, %v2241
      %v2243 = vpop.f32.mrf.mxu0
      %v2244 = vadd.f32 %v2111, %v2243
      %2245 = vmatmul.bf16.gmra.mxu0 %v1468
      %v2246 = vpop.f32.mrf.mxu0
      %v2247 = vadd.f32 %v2114, %v2246
      %v2248 = vpop.f32.mrf.mxu0
      %v2249 = vadd.f32 %v2116, %v2248
      %2250 = vmatmul.bf16.gmra.mxu0 %v1471
      %v2251 = vpop.f32.mrf.mxu0
      %v2252 = vadd.f32 %v2119, %v2251
      %v2253 = vpop.f32.mrf.mxu0
      %v2254 = vadd.f32 %v2121, %v2253
      %2255 = vmatmul.bf16.gmra.mxu0 %v1474
      %v2256 = vpop.f32.mrf.mxu0
      %v2257 = vadd.f32 %v2124, %v2256
      %v2258 = vpop.f32.mrf.mxu0
      %v2259 = vadd.f32 %v2126, %v2258
      %2260 = vmatmul.bf16.gmra.mxu0 %v1477
      %v2261 = vpop.f32.mrf.mxu0
      %v2262 = vadd.f32 %v2129, %v2261
      %v2263 = vpop.f32.mrf.mxu0
      %v2264 = vadd.f32 %v2131, %v2263
      %2265 = vmatmul.bf16.gmra.mxu0 %v1480
      %v2266 = vpop.f32.mrf.mxu0
      %v2267 = vadd.f32 %v2134, %v2266
      %v2268 = vpop.f32.mrf.mxu0
      %v2269 = vadd.f32 %v2136, %v2268
      %2270 = vmatmul.bf16.gmra.mxu0 %v1483
      %v2271 = vpop.f32.mrf.mxu0
      %v2272 = vadd.f32 %v2139, %v2271
      %v2273 = vpop.f32.mrf.mxu0
      %v2274 = vadd.f32 %v2141, %v2273
      %2275 = vmatmul.bf16.gmra.mxu0 %v1486
      %v2276 = vpop.f32.mrf.mxu0
      %v2277 = vadd.f32 %v2144, %v2276
      %v2278 = vpop.f32.mrf.mxu0
      %v2279 = vadd.f32 %v2146, %v2278
      %2280 = vmatmul.bf16.gmra.mxu0 %v1489
      %v2281 = vpop.f32.mrf.mxu0
      %v2282 = vadd.f32 %v2149, %v2281
      %v2283 = vpop.f32.mrf.mxu0
      %v2284 = vadd.f32 %v2151, %v2283
      %2285 = vmatmul.bf16.gmra.mxu0 %v1492
      %v2286 = vpop.f32.mrf.mxu0
      %v2287 = vadd.f32 %v2154, %v2286
      %v2288 = vpop.f32.mrf.mxu0
      %v2289 = vadd.f32 %v2156, %v2288
      %2290 = vmatmul.bf16.gmra.mxu0 %v1495
      %v2291 = vpop.f32.mrf.mxu0
      %v2292 = vadd.f32 %v2159, %v2291
      %v2293 = vpop.f32.mrf.mxu0
      %2294 = vdwg.mxu0
      %v2295 = vmax.f32 %v2172, 0.0
      %v2296 = vmax.f32 %v2174, 0.0
      %v2297 = vmax.f32 %v2177, 0.0
      %v2298 = vmax.f32 %v2179, 0.0
      %v2299 = vmax.f32 %v2182, 0.0
      %v2300 = vmax.f32 %v2184, 0.0
      %v2301 = vmax.f32 %v2187, 0.0
      %v2302 = vmax.f32 %v2189, 0.0
      %v2303 = vmax.f32 %v2192, 0.0
      %v2304 = vmax.f32 %v2194, 0.0
      %v2305 = vmax.f32 %v2197, 0.0
      %v2306 = vmax.f32 %v2199, 0.0
      %v2307 = vmax.f32 %v2202, 0.0
      %v2308 = vmax.f32 %v2204, 0.0
      %v2309 = vmax.f32 %v2207, 0.0
      %v2310 = vmax.f32 %v2209, 0.0
      %v2311 = vmax.f32 %v2212, 0.0
      %v2312 = vmax.f32 %v2214, 0.0
      %v2313 = vmax.f32 %v2217, 0.0
      %v2314 = vmax.f32 %v2219, 0.0
      %v2315 = vmax.f32 %v2222, 0.0
      %v2316 = vmax.f32 %v2224, 0.0
      %v2317 = vmax.f32 %v2227, 0.0
      %v2318 = vmax.f32 %v2229, 0.0
      %v2319 = vmax.f32 %v2232, 0.0
      %v2320 = vmax.f32 %v2234, 0.0
      %v2321 = vmax.f32 %v2237, 0.0
      %v2322 = vmax.f32 %v2239, 0.0
      %v2323 = vmax.f32 %v2242, 0.0
      %v2324 = vmax.f32 %v2244, 0.0
      %v2325 = vmax.f32 %v2247, 0.0
      %v2326 = vmax.f32 %v2249, 0.0
      %v2327 = vmax.f32 %v2252, 0.0
      %v2328 = vmax.f32 %v2254, 0.0
      %v2329 = vmax.f32 %v2257, 0.0
      %v2330 = vmax.f32 %v2259, 0.0
      %v2331 = vmax.f32 %v2262, 0.0
      %v2332 = vmax.f32 %v2264, 0.0
      %v2333 = vmax.f32 %v2267, 0.0
      %v2334 = vmax.f32 %v2269, 0.0
      %v2335 = vmax.f32 %v2272, 0.0
      %v2336 = vmax.f32 %v2274, 0.0
      %v2337 = vmax.f32 %v2277, 0.0
      %v2338 = vmax.f32 %v2279, 0.0
      %v2339 = vmax.f32 %v2282, 0.0
      %v2340 = vmax.f32 %v2284, 0.0
      %v2341 = vmax.f32 %v2287, 0.0
      %v2342 = vmax.f32 %v2289, 0.0
      %v2343 = vmax.f32 %v2292, 0.0
      %v2344 = vpack.c.bf16 %v2295, %v2295
      %v2345 = vpack.c.bf16 %v2296, %v2296
      %v2346 = vpack.c.bf16 %v2297, %v2297
      %v2347 = vpack.c.bf16 %v2298, %v2298
      %v2348 = vpack.c.bf16 %v2299, %v2299
      %v2349 = vpack.c.bf16 %v2300, %v2300
      %v2350 = vpack.c.bf16 %v2301, %v2301
      %v2351 = vpack.c.bf16 %v2302, %v2302
      %v2352 = vpack.c.bf16 %v2303, %v2303
      %v2353 = vpack.c.bf16 %v2304, %v2304
      %v2354 = vpack.c.bf16 %v2305, %v2305
      %v2355 = vpack.c.bf16 %v2306, %v2306
      %v2356 = vpack.c.bf16 %v2307, %v2307
      %v2357 = vpack.c.bf16 %v2308, %v2308
      %v2358 = vpack.c.bf16 %v2309, %v2309
      %v2359 = vpack.c.bf16 %v2310, %v2310
      %v2360 = vpack.c.bf16 %v2311, %v2311
      %v2361 = vpack.c.bf16 %v2312, %v2312
      %v2362 = vpack.c.bf16 %v2313, %v2313
      %v2363 = vpack.c.bf16 %v2314, %v2314
      %v2364 = vpack.c.bf16 %v2315, %v2315
      %v2365 = vpack.c.bf16 %v2316, %v2316
      %v2366 = vpack.c.bf16 %v2317, %v2317
      %v2367 = vpack.c.bf16 %v2318, %v2318
      %v2368 = vpack.c.bf16 %v2319, %v2319
      %v2369 = vpack.c.bf16 %v2320, %v2320
      %v2370 = vpack.c.bf16 %v2321, %v2321
      %v2371 = vpack.c.bf16 %v2322, %v2322
      %v2372 = vpack.c.bf16 %v2323, %v2323
      %v2373 = vpack.c.bf16 %v2324, %v2324
      %v2374 = vpack.c.bf16 %v2325, %v2325
      %v2375 = vpack.c.bf16 %v2326, %v2326
      %v2376 = vpack.c.bf16 %v2327, %v2327
      %v2377 = vpack.c.bf16 %v2328, %v2328
      %v2378 = vpack.c.bf16 %v2329, %v2329
      %v2379 = vpack.c.bf16 %v2330, %v2330
      %v2380 = vpack.c.bf16 %v2331, %v2331
      %v2381 = vpack.c.bf16 %v2332, %v2332
      %v2382 = vpack.c.bf16 %v2333, %v2333
      %v2383 = vpack.c.bf16 %v2334, %v2334
      %v2384 = vpack.c.bf16 %v2335, %v2335
      %v2385 = vpack.c.bf16 %v2336, %v2336
      %v2386 = vpack.c.bf16 %v2337, %v2337
      %v2387 = vpack.c.bf16 %v2338, %v2338
      %v2388 = vpack.c.bf16 %v2339, %v2339
      %v2389 = vpack.c.bf16 %v2340, %v2340
      %v2390 = vpack.c.bf16 %v2341, %v2341
      %v2391 = vpack.c.bf16 %v2342, %v2342
      %v2392 = vpack.c.bf16 %v2343, %v2343
      %2393 = vst [vmem:[%s175] sm:$0xf] %v2344
      %2394 = vst [vmem:[%s175 + $0x4] sm:$0xf] %v2345
      %2395 = vst [vmem:[%s175 + $0x8] sm:$0xf] %v2346
      %2396 = vst [vmem:[%s175 + $0xc] sm:$0xf] %v2347
      %2397 = vst [vmem:[%s175 + $0x10] sm:$0xf] %v2348
      %2398 = vst [vmem:[%s175 + $0x14] sm:$0xf] %v2349
      %2399 = vst [vmem:[%s175 + $0x18] sm:$0xf] %v2350
      %2400 = vst [vmem:[%s175 + $0x1c] sm:$0xf] %v2351
      %2401 = vst [vmem:[%s175 + $0x20] sm:$0xf] %v2352
      %2402 = vst [vmem:[%s175 + $0x24] sm:$0xf] %v2353
      %2403 = vst [vmem:[%s175 + $0x28] sm:$0xf] %v2354
      %2404 = vst [vmem:[%s175 + $0x2c] sm:$0xf] %v2355
      %2405 = vst [vmem:[%s175 + $0x30] sm:$0xf] %v2356
      %2406 = vst [vmem:[%s175 + $0x34] sm:$0xf] %v2357
      %2407 = vst [vmem:[%s175 + $0x38] sm:$0xf] %v2358
      %2408 = vst [vmem:[%s175 + $0x3c] sm:$0xf] %v2359
      %2409 = vst [vmem:[%s175 + $0x40] sm:$0xf] %v2360
      %2410 = vst [vmem:[%s175 + $0x44] sm:$0xf] %v2361
      %2411 = vst [vmem:[%s175 + $0x48] sm:$0xf] %v2362
      %2412 = vst [vmem:[%s175 + $0x4c] sm:$0xf] %v2363
      %2413 = vst [vmem:[%s175 + $0x50] sm:$0xf] %v2364
      %2414 = vst [vmem:[%s175 + $0x54] sm:$0xf] %v2365
      %2415 = vst [vmem:[%s175 + $0x58] sm:$0xf] %v2366
      %2416 = vst [vmem:[%s175 + $0x5c] sm:$0xf] %v2367
      %2417 = vst [vmem:[%s175 + $0x60] sm:$0xf] %v2368
      %2418 = vst [vmem:[%s175 + $0x64] sm:$0xf] %v2369
      %2419 = vst [vmem:[%s175 + $0x68] sm:$0xf] %v2370
      %2420 = vst [vmem:[%s175 + $0x6c] sm:$0xf] %v2371
      %2421 = vst [vmem:[%s175 + $0x70] sm:$0xf] %v2372
      %2422 = vst [vmem:[%s175 + $0x74] sm:$0xf] %v2373
      %2423 = vst [vmem:[%s175 + $0x78] sm:$0xf] %v2374
      %2424 = vst [vmem:[%s175 + $0x7c] sm:$0xf] %v2375
      %2425 = vst [vmem:[%s175 + $0x80] sm:$0xf] %v2376
      %2426 = vst [vmem:[%s175 + $0x84] sm:$0xf] %v2377
      %2427 = vst [vmem:[%s175 + $0x88] sm:$0xf] %v2378
      %2428 = vst [vmem:[%s175 + $0x8c] sm:$0xf] %v2379
      %2429 = vst [vmem:[%s175 + $0x90] sm:$0xf] %v2380
      %2430 = vst [vmem:[%s175 + $0x94] sm:$0xf] %v2381
      %2431 = vst [vmem:[%s175 + $0x98] sm:$0xf] %v2382
      %2432 = vst [vmem:[%s175 + $0x9c] sm:$0xf] %v2383
      %2433 = vst [vmem:[%s175 + $0xa0] sm:$0xf] %v2384
      %2434 = vst [vmem:[%s175 + $0xa4] sm:$0xf] %v2385
      %2435 = vst [vmem:[%s175 + $0xa8] sm:$0xf] %v2386
      %2436 = vst [vmem:[%s175 + $0xac] sm:$0xf] %v2387
      %2437 = vst [vmem:[%s175 + $0xb0] sm:$0xf] %v2388
      %2438 = vst [vmem:[%s175 + $0xb4] sm:$0xf] %v2389
      %2439 = vst [vmem:[%s175 + $0xb8] sm:$0xf] %v2390
      %2440 = vst [vmem:[%s175 + $0xbc] sm:$0xf] %v2391
      %2441 = vst [vmem:[%s175 + $0xc0] sm:$0xf] %v2392
      %s2442 = smul.u32 49, %s14
      %p2443 = scmp.lt.s32.totalorder %s2442, 195
      %s2444 = scalar_select %p2443, %s2442, 195
      %s2445 = smul.addr %s2444, 4
      %s2446 = scalar_lea.vmem %s3, %s2445
      // Predicated region
      $region33: #{neural_net_forward.12} parent=31 // pred_check
        %p2447 = pneg %p100
      $region34: #{neural_net_forward.12} parent=31 // pred_check_branch
        %2449 = sbr.rel (%p2447) target = $region36
      $region35: #{neural_net_forward.12} parent=31 // pred_region
        %s2450 = smul.u32 49, %s14
      $region36: #{neural_net_forward.12} parent=31 // pred_fallthru
        _
    $region32: #{neural_net_forward.12} parent=5 // pred_fallthru
      _
    %p2451 = scmp.le.s32.totalorder 2, %s9
    // Predicated region
    $region37: #{neural_net_forward.12} parent=5 // pred_check
      %p2452 = pneg %p2451
    $region38: #{neural_net_forward.12} parent=5 // pred_check_branch
      %2454 = sbr.rel (%p2452) target = $region40
    $region39: #{neural_net_forward.12} parent=5 // pred_region
      %s2455 = ssub.s32 %s9, 2
      // Predicated region
      $region41: #{neural_net_forward.12} parent=39 // pred_check
        %p2456 = pneg %p106
      $region42: #{neural_net_forward.12} parent=39 // pred_check_branch
        %2458 = sbr.rel (%p2456) target = $region44
      $region43: #{neural_net_forward.12} parent=39 // pred_region
        %s2459 = smul.u32 49, %s15
        %p2460 = scmp.lt.s32.totalorder %s2459, 195
        %s2461 = scalar_select %p2460, %s2459, 195
        %s2462 = smul.addr %s2461, 4
        %s2463 = scalar_lea.vmem %s3, %s2462
      $region44: #{neural_net_forward.12} parent=39 // pred_fallthru
        _
    $region40: #{neural_net_forward.12} parent=5 // pred_fallthru
      _
  $region6: #{neural_net_forward.12} parent=0 // loop_footer
    %s13 = sadd.s32 1, %s9
  $region7: #{neural_net_forward.12} parent=0 // loop_footer_branch
    %8 = sbr.rel target = $region3
  $region8: #{neural_net_forward.12} parent=0 // loop_exit
    _

// kernel: neural_net_forward.13
$region0: #{neural_net_forward.13}
  #allocation0 [shape = 'u32[]', space=smem, size = 0x4, offset = 0x4, fixed_abs, tag = 'smem constant byte address 0x4 - core index']
  #allocation1 [shape = 'u32[72,128]{1,0:T(1,128)}', space=vmem, size = 0x9000, scoped, tag = 'internal scratch']
  %s0 = inlined_call_operand.vmem [shape: bf16[392,128], index: 0, kind: input, shape index: {}]
  %s1 = inlined_call_operand.vmem [shape: bf16[128,128], index: 1, kind: input, shape index: {}]
  %s2 = inlined_call_operand.vmem [shape: f32[1,128], index: 2, kind: input, shape index: {}]
  %s3 = inlined_call_operand.vmem [shape: bf16[392,128], index: 3, kind: output, shape index: {}]
  %s4 = sld [smem:[#allocation0]]
  $region45: #{neural_net_forward.13} parent=0
    _
  %s6 = ssub.s32 1, %s4
  %s7 = scalar_select 0, %s6, %s4
  loop: start=0, step=1, limit=9
  $region2: #{neural_net_forward.13} parent=0 // loop_pre_header
    _
  $region3: #{neural_net_forward.13} parent=0 // loop_header
    %s9 = sphi 0, %s13
    %p10 = scmp.ge.s32.totalorder %s9, 9
    %s19 = sphi 0, %s21
    %s22 = sphi 0, %s19
    %s23 = sphi 0, %s22
    %s39 = sphi 0, %s23
    %s43 = sphi 0, %s43
    %s45 = sphi 0, %s43
    %s46 = sphi 0, %s45
    %s60 = sphi 0, %s46
    %s64 = sphi 0, %s64
    %s66 = sphi 0, %s64
    %s67 = sphi 0, %s66
    %s81 = sphi 0, %s67
    %s87 = sphi 0, %s89
    %s90 = sphi 0, %s87
    %s91 = sphi 0, %s90
    %s107 = sphi 0, %s91
  $region4: #{neural_net_forward.13} parent=0 // loop_header_branch
    %12 = sbr.rel (%p10) target = $region8
  $region5: #{neural_net_forward.13} parent=0 // loop_body
    %s14 = ssub.s32 %s9, 1
    %s15 = ssub.s32 %s9, 2
    %s16 = sadd.s32 %s9, 1
    %s17 = ssub.s32 %s9, %s16
    %p18 = scmp.eq.s32.totalorder %s17, 0
    %s20 = sadd.s32 %s19, 1
    %s21 = scalar_select %p18, %s19, %s20
    %p24 = pneg %p18
    %p25 = scmp.eq.s32.totalorder %s9, 6
    %p26 = por %p24, %p25
    %p27 = scmp.ne.s32.totalorder %s19, %s22
    %p28 = scmp.eq.s32.totalorder %s9, 0
    %p29 = por %p27, %p28
    %p30 = scmp.ne.s32.totalorder %s19, %s22
    %p31 = scmp.eq.s32.totalorder %s14, 6
    %p32 = por %p30, %p31
    %p33 = scmp.ne.s32.totalorder %s22, %s23
    %p34 = scmp.eq.s32.totalorder %s14, 0
    %p35 = por %p33, %p34
    %p36 = scmp.ne.s32.totalorder %s22, %s23
    %p37 = scmp.eq.s32.totalorder %s15, 6
    %p38 = por %p36, %p37
    %p40 = scmp.ne.s32.totalorder %s23, %s39
    %p41 = scmp.eq.s32.totalorder %s15, 0
    %p42 = por %p40, %p41
    %s44 = sadd.s32 %s43, 1
    %p47 = scmp.eq.s32.totalorder %s9, 6
    %p48 = scmp.ne.s32.totalorder %s43, %s45
    %p49 = scmp.eq.s32.totalorder %s9, 0
    %p50 = por %p48, %p49
    %p51 = scmp.ne.s32.totalorder %s43, %s45
    %p52 = scmp.eq.s32.totalorder %s14, 6
    %p53 = por %p51, %p52
    %p54 = scmp.ne.s32.totalorder %s45, %s46
    %p55 = scmp.eq.s32.totalorder %s14, 0
    %p56 = por %p54, %p55
    %p57 = scmp.ne.s32.totalorder %s45, %s46
    %p58 = scmp.eq.s32.totalorder %s15, 6
    %p59 = por %p57, %p58
    %p61 = scmp.ne.s32.totalorder %s46, %s60
    %p62 = scmp.eq.s32.totalorder %s15, 0
    %p63 = por %p61, %p62
    %s65 = sadd.s32 %s64, 1
    %p68 = scmp.eq.s32.totalorder %s9, 6
    %p69 = scmp.ne.s32.totalorder %s64, %s66
    %p70 = scmp.eq.s32.totalorder %s9, 0
    %p71 = por %p69, %p70
    %p72 = scmp.ne.s32.totalorder %s64, %s66
    %p73 = scmp.eq.s32.totalorder %s14, 6
    %p74 = por %p72, %p73
    %p75 = scmp.ne.s32.totalorder %s66, %s67
    %p76 = scmp.eq.s32.totalorder %s14, 0
    %p77 = por %p75, %p76
    %p78 = scmp.ne.s32.totalorder %s66, %s67
    %p79 = scmp.eq.s32.totalorder %s15, 6
    %p80 = por %p78, %p79
    %p82 = scmp.ne.s32.totalorder %s67, %s81
    %p83 = scmp.eq.s32.totalorder %s15, 0
    %p84 = por %p82, %p83
    %s85 = ssub.s32 %s9, %s16
    %p86 = scmp.eq.s32.totalorder %s85, 0
    %s88 = sadd.s32 %s87, 1
    %s89 = scalar_select %p86, %s87, %s88
    %p92 = pneg %p86
    %p93 = scmp.eq.s32.totalorder %s9, 6
    %p94 = por %p92, %p93
    %p95 = scmp.ne.s32.totalorder %s87, %s90
    %p96 = scmp.eq.s32.totalorder %s9, 0
    %p97 = por %p95, %p96
    %p98 = scmp.ne.s32.totalorder %s87, %s90
    %p99 = scmp.eq.s32.totalorder %s14, 6
    %p100 = por %p98, %p99
    %p101 = scmp.ne.s32.totalorder %s90, %s91
    %p102 = scmp.eq.s32.totalorder %s14, 0
    %p103 = por %p101, %p102
    %p104 = scmp.ne.s32.totalorder %s90, %s91
    %p105 = scmp.eq.s32.totalorder %s15, 6
    %p106 = por %p104, %p105
    %p108 = scmp.ne.s32.totalorder %s91, %s107
    %p109 = scmp.eq.s32.totalorder %s15, 0
    %p110 = por %p108, %p109
    %p111 = scmp.le.s32.totalorder 1, %s9
    %p112 = scmp.lt.s32.totalorder %s9, 8
    %p113 = pnand %p111, %p112
    %p114 = pneg %p113
    // Predicated region
    $region9: #{neural_net_forward.13} parent=5 // pred_check
      _
    $region10: #{neural_net_forward.13} parent=5 // pred_check_branch
      %116 = sbr.rel (%p113) target = $region12
    $region11: #{neural_net_forward.13} parent=5 // pred_region
      %s117 = ssub.s32 %s9, 1
      // Predicated region
      $region13: #{neural_net_forward.13} parent=11 // pred_check
        %p118 = pneg %p56
      $region14: #{neural_net_forward.13} parent=11 // pred_check_branch
        %120 = sbr.rel (%p118) target = $region16
      $region15: #{neural_net_forward.13} parent=11 // pred_region
        _
      $region16: #{neural_net_forward.13} parent=11 // pred_fallthru
        _
      // Predicated region
      $region17: #{neural_net_forward.13} parent=11 // pred_check
        %p121 = pneg %p77
      $region18: #{neural_net_forward.13} parent=11 // pred_check_branch
        %123 = sbr.rel (%p121) target = $region20
      $region19: #{neural_net_forward.13} parent=11 // pred_region
        _
      $region20: #{neural_net_forward.13} parent=11 // pred_fallthru
        _
    $region12: #{neural_net_forward.13} parent=5 // pred_fallthru
      _
    %p124 = scmp.lt.s32.totalorder %s9, 7
    // Predicated region
    $region21: #{neural_net_forward.13} parent=5 // pred_check
      %p125 = pneg %p124
    $region22: #{neural_net_forward.13} parent=5 // pred_check_branch
      %127 = sbr.rel (%p125) target = $region24
    $region23: #{neural_net_forward.13} parent=5 // pred_region
      // Predicated region
      $region25: #{neural_net_forward.13} parent=23 // pred_check
        %p128 = pneg %p29
      $region26: #{neural_net_forward.13} parent=23 // pred_check_branch
        %130 = sbr.rel (%p128) target = $region28
      $region27: #{neural_net_forward.13} parent=23 // pred_region
        %s131 = smul.u32 7, %s9
        %p132 = scmp.lt.s32.totalorder %s131, 48
        %s133 = scalar_select %p132, %s131, 48
        %s134 = smul.addr %s133, 4
        %s135 = scalar_lea.vmem %s0, %s134
        %s136 = smul.u32 7, %s9
      $region28: #{neural_net_forward.13} parent=23 // pred_fallthru
        _
    $region24: #{neural_net_forward.13} parent=5 // pred_fallthru
      _
    %p137 = scmp.le.s32.totalorder 1, %s9
    %p138 = scmp.lt.s32.totalorder %s9, 8
    %p139 = pnand %p137, %p138
    %p140 = pneg %p139
    // Predicated region
    $region29: #{neural_net_forward.13} parent=5 // pred_check
      _
    $region30: #{neural_net_forward.13} parent=5 // pred_check_branch
      %142 = sbr.rel (%p139) target = $region32
    $region31: #{neural_net_forward.13} parent=5 // pred_region
      %s143 = ssub.s32 %s9, 1
      %s144 = smul.u32 7, %s14
      %p145 = scmp.lt.s32.totalorder %s144, 48
      %s146 = scalar_select %p145, %s144, 48
      %s147 = smul.addr %s146, 4
      %s148 = scalar_lea.vmem %s0, %s147
      %p149 = pneg %p35
      %p150 = pneg %p32
      %p151 = pneg %p56
      %p152 = pneg %p53
      %p153 = pneg %p77
      %p154 = pneg %p74
      %p155 = pneg %p103
      %p156 = pneg %p100
      %s157 = smul.u32 7, %s14
      %p158 = scmp.lt.s32.totalorder %s157, 48
      %s159 = scalar_select %p158, %s157, 48
      %s160 = smul.addr %s159, 4
      %s161 = scalar_lea.vmem %s3, %s160
      %s162 = smul.u32 7, %s14
      %p163 = scmp.lt.s32.totalorder %s162, 48
      %s164 = scalar_select %p163, %s162, 48
      %s165 = smul.addr %s164, 4
      %s166 = scalar_lea.vmem %s0, %s165
      %s167 = smul.u32 7, %s14
      %s168 = smul.u32 7, %s14
      %p169 = scmp.lt.s32.totalorder %s168, 48
      %s170 = scalar_select %p169, %s168, 48
      %s171 = smul.addr %s170, 4
      %s172 = scalar_lea.vmem %s3, %s171
      %s173 = smul.u32 7, %s14
      %v174 = vld [vmem:[%s166] sm:$0xf]
      %v175 = vld [vmem:[%s166 + $0x4] sm:$0xf]
      %v176 = vld [vmem:[%s166 + $0x8] sm:$0xf]
      %v177 = vld [vmem:[%s166 + $0xc] sm:$0xf]
      %v178 = vld [vmem:[%s166 + $0x10] sm:$0xf]
      %v179 = vld [vmem:[%s166 + $0x14] sm:$0xf]
      %v180 = vld [vmem:[%s166 + $0x18] sm:$0xf]
      %v181 = vld [vmem:[%s1] sm:$0xf]
      %v182 = vld [vmem:[%s1 + $0x4] sm:$0xf]
      %v183 = vld [vmem:[%s1 + $0x8] sm:$0xf]
      %v184 = vld [vmem:[%s1 + $0xc] sm:$0xf]
      %v185 = vld [vmem:[%s1 + $0x10] sm:$0xf]
      %v186 = vld [vmem:[%s1 + $0x14] sm:$0xf]
      %v187 = vld [vmem:[%s1 + $0x18] sm:$0xf]
      %v188 = vld [vmem:[%s1 + $0x1c] sm:$0xf]
      %v189 = vld [vmem:[%s1 + $0x20] sm:$0xf]
      %v190 = vld [vmem:[%s1 + $0x24] sm:$0xf]
      %v191 = vld [vmem:[%s1 + $0x28] sm:$0xf]
      %v192 = vld [vmem:[%s1 + $0x2c] sm:$0xf]
      %v193 = vld [vmem:[%s1 + $0x30] sm:$0xf]
      %v194 = vld [vmem:[%s1 + $0x34] sm:$0xf]
      %v195 = vld [vmem:[%s1 + $0x38] sm:$0xf]
      %v196 = vld [vmem:[%s1 + $0x3c] sm:$0xf]
      %v197 = vld [vmem:[%s2] sm:$0x1]
      %v199 = vperm.slane %v197, 0
      %v208 = vunpack.c.l.b16 %v174
      %v209 = vunpack.c.l.b16 %v175
      %v210 = vunpack.c.l.b16 %v176
      %v211 = vunpack.c.l.b16 %v177
      %v212 = vunpack.c.l.b16 %v178
      %v213 = vunpack.c.l.b16 %v179
      %v214 = vunpack.c.l.b16 %v180
      %v215 = vpack.c.b16 %v209, %v208
      %v216 = vpack.c.b16 %v211, %v210
      %v217 = vpack.c.b16 %v213, %v212
      %v218 = vpack.c.b16 %v214, %v214
      %v239 = vunpack.c.l.b16 %v181
      %v240 = vunpack.c.l.b16 %v182
      %v241 = vunpack.c.l.b16 %v183
      %v242 = vunpack.c.l.b16 %v184
      %v243 = vunpack.c.l.b16 %v185
      %v244 = vunpack.c.l.b16 %v186
      %v245 = vunpack.c.l.b16 %v187
      %v246 = vunpack.c.l.b16 %v188
      %v247 = vunpack.c.l.b16 %v189
      %v248 = vunpack.c.l.b16 %v190
      %v249 = vunpack.c.l.b16 %v191
      %v250 = vunpack.c.l.b16 %v192
      %v251 = vunpack.c.l.b16 %v193
      %v252 = vunpack.c.l.b16 %v194
      %v253 = vunpack.c.l.b16 %v195
      %v254 = vunpack.c.l.b16 %v196
      %v255 = vpack.c.b16 %v240, %v239
      %v256 = vpack.c.b16 %v242, %v241
      %v257 = vpack.c.b16 %v244, %v243
      %v258 = vpack.c.b16 %v246, %v245
      %v259 = vpack.c.b16 %v248, %v247
      %v260 = vpack.c.b16 %v250, %v249
      %v261 = vpack.c.b16 %v252, %v251
      %v262 = vpack.c.b16 %v254, %v253
      %271 = vmatpush.bf16.msra.mxu0 %v262
      %272 = vmatpush.bf16.msra.mxu0 %v261
      %273 = vmatpush.bf16.msra.mxu0 %v260
      %274 = vmatpush.bf16.msra.mxu0 %v259
      %275 = vmatpush.bf16.msra.mxu0 %v258
      %276 = vmatpush.bf16.msra.mxu0 %v257
      %277 = vmatpush.bf16.msra.mxu0 %v256
      %278 = vmatpush.bf16.msra.mxu0 %v255
      %279 = vmatmul.bf16.gmra.mxu0 %v215
      %v280 = vpop.f32.mrf.mxu0
      %v281 = vadd.f32 %v199, %v280
      %v282 = vpop.f32.mrf.mxu0
      %v283 = vadd.f32 %v199, %v282
      %284 = vmatmul.bf16.gmra.mxu0 %v216
      %v285 = vpop.f32.mrf.mxu0
      %v286 = vadd.f32 %v199, %v285
      %v287 = vpop.f32.mrf.mxu0
      %v288 = vadd.f32 %v199, %v287
      %289 = vmatmul.bf16.gmra.mxu0 %v217
      %v290 = vpop.f32.mrf.mxu0
      %v291 = vadd.f32 %v199, %v290
      %v292 = vpop.f32.mrf.mxu0
      %v293 = vadd.f32 %v199, %v292
      %294 = vmatmul.bf16.gmra.mxu0 %v218
      %v295 = vpop.f32.mrf.mxu0
      %v296 = vadd.f32 %v199, %v295
      %v297 = vpop.f32.mrf.mxu0
      %298 = vdwg.mxu0
      %v299 = vmax.f32 %v281, 0.0
      %v300 = vmax.f32 %v283, 0.0
      %v301 = vmax.f32 %v286, 0.0
      %v302 = vmax.f32 %v288, 0.0
      %v303 = vmax.f32 %v291, 0.0
      %v304 = vmax.f32 %v293, 0.0
      %v305 = vmax.f32 %v296, 0.0
      %v306 = vpack.c.bf16 %v299, %v299
      %v307 = vpack.c.bf16 %v300, %v300
      %v308 = vpack.c.bf16 %v301, %v301
      %v309 = vpack.c.bf16 %v302, %v302
      %v310 = vpack.c.bf16 %v303, %v303
      %v311 = vpack.c.bf16 %v304, %v304
      %v312 = vpack.c.bf16 %v305, %v305
      %313 = vst [vmem:[%s172] sm:$0xf] %v306
      %314 = vst [vmem:[%s172 + $0x4] sm:$0xf] %v307
      %315 = vst [vmem:[%s172 + $0x8] sm:$0xf] %v308
      %316 = vst [vmem:[%s172 + $0xc] sm:$0xf] %v309
      %317 = vst [vmem:[%s172 + $0x10] sm:$0xf] %v310
      %318 = vst [vmem:[%s172 + $0x14] sm:$0xf] %v311
      %319 = vst [vmem:[%s172 + $0x18] sm:$0xf] %v312
      %s320 = smul.u32 7, %s14
      %p321 = scmp.lt.s32.totalorder %s320, 48
      %s322 = scalar_select %p321, %s320, 48
      %s323 = smul.addr %s322, 4
      %s324 = scalar_lea.vmem %s3, %s323
      // Predicated region
      $region33: #{neural_net_forward.13} parent=31 // pred_check
        %p325 = pneg %p100
      $region34: #{neural_net_forward.13} parent=31 // pred_check_branch
        %327 = sbr.rel (%p325) target = $region36
      $region35: #{neural_net_forward.13} parent=31 // pred_region
        %s328 = smul.u32 7, %s14
      $region36: #{neural_net_forward.13} parent=31 // pred_fallthru
        _
    $region32: #{neural_net_forward.13} parent=5 // pred_fallthru
      _
    %p329 = scmp.le.s32.totalorder 2, %s9
    // Predicated region
    $region37: #{neural_net_forward.13} parent=5 // pred_check
      %p330 = pneg %p329
    $region38: #{neural_net_forward.13} parent=5 // pred_check_branch
      %332 = sbr.rel (%p330) target = $region40
    $region39: #{neural_net_forward.13} parent=5 // pred_region
      %s333 = ssub.s32 %s9, 2
      // Predicated region
      $region41: #{neural_net_forward.13} parent=39 // pred_check
        %p334 = pneg %p106
      $region42: #{neural_net_forward.13} parent=39 // pred_check_branch
        %336 = sbr.rel (%p334) target = $region44
      $region43: #{neural_net_forward.13} parent=39 // pred_region
        %s337 = smul.u32 7, %s15
        %p338 = scmp.lt.s32.totalorder %s337, 48
        %s339 = scalar_select %p338, %s337, 48
        %s340 = smul.addr %s339, 4
        %s341 = scalar_lea.vmem %s3, %s340
      $region44: #{neural_net_forward.13} parent=39 // pred_fallthru
        _
    $region40: #{neural_net_forward.13} parent=5 // pred_fallthru
      _
  $region6: #{neural_net_forward.13} parent=0 // loop_footer
    %s13 = sadd.s32 1, %s9
  $region7: #{neural_net_forward.13} parent=0 // loop_footer_branch
    %8 = sbr.rel target = $region3
  $region8: #{neural_net_forward.13} parent=0 // loop_exit
    _

// kernel: neural_net_forward.14
$region0: #{neural_net_forward.14}
  #allocation0 [shape = 'u32[]', space=smem, size = 0x4, offset = 0x4, fixed_abs, tag = 'smem constant byte address 0x4 - core index']
  #allocation1 [shape = 'u32[72,128]{1,0:T(1,128)}', space=vmem, size = 0x9000, scoped, tag = 'internal scratch']
  %s0 = inlined_call_operand.vmem [shape: bf16[392,816], index: 0, kind: input, shape index: {}]
  %s1 = inlined_call_operand.vmem [shape: bf16[816,128], index: 1, kind: input, shape index: {}]
  %s2 = inlined_call_operand.vmem [shape: f32[1,128], index: 2, kind: input, shape index: {}]
  %s3 = inlined_call_operand.vmem [shape: bf16[392,128], index: 3, kind: output, shape index: {}]
  %s4 = sld [smem:[#allocation0]]
  $region45: #{neural_net_forward.14} parent=0
    _
  %s6 = ssub.s32 1, %s4
  %s7 = scalar_select 0, %s6, %s4
  loop: start=0, step=1, limit=9
  $region2: #{neural_net_forward.14} parent=0 // loop_pre_header
    _
  $region3: #{neural_net_forward.14} parent=0 // loop_header
    %s9 = sphi 0, %s13
    %p10 = scmp.ge.s32.totalorder %s9, 9
    %s19 = sphi 0, %s21
    %s22 = sphi 0, %s19
    %s23 = sphi 0, %s22
    %s39 = sphi 0, %s23
    %s43 = sphi 0, %s43
    %s45 = sphi 0, %s43
    %s46 = sphi 0, %s45
    %s60 = sphi 0, %s46
    %s64 = sphi 0, %s64
    %s66 = sphi 0, %s64
    %s67 = sphi 0, %s66
    %s81 = sphi 0, %s67
    %s87 = sphi 0, %s89
    %s90 = sphi 0, %s87
    %s91 = sphi 0, %s90
    %s107 = sphi 0, %s91
  $region4: #{neural_net_forward.14} parent=0 // loop_header_branch
    %12 = sbr.rel (%p10) target = $region8
  $region5: #{neural_net_forward.14} parent=0 // loop_body
    %s14 = ssub.s32 %s9, 1
    %s15 = ssub.s32 %s9, 2
    %s16 = sadd.s32 %s9, 1
    %s17 = ssub.s32 %s9, %s16
    %p18 = scmp.eq.s32.totalorder %s17, 0
    %s20 = sadd.s32 %s19, 1
    %s21 = scalar_select %p18, %s19, %s20
    %p24 = pneg %p18
    %p25 = scmp.eq.s32.totalorder %s9, 6
    %p26 = por %p24, %p25
    %p27 = scmp.ne.s32.totalorder %s19, %s22
    %p28 = scmp.eq.s32.totalorder %s9, 0
    %p29 = por %p27, %p28
    %p30 = scmp.ne.s32.totalorder %s19, %s22
    %p31 = scmp.eq.s32.totalorder %s14, 6
    %p32 = por %p30, %p31
    %p33 = scmp.ne.s32.totalorder %s22, %s23
    %p34 = scmp.eq.s32.totalorder %s14, 0
    %p35 = por %p33, %p34
    %p36 = scmp.ne.s32.totalorder %s22, %s23
    %p37 = scmp.eq.s32.totalorder %s15, 6
    %p38 = por %p36, %p37
    %p40 = scmp.ne.s32.totalorder %s23, %s39
    %p41 = scmp.eq.s32.totalorder %s15, 0
    %p42 = por %p40, %p41
    %s44 = sadd.s32 %s43, 1
    %p47 = scmp.eq.s32.totalorder %s9, 6
    %p48 = scmp.ne.s32.totalorder %s43, %s45
    %p49 = scmp.eq.s32.totalorder %s9, 0
    %p50 = por %p48, %p49
    %p51 = scmp.ne.s32.totalorder %s43, %s45
    %p52 = scmp.eq.s32.totalorder %s14, 6
    %p53 = por %p51, %p52
    %p54 = scmp.ne.s32.totalorder %s45, %s46
    %p55 = scmp.eq.s32.totalorder %s14, 0
    %p56 = por %p54, %p55
    %p57 = scmp.ne.s32.totalorder %s45, %s46
    %p58 = scmp.eq.s32.totalorder %s15, 6
    %p59 = por %p57, %p58
    %p61 = scmp.ne.s32.totalorder %s46, %s60
    %p62 = scmp.eq.s32.totalorder %s15, 0
    %p63 = por %p61, %p62
    %s65 = sadd.s32 %s64, 1
    %p68 = scmp.eq.s32.totalorder %s9, 6
    %p69 = scmp.ne.s32.totalorder %s64, %s66
    %p70 = scmp.eq.s32.totalorder %s9, 0
    %p71 = por %p69, %p70
    %p72 = scmp.ne.s32.totalorder %s64, %s66
    %p73 = scmp.eq.s32.totalorder %s14, 6
    %p74 = por %p72, %p73
    %p75 = scmp.ne.s32.totalorder %s66, %s67
    %p76 = scmp.eq.s32.totalorder %s14, 0
    %p77 = por %p75, %p76
    %p78 = scmp.ne.s32.totalorder %s66, %s67
    %p79 = scmp.eq.s32.totalorder %s15, 6
    %p80 = por %p78, %p79
    %p82 = scmp.ne.s32.totalorder %s67, %s81
    %p83 = scmp.eq.s32.totalorder %s15, 0
    %p84 = por %p82, %p83
    %s85 = ssub.s32 %s9, %s16
    %p86 = scmp.eq.s32.totalorder %s85, 0
    %s88 = sadd.s32 %s87, 1
    %s89 = scalar_select %p86, %s87, %s88
    %p92 = pneg %p86
    %p93 = scmp.eq.s32.totalorder %s9, 6
    %p94 = por %p92, %p93
    %p95 = scmp.ne.s32.totalorder %s87, %s90
    %p96 = scmp.eq.s32.totalorder %s9, 0
    %p97 = por %p95, %p96
    %p98 = scmp.ne.s32.totalorder %s87, %s90
    %p99 = scmp.eq.s32.totalorder %s14, 6
    %p100 = por %p98, %p99
    %p101 = scmp.ne.s32.totalorder %s90, %s91
    %p102 = scmp.eq.s32.totalorder %s14, 0
    %p103 = por %p101, %p102
    %p104 = scmp.ne.s32.totalorder %s90, %s91
    %p105 = scmp.eq.s32.totalorder %s15, 6
    %p106 = por %p104, %p105
    %p108 = scmp.ne.s32.totalorder %s91, %s107
    %p109 = scmp.eq.s32.totalorder %s15, 0
    %p110 = por %p108, %p109
    %p111 = scmp.le.s32.totalorder 1, %s9
    %p112 = scmp.lt.s32.totalorder %s9, 8
    %p113 = pnand %p111, %p112
    %p114 = pneg %p113
    // Predicated region
    $region9: #{neural_net_forward.14} parent=5 // pred_check
      _
    $region10: #{neural_net_forward.14} parent=5 // pred_check_branch
      %116 = sbr.rel (%p113) target = $region12
    $region11: #{neural_net_forward.14} parent=5 // pred_region
      %s117 = ssub.s32 %s9, 1
      // Predicated region
      $region13: #{neural_net_forward.14} parent=11 // pred_check
        %p118 = pneg %p56
      $region14: #{neural_net_forward.14} parent=11 // pred_check_branch
        %120 = sbr.rel (%p118) target = $region16
      $region15: #{neural_net_forward.14} parent=11 // pred_region
        _
      $region16: #{neural_net_forward.14} parent=11 // pred_fallthru
        _
      // Predicated region
      $region17: #{neural_net_forward.14} parent=11 // pred_check
        %p121 = pneg %p77
      $region18: #{neural_net_forward.14} parent=11 // pred_check_branch
        %123 = sbr.rel (%p121) target = $region20
      $region19: #{neural_net_forward.14} parent=11 // pred_region
        _
      $region20: #{neural_net_forward.14} parent=11 // pred_fallthru
        _
    $region12: #{neural_net_forward.14} parent=5 // pred_fallthru
      _
    %p124 = scmp.lt.s32.totalorder %s9, 7
    // Predicated region
    $region21: #{neural_net_forward.14} parent=5 // pred_check
      %p125 = pneg %p124
    $region22: #{neural_net_forward.14} parent=5 // pred_check_branch
      %127 = sbr.rel (%p125) target = $region24
    $region23: #{neural_net_forward.14} parent=5 // pred_region
      // Predicated region
      $region25: #{neural_net_forward.14} parent=23 // pred_check
        %p128 = pneg %p29
      $region26: #{neural_net_forward.14} parent=23 // pred_check_branch
        %130 = sbr.rel (%p128) target = $region28
      $region27: #{neural_net_forward.14} parent=23 // pred_region
        %s131 = smul.u32 7, %s9
        %p132 = scmp.lt.s32.totalorder %s131, 48
        %s133 = scalar_select %p132, %s131, 48
        %s134 = smul.addr %s133, 7
        %s135 = smul.addr %s134, 4
        %s136 = scalar_lea.vmem %s0, %s135
        %s137 = smul.u32 7, %s9
      $region28: #{neural_net_forward.14} parent=23 // pred_fallthru
        _
    $region24: #{neural_net_forward.14} parent=5 // pred_fallthru
      _
    %p138 = scmp.le.s32.totalorder 1, %s9
    %p139 = scmp.lt.s32.totalorder %s9, 8
    %p140 = pnand %p138, %p139
    %p141 = pneg %p140
    // Predicated region
    $region29: #{neural_net_forward.14} parent=5 // pred_check
      _
    $region30: #{neural_net_forward.14} parent=5 // pred_check_branch
      %143 = sbr.rel (%p140) target = $region32
    $region31: #{neural_net_forward.14} parent=5 // pred_region
      %s144 = ssub.s32 %s9, 1
      %s145 = smul.u32 7, %s14
      %p146 = scmp.lt.s32.totalorder %s145, 48
      %s147 = scalar_select %p146, %s145, 48
      %s148 = smul.addr %s147, 7
      %s149 = smul.addr %s148, 4
      %s150 = scalar_lea.vmem %s0, %s149
      %p151 = pneg %p35
      %p152 = pneg %p32
      %p153 = pneg %p56
      %p154 = pneg %p53
      %p155 = pneg %p77
      %p156 = pneg %p74
      %p157 = pneg %p103
      %p158 = pneg %p100
      %s159 = smul.u32 7, %s14
      %p160 = scmp.lt.s32.totalorder %s159, 48
      %s161 = scalar_select %p160, %s159, 48
      %s162 = smul.addr %s161, 4
      %s163 = scalar_lea.vmem %s3, %s162
      %s164 = smul.u32 7, %s14
      %p165 = scmp.lt.s32.totalorder %s164, 48
      %s166 = scalar_select %p165, %s164, 48
      %s167 = smul.addr %s166, 7
      %s168 = smul.addr %s167, 4
      %s169 = scalar_lea.vmem %s0, %s168
      %s170 = smul.u32 7, %s14
      %s171 = smul.u32 7, %s14
      %p172 = scmp.lt.s32.totalorder %s171, 48
      %s173 = scalar_select %p172, %s171, 48
      %s174 = smul.addr %s173, 4
      %s175 = scalar_lea.vmem %s3, %s174
      %s176 = smul.u32 7, %s14
      %v178 = vld [vmem:[%s169] sm:$0xff]
      %v179 = vld [vmem:[%s169 + $0x8] sm:$0xff]
      %v180 = vld [vmem:[%s169 + $0x10] sm:$0xff]
      %v181 = vld [vmem:[%s169 + $0x18] sm:$0xf]
      %v182 = vld [vmem:[%s169 + $0x1c] sm:$0xff]
      %v183 = vld [vmem:[%s169 + $0x24] sm:$0xff]
      %v184 = vld [vmem:[%s169 + $0x2c] sm:$0xff]
      %v185 = vld [vmem:[%s169 + $0x34] sm:$0xf]
      %v186 = vld [vmem:[%s169 + $0x38] sm:$0xff]
      %v187 = vld [vmem:[%s169 + $0x40] sm:$0xff]
      %v188 = vld [vmem:[%s169 + $0x48] sm:$0xff]
      %v189 = vld [vmem:[%s169 + $0x50] sm:$0xf]
      %v190 = vld [vmem:[%s169 + $0x54] sm:$0xff]
      %v191 = vld [vmem:[%s169 + $0x5c] sm:$0xff]
      %v192 = vld [vmem:[%s169 + $0x64] sm:$0xff]
      %v193 = vld [vmem:[%s169 + $0x6c] sm:$0xf]
      %v194 = vld [vmem:[%s169 + $0x70] sm:$0xff]
      %v195 = vld [vmem:[%s169 + $0x78] sm:$0xff]
      %v196 = vld [vmem:[%s169 + $0x80] sm:$0xff]
      %v197 = vld [vmem:[%s169 + $0x88] sm:$0xf]
      %v198 = vld [vmem:[%s169 + $0x8c] sm:$0xff]
      %v199 = vld [vmem:[%s169 + $0x94] sm:$0xff]
      %v200 = vld [vmem:[%s169 + $0x9c] sm:$0xff]
      %v201 = vld [vmem:[%s169 + $0xa4] sm:$0xf]
      %v202 = vld [vmem:[%s169 + $0xa8] sm:$0xff]
      %v203 = vld [vmem:[%s169 + $0xb0] sm:$0xff]
      %v204 = vld [vmem:[%s169 + $0xb8] sm:$0xff]
      %v205 = vld [vmem:[%s169 + $0xc0] sm:$0xf]
      %v206 = vld [vmem:[%s1] sm:$0xf]
      %v207 = vld [vmem:[%s1 + $0x4] sm:$0xf]
      %v208 = vld [vmem:[%s1 + $0x8] sm:$0xf]
      %v209 = vld [vmem:[%s1 + $0xc] sm:$0xf]
      %v210 = vld [vmem:[%s1 + $0x10] sm:$0xf]
      %v211 = vld [vmem:[%s1 + $0x14] sm:$0xf]
      %v212 = vld [vmem:[%s1 + $0x18] sm:$0xf]
      %v213 = vld [vmem:[%s1 + $0x1c] sm:$0xf]
      %v214 = vld [vmem:[%s1 + $0x20] sm:$0xf]
      %v215 = vld [vmem:[%s1 + $0x24] sm:$0xf]
      %v216 = vld [vmem:[%s1 + $0x28] sm:$0xf]
      %v217 = vld [vmem:[%s1 + $0x2c] sm:$0xf]
      %v218 = vld [vmem:[%s1 + $0x30] sm:$0xf]
      %v219 = vld [vmem:[%s1 + $0x34] sm:$0xf]
      %v220 = vld [vmem:[%s1 + $0x38] sm:$0xf]
      %v221 = vld [vmem:[%s1 + $0x3c] sm:$0xf]
      %v222 = vld [vmem:[%s1 + $0x40] sm:$0xf]
      %v223 = vld [vmem:[%s1 + $0x44] sm:$0xf]
      %v224 = vld [vmem:[%s1 + $0x48] sm:$0xf]
      %v225 = vld [vmem:[%s1 + $0x4c] sm:$0xf]
      %v226 = vld [vmem:[%s1 + $0x50] sm:$0xf]
      %v227 = vld [vmem:[%s1 + $0x54] sm:$0xf]
      %v228 = vld [vmem:[%s1 + $0x58] sm:$0xf]
      %v229 = vld [vmem:[%s1 + $0x5c] sm:$0xf]
      %v230 = vld [vmem:[%s1 + $0x60] sm:$0xf]
      %v231 = vld [vmem:[%s1 + $0x64] sm:$0xf]
      %v232 = vld [vmem:[%s1 + $0x68] sm:$0xf]
      %v233 = vld [vmem:[%s1 + $0x6c] sm:$0xf]
      %v234 = vld [vmem:[%s1 + $0x70] sm:$0xf]
      %v235 = vld [vmem:[%s1 + $0x74] sm:$0xf]
      %v236 = vld [vmem:[%s1 + $0x78] sm:$0xf]
      %v237 = vld [vmem:[%s1 + $0x7c] sm:$0xf]
      %v238 = vld [vmem:[%s1 + $0x80] sm:$0xf]
      %v239 = vld [vmem:[%s1 + $0x84] sm:$0xf]
      %v240 = vld [vmem:[%s1 + $0x88] sm:$0xf]
      %v241 = vld [vmem:[%s1 + $0x8c] sm:$0xf]
      %v242 = vld [vmem:[%s1 + $0x90] sm:$0xf]
      %v243 = vld [vmem:[%s1 + $0x94] sm:$0xf]
      %v244 = vld [vmem:[%s1 + $0x98] sm:$0xf]
      %v245 = vld [vmem:[%s1 + $0x9c] sm:$0xf]
      %v246 = vld [vmem:[%s1 + $0xa0] sm:$0xf]
      %v247 = vld [vmem:[%s1 + $0xa4] sm:$0xf]
      %v248 = vld [vmem:[%s1 + $0xa8] sm:$0xf]
      %v249 = vld [vmem:[%s1 + $0xac] sm:$0xf]
      %v250 = vld [vmem:[%s1 + $0xb0] sm:$0xf]
      %v251 = vld [vmem:[%s1 + $0xb4] sm:$0xf]
      %v252 = vld [vmem:[%s1 + $0xb8] sm:$0xf]
      %v253 = vld [vmem:[%s1 + $0xbc] sm:$0xf]
      %v254 = vld [vmem:[%s1 + $0xc0] sm:$0xf]
      %v255 = vld [vmem:[%s1 + $0xc4] sm:$0xf]
      %v256 = vld [vmem:[%s1 + $0xc8] sm:$0xf]
      %v257 = vld [vmem:[%s1 + $0xcc] sm:$0xf]
      %v258 = vld [vmem:[%s1 + $0xd0] sm:$0xf]
      %v259 = vld [vmem:[%s1 + $0xd4] sm:$0xf]
      %v260 = vld [vmem:[%s1 + $0xd8] sm:$0xf]
      %v261 = vld [vmem:[%s1 + $0xdc] sm:$0xf]
      %v262 = vld [vmem:[%s1 + $0xe0] sm:$0xf]
      %v263 = vld [vmem:[%s1 + $0xe4] sm:$0xf]
      %v264 = vld [vmem:[%s1 + $0xe8] sm:$0xf]
      %v265 = vld [vmem:[%s1 + $0xec] sm:$0xf]
      %v266 = vld [vmem:[%s1 + $0xf0] sm:$0xf]
      %v267 = vld [vmem:[%s1 + $0xf4] sm:$0xf]
      %v268 = vld [vmem:[%s1 + $0xf8] sm:$0xf]
      %v269 = vld [vmem:[%s1 + $0xfc] sm:$0xf]
      %v270 = vld [vmem:[%s1 + $0x100] sm:$0xf]
      %v271 = vld [vmem:[%s1 + $0x104] sm:$0xf]
      %v272 = vld [vmem:[%s1 + $0x108] sm:$0xf]
      %v273 = vld [vmem:[%s1 + $0x10c] sm:$0xf]
      %v274 = vld [vmem:[%s1 + $0x110] sm:$0xf]
      %v275 = vld [vmem:[%s1 + $0x114] sm:$0xf]
      %v276 = vld [vmem:[%s1 + $0x118] sm:$0xf]
      %v277 = vld [vmem:[%s1 + $0x11c] sm:$0xf]
      %v278 = vld [vmem:[%s1 + $0x120] sm:$0xf]
      %v279 = vld [vmem:[%s1 + $0x124] sm:$0xf]
      %v280 = vld [vmem:[%s1 + $0x128] sm:$0xf]
      %v281 = vld [vmem:[%s1 + $0x12c] sm:$0xf]
      %v282 = vld [vmem:[%s1 + $0x130] sm:$0xf]
      %v283 = vld [vmem:[%s1 + $0x134] sm:$0xf]
      %v284 = vld [vmem:[%s1 + $0x138] sm:$0xf]
      %v285 = vld [vmem:[%s1 + $0x13c] sm:$0xf]
      %v286 = vld [vmem:[%s1 + $0x140] sm:$0xf]
      %v287 = vld [vmem:[%s1 + $0x144] sm:$0xf]
      %v288 = vld [vmem:[%s1 + $0x148] sm:$0xf]
      %v289 = vld [vmem:[%s1 + $0x14c] sm:$0xf]
      %v290 = vld [vmem:[%s1 + $0x150] sm:$0xf]
      %v291 = vld [vmem:[%s1 + $0x154] sm:$0xf]
      %v292 = vld [vmem:[%s1 + $0x158] sm:$0xf]
      %v293 = vld [vmem:[%s1 + $0x15c] sm:$0xf]
      %v294 = vld [vmem:[%s1 + $0x160] sm:$0xf]
      %v295 = vld [vmem:[%s1 + $0x164] sm:$0xf]
      %v296 = vld [vmem:[%s1 + $0x168] sm:$0xf]
      %v297 = vld [vmem:[%s1 + $0x16c] sm:$0xf]
      %v298 = vld [vmem:[%s1 + $0x170] sm:$0xf]
      %v299 = vld [vmem:[%s1 + $0x174] sm:$0xf]
      %v300 = vld [vmem:[%s1 + $0x178] sm:$0xf]
      %v301 = vld [vmem:[%s1 + $0x17c] sm:$0xf]
      %v302 = vld [vmem:[%s1 + $0x180] sm:$0xf]
      %v303 = vld [vmem:[%s1 + $0x184] sm:$0xf]
      %v304 = vld [vmem:[%s1 + $0x188] sm:$0xf]
      %v305 = vld [vmem:[%s1 + $0x18c] sm:$0xf]
      %v306 = vld [vmem:[%s1 + $0x190] sm:$0xf]
      %v307 = vld [vmem:[%s1 + $0x194] sm:$0xf]
      %v308 = vld [vmem:[%s2] sm:$0x1]
      %v310 = vperm.slane %v308, 0
      %v340 = vunpack.c.l.b16 %v178
      %v341 = vunpack.c.h.b16 %v178
      %v342 = vunpack.c.l.b16 %v179
      %v343 = vunpack.c.h.b16 %v179
      %v344 = vunpack.c.l.b16 %v180
      %v345 = vunpack.c.h.b16 %v180
      %v346 = vunpack.c.l.b16 %v181
      %v347 = vunpack.c.l.b16 %v182
      %v348 = vunpack.c.h.b16 %v182
      %v349 = vunpack.c.l.b16 %v183
      %v350 = vunpack.c.h.b16 %v183
      %v351 = vunpack.c.l.b16 %v184
      %v352 = vunpack.c.h.b16 %v184
      %v353 = vunpack.c.l.b16 %v185
      %v354 = vunpack.c.l.b16 %v186
      %v355 = vunpack.c.h.b16 %v186
      %v356 = vunpack.c.l.b16 %v187
      %v357 = vunpack.c.h.b16 %v187
      %v358 = vunpack.c.l.b16 %v188
      %v359 = vunpack.c.h.b16 %v188
      %v360 = vunpack.c.l.b16 %v189
      %v361 = vunpack.c.l.b16 %v190
      %v362 = vunpack.c.h.b16 %v190
      %v363 = vunpack.c.l.b16 %v191
      %v364 = vunpack.c.h.b16 %v191
      %v365 = vunpack.c.l.b16 %v192
      %v366 = vunpack.c.h.b16 %v192
      %v367 = vunpack.c.l.b16 %v193
      %v368 = vunpack.c.l.b16 %v194
      %v369 = vunpack.c.h.b16 %v194
      %v370 = vunpack.c.l.b16 %v195
      %v371 = vunpack.c.h.b16 %v195
      %v372 = vunpack.c.l.b16 %v196
      %v373 = vunpack.c.h.b16 %v196
      %v374 = vunpack.c.l.b16 %v197
      %v375 = vunpack.c.l.b16 %v198
      %v376 = vunpack.c.h.b16 %v198
      %v377 = vunpack.c.l.b16 %v199
      %v378 = vunpack.c.h.b16 %v199
      %v379 = vunpack.c.l.b16 %v200
      %v380 = vunpack.c.h.b16 %v200
      %v381 = vunpack.c.l.b16 %v201
      %v382 = vunpack.c.l.b16 %v202
      %v383 = vunpack.c.h.b16 %v202
      %v384 = vunpack.c.l.b16 %v203
      %v385 = vunpack.c.h.b16 %v203
      %v386 = vunpack.c.l.b16 %v204
      %v387 = vunpack.c.h.b16 %v204
      %v388 = vunpack.c.l.b16 %v205
      %v389 = vpack.c.b16 %v347, %v340
      %v390 = vpack.c.b16 %v348, %v341
      %v391 = vpack.c.b16 %v349, %v342
      %v392 = vpack.c.b16 %v350, %v343
      %v393 = vpack.c.b16 %v351, %v344
      %v394 = vpack.c.b16 %v352, %v345
      %v395 = vpack.c.b16 %v353, %v346
      %v396 = vpack.c.b16 %v361, %v354
      %v397 = vpack.c.b16 %v362, %v355
      %v398 = vpack.c.b16 %v363, %v356
      %v399 = vpack.c.b16 %v364, %v357
      %v400 = vpack.c.b16 %v365, %v358
      %v401 = vpack.c.b16 %v366, %v359
      %v402 = vpack.c.b16 %v367, %v360
      %v403 = vpack.c.b16 %v375, %v368
      %v404 = vpack.c.b16 %v376, %v369
      %v405 = vpack.c.b16 %v377, %v370
      %v406 = vpack.c.b16 %v378, %v371
      %v407 = vpack.c.b16 %v379, %v372
      %v408 = vpack.c.b16 %v380, %v373
      %v409 = vpack.c.b16 %v381, %v374
      %v410 = vpack.c.b16 %v382, %v382
      %v411 = vpack.c.b16 %v383, %v383
      %v412 = vpack.c.b16 %v384, %v384
      %v413 = vpack.c.b16 %v385, %v385
      %v414 = vpack.c.b16 %v386, %v386
      %v415 = vpack.c.b16 %v387, %v387
      %v416 = vpack.c.b16 %v388, %v388
      %v543 = vunpack.c.l.b16 %v206
      %v544 = vunpack.c.l.b16 %v207
      %v545 = vunpack.c.l.b16 %v208
      %v546 = vunpack.c.l.b16 %v209
      %v547 = vunpack.c.l.b16 %v210
      %v548 = vunpack.c.l.b16 %v211
      %v549 = vunpack.c.l.b16 %v212
      %v550 = vunpack.c.l.b16 %v213
      %v551 = vunpack.c.l.b16 %v214
      %v552 = vunpack.c.l.b16 %v215
      %v553 = vunpack.c.l.b16 %v216
      %v554 = vunpack.c.l.b16 %v217
      %v555 = vunpack.c.l.b16 %v218
      %v556 = vunpack.c.l.b16 %v219
      %v557 = vunpack.c.l.b16 %v220
      %v558 = vunpack.c.l.b16 %v221
      %v559 = vunpack.c.l.b16 %v222
      %v560 = vunpack.c.l.b16 %v223
      %v561 = vunpack.c.l.b16 %v224
      %v562 = vunpack.c.l.b16 %v225
      %v563 = vunpack.c.l.b16 %v226
      %v564 = vunpack.c.l.b16 %v227
      %v565 = vunpack.c.l.b16 %v228
      %v566 = vunpack.c.l.b16 %v229
      %v567 = vunpack.c.l.b16 %v230
      %v568 = vunpack.c.l.b16 %v231
      %v569 = vunpack.c.l.b16 %v232
      %v570 = vunpack.c.l.b16 %v233
      %v571 = vunpack.c.l.b16 %v234
      %v572 = vunpack.c.l.b16 %v235
      %v573 = vunpack.c.l.b16 %v236
      %v574 = vunpack.c.l.b16 %v237
      %v575 = vunpack.c.l.b16 %v238
      %v576 = vunpack.c.l.b16 %v239
      %v577 = vunpack.c.l.b16 %v240
      %v578 = vunpack.c.l.b16 %v241
      %v579 = vunpack.c.l.b16 %v242
      %v580 = vunpack.c.l.b16 %v243
      %v581 = vunpack.c.l.b16 %v244
      %v582 = vunpack.c.l.b16 %v245
      %v583 = vunpack.c.l.b16 %v246
      %v584 = vunpack.c.l.b16 %v247
      %v585 = vunpack.c.l.b16 %v248
      %v586 = vunpack.c.l.b16 %v249
      %v587 = vunpack.c.l.b16 %v250
      %v588 = vunpack.c.l.b16 %v251
      %v589 = vunpack.c.l.b16 %v252
      %v590 = vunpack.c.l.b16 %v253
      %v591 = vunpack.c.l.b16 %v254
      %v592 = vunpack.c.l.b16 %v255
      %v593 = vunpack.c.l.b16 %v256
      %v594 = vunpack.c.l.b16 %v257
      %v595 = vunpack.c.l.b16 %v258
      %v596 = vunpack.c.l.b16 %v259
      %v597 = vunpack.c.l.b16 %v260
      %v598 = vunpack.c.l.b16 %v261
      %v599 = vunpack.c.l.b16 %v262
      %v600 = vunpack.c.l.b16 %v263
      %v601 = vunpack.c.l.b16 %v264
      %v602 = vunpack.c.l.b16 %v265
      %v603 = vunpack.c.l.b16 %v266
      %v604 = vunpack.c.l.b16 %v267
      %v605 = vunpack.c.l.b16 %v268
      %v606 = vunpack.c.l.b16 %v269
      %v607 = vunpack.c.l.b16 %v270
      %v608 = vunpack.c.l.b16 %v271
      %v609 = vunpack.c.l.b16 %v272
      %v610 = vunpack.c.l.b16 %v273
      %v611 = vunpack.c.l.b16 %v274
      %v612 = vunpack.c.l.b16 %v275
      %v613 = vunpack.c.l.b16 %v276
      %v614 = vunpack.c.l.b16 %v277
      %v615 = vunpack.c.l.b16 %v278
      %v616 = vunpack.c.l.b16 %v279
      %v617 = vunpack.c.l.b16 %v280
      %v618 = vunpack.c.l.b16 %v281
      %v619 = vunpack.c.l.b16 %v282
      %v620 = vunpack.c.l.b16 %v283
      %v621 = vunpack.c.l.b16 %v284
      %v622 = vunpack.c.l.b16 %v285
      %v623 = vunpack.c.l.b16 %v286
      %v624 = vunpack.c.l.b16 %v287
      %v625 = vunpack.c.l.b16 %v288
      %v626 = vunpack.c.l.b16 %v289
      %v627 = vunpack.c.l.b16 %v290
      %v628 = vunpack.c.l.b16 %v291
      %v629 = vunpack.c.l.b16 %v292
      %v630 = vunpack.c.l.b16 %v293
      %v631 = vunpack.c.l.b16 %v294
      %v632 = vunpack.c.l.b16 %v295
      %v633 = vunpack.c.l.b16 %v296
      %v634 = vunpack.c.l.b16 %v297
      %v635 = vunpack.c.l.b16 %v298
      %v636 = vunpack.c.l.b16 %v299
      %v637 = vunpack.c.l.b16 %v300
      %v638 = vunpack.c.l.b16 %v301
      %v639 = vunpack.c.l.b16 %v302
      %v640 = vunpack.c.l.b16 %v303
      %v641 = vunpack.c.l.b16 %v304
      %v642 = vunpack.c.l.b16 %v305
      %v643 = vunpack.c.l.b16 %v306
      %v644 = vunpack.c.l.b16 %v307
      %v645 = vpack.c.b16 %v544, %v543
      %v646 = vpack.c.b16 %v546, %v545
      %v647 = vpack.c.b16 %v548, %v547
      %v648 = vpack.c.b16 %v550, %v549
      %v649 = vpack.c.b16 %v552, %v551
      %v650 = vpack.c.b16 %v554, %v553
      %v651 = vpack.c.b16 %v556, %v555
      %v652 = vpack.c.b16 %v558, %v557
      %v653 = vpack.c.b16 %v560, %v559
      %v654 = vpack.c.b16 %v562, %v561
      %v655 = vpack.c.b16 %v564, %v563
      %v656 = vpack.c.b16 %v566, %v565
      %v657 = vpack.c.b16 %v568, %v567
      %v658 = vpack.c.b16 %v570, %v569
      %v659 = vpack.c.b16 %v572, %v571
      %v660 = vpack.c.b16 %v574, %v573
      %v661 = vpack.c.b16 %v576, %v575
      %v662 = vpack.c.b16 %v578, %v577
      %v663 = vpack.c.b16 %v580, %v579
      %v664 = vpack.c.b16 %v582, %v581
      %v665 = vpack.c.b16 %v584, %v583
      %v666 = vpack.c.b16 %v586, %v585
      %v667 = vpack.c.b16 %v588, %v587
      %v668 = vpack.c.b16 %v590, %v589
      %v669 = vpack.c.b16 %v592, %v591
      %v670 = vpack.c.b16 %v594, %v593
      %v671 = vpack.c.b16 %v596, %v595
      %v672 = vpack.c.b16 %v598, %v597
      %v673 = vpack.c.b16 %v600, %v599
      %v674 = vpack.c.b16 %v602, %v601
      %v675 = vpack.c.b16 %v604, %v603
      %v676 = vpack.c.b16 %v606, %v605
      %v677 = vpack.c.b16 %v608, %v607
      %v678 = vpack.c.b16 %v610, %v609
      %v679 = vpack.c.b16 %v612, %v611
      %v680 = vpack.c.b16 %v614, %v613
      %v681 = vpack.c.b16 %v616, %v615
      %v682 = vpack.c.b16 %v618, %v617
      %v683 = vpack.c.b16 %v620, %v619
      %v684 = vpack.c.b16 %v622, %v621
      %v685 = vpack.c.b16 %v624, %v623
      %v686 = vpack.c.b16 %v626, %v625
      %v687 = vpack.c.b16 %v628, %v627
      %v688 = vpack.c.b16 %v630, %v629
      %v689 = vpack.c.b16 %v632, %v631
      %v690 = vpack.c.b16 %v634, %v633
      %v691 = vpack.c.b16 %v636, %v635
      %v692 = vpack.c.b16 %v638, %v637
      %v693 = vpack.c.b16 %v640, %v639
      %v694 = vpack.c.b16 %v642, %v641
      %v695 = vpack.c.b16 %v644, %v643
      %vm747 = vcmask 392192
      %v749 = vsel %vm747, %v395, 0
      %v752 = vsel %vm747, %v402, 0
      %v755 = vsel %vm747, %v409, 0
      %v758 = vsel %vm747, %v416, 0
      %760 = vmatpush.bf16.msra.mxu0 %v652
      %761 = vmatpush.bf16.msra.mxu0 %v651
      %762 = vmatpush.bf16.msra.mxu0 %v650
      %763 = vmatpush.bf16.msra.mxu0 %v649
      %764 = vmatpush.bf16.msra.mxu0 %v648
      %765 = vmatpush.bf16.msra.mxu0 %v647
      %766 = vmatpush.bf16.msra.mxu0 %v646
      %767 = vmatpush.bf16.msra.mxu0 %v645
      %768 = vmatmul.bf16.gmra.mxu0 %v389
      %v769 = vpop.f32.mrf.mxu0
      %v770 = vadd.f32 %v310, %v769
      %v771 = vpop.f32.mrf.mxu0
      %v772 = vadd.f32 %v310, %v771
      %773 = vmatmul.bf16.gmra.mxu0 %v396
      %v774 = vpop.f32.mrf.mxu0
      %v775 = vadd.f32 %v310, %v774
      %v776 = vpop.f32.mrf.mxu0
      %v777 = vadd.f32 %v310, %v776
      %778 = vmatmul.bf16.gmra.mxu0 %v403
      %v779 = vpop.f32.mrf.mxu0
      %v780 = vadd.f32 %v310, %v779
      %v781 = vpop.f32.mrf.mxu0
      %v782 = vadd.f32 %v310, %v781
      %783 = vmatmul.bf16.gmra.mxu0 %v410
      %v784 = vpop.f32.mrf.mxu0
      %v785 = vadd.f32 %v310, %v784
      %v786 = vpop.f32.mrf.mxu0
      %787 = vdwg.mxu0
      %788 = vmatpush.bf16.msra.mxu0 %v660
      %789 = vmatpush.bf16.msra.mxu0 %v659
      %790 = vmatpush.bf16.msra.mxu0 %v658
      %791 = vmatpush.bf16.msra.mxu0 %v657
      %792 = vmatpush.bf16.msra.mxu0 %v656
      %793 = vmatpush.bf16.msra.mxu0 %v655
      %794 = vmatpush.bf16.msra.mxu0 %v654
      %795 = vmatpush.bf16.msra.mxu0 %v653
      %796 = vmatmul.bf16.gmra.mxu0 %v390
      %v797 = vpop.f32.mrf.mxu0
      %v798 = vadd.f32 %v770, %v797
      %v799 = vpop.f32.mrf.mxu0
      %v800 = vadd.f32 %v772, %v799
      %801 = vmatmul.bf16.gmra.mxu0 %v397
      %v802 = vpop.f32.mrf.mxu0
      %v803 = vadd.f32 %v775, %v802
      %v804 = vpop.f32.mrf.mxu0
      %v805 = vadd.f32 %v777, %v804
      %806 = vmatmul.bf16.gmra.mxu0 %v404
      %v807 = vpop.f32.mrf.mxu0
      %v808 = vadd.f32 %v780, %v807
      %v809 = vpop.f32.mrf.mxu0
      %v810 = vadd.f32 %v782, %v809
      %811 = vmatmul.bf16.gmra.mxu0 %v411
      %v812 = vpop.f32.mrf.mxu0
      %v813 = vadd.f32 %v785, %v812
      %v814 = vpop.f32.mrf.mxu0
      %815 = vdwg.mxu0
      %816 = vmatpush.bf16.msra.mxu0 %v668
      %817 = vmatpush.bf16.msra.mxu0 %v667
      %818 = vmatpush.bf16.msra.mxu0 %v666
      %819 = vmatpush.bf16.msra.mxu0 %v665
      %820 = vmatpush.bf16.msra.mxu0 %v664
      %821 = vmatpush.bf16.msra.mxu0 %v663
      %822 = vmatpush.bf16.msra.mxu0 %v662
      %823 = vmatpush.bf16.msra.mxu0 %v661
      %824 = vmatmul.bf16.gmra.mxu0 %v391
      %v825 = vpop.f32.mrf.mxu0
      %v826 = vadd.f32 %v798, %v825
      %v827 = vpop.f32.mrf.mxu0
      %v828 = vadd.f32 %v800, %v827
      %829 = vmatmul.bf16.gmra.mxu0 %v398
      %v830 = vpop.f32.mrf.mxu0
      %v831 = vadd.f32 %v803, %v830
      %v832 = vpop.f32.mrf.mxu0
      %v833 = vadd.f32 %v805, %v832
      %834 = vmatmul.bf16.gmra.mxu0 %v405
      %v835 = vpop.f32.mrf.mxu0
      %v836 = vadd.f32 %v808, %v835
      %v837 = vpop.f32.mrf.mxu0
      %v838 = vadd.f32 %v810, %v837
      %839 = vmatmul.bf16.gmra.mxu0 %v412
      %v840 = vpop.f32.mrf.mxu0
      %v841 = vadd.f32 %v813, %v840
      %v842 = vpop.f32.mrf.mxu0
      %843 = vdwg.mxu0
      %844 = vmatpush.bf16.msra.mxu0 %v676
      %845 = vmatpush.bf16.msra.mxu0 %v675
      %846 = vmatpush.bf16.msra.mxu0 %v674
      %847 = vmatpush.bf16.msra.mxu0 %v673
      %848 = vmatpush.bf16.msra.mxu0 %v672
      %849 = vmatpush.bf16.msra.mxu0 %v671
      %850 = vmatpush.bf16.msra.mxu0 %v670
      %851 = vmatpush.bf16.msra.mxu0 %v669
      %852 = vmatmul.bf16.gmra.mxu0 %v392
      %v853 = vpop.f32.mrf.mxu0
      %v854 = vadd.f32 %v826, %v853
      %v855 = vpop.f32.mrf.mxu0
      %v856 = vadd.f32 %v828, %v855
      %857 = vmatmul.bf16.gmra.mxu0 %v399
      %v858 = vpop.f32.mrf.mxu0
      %v859 = vadd.f32 %v831, %v858
      %v860 = vpop.f32.mrf.mxu0
      %v861 = vadd.f32 %v833, %v860
      %862 = vmatmul.bf16.gmra.mxu0 %v406
      %v863 = vpop.f32.mrf.mxu0
      %v864 = vadd.f32 %v836, %v863
      %v865 = vpop.f32.mrf.mxu0
      %v866 = vadd.f32 %v838, %v865
      %867 = vmatmul.bf16.gmra.mxu0 %v413
      %v868 = vpop.f32.mrf.mxu0
      %v869 = vadd.f32 %v841, %v868
      %v870 = vpop.f32.mrf.mxu0
      %871 = vdwg.mxu0
      %872 = vmatpush.bf16.msra.mxu0 %v684
      %873 = vmatpush.bf16.msra.mxu0 %v683
      %874 = vmatpush.bf16.msra.mxu0 %v682
      %875 = vmatpush.bf16.msra.mxu0 %v681
      %876 = vmatpush.bf16.msra.mxu0 %v680
      %877 = vmatpush.bf16.msra.mxu0 %v679
      %878 = vmatpush.bf16.msra.mxu0 %v678
      %879 = vmatpush.bf16.msra.mxu0 %v677
      %880 = vmatmul.bf16.gmra.mxu0 %v393
      %v881 = vpop.f32.mrf.mxu0
      %v882 = vadd.f32 %v854, %v881
      %v883 = vpop.f32.mrf.mxu0
      %v884 = vadd.f32 %v856, %v883
      %885 = vmatmul.bf16.gmra.mxu0 %v400
      %v886 = vpop.f32.mrf.mxu0
      %v887 = vadd.f32 %v859, %v886
      %v888 = vpop.f32.mrf.mxu0
      %v889 = vadd.f32 %v861, %v888
      %890 = vmatmul.bf16.gmra.mxu0 %v407
      %v891 = vpop.f32.mrf.mxu0
      %v892 = vadd.f32 %v864, %v891
      %v893 = vpop.f32.mrf.mxu0
      %v894 = vadd.f32 %v866, %v893
      %895 = vmatmul.bf16.gmra.mxu0 %v414
      %v896 = vpop.f32.mrf.mxu0
      %v897 = vadd.f32 %v869, %v896
      %v898 = vpop.f32.mrf.mxu0
      %899 = vdwg.mxu0
      %900 = vmatpush.bf16.msra.mxu0 %v692
      %901 = vmatpush.bf16.msra.mxu0 %v691
      %902 = vmatpush.bf16.msra.mxu0 %v690
      %903 = vmatpush.bf16.msra.mxu0 %v689
      %904 = vmatpush.bf16.msra.mxu0 %v688
      %905 = vmatpush.bf16.msra.mxu0 %v687
      %906 = vmatpush.bf16.msra.mxu0 %v686
      %907 = vmatpush.bf16.msra.mxu0 %v685
      %908 = vmatmul.bf16.gmra.mxu0 %v394
      %v909 = vpop.f32.mrf.mxu0
      %v910 = vadd.f32 %v882, %v909
      %v911 = vpop.f32.mrf.mxu0
      %v912 = vadd.f32 %v884, %v911
      %913 = vmatmul.bf16.gmra.mxu0 %v401
      %v914 = vpop.f32.mrf.mxu0
      %v915 = vadd.f32 %v887, %v914
      %v916 = vpop.f32.mrf.mxu0
      %v917 = vadd.f32 %v889, %v916
      %918 = vmatmul.bf16.gmra.mxu0 %v408
      %v919 = vpop.f32.mrf.mxu0
      %v920 = vadd.f32 %v892, %v919
      %v921 = vpop.f32.mrf.mxu0
      %v922 = vadd.f32 %v894, %v921
      %923 = vmatmul.bf16.gmra.mxu0 %v415
      %v924 = vpop.f32.mrf.mxu0
      %v925 = vadd.f32 %v897, %v924
      %v926 = vpop.f32.mrf.mxu0
      %927 = vdwg.mxu0
      %928 = vmatpush.bf16.msra.mxu0 0
      %929 = vmatpush.bf16.msra.mxu0 0
      %930 = vmatpush.bf16.msra.mxu0 0
      %931 = vmatpush.bf16.msra.mxu0 0
      %932 = vmatpush.bf16.msra.mxu0 0
      %933 = vmatpush.bf16.msra.mxu0 %v695
      %934 = vmatpush.bf16.msra.mxu0 %v694
      %935 = vmatpush.bf16.msra.mxu0 %v693
      %936 = vmatmul.bf16.gmra.mxu0 %v749
      %v937 = vpop.f32.mrf.mxu0
      %v938 = vadd.f32 %v910, %v937
      %v939 = vpop.f32.mrf.mxu0
      %v940 = vadd.f32 %v912, %v939
      %941 = vmatmul.bf16.gmra.mxu0 %v752
      %v942 = vpop.f32.mrf.mxu0
      %v943 = vadd.f32 %v915, %v942
      %v944 = vpop.f32.mrf.mxu0
      %v945 = vadd.f32 %v917, %v944
      %946 = vmatmul.bf16.gmra.mxu0 %v755
      %v947 = vpop.f32.mrf.mxu0
      %v948 = vadd.f32 %v920, %v947
      %v949 = vpop.f32.mrf.mxu0
      %v950 = vadd.f32 %v922, %v949
      %951 = vmatmul.bf16.gmra.mxu0 %v758
      %v952 = vpop.f32.mrf.mxu0
      %v953 = vadd.f32 %v925, %v952
      %v954 = vpop.f32.mrf.mxu0
      %955 = vdwg.mxu0
      %v956 = vmax.f32 %v938, 0.0
      %v957 = vmax.f32 %v940, 0.0
      %v958 = vmax.f32 %v943, 0.0
      %v959 = vmax.f32 %v945, 0.0
      %v960 = vmax.f32 %v948, 0.0
      %v961 = vmax.f32 %v950, 0.0
      %v962 = vmax.f32 %v953, 0.0
      %v963 = vpack.c.bf16 %v956, %v956
      %v964 = vpack.c.bf16 %v957, %v957
      %v965 = vpack.c.bf16 %v958, %v958
      %v966 = vpack.c.bf16 %v959, %v959
      %v967 = vpack.c.bf16 %v960, %v960
      %v968 = vpack.c.bf16 %v961, %v961
      %v969 = vpack.c.bf16 %v962, %v962
      %970 = vst [vmem:[%s175] sm:$0xf] %v963
      %971 = vst [vmem:[%s175 + $0x4] sm:$0xf] %v964
      %972 = vst [vmem:[%s175 + $0x8] sm:$0xf] %v965
      %973 = vst [vmem:[%s175 + $0xc] sm:$0xf] %v966
      %974 = vst [vmem:[%s175 + $0x10] sm:$0xf] %v967
      %975 = vst [vmem:[%s175 + $0x14] sm:$0xf] %v968
      %976 = vst [vmem:[%s175 + $0x18] sm:$0xf] %v969
      %s977 = smul.u32 7, %s14
      %p978 = scmp.lt.s32.totalorder %s977, 48
      %s979 = scalar_select %p978, %s977, 48
      %s980 = smul.addr %s979, 4
      %s981 = scalar_lea.vmem %s3, %s980
      // Predicated region
      $region33: #{neural_net_forward.14} parent=31 // pred_check
        %p982 = pneg %p100
      $region34: #{neural_net_forward.14} parent=31 // pred_check_branch
        %984 = sbr.rel (%p982) target = $region36
      $region35: #{neural_net_forward.14} parent=31 // pred_region
        %s985 = smul.u32 7, %s14
      $region36: #{neural_net_forward.14} parent=31 // pred_fallthru
        _
    $region32: #{neural_net_forward.14} parent=5 // pred_fallthru
      _
    %p986 = scmp.le.s32.totalorder 2, %s9
    // Predicated region
    $region37: #{neural_net_forward.14} parent=5 // pred_check
      %p987 = pneg %p986
    $region38: #{neural_net_forward.14} parent=5 // pred_check_branch
      %989 = sbr.rel (%p987) target = $region40
    $region39: #{neural_net_forward.14} parent=5 // pred_region
      %s990 = ssub.s32 %s9, 2
      // Predicated region
      $region41: #{neural_net_forward.14} parent=39 // pred_check
        %p991 = pneg %p106
      $region42: #{neural_net_forward.14} parent=39 // pred_check_branch
        %993 = sbr.rel (%p991) target = $region44
      $region43: #{neural_net_forward.14} parent=39 // pred_region
        %s994 = smul.u32 7, %s15
        %p995 = scmp.lt.s32.totalorder %s994, 48
        %s996 = scalar_select %p995, %s994, 48
        %s997 = smul.addr %s996, 4
        %s998 = scalar_lea.vmem %s3, %s997
      $region44: #{neural_net_forward.14} parent=39 // pred_fallthru
        _
    $region40: #{neural_net_forward.14} parent=5 // pred_fallthru
      _
  $region6: #{neural_net_forward.14} parent=0 // loop_footer
    %s13 = sadd.s32 1, %s9
  $region7: #{neural_net_forward.14} parent=0 // loop_footer_branch
    %8 = sbr.rel target = $region3
  $region8: #{neural_net_forward.14} parent=0 // loop_exit
    _

// kernel: neural_net_forward.15
$region0: #{neural_net_forward.15}
  #allocation0 [shape = 'u32[]', space=smem, size = 0x4, offset = 0x4, fixed_abs, tag = 'smem constant byte address 0x4 - core index']
  #allocation1 [shape = 'u32[72,128]{1,0:T(1,128)}', space=vmem, size = 0x9000, scoped, tag = 'internal scratch']
  %s0 = inlined_call_operand.vmem [shape: bf16[104,128], index: 0, kind: input, shape index: {}]
  %s1 = inlined_call_operand.vmem [shape: bf16[128,256], index: 1, kind: input, shape index: {}]
  %s2 = inlined_call_operand.vmem [shape: f32[1,256], index: 2, kind: input, shape index: {}]
  %s3 = inlined_call_operand.vmem [shape: bf16[104,256], index: 3, kind: output, shape index: {}]
  %s4 = sld [smem:[#allocation0]]
  $region22: #{neural_net_forward.15} parent=0
    _
  %s6 = ssub.s32 1, %s4
  %s7 = scalar_select 0, %s6, %s4
  // Predicated region
  $region2: #{neural_net_forward.15} parent=0 // pred_check
    _
  $region3: #{neural_net_forward.15} parent=0 // pred_check_branch
    %9 = sbr.rel (0) target = $region5
  $region4: #{neural_net_forward.15} parent=0 // pred_region
    _
  $region5: #{neural_net_forward.15} parent=0 // pred_fallthru
    _
  // Predicated region
  $region6: #{neural_net_forward.15} parent=0 // pred_check
    _
  $region7: #{neural_net_forward.15} parent=0 // pred_check_branch
    %11 = sbr.rel (0) target = $region9
  $region8: #{neural_net_forward.15} parent=0 // pred_region
    _
  $region9: #{neural_net_forward.15} parent=0 // pred_fallthru
    _
  // Predicated region
  $region10: #{neural_net_forward.15} parent=0 // pred_check
    _
  $region11: #{neural_net_forward.15} parent=0 // pred_check_branch
    %13 = sbr.rel (0) target = $region13
  $region12: #{neural_net_forward.15} parent=0 // pred_region
    _
  $region13: #{neural_net_forward.15} parent=0 // pred_fallthru
    _
  %v14 = vld [vmem:[%s0] sm:$0xf]
  %v15 = vld [vmem:[%s0 + $0x4] sm:$0xf]
  %v16 = vld [vmem:[%s0 + $0x8] sm:$0xf]
  %v17 = vld [vmem:[%s0 + $0xc] sm:$0xf]
  %v18 = vld [vmem:[%s0 + $0x10] sm:$0xf]
  %v19 = vld [vmem:[%s0 + $0x14] sm:$0xf]
  %v20 = vld [vmem:[%s0 + $0x18] sm:$0xf]
  %v21 = vld [vmem:[%s0 + $0x1c] sm:$0xf]
  %v22 = vld [vmem:[%s0 + $0x20] sm:$0xf]
  %v23 = vld [vmem:[%s0 + $0x24] sm:$0xf]
  %v24 = vld [vmem:[%s0 + $0x28] sm:$0xf]
  %v25 = vld [vmem:[%s0 + $0x2c] sm:$0xf]
  %v26 = vld [vmem:[%s0 + $0x30] sm:$0xf]
  %v27 = vld [vmem:[%s1] sm:$0xff]
  %v28 = vld [vmem:[%s1 + $0x8] sm:$0xff]
  %v29 = vld [vmem:[%s1 + $0x10] sm:$0xff]
  %v30 = vld [vmem:[%s1 + $0x18] sm:$0xff]
  %v31 = vld [vmem:[%s1 + $0x20] sm:$0xff]
  %v32 = vld [vmem:[%s1 + $0x28] sm:$0xff]
  %v33 = vld [vmem:[%s1 + $0x30] sm:$0xff]
  %v34 = vld [vmem:[%s1 + $0x38] sm:$0xff]
  %v35 = vld [vmem:[%s1 + $0x40] sm:$0xff]
  %v36 = vld [vmem:[%s1 + $0x48] sm:$0xff]
  %v37 = vld [vmem:[%s1 + $0x50] sm:$0xff]
  %v38 = vld [vmem:[%s1 + $0x58] sm:$0xff]
  %v39 = vld [vmem:[%s1 + $0x60] sm:$0xff]
  %v40 = vld [vmem:[%s1 + $0x68] sm:$0xff]
  %v41 = vld [vmem:[%s1 + $0x70] sm:$0xff]
  %v42 = vld [vmem:[%s1 + $0x78] sm:$0xff]
  %v43 = vld [vmem:[%s2] sm:$0x3]
  %v45 = vperm.slane %v43, 0
  %v46 = vperm.slane %v43, 1
  %v62 = vunpack.c.l.b16 %v14
  %v63 = vunpack.c.l.b16 %v15
  %v64 = vunpack.c.l.b16 %v16
  %v65 = vunpack.c.l.b16 %v17
  %v66 = vunpack.c.l.b16 %v18
  %v67 = vunpack.c.l.b16 %v19
  %v68 = vunpack.c.l.b16 %v20
  %v69 = vunpack.c.l.b16 %v21
  %v70 = vunpack.c.l.b16 %v22
  %v71 = vunpack.c.l.b16 %v23
  %v72 = vunpack.c.l.b16 %v24
  %v73 = vunpack.c.l.b16 %v25
  %v74 = vunpack.c.l.b16 %v26
  %v75 = vpack.c.b16 %v63, %v62
  %v76 = vpack.c.b16 %v65, %v64
  %v77 = vpack.c.b16 %v67, %v66
  %v78 = vpack.c.b16 %v69, %v68
  %v79 = vpack.c.b16 %v71, %v70
  %v80 = vpack.c.b16 %v73, %v72
  %v81 = vpack.c.b16 %v74, %v74
  %v105 = vunpack.c.l.b16 %v27
  %v106 = vunpack.c.h.b16 %v27
  %v107 = vunpack.c.l.b16 %v28
  %v108 = vunpack.c.h.b16 %v28
  %v109 = vunpack.c.l.b16 %v29
  %v110 = vunpack.c.h.b16 %v29
  %v111 = vunpack.c.l.b16 %v30
  %v112 = vunpack.c.h.b16 %v30
  %v113 = vunpack.c.l.b16 %v31
  %v114 = vunpack.c.h.b16 %v31
  %v115 = vunpack.c.l.b16 %v32
  %v116 = vunpack.c.h.b16 %v32
  %v117 = vunpack.c.l.b16 %v33
  %v118 = vunpack.c.h.b16 %v33
  %v119 = vunpack.c.l.b16 %v34
  %v120 = vunpack.c.h.b16 %v34
  %v121 = vunpack.c.l.b16 %v35
  %v122 = vunpack.c.h.b16 %v35
  %v123 = vunpack.c.l.b16 %v36
  %v124 = vunpack.c.h.b16 %v36
  %v125 = vunpack.c.l.b16 %v37
  %v126 = vunpack.c.h.b16 %v37
  %v127 = vunpack.c.l.b16 %v38
  %v128 = vunpack.c.h.b16 %v38
  %v129 = vunpack.c.l.b16 %v39
  %v130 = vunpack.c.h.b16 %v39
  %v131 = vunpack.c.l.b16 %v40
  %v132 = vunpack.c.h.b16 %v40
  %v133 = vunpack.c.l.b16 %v41
  %v134 = vunpack.c.h.b16 %v41
  %v135 = vunpack.c.l.b16 %v42
  %v136 = vunpack.c.h.b16 %v42
  %v137 = vpack.c.b16 %v107, %v105
  %v138 = vpack.c.b16 %v108, %v106
  %v139 = vpack.c.b16 %v111, %v109
  %v140 = vpack.c.b16 %v112, %v110
  %v141 = vpack.c.b16 %v115, %v113
  %v142 = vpack.c.b16 %v116, %v114
  %v143 = vpack.c.b16 %v119, %v117
  %v144 = vpack.c.b16 %v120, %v118
  %v145 = vpack.c.b16 %v123, %v121
  %v146 = vpack.c.b16 %v124, %v122
  %v147 = vpack.c.b16 %v127, %v125
  %v148 = vpack.c.b16 %v128, %v126
  %v149 = vpack.c.b16 %v131, %v129
  %v150 = vpack.c.b16 %v132, %v130
  %v151 = vpack.c.b16 %v135, %v133
  %v152 = vpack.c.b16 %v136, %v134
  %169 = vmatpush.bf16.msra.mxu0 %v151
  %170 = vmatpush.bf16.msra.mxu0 %v149
  %171 = vmatpush.bf16.msra.mxu0 %v147
  %172 = vmatpush.bf16.msra.mxu0 %v145
  %173 = vmatpush.bf16.msra.mxu0 %v143
  %174 = vmatpush.bf16.msra.mxu0 %v141
  %175 = vmatpush.bf16.msra.mxu0 %v139
  %176 = vmatpush.bf16.msra.mxu0 %v137
  %177 = vmatmul.bf16.gmra.mxu0 %v75
  %v178 = vpop.f32.mrf.mxu0
  %v179 = vadd.f32 %v45, %v178
  %v180 = vpop.f32.mrf.mxu0
  %v181 = vadd.f32 %v45, %v180
  %182 = vmatmul.bf16.gmra.mxu0 %v76
  %v183 = vpop.f32.mrf.mxu0
  %v184 = vadd.f32 %v45, %v183
  %v185 = vpop.f32.mrf.mxu0
  %v186 = vadd.f32 %v45, %v185
  %187 = vmatmul.bf16.gmra.mxu0 %v77
  %v188 = vpop.f32.mrf.mxu0
  %v189 = vadd.f32 %v45, %v188
  %v190 = vpop.f32.mrf.mxu0
  %v191 = vadd.f32 %v45, %v190
  %192 = vmatmul.bf16.gmra.mxu0 %v78
  %v193 = vpop.f32.mrf.mxu0
  %v194 = vadd.f32 %v45, %v193
  %v195 = vpop.f32.mrf.mxu0
  %v196 = vadd.f32 %v45, %v195
  %197 = vmatmul.bf16.gmra.mxu0 %v79
  %v198 = vpop.f32.mrf.mxu0
  %v199 = vadd.f32 %v45, %v198
  %v200 = vpop.f32.mrf.mxu0
  %v201 = vadd.f32 %v45, %v200
  %202 = vmatmul.bf16.gmra.mxu0 %v80
  %v203 = vpop.f32.mrf.mxu0
  %v204 = vadd.f32 %v45, %v203
  %v205 = vpop.f32.mrf.mxu0
  %v206 = vadd.f32 %v45, %v205
  %207 = vmatmul.bf16.gmra.mxu0 %v81
  %v208 = vpop.f32.mrf.mxu0
  %v209 = vadd.f32 %v45, %v208
  %v210 = vpop.f32.mrf.mxu0
  %211 = vdwg.mxu0
  %212 = vmatpush.bf16.msra.mxu0 %v152
  %213 = vmatpush.bf16.msra.mxu0 %v150
  %214 = vmatpush.bf16.msra.mxu0 %v148
  %215 = vmatpush.bf16.msra.mxu0 %v146
  %216 = vmatpush.bf16.msra.mxu0 %v144
  %217 = vmatpush.bf16.msra.mxu0 %v142
  %218 = vmatpush.bf16.msra.mxu0 %v140
  %219 = vmatpush.bf16.msra.mxu0 %v138
  %220 = vmatmul.bf16.gmra.mxu0 %v75
  %v221 = vpop.f32.mrf.mxu0
  %v222 = vadd.f32 %v46, %v221
  %v223 = vpop.f32.mrf.mxu0
  %v224 = vadd.f32 %v46, %v223
  %225 = vmatmul.bf16.gmra.mxu0 %v76
  %v226 = vpop.f32.mrf.mxu0
  %v227 = vadd.f32 %v46, %v226
  %v228 = vpop.f32.mrf.mxu0
  %v229 = vadd.f32 %v46, %v228
  %230 = vmatmul.bf16.gmra.mxu0 %v77
  %v231 = vpop.f32.mrf.mxu0
  %v232 = vadd.f32 %v46, %v231
  %v233 = vpop.f32.mrf.mxu0
  %v234 = vadd.f32 %v46, %v233
  %235 = vmatmul.bf16.gmra.mxu0 %v78
  %v236 = vpop.f32.mrf.mxu0
  %v237 = vadd.f32 %v46, %v236
  %v238 = vpop.f32.mrf.mxu0
  %v239 = vadd.f32 %v46, %v238
  %240 = vmatmul.bf16.gmra.mxu0 %v79
  %v241 = vpop.f32.mrf.mxu0
  %v242 = vadd.f32 %v46, %v241
  %v243 = vpop.f32.mrf.mxu0
  %v244 = vadd.f32 %v46, %v243
  %245 = vmatmul.bf16.gmra.mxu0 %v80
  %v246 = vpop.f32.mrf.mxu0
  %v247 = vadd.f32 %v46, %v246
  %v248 = vpop.f32.mrf.mxu0
  %v249 = vadd.f32 %v46, %v248
  %250 = vmatmul.bf16.gmra.mxu0 %v81
  %v251 = vpop.f32.mrf.mxu0
  %v252 = vadd.f32 %v46, %v251
  %v253 = vpop.f32.mrf.mxu0
  %254 = vdwg.mxu0
  %v255 = vmax.f32 %v179, 0.0
  %v256 = vmax.f32 %v222, 0.0
  %v257 = vmax.f32 %v181, 0.0
  %v258 = vmax.f32 %v224, 0.0
  %v259 = vmax.f32 %v184, 0.0
  %v260 = vmax.f32 %v227, 0.0
  %v261 = vmax.f32 %v186, 0.0
  %v262 = vmax.f32 %v229, 0.0
  %v263 = vmax.f32 %v189, 0.0
  %v264 = vmax.f32 %v232, 0.0
  %v265 = vmax.f32 %v191, 0.0
  %v266 = vmax.f32 %v234, 0.0
  %v267 = vmax.f32 %v194, 0.0
  %v268 = vmax.f32 %v237, 0.0
  %v269 = vmax.f32 %v196, 0.0
  %v270 = vmax.f32 %v239, 0.0
  %v271 = vmax.f32 %v199, 0.0
  %v272 = vmax.f32 %v242, 0.0
  %v273 = vmax.f32 %v201, 0.0
  %v274 = vmax.f32 %v244, 0.0
  %v275 = vmax.f32 %v204, 0.0
  %v276 = vmax.f32 %v247, 0.0
  %v277 = vmax.f32 %v206, 0.0
  %v278 = vmax.f32 %v249, 0.0
  %v279 = vmax.f32 %v209, 0.0
  %v280 = vmax.f32 %v252, 0.0
  %v281 = vpack.c.bf16 %v256, %v255
  %v282 = vpack.c.bf16 %v258, %v257
  %v283 = vpack.c.bf16 %v260, %v259
  %v284 = vpack.c.bf16 %v262, %v261
  %v285 = vpack.c.bf16 %v264, %v263
  %v286 = vpack.c.bf16 %v266, %v265
  %v287 = vpack.c.bf16 %v268, %v267
  %v288 = vpack.c.bf16 %v270, %v269
  %v289 = vpack.c.bf16 %v272, %v271
  %v290 = vpack.c.bf16 %v274, %v273
  %v291 = vpack.c.bf16 %v276, %v275
  %v292 = vpack.c.bf16 %v278, %v277
  %v293 = vpack.c.bf16 %v280, %v279
  %294 = vst [vmem:[%s3] sm:$0xff] %v281
  %295 = vst [vmem:[%s3 + $0x8] sm:$0xff] %v282
  %296 = vst [vmem:[%s3 + $0x10] sm:$0xff] %v283
  %297 = vst [vmem:[%s3 + $0x18] sm:$0xff] %v284
  %298 = vst [vmem:[%s3 + $0x20] sm:$0xff] %v285
  %299 = vst [vmem:[%s3 + $0x28] sm:$0xff] %v286
  %300 = vst [vmem:[%s3 + $0x30] sm:$0xff] %v287
  %301 = vst [vmem:[%s3 + $0x38] sm:$0xff] %v288
  %302 = vst [vmem:[%s3 + $0x40] sm:$0xff] %v289
  %303 = vst [vmem:[%s3 + $0x48] sm:$0xff] %v290
  %304 = vst [vmem:[%s3 + $0x50] sm:$0xff] %v291
  %305 = vst [vmem:[%s3 + $0x58] sm:$0xff] %v292
  %306 = vst [vmem:[%s3 + $0x60] sm:$0xff] %v293
  // Predicated region
  $region14: #{neural_net_forward.15} parent=0 // pred_check
    _
  $region15: #{neural_net_forward.15} parent=0 // pred_check_branch
    %308 = sbr.rel (0) target = $region17
  $region16: #{neural_net_forward.15} parent=0 // pred_region
    _
  $region17: #{neural_net_forward.15} parent=0 // pred_fallthru
    _
  // Predicated region
  $region18: #{neural_net_forward.15} parent=0 // pred_check
    _
  $region19: #{neural_net_forward.15} parent=0 // pred_check_branch
    %310 = sbr.rel (0) target = $region21
  $region20: #{neural_net_forward.15} parent=0 // pred_region
    _
  $region21: #{neural_net_forward.15} parent=0 // pred_fallthru
    _

// kernel: neural_net_forward.16
$region0: #{neural_net_forward.16}
  #allocation0 [shape = 'u32[]', space=smem, size = 0x4, offset = 0x4, fixed_abs, tag = 'smem constant byte address 0x4 - core index']
  #allocation1 [shape = 'u32[72,128]{1,0:T(1,128)}', space=vmem, size = 0x9000, scoped, tag = 'internal scratch']
  %s0 = inlined_call_operand.vmem [shape: bf16[104,1104], index: 0, kind: input, shape index: {}]
  %s1 = inlined_call_operand.vmem [shape: bf16[1104,256], index: 1, kind: input, shape index: {}]
  %s2 = inlined_call_operand.vmem [shape: f32[1,256], index: 2, kind: input, shape index: {}]
  %s3 = inlined_call_operand.vmem [shape: bf16[104,256], index: 3, kind: output, shape index: {}]
  %s4 = sld [smem:[#allocation0]]
  $region22: #{neural_net_forward.16} parent=0
    _
  %s6 = ssub.s32 1, %s4
  %s7 = scalar_select 0, %s6, %s4
  // Predicated region
  $region2: #{neural_net_forward.16} parent=0 // pred_check
    _
  $region3: #{neural_net_forward.16} parent=0 // pred_check_branch
    %9 = sbr.rel (0) target = $region5
  $region4: #{neural_net_forward.16} parent=0 // pred_region
    _
  $region5: #{neural_net_forward.16} parent=0 // pred_fallthru
    _
  // Predicated region
  $region6: #{neural_net_forward.16} parent=0 // pred_check
    _
  $region7: #{neural_net_forward.16} parent=0 // pred_check_branch
    %11 = sbr.rel (0) target = $region9
  $region8: #{neural_net_forward.16} parent=0 // pred_region
    _
  $region9: #{neural_net_forward.16} parent=0 // pred_fallthru
    _
  // Predicated region
  $region10: #{neural_net_forward.16} parent=0 // pred_check
    _
  $region11: #{neural_net_forward.16} parent=0 // pred_check_branch
    %13 = sbr.rel (0) target = $region13
  $region12: #{neural_net_forward.16} parent=0 // pred_region
    _
  $region13: #{neural_net_forward.16} parent=0 // pred_fallthru
    _
  %v15 = vld [vmem:[%s0] sm:$0xff]
  %v16 = vld [vmem:[%s0 + $0x8] sm:$0xff]
  %v17 = vld [vmem:[%s0 + $0x10] sm:$0xff]
  %v18 = vld [vmem:[%s0 + $0x18] sm:$0xff]
  %v19 = vld [vmem:[%s0 + $0x20] sm:$0xf]
  %v20 = vld [vmem:[%s0 + $0x24] sm:$0xff]
  %v21 = vld [vmem:[%s0 + $0x2c] sm:$0xff]
  %v22 = vld [vmem:[%s0 + $0x34] sm:$0xff]
  %v23 = vld [vmem:[%s0 + $0x3c] sm:$0xff]
  %v24 = vld [vmem:[%s0 + $0x44] sm:$0xf]
  %v25 = vld [vmem:[%s0 + $0x48] sm:$0xff]
  %v26 = vld [vmem:[%s0 + $0x50] sm:$0xff]
  %v27 = vld [vmem:[%s0 + $0x58] sm:$0xff]
  %v28 = vld [vmem:[%s0 + $0x60] sm:$0xff]
  %v29 = vld [vmem:[%s0 + $0x68] sm:$0xf]
  %v30 = vld [vmem:[%s0 + $0x6c] sm:$0xff]
  %v31 = vld [vmem:[%s0 + $0x74] sm:$0xff]
  %v32 = vld [vmem:[%s0 + $0x7c] sm:$0xff]
  %v33 = vld [vmem:[%s0 + $0x84] sm:$0xff]
  %v34 = vld [vmem:[%s0 + $0x8c] sm:$0xf]
  %v35 = vld [vmem:[%s0 + $0x90] sm:$0xff]
  %v36 = vld [vmem:[%s0 + $0x98] sm:$0xff]
  %v37 = vld [vmem:[%s0 + $0xa0] sm:$0xff]
  %v38 = vld [vmem:[%s0 + $0xa8] sm:$0xff]
  %v39 = vld [vmem:[%s0 + $0xb0] sm:$0xf]
  %v40 = vld [vmem:[%s0 + $0xb4] sm:$0xff]
  %v41 = vld [vmem:[%s0 + $0xbc] sm:$0xff]
  %v42 = vld [vmem:[%s0 + $0xc4] sm:$0xff]
  %v43 = vld [vmem:[%s0 + $0xcc] sm:$0xff]
  %v44 = vld [vmem:[%s0 + $0xd4] sm:$0xf]
  %v45 = vld [vmem:[%s0 + $0xd8] sm:$0xff]
  %v46 = vld [vmem:[%s0 + $0xe0] sm:$0xff]
  %v47 = vld [vmem:[%s0 + $0xe8] sm:$0xff]
  %v48 = vld [vmem:[%s0 + $0xf0] sm:$0xff]
  %v49 = vld [vmem:[%s0 + $0xf8] sm:$0xf]
  %v50 = vld [vmem:[%s0 + $0xfc] sm:$0xff]
  %v51 = vld [vmem:[%s0 + $0x104] sm:$0xff]
  %v52 = vld [vmem:[%s0 + $0x10c] sm:$0xff]
  %v53 = vld [vmem:[%s0 + $0x114] sm:$0xff]
  %v54 = vld [vmem:[%s0 + $0x11c] sm:$0xf]
  %v55 = vld [vmem:[%s0 + $0x120] sm:$0xff]
  %v56 = vld [vmem:[%s0 + $0x128] sm:$0xff]
  %v57 = vld [vmem:[%s0 + $0x130] sm:$0xff]
  %v58 = vld [vmem:[%s0 + $0x138] sm:$0xff]
  %v59 = vld [vmem:[%s0 + $0x140] sm:$0xf]
  %v60 = vld [vmem:[%s0 + $0x144] sm:$0xff]
  %v61 = vld [vmem:[%s0 + $0x14c] sm:$0xff]
  %v62 = vld [vmem:[%s0 + $0x154] sm:$0xff]
  %v63 = vld [vmem:[%s0 + $0x15c] sm:$0xff]
  %v64 = vld [vmem:[%s0 + $0x164] sm:$0xf]
  %v65 = vld [vmem:[%s0 + $0x168] sm:$0xff]
  %v66 = vld [vmem:[%s0 + $0x170] sm:$0xff]
  %v67 = vld [vmem:[%s0 + $0x178] sm:$0xff]
  %v68 = vld [vmem:[%s0 + $0x180] sm:$0xff]
  %v69 = vld [vmem:[%s0 + $0x188] sm:$0xf]
  %v70 = vld [vmem:[%s0 + $0x18c] sm:$0xff]
  %v71 = vld [vmem:[%s0 + $0x194] sm:$0xff]
  %v72 = vld [vmem:[%s0 + $0x19c] sm:$0xff]
  %v73 = vld [vmem:[%s0 + $0x1a4] sm:$0xff]
  %v74 = vld [vmem:[%s0 + $0x1ac] sm:$0xf]
  %v75 = vld [vmem:[%s0 + $0x1b0] sm:$0xff]
  %v76 = vld [vmem:[%s0 + $0x1b8] sm:$0xff]
  %v77 = vld [vmem:[%s0 + $0x1c0] sm:$0xff]
  %v78 = vld [vmem:[%s0 + $0x1c8] sm:$0xff]
  %v79 = vld [vmem:[%s0 + $0x1d0] sm:$0xf]
  %v80 = vld [vmem:[%s1] sm:$0xff]
  %v81 = vld [vmem:[%s1 + $0x8] sm:$0xff]
  %v82 = vld [vmem:[%s1 + $0x10] sm:$0xff]
  %v83 = vld [vmem:[%s1 + $0x18] sm:$0xff]
  %v84 = vld [vmem:[%s1 + $0x20] sm:$0xff]
  %v85 = vld [vmem:[%s1 + $0x28] sm:$0xff]
  %v86 = vld [vmem:[%s1 + $0x30] sm:$0xff]
  %v87 = vld [vmem:[%s1 + $0x38] sm:$0xff]
  %v88 = vld [vmem:[%s1 + $0x40] sm:$0xff]
  %v89 = vld [vmem:[%s1 + $0x48] sm:$0xff]
  %v90 = vld [vmem:[%s1 + $0x50] sm:$0xff]
  %v91 = vld [vmem:[%s1 + $0x58] sm:$0xff]
  %v92 = vld [vmem:[%s1 + $0x60] sm:$0xff]
  %v93 = vld [vmem:[%s1 + $0x68] sm:$0xff]
  %v94 = vld [vmem:[%s1 + $0x70] sm:$0xff]
  %v95 = vld [vmem:[%s1 + $0x78] sm:$0xff]
  %v96 = vld [vmem:[%s1 + $0x80] sm:$0xff]
  %v97 = vld [vmem:[%s1 + $0x88] sm:$0xff]
  %v98 = vld [vmem:[%s1 + $0x90] sm:$0xff]
  %v99 = vld [vmem:[%s1 + $0x98] sm:$0xff]
  %v100 = vld [vmem:[%s1 + $0xa0] sm:$0xff]
  %v101 = vld [vmem:[%s1 + $0xa8] sm:$0xff]
  %v102 = vld [vmem:[%s1 + $0xb0] sm:$0xff]
  %v103 = vld [vmem:[%s1 + $0xb8] sm:$0xff]
  %v104 = vld [vmem:[%s1 + $0xc0] sm:$0xff]
  %v105 = vld [vmem:[%s1 + $0xc8] sm:$0xff]
  %v106 = vld [vmem:[%s1 + $0xd0] sm:$0xff]
  %v107 = vld [vmem:[%s1 + $0xd8] sm:$0xff]
  %v108 = vld [vmem:[%s1 + $0xe0] sm:$0xff]
  %v109 = vld [vmem:[%s1 + $0xe8] sm:$0xff]
  %v110 = vld [vmem:[%s1 + $0xf0] sm:$0xff]
  %v111 = vld [vmem:[%s1 + $0xf8] sm:$0xff]
  %v112 = vld [vmem:[%s1 + $0x100] sm:$0xff]
  %v113 = vld [vmem:[%s1 + $0x108] sm:$0xff]
  %v114 = vld [vmem:[%s1 + $0x110] sm:$0xff]
  %v115 = vld [vmem:[%s1 + $0x118] sm:$0xff]
  %v116 = vld [vmem:[%s1 + $0x120] sm:$0xff]
  %v117 = vld [vmem:[%s1 + $0x128] sm:$0xff]
  %v118 = vld [vmem:[%s1 + $0x130] sm:$0xff]
  %v119 = vld [vmem:[%s1 + $0x138] sm:$0xff]
  %v120 = vld [vmem:[%s1 + $0x140] sm:$0xff]
  %v121 = vld [vmem:[%s1 + $0x148] sm:$0xff]
  %v122 = vld [vmem:[%s1 + $0x150] sm:$0xff]
  %v123 = vld [vmem:[%s1 + $0x158] sm:$0xff]
  %v124 = vld [vmem:[%s1 + $0x160] sm:$0xff]
  %v125 = vld [vmem:[%s1 + $0x168] sm:$0xff]
  %v126 = vld [vmem:[%s1 + $0x170] sm:$0xff]
  %v127 = vld [vmem:[%s1 + $0x178] sm:$0xff]
  %v128 = vld [vmem:[%s1 + $0x180] sm:$0xff]
  %v129 = vld [vmem:[%s1 + $0x188] sm:$0xff]
  %v130 = vld [vmem:[%s1 + $0x190] sm:$0xff]
  %v131 = vld [vmem:[%s1 + $0x198] sm:$0xff]
  %v132 = vld [vmem:[%s1 + $0x1a0] sm:$0xff]
  %v133 = vld [vmem:[%s1 + $0x1a8] sm:$0xff]
  %v134 = vld [vmem:[%s1 + $0x1b0] sm:$0xff]
  %v135 = vld [vmem:[%s1 + $0x1b8] sm:$0xff]
  %v136 = vld [vmem:[%s1 + $0x1c0] sm:$0xff]
  %v137 = vld [vmem:[%s1 + $0x1c8] sm:$0xff]
  %v138 = vld [vmem:[%s1 + $0x1d0] sm:$0xff]
  %v139 = vld [vmem:[%s1 + $0x1d8] sm:$0xff]
  %v140 = vld [vmem:[%s1 + $0x1e0] sm:$0xff]
  %v141 = vld [vmem:[%s1 + $0x1e8] sm:$0xff]
  %v142 = vld [vmem:[%s1 + $0x1f0] sm:$0xff]
  %v143 = vld [vmem:[%s1 + $0x1f8] sm:$0xff]
  %v144 = vld [vmem:[%s1 + $0x200] sm:$0xff]
  %v145 = vld [vmem:[%s1 + $0x208] sm:$0xff]
  %v146 = vld [vmem:[%s1 + $0x210] sm:$0xff]
  %v147 = vld [vmem:[%s1 + $0x218] sm:$0xff]
  %v148 = vld [vmem:[%s1 + $0x220] sm:$0xff]
  %v149 = vld [vmem:[%s1 + $0x228] sm:$0xff]
  %v150 = vld [vmem:[%s1 + $0x230] sm:$0xff]
  %v151 = vld [vmem:[%s1 + $0x238] sm:$0xff]
  %v152 = vld [vmem:[%s1 + $0x240] sm:$0xff]
  %v153 = vld [vmem:[%s1 + $0x248] sm:$0xff]
  %v154 = vld [vmem:[%s1 + $0x250] sm:$0xff]
  %v155 = vld [vmem:[%s1 + $0x258] sm:$0xff]
  %v156 = vld [vmem:[%s1 + $0x260] sm:$0xff]
  %v157 = vld [vmem:[%s1 + $0x268] sm:$0xff]
  %v158 = vld [vmem:[%s1 + $0x270] sm:$0xff]
  %v159 = vld [vmem:[%s1 + $0x278] sm:$0xff]
  %v160 = vld [vmem:[%s1 + $0x280] sm:$0xff]
  %v161 = vld [vmem:[%s1 + $0x288] sm:$0xff]
  %v162 = vld [vmem:[%s1 + $0x290] sm:$0xff]
  %v163 = vld [vmem:[%s1 + $0x298] sm:$0xff]
  %v164 = vld [vmem:[%s1 + $0x2a0] sm:$0xff]
  %v165 = vld [vmem:[%s1 + $0x2a8] sm:$0xff]
  %v166 = vld [vmem:[%s1 + $0x2b0] sm:$0xff]
  %v167 = vld [vmem:[%s1 + $0x2b8] sm:$0xff]
  %v168 = vld [vmem:[%s1 + $0x2c0] sm:$0xff]
  %v169 = vld [vmem:[%s1 + $0x2c8] sm:$0xff]
  %v170 = vld [vmem:[%s1 + $0x2d0] sm:$0xff]
  %v171 = vld [vmem:[%s1 + $0x2d8] sm:$0xff]
  %v172 = vld [vmem:[%s1 + $0x2e0] sm:$0xff]
  %v173 = vld [vmem:[%s1 + $0x2e8] sm:$0xff]
  %v174 = vld [vmem:[%s1 + $0x2f0] sm:$0xff]
  %v175 = vld [vmem:[%s1 + $0x2f8] sm:$0xff]
  %v176 = vld [vmem:[%s1 + $0x300] sm:$0xff]
  %v177 = vld [vmem:[%s1 + $0x308] sm:$0xff]
  %v178 = vld [vmem:[%s1 + $0x310] sm:$0xff]
  %v179 = vld [vmem:[%s1 + $0x318] sm:$0xff]
  %v180 = vld [vmem:[%s1 + $0x320] sm:$0xff]
  %v181 = vld [vmem:[%s1 + $0x328] sm:$0xff]
  %v182 = vld [vmem:[%s1 + $0x330] sm:$0xff]
  %v183 = vld [vmem:[%s1 + $0x338] sm:$0xff]
  %v184 = vld [vmem:[%s1 + $0x340] sm:$0xff]
  %v185 = vld [vmem:[%s1 + $0x348] sm:$0xff]
  %v186 = vld [vmem:[%s1 + $0x350] sm:$0xff]
  %v187 = vld [vmem:[%s1 + $0x358] sm:$0xff]
  %v188 = vld [vmem:[%s1 + $0x360] sm:$0xff]
  %v189 = vld [vmem:[%s1 + $0x368] sm:$0xff]
  %v190 = vld [vmem:[%s1 + $0x370] sm:$0xff]
  %v191 = vld [vmem:[%s1 + $0x378] sm:$0xff]
  %v192 = vld [vmem:[%s1 + $0x380] sm:$0xff]
  %v193 = vld [vmem:[%s1 + $0x388] sm:$0xff]
  %v194 = vld [vmem:[%s1 + $0x390] sm:$0xff]
  %v195 = vld [vmem:[%s1 + $0x398] sm:$0xff]
  %v196 = vld [vmem:[%s1 + $0x3a0] sm:$0xff]
  %v197 = vld [vmem:[%s1 + $0x3a8] sm:$0xff]
  %v198 = vld [vmem:[%s1 + $0x3b0] sm:$0xff]
  %v199 = vld [vmem:[%s1 + $0x3b8] sm:$0xff]
  %v200 = vld [vmem:[%s1 + $0x3c0] sm:$0xff]
  %v201 = vld [vmem:[%s1 + $0x3c8] sm:$0xff]
  %v202 = vld [vmem:[%s1 + $0x3d0] sm:$0xff]
  %v203 = vld [vmem:[%s1 + $0x3d8] sm:$0xff]
  %v204 = vld [vmem:[%s1 + $0x3e0] sm:$0xff]
  %v205 = vld [vmem:[%s1 + $0x3e8] sm:$0xff]
  %v206 = vld [vmem:[%s1 + $0x3f0] sm:$0xff]
  %v207 = vld [vmem:[%s1 + $0x3f8] sm:$0xff]
  %v208 = vld [vmem:[%s1 + $0x400] sm:$0xff]
  %v209 = vld [vmem:[%s1 + $0x408] sm:$0xff]
  %v210 = vld [vmem:[%s1 + $0x410] sm:$0xff]
  %v211 = vld [vmem:[%s1 + $0x418] sm:$0xff]
  %v212 = vld [vmem:[%s1 + $0x420] sm:$0xff]
  %v213 = vld [vmem:[%s1 + $0x428] sm:$0xff]
  %v214 = vld [vmem:[%s1 + $0x430] sm:$0xff]
  %v215 = vld [vmem:[%s1 + $0x438] sm:$0xff]
  %v216 = vld [vmem:[%s1 + $0x440] sm:$0xff]
  %v217 = vld [vmem:[%s1 + $0x448] sm:$0xff]
  %v218 = vld [vmem:[%s2] sm:$0x3]
  %v220 = vperm.slane %v218, 0
  %v221 = vperm.slane %v218, 1
  %v289 = vunpack.c.l.b16 %v15
  %v290 = vunpack.c.h.b16 %v15
  %v291 = vunpack.c.l.b16 %v16
  %v292 = vunpack.c.h.b16 %v16
  %v293 = vunpack.c.l.b16 %v17
  %v294 = vunpack.c.h.b16 %v17
  %v295 = vunpack.c.l.b16 %v18
  %v296 = vunpack.c.h.b16 %v18
  %v297 = vunpack.c.l.b16 %v19
  %v298 = vunpack.c.l.b16 %v20
  %v299 = vunpack.c.h.b16 %v20
  %v300 = vunpack.c.l.b16 %v21
  %v301 = vunpack.c.h.b16 %v21
  %v302 = vunpack.c.l.b16 %v22
  %v303 = vunpack.c.h.b16 %v22
  %v304 = vunpack.c.l.b16 %v23
  %v305 = vunpack.c.h.b16 %v23
  %v306 = vunpack.c.l.b16 %v24
  %v307 = vunpack.c.l.b16 %v25
  %v308 = vunpack.c.h.b16 %v25
  %v309 = vunpack.c.l.b16 %v26
  %v310 = vunpack.c.h.b16 %v26
  %v311 = vunpack.c.l.b16 %v27
  %v312 = vunpack.c.h.b16 %v27
  %v313 = vunpack.c.l.b16 %v28
  %v314 = vunpack.c.h.b16 %v28
  %v315 = vunpack.c.l.b16 %v29
  %v316 = vunpack.c.l.b16 %v30
  %v317 = vunpack.c.h.b16 %v30
  %v318 = vunpack.c.l.b16 %v31
  %v319 = vunpack.c.h.b16 %v31
  %v320 = vunpack.c.l.b16 %v32
  %v321 = vunpack.c.h.b16 %v32
  %v322 = vunpack.c.l.b16 %v33
  %v323 = vunpack.c.h.b16 %v33
  %v324 = vunpack.c.l.b16 %v34
  %v325 = vunpack.c.l.b16 %v35
  %v326 = vunpack.c.h.b16 %v35
  %v327 = vunpack.c.l.b16 %v36
  %v328 = vunpack.c.h.b16 %v36
  %v329 = vunpack.c.l.b16 %v37
  %v330 = vunpack.c.h.b16 %v37
  %v331 = vunpack.c.l.b16 %v38
  %v332 = vunpack.c.h.b16 %v38
  %v333 = vunpack.c.l.b16 %v39
  %v334 = vunpack.c.l.b16 %v40
  %v335 = vunpack.c.h.b16 %v40
  %v336 = vunpack.c.l.b16 %v41
  %v337 = vunpack.c.h.b16 %v41
  %v338 = vunpack.c.l.b16 %v42
  %v339 = vunpack.c.h.b16 %v42
  %v340 = vunpack.c.l.b16 %v43
  %v341 = vunpack.c.h.b16 %v43
  %v342 = vunpack.c.l.b16 %v44
  %v343 = vunpack.c.l.b16 %v45
  %v344 = vunpack.c.h.b16 %v45
  %v345 = vunpack.c.l.b16 %v46
  %v346 = vunpack.c.h.b16 %v46
  %v347 = vunpack.c.l.b16 %v47
  %v348 = vunpack.c.h.b16 %v47
  %v349 = vunpack.c.l.b16 %v48
  %v350 = vunpack.c.h.b16 %v48
  %v351 = vunpack.c.l.b16 %v49
  %v352 = vunpack.c.l.b16 %v50
  %v353 = vunpack.c.h.b16 %v50
  %v354 = vunpack.c.l.b16 %v51
  %v355 = vunpack.c.h.b16 %v51
  %v356 = vunpack.c.l.b16 %v52
  %v357 = vunpack.c.h.b16 %v52
  %v358 = vunpack.c.l.b16 %v53
  %v359 = vunpack.c.h.b16 %v53
  %v360 = vunpack.c.l.b16 %v54
  %v361 = vunpack.c.l.b16 %v55
  %v362 = vunpack.c.h.b16 %v55
  %v363 = vunpack.c.l.b16 %v56
  %v364 = vunpack.c.h.b16 %v56
  %v365 = vunpack.c.l.b16 %v57
  %v366 = vunpack.c.h.b16 %v57
  %v367 = vunpack.c.l.b16 %v58
  %v368 = vunpack.c.h.b16 %v58
  %v369 = vunpack.c.l.b16 %v59
  %v370 = vunpack.c.l.b16 %v60
  %v371 = vunpack.c.h.b16 %v60
  %v372 = vunpack.c.l.b16 %v61
  %v373 = vunpack.c.h.b16 %v61
  %v374 = vunpack.c.l.b16 %v62
  %v375 = vunpack.c.h.b16 %v62
  %v376 = vunpack.c.l.b16 %v63
  %v377 = vunpack.c.h.b16 %v63
  %v378 = vunpack.c.l.b16 %v64
  %v379 = vunpack.c.l.b16 %v65
  %v380 = vunpack.c.h.b16 %v65
  %v381 = vunpack.c.l.b16 %v66
  %v382 = vunpack.c.h.b16 %v66
  %v383 = vunpack.c.l.b16 %v67
  %v384 = vunpack.c.h.b16 %v67
  %v385 = vunpack.c.l.b16 %v68
  %v386 = vunpack.c.h.b16 %v68
  %v387 = vunpack.c.l.b16 %v69
  %v388 = vunpack.c.l.b16 %v70
  %v389 = vunpack.c.h.b16 %v70
  %v390 = vunpack.c.l.b16 %v71
  %v391 = vunpack.c.h.b16 %v71
  %v392 = vunpack.c.l.b16 %v72
  %v393 = vunpack.c.h.b16 %v72
  %v394 = vunpack.c.l.b16 %v73
  %v395 = vunpack.c.h.b16 %v73
  %v396 = vunpack.c.l.b16 %v74
  %v397 = vunpack.c.l.b16 %v75
  %v398 = vunpack.c.h.b16 %v75
  %v399 = vunpack.c.l.b16 %v76
  %v400 = vunpack.c.h.b16 %v76
  %v401 = vunpack.c.l.b16 %v77
  %v402 = vunpack.c.h.b16 %v77
  %v403 = vunpack.c.l.b16 %v78
  %v404 = vunpack.c.h.b16 %v78
  %v405 = vunpack.c.l.b16 %v79
  %v406 = vpack.c.b16 %v298, %v289
  %v407 = vpack.c.b16 %v299, %v290
  %v408 = vpack.c.b16 %v300, %v291
  %v409 = vpack.c.b16 %v301, %v292
  %v410 = vpack.c.b16 %v302, %v293
  %v411 = vpack.c.b16 %v303, %v294
  %v412 = vpack.c.b16 %v304, %v295
  %v413 = vpack.c.b16 %v305, %v296
  %v414 = vpack.c.b16 %v306, %v297
  %v415 = vpack.c.b16 %v316, %v307
  %v416 = vpack.c.b16 %v317, %v308
  %v417 = vpack.c.b16 %v318, %v309
  %v418 = vpack.c.b16 %v319, %v310
  %v419 = vpack.c.b16 %v320, %v311
  %v420 = vpack.c.b16 %v321, %v312
  %v421 = vpack.c.b16 %v322, %v313
  %v422 = vpack.c.b16 %v323, %v314
  %v423 = vpack.c.b16 %v324, %v315
  %v424 = vpack.c.b16 %v334, %v325
  %v425 = vpack.c.b16 %v335, %v326
  %v426 = vpack.c.b16 %v336, %v327
  %v427 = vpack.c.b16 %v337, %v328
  %v428 = vpack.c.b16 %v338, %v329
  %v429 = vpack.c.b16 %v339, %v330
  %v430 = vpack.c.b16 %v340, %v331
  %v431 = vpack.c.b16 %v341, %v332
  %v432 = vpack.c.b16 %v342, %v333
  %v433 = vpack.c.b16 %v352, %v343
  %v434 = vpack.c.b16 %v353, %v344
  %v435 = vpack.c.b16 %v354, %v345
  %v436 = vpack.c.b16 %v355, %v346
  %v437 = vpack.c.b16 %v356, %v347
  %v438 = vpack.c.b16 %v357, %v348
  %v439 = vpack.c.b16 %v358, %v349
  %v440 = vpack.c.b16 %v359, %v350
  %v441 = vpack.c.b16 %v360, %v351
  %v442 = vpack.c.b16 %v370, %v361
  %v443 = vpack.c.b16 %v371, %v362
  %v444 = vpack.c.b16 %v372, %v363
  %v445 = vpack.c.b16 %v373, %v364
  %v446 = vpack.c.b16 %v374, %v365
  %v447 = vpack.c.b16 %v375, %v366
  %v448 = vpack.c.b16 %v376, %v367
  %v449 = vpack.c.b16 %v377, %v368
  %v450 = vpack.c.b16 %v378, %v369
  %v451 = vpack.c.b16 %v388, %v379
  %v452 = vpack.c.b16 %v389, %v380
  %v453 = vpack.c.b16 %v390, %v381
  %v454 = vpack.c.b16 %v391, %v382
  %v455 = vpack.c.b16 %v392, %v383
  %v456 = vpack.c.b16 %v393, %v384
  %v457 = vpack.c.b16 %v394, %v385
  %v458 = vpack.c.b16 %v395, %v386
  %v459 = vpack.c.b16 %v396, %v387
  %v460 = vpack.c.b16 %v397, %v397
  %v461 = vpack.c.b16 %v398, %v398
  %v462 = vpack.c.b16 %v399, %v399
  %v463 = vpack.c.b16 %v400, %v400
  %v464 = vpack.c.b16 %v401, %v401
  %v465 = vpack.c.b16 %v402, %v402
  %v466 = vpack.c.b16 %v403, %v403
  %v467 = vpack.c.b16 %v404, %v404
  %v468 = vpack.c.b16 %v405, %v405
  %v663 = vunpack.c.l.b16 %v80
  %v664 = vunpack.c.h.b16 %v80
  %v665 = vunpack.c.l.b16 %v81
  %v666 = vunpack.c.h.b16 %v81
  %v667 = vunpack.c.l.b16 %v82
  %v668 = vunpack.c.h.b16 %v82
  %v669 = vunpack.c.l.b16 %v83
  %v670 = vunpack.c.h.b16 %v83
  %v671 = vunpack.c.l.b16 %v84
  %v672 = vunpack.c.h.b16 %v84
  %v673 = vunpack.c.l.b16 %v85
  %v674 = vunpack.c.h.b16 %v85
  %v675 = vunpack.c.l.b16 %v86
  %v676 = vunpack.c.h.b16 %v86
  %v677 = vunpack.c.l.b16 %v87
  %v678 = vunpack.c.h.b16 %v87
  %v679 = vunpack.c.l.b16 %v88
  %v680 = vunpack.c.h.b16 %v88
  %v681 = vunpack.c.l.b16 %v89
  %v682 = vunpack.c.h.b16 %v89
  %v683 = vunpack.c.l.b16 %v90
  %v684 = vunpack.c.h.b16 %v90
  %v685 = vunpack.c.l.b16 %v91
  %v686 = vunpack.c.h.b16 %v91
  %v687 = vunpack.c.l.b16 %v92
  %v688 = vunpack.c.h.b16 %v92
  %v689 = vunpack.c.l.b16 %v93
  %v690 = vunpack.c.h.b16 %v93
  %v691 = vunpack.c.l.b16 %v94
  %v692 = vunpack.c.h.b16 %v94
  %v693 = vunpack.c.l.b16 %v95
  %v694 = vunpack.c.h.b16 %v95
  %v695 = vunpack.c.l.b16 %v96
  %v696 = vunpack.c.h.b16 %v96
  %v697 = vunpack.c.l.b16 %v97
  %v698 = vunpack.c.h.b16 %v97
  %v699 = vunpack.c.l.b16 %v98
  %v700 = vunpack.c.h.b16 %v98
  %v701 = vunpack.c.l.b16 %v99
  %v702 = vunpack.c.h.b16 %v99
  %v703 = vunpack.c.l.b16 %v100
  %v704 = vunpack.c.h.b16 %v100
  %v705 = vunpack.c.l.b16 %v101
  %v706 = vunpack.c.h.b16 %v101
  %v707 = vunpack.c.l.b16 %v102
  %v708 = vunpack.c.h.b16 %v102
  %v709 = vunpack.c.l.b16 %v103
  %v710 = vunpack.c.h.b16 %v103
  %v711 = vunpack.c.l.b16 %v104
  %v712 = vunpack.c.h.b16 %v104
  %v713 = vunpack.c.l.b16 %v105
  %v714 = vunpack.c.h.b16 %v105
  %v715 = vunpack.c.l.b16 %v106
  %v716 = vunpack.c.h.b16 %v106
  %v717 = vunpack.c.l.b16 %v107
  %v718 = vunpack.c.h.b16 %v107
  %v719 = vunpack.c.l.b16 %v108
  %v720 = vunpack.c.h.b16 %v108
  %v721 = vunpack.c.l.b16 %v109
  %v722 = vunpack.c.h.b16 %v109
  %v723 = vunpack.c.l.b16 %v110
  %v724 = vunpack.c.h.b16 %v110
  %v725 = vunpack.c.l.b16 %v111
  %v726 = vunpack.c.h.b16 %v111
  %v727 = vunpack.c.l.b16 %v112
  %v728 = vunpack.c.h.b16 %v112
  %v729 = vunpack.c.l.b16 %v113
  %v730 = vunpack.c.h.b16 %v113
  %v731 = vunpack.c.l.b16 %v114
  %v732 = vunpack.c.h.b16 %v114
  %v733 = vunpack.c.l.b16 %v115
  %v734 = vunpack.c.h.b16 %v115
  %v735 = vunpack.c.l.b16 %v116
  %v736 = vunpack.c.h.b16 %v116
  %v737 = vunpack.c.l.b16 %v117
  %v738 = vunpack.c.h.b16 %v117
  %v739 = vunpack.c.l.b16 %v118
  %v740 = vunpack.c.h.b16 %v118
  %v741 = vunpack.c.l.b16 %v119
  %v742 = vunpack.c.h.b16 %v119
  %v743 = vunpack.c.l.b16 %v120
  %v744 = vunpack.c.h.b16 %v120
  %v745 = vunpack.c.l.b16 %v121
  %v746 = vunpack.c.h.b16 %v121
  %v747 = vunpack.c.l.b16 %v122
  %v748 = vunpack.c.h.b16 %v122
  %v749 = vunpack.c.l.b16 %v123
  %v750 = vunpack.c.h.b16 %v123
  %v751 = vunpack.c.l.b16 %v124
  %v752 = vunpack.c.h.b16 %v124
  %v753 = vunpack.c.l.b16 %v125
  %v754 = vunpack.c.h.b16 %v125
  %v755 = vunpack.c.l.b16 %v126
  %v756 = vunpack.c.h.b16 %v126
  %v757 = vunpack.c.l.b16 %v127
  %v758 = vunpack.c.h.b16 %v127
  %v759 = vunpack.c.l.b16 %v128
  %v760 = vunpack.c.h.b16 %v128
  %v761 = vunpack.c.l.b16 %v129
  %v762 = vunpack.c.h.b16 %v129
  %v763 = vunpack.c.l.b16 %v130
  %v764 = vunpack.c.h.b16 %v130
  %v765 = vunpack.c.l.b16 %v131
  %v766 = vunpack.c.h.b16 %v131
  %v767 = vunpack.c.l.b16 %v132
  %v768 = vunpack.c.h.b16 %v132
  %v769 = vunpack.c.l.b16 %v133
  %v770 = vunpack.c.h.b16 %v133
  %v771 = vunpack.c.l.b16 %v134
  %v772 = vunpack.c.h.b16 %v134
  %v773 = vunpack.c.l.b16 %v135
  %v774 = vunpack.c.h.b16 %v135
  %v775 = vunpack.c.l.b16 %v136
  %v776 = vunpack.c.h.b16 %v136
  %v777 = vunpack.c.l.b16 %v137
  %v778 = vunpack.c.h.b16 %v137
  %v779 = vunpack.c.l.b16 %v138
  %v780 = vunpack.c.h.b16 %v138
  %v781 = vunpack.c.l.b16 %v139
  %v782 = vunpack.c.h.b16 %v139
  %v783 = vunpack.c.l.b16 %v140
  %v784 = vunpack.c.h.b16 %v140
  %v785 = vunpack.c.l.b16 %v141
  %v786 = vunpack.c.h.b16 %v141
  %v787 = vunpack.c.l.b16 %v142
  %v788 = vunpack.c.h.b16 %v142
  %v789 = vunpack.c.l.b16 %v143
  %v790 = vunpack.c.h.b16 %v143
  %v791 = vunpack.c.l.b16 %v144
  %v792 = vunpack.c.h.b16 %v144
  %v793 = vunpack.c.l.b16 %v145
  %v794 = vunpack.c.h.b16 %v145
  %v795 = vunpack.c.l.b16 %v146
  %v796 = vunpack.c.h.b16 %v146
  %v797 = vunpack.c.l.b16 %v147
  %v798 = vunpack.c.h.b16 %v147
  %v799 = vunpack.c.l.b16 %v148
  %v800 = vunpack.c.h.b16 %v148
  %v801 = vunpack.c.l.b16 %v149
  %v802 = vunpack.c.h.b16 %v149
  %v803 = vunpack.c.l.b16 %v150
  %v804 = vunpack.c.h.b16 %v150
  %v805 = vunpack.c.l.b16 %v151
  %v806 = vunpack.c.h.b16 %v151
  %v807 = vunpack.c.l.b16 %v152
  %v808 = vunpack.c.h.b16 %v152
  %v809 = vunpack.c.l.b16 %v153
  %v810 = vunpack.c.h.b16 %v153
  %v811 = vunpack.c.l.b16 %v154
  %v812 = vunpack.c.h.b16 %v154
  %v813 = vunpack.c.l.b16 %v155
  %v814 = vunpack.c.h.b16 %v155
  %v815 = vunpack.c.l.b16 %v156
  %v816 = vunpack.c.h.b16 %v156
  %v817 = vunpack.c.l.b16 %v157
  %v818 = vunpack.c.h.b16 %v157
  %v819 = vunpack.c.l.b16 %v158
  %v820 = vunpack.c.h.b16 %v158
  %v821 = vunpack.c.l.b16 %v159
  %v822 = vunpack.c.h.b16 %v159
  %v823 = vunpack.c.l.b16 %v160
  %v824 = vunpack.c.h.b16 %v160
  %v825 = vunpack.c.l.b16 %v161
  %v826 = vunpack.c.h.b16 %v161
  %v827 = vunpack.c.l.b16 %v162
  %v828 = vunpack.c.h.b16 %v162
  %v829 = vunpack.c.l.b16 %v163
  %v830 = vunpack.c.h.b16 %v163
  %v831 = vunpack.c.l.b16 %v164
  %v832 = vunpack.c.h.b16 %v164
  %v833 = vunpack.c.l.b16 %v165
  %v834 = vunpack.c.h.b16 %v165
  %v835 = vunpack.c.l.b16 %v166
  %v836 = vunpack.c.h.b16 %v166
  %v837 = vunpack.c.l.b16 %v167
  %v838 = vunpack.c.h.b16 %v167
  %v839 = vunpack.c.l.b16 %v168
  %v840 = vunpack.c.h.b16 %v168
  %v841 = vunpack.c.l.b16 %v169
  %v842 = vunpack.c.h.b16 %v169
  %v843 = vunpack.c.l.b16 %v170
  %v844 = vunpack.c.h.b16 %v170
  %v845 = vunpack.c.l.b16 %v171
  %v846 = vunpack.c.h.b16 %v171
  %v847 = vunpack.c.l.b16 %v172
  %v848 = vunpack.c.h.b16 %v172
  %v849 = vunpack.c.l.b16 %v173
  %v850 = vunpack.c.h.b16 %v173
  %v851 = vunpack.c.l.b16 %v174
  %v852 = vunpack.c.h.b16 %v174
  %v853 = vunpack.c.l.b16 %v175
  %v854 = vunpack.c.h.b16 %v175
  %v855 = vunpack.c.l.b16 %v176
  %v856 = vunpack.c.h.b16 %v176
  %v857 = vunpack.c.l.b16 %v177
  %v858 = vunpack.c.h.b16 %v177
  %v859 = vunpack.c.l.b16 %v178
  %v860 = vunpack.c.h.b16 %v178
  %v861 = vunpack.c.l.b16 %v179
  %v862 = vunpack.c.h.b16 %v179
  %v863 = vunpack.c.l.b16 %v180
  %v864 = vunpack.c.h.b16 %v180
  %v865 = vunpack.c.l.b16 %v181
  %v866 = vunpack.c.h.b16 %v181
  %v867 = vunpack.c.l.b16 %v182
  %v868 = vunpack.c.h.b16 %v182
  %v869 = vunpack.c.l.b16 %v183
  %v870 = vunpack.c.h.b16 %v183
  %v871 = vunpack.c.l.b16 %v184
  %v872 = vunpack.c.h.b16 %v184
  %v873 = vunpack.c.l.b16 %v185
  %v874 = vunpack.c.h.b16 %v185
  %v875 = vunpack.c.l.b16 %v186
  %v876 = vunpack.c.h.b16 %v186
  %v877 = vunpack.c.l.b16 %v187
  %v878 = vunpack.c.h.b16 %v187
  %v879 = vunpack.c.l.b16 %v188
  %v880 = vunpack.c.h.b16 %v188
  %v881 = vunpack.c.l.b16 %v189
  %v882 = vunpack.c.h.b16 %v189
  %v883 = vunpack.c.l.b16 %v190
  %v884 = vunpack.c.h.b16 %v190
  %v885 = vunpack.c.l.b16 %v191
  %v886 = vunpack.c.h.b16 %v191
  %v887 = vunpack.c.l.b16 %v192
  %v888 = vunpack.c.h.b16 %v192
  %v889 = vunpack.c.l.b16 %v193
  %v890 = vunpack.c.h.b16 %v193
  %v891 = vunpack.c.l.b16 %v194
  %v892 = vunpack.c.h.b16 %v194
  %v893 = vunpack.c.l.b16 %v195
  %v894 = vunpack.c.h.b16 %v195
  %v895 = vunpack.c.l.b16 %v196
  %v896 = vunpack.c.h.b16 %v196
  %v897 = vunpack.c.l.b16 %v197
  %v898 = vunpack.c.h.b16 %v197
  %v899 = vunpack.c.l.b16 %v198
  %v900 = vunpack.c.h.b16 %v198
  %v901 = vunpack.c.l.b16 %v199
  %v902 = vunpack.c.h.b16 %v199
  %v903 = vunpack.c.l.b16 %v200
  %v904 = vunpack.c.h.b16 %v200
  %v905 = vunpack.c.l.b16 %v201
  %v906 = vunpack.c.h.b16 %v201
  %v907 = vunpack.c.l.b16 %v202
  %v908 = vunpack.c.h.b16 %v202
  %v909 = vunpack.c.l.b16 %v203
  %v910 = vunpack.c.h.b16 %v203
  %v911 = vunpack.c.l.b16 %v204
  %v912 = vunpack.c.h.b16 %v204
  %v913 = vunpack.c.l.b16 %v205
  %v914 = vunpack.c.h.b16 %v205
  %v915 = vunpack.c.l.b16 %v206
  %v916 = vunpack.c.h.b16 %v206
  %v917 = vunpack.c.l.b16 %v207
  %v918 = vunpack.c.h.b16 %v207
  %v919 = vunpack.c.l.b16 %v208
  %v920 = vunpack.c.h.b16 %v208
  %v921 = vunpack.c.l.b16 %v209
  %v922 = vunpack.c.h.b16 %v209
  %v923 = vunpack.c.l.b16 %v210
  %v924 = vunpack.c.h.b16 %v210
  %v925 = vunpack.c.l.b16 %v211
  %v926 = vunpack.c.h.b16 %v211
  %v927 = vunpack.c.l.b16 %v212
  %v928 = vunpack.c.h.b16 %v212
  %v929 = vunpack.c.l.b16 %v213
  %v930 = vunpack.c.h.b16 %v213
  %v931 = vunpack.c.l.b16 %v214
  %v932 = vunpack.c.h.b16 %v214
  %v933 = vunpack.c.l.b16 %v215
  %v934 = vunpack.c.h.b16 %v215
  %v935 = vunpack.c.l.b16 %v216
  %v936 = vunpack.c.h.b16 %v216
  %v937 = vunpack.c.l.b16 %v217
  %v938 = vunpack.c.h.b16 %v217
  %v939 = vpack.c.b16 %v665, %v663
  %v940 = vpack.c.b16 %v666, %v664
  %v941 = vpack.c.b16 %v669, %v667
  %v942 = vpack.c.b16 %v670, %v668
  %v943 = vpack.c.b16 %v673, %v671
  %v944 = vpack.c.b16 %v674, %v672
  %v945 = vpack.c.b16 %v677, %v675
  %v946 = vpack.c.b16 %v678, %v676
  %v947 = vpack.c.b16 %v681, %v679
  %v948 = vpack.c.b16 %v682, %v680
  %v949 = vpack.c.b16 %v685, %v683
  %v950 = vpack.c.b16 %v686, %v684
  %v951 = vpack.c.b16 %v689, %v687
  %v952 = vpack.c.b16 %v690, %v688
  %v953 = vpack.c.b16 %v693, %v691
  %v954 = vpack.c.b16 %v694, %v692
  %v955 = vpack.c.b16 %v697, %v695
  %v956 = vpack.c.b16 %v698, %v696
  %v957 = vpack.c.b16 %v701, %v699
  %v958 = vpack.c.b16 %v702, %v700
  %v959 = vpack.c.b16 %v705, %v703
  %v960 = vpack.c.b16 %v706, %v704
  %v961 = vpack.c.b16 %v709, %v707
  %v962 = vpack.c.b16 %v710, %v708
  %v963 = vpack.c.b16 %v713, %v711
  %v964 = vpack.c.b16 %v714, %v712
  %v965 = vpack.c.b16 %v717, %v715
  %v966 = vpack.c.b16 %v718, %v716
  %v967 = vpack.c.b16 %v721, %v719
  %v968 = vpack.c.b16 %v722, %v720
  %v969 = vpack.c.b16 %v725, %v723
  %v970 = vpack.c.b16 %v726, %v724
  %v971 = vpack.c.b16 %v729, %v727
  %v972 = vpack.c.b16 %v730, %v728
  %v973 = vpack.c.b16 %v733, %v731
  %v974 = vpack.c.b16 %v734, %v732
  %v975 = vpack.c.b16 %v737, %v735
  %v976 = vpack.c.b16 %v738, %v736
  %v977 = vpack.c.b16 %v741, %v739
  %v978 = vpack.c.b16 %v742, %v740
  %v979 = vpack.c.b16 %v745, %v743
  %v980 = vpack.c.b16 %v746, %v744
  %v981 = vpack.c.b16 %v749, %v747
  %v982 = vpack.c.b16 %v750, %v748
  %v983 = vpack.c.b16 %v753, %v751
  %v984 = vpack.c.b16 %v754, %v752
  %v985 = vpack.c.b16 %v757, %v755
  %v986 = vpack.c.b16 %v758, %v756
  %v987 = vpack.c.b16 %v761, %v759
  %v988 = vpack.c.b16 %v762, %v760
  %v989 = vpack.c.b16 %v765, %v763
  %v990 = vpack.c.b16 %v766, %v764
  %v991 = vpack.c.b16 %v769, %v767
  %v992 = vpack.c.b16 %v770, %v768
  %v993 = vpack.c.b16 %v773, %v771
  %v994 = vpack.c.b16 %v774, %v772
  %v995 = vpack.c.b16 %v777, %v775
  %v996 = vpack.c.b16 %v778, %v776
  %v997 = vpack.c.b16 %v781, %v779
  %v998 = vpack.c.b16 %v782, %v780
  %v999 = vpack.c.b16 %v785, %v783
  %v1000 = vpack.c.b16 %v786, %v784
  %v1001 = vpack.c.b16 %v789, %v787
  %v1002 = vpack.c.b16 %v790, %v788
  %v1003 = vpack.c.b16 %v793, %v791
  %v1004 = vpack.c.b16 %v794, %v792
  %v1005 = vpack.c.b16 %v797, %v795
  %v1006 = vpack.c.b16 %v798, %v796
  %v1007 = vpack.c.b16 %v801, %v799
  %v1008 = vpack.c.b16 %v802, %v800
  %v1009 = vpack.c.b16 %v805, %v803
  %v1010 = vpack.c.b16 %v806, %v804
  %v1011 = vpack.c.b16 %v809, %v807
  %v1012 = vpack.c.b16 %v810, %v808
  %v1013 = vpack.c.b16 %v813, %v811
  %v1014 = vpack.c.b16 %v814, %v812
  %v1015 = vpack.c.b16 %v817, %v815
  %v1016 = vpack.c.b16 %v818, %v816
  %v1017 = vpack.c.b16 %v821, %v819
  %v1018 = vpack.c.b16 %v822, %v820
  %v1019 = vpack.c.b16 %v825, %v823
  %v1020 = vpack.c.b16 %v826, %v824
  %v1021 = vpack.c.b16 %v829, %v827
  %v1022 = vpack.c.b16 %v830, %v828
  %v1023 = vpack.c.b16 %v833, %v831
  %v1024 = vpack.c.b16 %v834, %v832
  %v1025 = vpack.c.b16 %v837, %v835
  %v1026 = vpack.c.b16 %v838, %v836
  %v1027 = vpack.c.b16 %v841, %v839
  %v1028 = vpack.c.b16 %v842, %v840
  %v1029 = vpack.c.b16 %v845, %v843
  %v1030 = vpack.c.b16 %v846, %v844
  %v1031 = vpack.c.b16 %v849, %v847
  %v1032 = vpack.c.b16 %v850, %v848
  %v1033 = vpack.c.b16 %v853, %v851
  %v1034 = vpack.c.b16 %v854, %v852
  %v1035 = vpack.c.b16 %v857, %v855
  %v1036 = vpack.c.b16 %v858, %v856
  %v1037 = vpack.c.b16 %v861, %v859
  %v1038 = vpack.c.b16 %v862, %v860
  %v1039 = vpack.c.b16 %v865, %v863
  %v1040 = vpack.c.b16 %v866, %v864
  %v1041 = vpack.c.b16 %v869, %v867
  %v1042 = vpack.c.b16 %v870, %v868
  %v1043 = vpack.c.b16 %v873, %v871
  %v1044 = vpack.c.b16 %v874, %v872
  %v1045 = vpack.c.b16 %v877, %v875
  %v1046 = vpack.c.b16 %v878, %v876
  %v1047 = vpack.c.b16 %v881, %v879
  %v1048 = vpack.c.b16 %v882, %v880
  %v1049 = vpack.c.b16 %v885, %v883
  %v1050 = vpack.c.b16 %v886, %v884
  %v1051 = vpack.c.b16 %v889, %v887
  %v1052 = vpack.c.b16 %v890, %v888
  %v1053 = vpack.c.b16 %v893, %v891
  %v1054 = vpack.c.b16 %v894, %v892
  %v1055 = vpack.c.b16 %v897, %v895
  %v1056 = vpack.c.b16 %v898, %v896
  %v1057 = vpack.c.b16 %v901, %v899
  %v1058 = vpack.c.b16 %v902, %v900
  %v1059 = vpack.c.b16 %v905, %v903
  %v1060 = vpack.c.b16 %v906, %v904
  %v1061 = vpack.c.b16 %v909, %v907
  %v1062 = vpack.c.b16 %v910, %v908
  %v1063 = vpack.c.b16 %v913, %v911
  %v1064 = vpack.c.b16 %v914, %v912
  %v1065 = vpack.c.b16 %v917, %v915
  %v1066 = vpack.c.b16 %v918, %v916
  %v1067 = vpack.c.b16 %v921, %v919
  %v1068 = vpack.c.b16 %v922, %v920
  %v1069 = vpack.c.b16 %v925, %v923
  %v1070 = vpack.c.b16 %v926, %v924
  %v1071 = vpack.c.b16 %v929, %v927
  %v1072 = vpack.c.b16 %v930, %v928
  %v1073 = vpack.c.b16 %v933, %v931
  %v1074 = vpack.c.b16 %v934, %v932
  %v1075 = vpack.c.b16 %v937, %v935
  %v1076 = vpack.c.b16 %v938, %v936
  %vm1215 = vcmask 654336
  %v1217 = vsel %vm1215, %v414, 0
  %v1220 = vsel %vm1215, %v423, 0
  %v1223 = vsel %vm1215, %v432, 0
  %v1226 = vsel %vm1215, %v441, 0
  %v1229 = vsel %vm1215, %v450, 0
  %v1232 = vsel %vm1215, %v459, 0
  %v1235 = vsel %vm1215, %v468, 0
  %1237 = vmatpush.bf16.msra.mxu0 %v953
  %1238 = vmatpush.bf16.msra.mxu0 %v951
  %1239 = vmatpush.bf16.msra.mxu0 %v949
  %1240 = vmatpush.bf16.msra.mxu0 %v947
  %1241 = vmatpush.bf16.msra.mxu0 %v945
  %1242 = vmatpush.bf16.msra.mxu0 %v943
  %1243 = vmatpush.bf16.msra.mxu0 %v941
  %1244 = vmatpush.bf16.msra.mxu0 %v939
  %1245 = vmatmul.bf16.gmra.mxu0 %v406
  %v1246 = vpop.f32.mrf.mxu0
  %v1247 = vadd.f32 %v220, %v1246
  %v1248 = vpop.f32.mrf.mxu0
  %v1249 = vadd.f32 %v220, %v1248
  %1250 = vmatmul.bf16.gmra.mxu0 %v415
  %v1251 = vpop.f32.mrf.mxu0
  %v1252 = vadd.f32 %v220, %v1251
  %v1253 = vpop.f32.mrf.mxu0
  %v1254 = vadd.f32 %v220, %v1253
  %1255 = vmatmul.bf16.gmra.mxu0 %v424
  %v1256 = vpop.f32.mrf.mxu0
  %v1257 = vadd.f32 %v220, %v1256
  %v1258 = vpop.f32.mrf.mxu0
  %v1259 = vadd.f32 %v220, %v1258
  %1260 = vmatmul.bf16.gmra.mxu0 %v433
  %v1261 = vpop.f32.mrf.mxu0
  %v1262 = vadd.f32 %v220, %v1261
  %v1263 = vpop.f32.mrf.mxu0
  %v1264 = vadd.f32 %v220, %v1263
  %1265 = vmatmul.bf16.gmra.mxu0 %v442
  %v1266 = vpop.f32.mrf.mxu0
  %v1267 = vadd.f32 %v220, %v1266
  %v1268 = vpop.f32.mrf.mxu0
  %v1269 = vadd.f32 %v220, %v1268
  %1270 = vmatmul.bf16.gmra.mxu0 %v451
  %v1271 = vpop.f32.mrf.mxu0
  %v1272 = vadd.f32 %v220, %v1271
  %v1273 = vpop.f32.mrf.mxu0
  %v1274 = vadd.f32 %v220, %v1273
  %1275 = vmatmul.bf16.gmra.mxu0 %v460
  %v1276 = vpop.f32.mrf.mxu0
  %v1277 = vadd.f32 %v220, %v1276
  %v1278 = vpop.f32.mrf.mxu0
  %1279 = vdwg.mxu0
  %1280 = vmatpush.bf16.msra.mxu0 %v969
  %1281 = vmatpush.bf16.msra.mxu0 %v967
  %1282 = vmatpush.bf16.msra.mxu0 %v965
  %1283 = vmatpush.bf16.msra.mxu0 %v963
  %1284 = vmatpush.bf16.msra.mxu0 %v961
  %1285 = vmatpush.bf16.msra.mxu0 %v959
  %1286 = vmatpush.bf16.msra.mxu0 %v957
  %1287 = vmatpush.bf16.msra.mxu0 %v955
  %1288 = vmatmul.bf16.gmra.mxu0 %v407
  %v1289 = vpop.f32.mrf.mxu0
  %v1290 = vadd.f32 %v1247, %v1289
  %v1291 = vpop.f32.mrf.mxu0
  %v1292 = vadd.f32 %v1249, %v1291
  %1293 = vmatmul.bf16.gmra.mxu0 %v416
  %v1294 = vpop.f32.mrf.mxu0
  %v1295 = vadd.f32 %v1252, %v1294
  %v1296 = vpop.f32.mrf.mxu0
  %v1297 = vadd.f32 %v1254, %v1296
  %1298 = vmatmul.bf16.gmra.mxu0 %v425
  %v1299 = vpop.f32.mrf.mxu0
  %v1300 = vadd.f32 %v1257, %v1299
  %v1301 = vpop.f32.mrf.mxu0
  %v1302 = vadd.f32 %v1259, %v1301
  %1303 = vmatmul.bf16.gmra.mxu0 %v434
  %v1304 = vpop.f32.mrf.mxu0
  %v1305 = vadd.f32 %v1262, %v1304
  %v1306 = vpop.f32.mrf.mxu0
  %v1307 = vadd.f32 %v1264, %v1306
  %1308 = vmatmul.bf16.gmra.mxu0 %v443
  %v1309 = vpop.f32.mrf.mxu0
  %v1310 = vadd.f32 %v1267, %v1309
  %v1311 = vpop.f32.mrf.mxu0
  %v1312 = vadd.f32 %v1269, %v1311
  %1313 = vmatmul.bf16.gmra.mxu0 %v452
  %v1314 = vpop.f32.mrf.mxu0
  %v1315 = vadd.f32 %v1272, %v1314
  %v1316 = vpop.f32.mrf.mxu0
  %v1317 = vadd.f32 %v1274, %v1316
  %1318 = vmatmul.bf16.gmra.mxu0 %v461
  %v1319 = vpop.f32.mrf.mxu0
  %v1320 = vadd.f32 %v1277, %v1319
  %v1321 = vpop.f32.mrf.mxu0
  %1322 = vdwg.mxu0
  %1323 = vmatpush.bf16.msra.mxu0 %v985
  %1324 = vmatpush.bf16.msra.mxu0 %v983
  %1325 = vmatpush.bf16.msra.mxu0 %v981
  %1326 = vmatpush.bf16.msra.mxu0 %v979
  %1327 = vmatpush.bf16.msra.mxu0 %v977
  %1328 = vmatpush.bf16.msra.mxu0 %v975
  %1329 = vmatpush.bf16.msra.mxu0 %v973
  %1330 = vmatpush.bf16.msra.mxu0 %v971
  %1331 = vmatmul.bf16.gmra.mxu0 %v408
  %v1332 = vpop.f32.mrf.mxu0
  %v1333 = vadd.f32 %v1290, %v1332
  %v1334 = vpop.f32.mrf.mxu0
  %v1335 = vadd.f32 %v1292, %v1334
  %1336 = vmatmul.bf16.gmra.mxu0 %v417
  %v1337 = vpop.f32.mrf.mxu0
  %v1338 = vadd.f32 %v1295, %v1337
  %v1339 = vpop.f32.mrf.mxu0
  %v1340 = vadd.f32 %v1297, %v1339
  %1341 = vmatmul.bf16.gmra.mxu0 %v426
  %v1342 = vpop.f32.mrf.mxu0
  %v1343 = vadd.f32 %v1300, %v1342
  %v1344 = vpop.f32.mrf.mxu0
  %v1345 = vadd.f32 %v1302, %v1344
  %1346 = vmatmul.bf16.gmra.mxu0 %v435
  %v1347 = vpop.f32.mrf.mxu0
  %v1348 = vadd.f32 %v1305, %v1347
  %v1349 = vpop.f32.mrf.mxu0
  %v1350 = vadd.f32 %v1307, %v1349
  %1351 = vmatmul.bf16.gmra.mxu0 %v444
  %v1352 = vpop.f32.mrf.mxu0
  %v1353 = vadd.f32 %v1310, %v1352
  %v1354 = vpop.f32.mrf.mxu0
  %v1355 = vadd.f32 %v1312, %v1354
  %1356 = vmatmul.bf16.gmra.mxu0 %v453
  %v1357 = vpop.f32.mrf.mxu0
  %v1358 = vadd.f32 %v1315, %v1357
  %v1359 = vpop.f32.mrf.mxu0
  %v1360 = vadd.f32 %v1317, %v1359
  %1361 = vmatmul.bf16.gmra.mxu0 %v462
  %v1362 = vpop.f32.mrf.mxu0
  %v1363 = vadd.f32 %v1320, %v1362
  %v1364 = vpop.f32.mrf.mxu0
  %1365 = vdwg.mxu0
  %1366 = vmatpush.bf16.msra.mxu0 %v1001
  %1367 = vmatpush.bf16.msra.mxu0 %v999
  %1368 = vmatpush.bf16.msra.mxu0 %v997
  %1369 = vmatpush.bf16.msra.mxu0 %v995
  %1370 = vmatpush.bf16.msra.mxu0 %v993
  %1371 = vmatpush.bf16.msra.mxu0 %v991
  %1372 = vmatpush.bf16.msra.mxu0 %v989
  %1373 = vmatpush.bf16.msra.mxu0 %v987
  %1374 = vmatmul.bf16.gmra.mxu0 %v409
  %v1375 = vpop.f32.mrf.mxu0
  %v1376 = vadd.f32 %v1333, %v1375
  %v1377 = vpop.f32.mrf.mxu0
  %v1378 = vadd.f32 %v1335, %v1377
  %1379 = vmatmul.bf16.gmra.mxu0 %v418
  %v1380 = vpop.f32.mrf.mxu0
  %v1381 = vadd.f32 %v1338, %v1380
  %v1382 = vpop.f32.mrf.mxu0
  %v1383 = vadd.f32 %v1340, %v1382
  %1384 = vmatmul.bf16.gmra.mxu0 %v427
  %v1385 = vpop.f32.mrf.mxu0
  %v1386 = vadd.f32 %v1343, %v1385
  %v1387 = vpop.f32.mrf.mxu0
  %v1388 = vadd.f32 %v1345, %v1387
  %1389 = vmatmul.bf16.gmra.mxu0 %v436
  %v1390 = vpop.f32.mrf.mxu0
  %v1391 = vadd.f32 %v1348, %v1390
  %v1392 = vpop.f32.mrf.mxu0
  %v1393 = vadd.f32 %v1350, %v1392
  %1394 = vmatmul.bf16.gmra.mxu0 %v445
  %v1395 = vpop.f32.mrf.mxu0
  %v1396 = vadd.f32 %v1353, %v1395
  %v1397 = vpop.f32.mrf.mxu0
  %v1398 = vadd.f32 %v1355, %v1397
  %1399 = vmatmul.bf16.gmra.mxu0 %v454
  %v1400 = vpop.f32.mrf.mxu0
  %v1401 = vadd.f32 %v1358, %v1400
  %v1402 = vpop.f32.mrf.mxu0
  %v1403 = vadd.f32 %v1360, %v1402
  %1404 = vmatmul.bf16.gmra.mxu0 %v463
  %v1405 = vpop.f32.mrf.mxu0
  %v1406 = vadd.f32 %v1363, %v1405
  %v1407 = vpop.f32.mrf.mxu0
  %1408 = vdwg.mxu0
  %1409 = vmatpush.bf16.msra.mxu0 %v1017
  %1410 = vmatpush.bf16.msra.mxu0 %v1015
  %1411 = vmatpush.bf16.msra.mxu0 %v1013
  %1412 = vmatpush.bf16.msra.mxu0 %v1011
  %1413 = vmatpush.bf16.msra.mxu0 %v1009
  %1414 = vmatpush.bf16.msra.mxu0 %v1007
  %1415 = vmatpush.bf16.msra.mxu0 %v1005
  %1416 = vmatpush.bf16.msra.mxu0 %v1003
  %1417 = vmatmul.bf16.gmra.mxu0 %v410
  %v1418 = vpop.f32.mrf.mxu0
  %v1419 = vadd.f32 %v1376, %v1418
  %v1420 = vpop.f32.mrf.mxu0
  %v1421 = vadd.f32 %v1378, %v1420
  %1422 = vmatmul.bf16.gmra.mxu0 %v419
  %v1423 = vpop.f32.mrf.mxu0
  %v1424 = vadd.f32 %v1381, %v1423
  %v1425 = vpop.f32.mrf.mxu0
  %v1426 = vadd.f32 %v1383, %v1425
  %1427 = vmatmul.bf16.gmra.mxu0 %v428
  %v1428 = vpop.f32.mrf.mxu0
  %v1429 = vadd.f32 %v1386, %v1428
  %v1430 = vpop.f32.mrf.mxu0
  %v1431 = vadd.f32 %v1388, %v1430
  %1432 = vmatmul.bf16.gmra.mxu0 %v437
  %v1433 = vpop.f32.mrf.mxu0
  %v1434 = vadd.f32 %v1391, %v1433
  %v1435 = vpop.f32.mrf.mxu0
  %v1436 = vadd.f32 %v1393, %v1435
  %1437 = vmatmul.bf16.gmra.mxu0 %v446
  %v1438 = vpop.f32.mrf.mxu0
  %v1439 = vadd.f32 %v1396, %v1438
  %v1440 = vpop.f32.mrf.mxu0
  %v1441 = vadd.f32 %v1398, %v1440
  %1442 = vmatmul.bf16.gmra.mxu0 %v455
  %v1443 = vpop.f32.mrf.mxu0
  %v1444 = vadd.f32 %v1401, %v1443
  %v1445 = vpop.f32.mrf.mxu0
  %v1446 = vadd.f32 %v1403, %v1445
  %1447 = vmatmul.bf16.gmra.mxu0 %v464
  %v1448 = vpop.f32.mrf.mxu0
  %v1449 = vadd.f32 %v1406, %v1448
  %v1450 = vpop.f32.mrf.mxu0
  %1451 = vdwg.mxu0
  %1452 = vmatpush.bf16.msra.mxu0 %v1033
  %1453 = vmatpush.bf16.msra.mxu0 %v1031
  %1454 = vmatpush.bf16.msra.mxu0 %v1029
  %1455 = vmatpush.bf16.msra.mxu0 %v1027
  %1456 = vmatpush.bf16.msra.mxu0 %v1025
  %1457 = vmatpush.bf16.msra.mxu0 %v1023
  %1458 = vmatpush.bf16.msra.mxu0 %v1021
  %1459 = vmatpush.bf16.msra.mxu0 %v1019
  %1460 = vmatmul.bf16.gmra.mxu0 %v411
  %v1461 = vpop.f32.mrf.mxu0
  %v1462 = vadd.f32 %v1419, %v1461
  %v1463 = vpop.f32.mrf.mxu0
  %v1464 = vadd.f32 %v1421, %v1463
  %1465 = vmatmul.bf16.gmra.mxu0 %v420
  %v1466 = vpop.f32.mrf.mxu0
  %v1467 = vadd.f32 %v1424, %v1466
  %v1468 = vpop.f32.mrf.mxu0
  %v1469 = vadd.f32 %v1426, %v1468
  %1470 = vmatmul.bf16.gmra.mxu0 %v429
  %v1471 = vpop.f32.mrf.mxu0
  %v1472 = vadd.f32 %v1429, %v1471
  %v1473 = vpop.f32.mrf.mxu0
  %v1474 = vadd.f32 %v1431, %v1473
  %1475 = vmatmul.bf16.gmra.mxu0 %v438
  %v1476 = vpop.f32.mrf.mxu0
  %v1477 = vadd.f32 %v1434, %v1476
  %v1478 = vpop.f32.mrf.mxu0
  %v1479 = vadd.f32 %v1436, %v1478
  %1480 = vmatmul.bf16.gmra.mxu0 %v447
  %v1481 = vpop.f32.mrf.mxu0
  %v1482 = vadd.f32 %v1439, %v1481
  %v1483 = vpop.f32.mrf.mxu0
  %v1484 = vadd.f32 %v1441, %v1483
  %1485 = vmatmul.bf16.gmra.mxu0 %v456
  %v1486 = vpop.f32.mrf.mxu0
  %v1487 = vadd.f32 %v1444, %v1486
  %v1488 = vpop.f32.mrf.mxu0
  %v1489 = vadd.f32 %v1446, %v1488
  %1490 = vmatmul.bf16.gmra.mxu0 %v465
  %v1491 = vpop.f32.mrf.mxu0
  %v1492 = vadd.f32 %v1449, %v1491
  %v1493 = vpop.f32.mrf.mxu0
  %1494 = vdwg.mxu0
  %1495 = vmatpush.bf16.msra.mxu0 %v1049
  %1496 = vmatpush.bf16.msra.mxu0 %v1047
  %1497 = vmatpush.bf16.msra.mxu0 %v1045
  %1498 = vmatpush.bf16.msra.mxu0 %v1043
  %1499 = vmatpush.bf16.msra.mxu0 %v1041
  %1500 = vmatpush.bf16.msra.mxu0 %v1039
  %1501 = vmatpush.bf16.msra.mxu0 %v1037
  %1502 = vmatpush.bf16.msra.mxu0 %v1035
  %1503 = vmatmul.bf16.gmra.mxu0 %v412
  %v1504 = vpop.f32.mrf.mxu0
  %v1505 = vadd.f32 %v1462, %v1504
  %v1506 = vpop.f32.mrf.mxu0
  %v1507 = vadd.f32 %v1464, %v1506
  %1508 = vmatmul.bf16.gmra.mxu0 %v421
  %v1509 = vpop.f32.mrf.mxu0
  %v1510 = vadd.f32 %v1467, %v1509
  %v1511 = vpop.f32.mrf.mxu0
  %v1512 = vadd.f32 %v1469, %v1511
  %1513 = vmatmul.bf16.gmra.mxu0 %v430
  %v1514 = vpop.f32.mrf.mxu0
  %v1515 = vadd.f32 %v1472, %v1514
  %v1516 = vpop.f32.mrf.mxu0
  %v1517 = vadd.f32 %v1474, %v1516
  %1518 = vmatmul.bf16.gmra.mxu0 %v439
  %v1519 = vpop.f32.mrf.mxu0
  %v1520 = vadd.f32 %v1477, %v1519
  %v1521 = vpop.f32.mrf.mxu0
  %v1522 = vadd.f32 %v1479, %v1521
  %1523 = vmatmul.bf16.gmra.mxu0 %v448
  %v1524 = vpop.f32.mrf.mxu0
  %v1525 = vadd.f32 %v1482, %v1524
  %v1526 = vpop.f32.mrf.mxu0
  %v1527 = vadd.f32 %v1484, %v1526
  %1528 = vmatmul.bf16.gmra.mxu0 %v457
  %v1529 = vpop.f32.mrf.mxu0
  %v1530 = vadd.f32 %v1487, %v1529
  %v1531 = vpop.f32.mrf.mxu0
  %v1532 = vadd.f32 %v1489, %v1531
  %1533 = vmatmul.bf16.gmra.mxu0 %v466
  %v1534 = vpop.f32.mrf.mxu0
  %v1535 = vadd.f32 %v1492, %v1534
  %v1536 = vpop.f32.mrf.mxu0
  %1537 = vdwg.mxu0
  %1538 = vmatpush.bf16.msra.mxu0 %v1065
  %1539 = vmatpush.bf16.msra.mxu0 %v1063
  %1540 = vmatpush.bf16.msra.mxu0 %v1061
  %1541 = vmatpush.bf16.msra.mxu0 %v1059
  %1542 = vmatpush.bf16.msra.mxu0 %v1057
  %1543 = vmatpush.bf16.msra.mxu0 %v1055
  %1544 = vmatpush.bf16.msra.mxu0 %v1053
  %1545 = vmatpush.bf16.msra.mxu0 %v1051
  %1546 = vmatmul.bf16.gmra.mxu0 %v413
  %v1547 = vpop.f32.mrf.mxu0
  %v1548 = vadd.f32 %v1505, %v1547
  %v1549 = vpop.f32.mrf.mxu0
  %v1550 = vadd.f32 %v1507, %v1549
  %1551 = vmatmul.bf16.gmra.mxu0 %v422
  %v1552 = vpop.f32.mrf.mxu0
  %v1553 = vadd.f32 %v1510, %v1552
  %v1554 = vpop.f32.mrf.mxu0
  %v1555 = vadd.f32 %v1512, %v1554
  %1556 = vmatmul.bf16.gmra.mxu0 %v431
  %v1557 = vpop.f32.mrf.mxu0
  %v1558 = vadd.f32 %v1515, %v1557
  %v1559 = vpop.f32.mrf.mxu0
  %v1560 = vadd.f32 %v1517, %v1559
  %1561 = vmatmul.bf16.gmra.mxu0 %v440
  %v1562 = vpop.f32.mrf.mxu0
  %v1563 = vadd.f32 %v1520, %v1562
  %v1564 = vpop.f32.mrf.mxu0
  %v1565 = vadd.f32 %v1522, %v1564
  %1566 = vmatmul.bf16.gmra.mxu0 %v449
  %v1567 = vpop.f32.mrf.mxu0
  %v1568 = vadd.f32 %v1525, %v1567
  %v1569 = vpop.f32.mrf.mxu0
  %v1570 = vadd.f32 %v1527, %v1569
  %1571 = vmatmul.bf16.gmra.mxu0 %v458
  %v1572 = vpop.f32.mrf.mxu0
  %v1573 = vadd.f32 %v1530, %v1572
  %v1574 = vpop.f32.mrf.mxu0
  %v1575 = vadd.f32 %v1532, %v1574
  %1576 = vmatmul.bf16.gmra.mxu0 %v467
  %v1577 = vpop.f32.mrf.mxu0
  %v1578 = vadd.f32 %v1535, %v1577
  %v1579 = vpop.f32.mrf.mxu0
  %1580 = vdwg.mxu0
  %1581 = vmatpush.bf16.msra.mxu0 0
  %1582 = vmatpush.bf16.msra.mxu0 0
  %1583 = vmatpush.bf16.msra.mxu0 0
  %1584 = vmatpush.bf16.msra.mxu0 %v1075
  %1585 = vmatpush.bf16.msra.mxu0 %v1073
  %1586 = vmatpush.bf16.msra.mxu0 %v1071
  %1587 = vmatpush.bf16.msra.mxu0 %v1069
  %1588 = vmatpush.bf16.msra.mxu0 %v1067
  %1589 = vmatmul.bf16.gmra.mxu0 %v1217
  %v1590 = vpop.f32.mrf.mxu0
  %v1591 = vadd.f32 %v1548, %v1590
  %v1592 = vpop.f32.mrf.mxu0
  %v1593 = vadd.f32 %v1550, %v1592
  %1594 = vmatmul.bf16.gmra.mxu0 %v1220
  %v1595 = vpop.f32.mrf.mxu0
  %v1596 = vadd.f32 %v1553, %v1595
  %v1597 = vpop.f32.mrf.mxu0
  %v1598 = vadd.f32 %v1555, %v1597
  %1599 = vmatmul.bf16.gmra.mxu0 %v1223
  %v1600 = vpop.f32.mrf.mxu0
  %v1601 = vadd.f32 %v1558, %v1600
  %v1602 = vpop.f32.mrf.mxu0
  %v1603 = vadd.f32 %v1560, %v1602
  %1604 = vmatmul.bf16.gmra.mxu0 %v1226
  %v1605 = vpop.f32.mrf.mxu0
  %v1606 = vadd.f32 %v1563, %v1605
  %v1607 = vpop.f32.mrf.mxu0
  %v1608 = vadd.f32 %v1565, %v1607
  %1609 = vmatmul.bf16.gmra.mxu0 %v1229
  %v1610 = vpop.f32.mrf.mxu0
  %v1611 = vadd.f32 %v1568, %v1610
  %v1612 = vpop.f32.mrf.mxu0
  %v1613 = vadd.f32 %v1570, %v1612
  %1614 = vmatmul.bf16.gmra.mxu0 %v1232
  %v1615 = vpop.f32.mrf.mxu0
  %v1616 = vadd.f32 %v1573, %v1615
  %v1617 = vpop.f32.mrf.mxu0
  %v1618 = vadd.f32 %v1575, %v1617
  %1619 = vmatmul.bf16.gmra.mxu0 %v1235
  %v1620 = vpop.f32.mrf.mxu0
  %v1621 = vadd.f32 %v1578, %v1620
  %v1622 = vpop.f32.mrf.mxu0
  %1623 = vdwg.mxu0
  %1624 = vmatpush.bf16.msra.mxu0 %v954
  %1625 = vmatpush.bf16.msra.mxu0 %v952
  %1626 = vmatpush.bf16.msra.mxu0 %v950
  %1627 = vmatpush.bf16.msra.mxu0 %v948
  %1628 = vmatpush.bf16.msra.mxu0 %v946
  %1629 = vmatpush.bf16.msra.mxu0 %v944
  %1630 = vmatpush.bf16.msra.mxu0 %v942
  %1631 = vmatpush.bf16.msra.mxu0 %v940
  %1632 = vmatmul.bf16.gmra.mxu0 %v406
  %v1633 = vpop.f32.mrf.mxu0
  %v1634 = vadd.f32 %v221, %v1633
  %v1635 = vpop.f32.mrf.mxu0
  %v1636 = vadd.f32 %v221, %v1635
  %1637 = vmatmul.bf16.gmra.mxu0 %v415
  %v1638 = vpop.f32.mrf.mxu0
  %v1639 = vadd.f32 %v221, %v1638
  %v1640 = vpop.f32.mrf.mxu0
  %v1641 = vadd.f32 %v221, %v1640
  %1642 = vmatmul.bf16.gmra.mxu0 %v424
  %v1643 = vpop.f32.mrf.mxu0
  %v1644 = vadd.f32 %v221, %v1643
  %v1645 = vpop.f32.mrf.mxu0
  %v1646 = vadd.f32 %v221, %v1645
  %1647 = vmatmul.bf16.gmra.mxu0 %v433
  %v1648 = vpop.f32.mrf.mxu0
  %v1649 = vadd.f32 %v221, %v1648
  %v1650 = vpop.f32.mrf.mxu0
  %v1651 = vadd.f32 %v221, %v1650
  %1652 = vmatmul.bf16.gmra.mxu0 %v442
  %v1653 = vpop.f32.mrf.mxu0
  %v1654 = vadd.f32 %v221, %v1653
  %v1655 = vpop.f32.mrf.mxu0
  %v1656 = vadd.f32 %v221, %v1655
  %1657 = vmatmul.bf16.gmra.mxu0 %v451
  %v1658 = vpop.f32.mrf.mxu0
  %v1659 = vadd.f32 %v221, %v1658
  %v1660 = vpop.f32.mrf.mxu0
  %v1661 = vadd.f32 %v221, %v1660
  %1662 = vmatmul.bf16.gmra.mxu0 %v460
  %v1663 = vpop.f32.mrf.mxu0
  %v1664 = vadd.f32 %v221, %v1663
  %v1665 = vpop.f32.mrf.mxu0
  %1666 = vdwg.mxu0
  %1667 = vmatpush.bf16.msra.mxu0 %v970
  %1668 = vmatpush.bf16.msra.mxu0 %v968
  %1669 = vmatpush.bf16.msra.mxu0 %v966
  %1670 = vmatpush.bf16.msra.mxu0 %v964
  %1671 = vmatpush.bf16.msra.mxu0 %v962
  %1672 = vmatpush.bf16.msra.mxu0 %v960
  %1673 = vmatpush.bf16.msra.mxu0 %v958
  %1674 = vmatpush.bf16.msra.mxu0 %v956
  %1675 = vmatmul.bf16.gmra.mxu0 %v407
  %v1676 = vpop.f32.mrf.mxu0
  %v1677 = vadd.f32 %v1634, %v1676
  %v1678 = vpop.f32.mrf.mxu0
  %v1679 = vadd.f32 %v1636, %v1678
  %1680 = vmatmul.bf16.gmra.mxu0 %v416
  %v1681 = vpop.f32.mrf.mxu0
  %v1682 = vadd.f32 %v1639, %v1681
  %v1683 = vpop.f32.mrf.mxu0
  %v1684 = vadd.f32 %v1641, %v1683
  %1685 = vmatmul.bf16.gmra.mxu0 %v425
  %v1686 = vpop.f32.mrf.mxu0
  %v1687 = vadd.f32 %v1644, %v1686
  %v1688 = vpop.f32.mrf.mxu0
  %v1689 = vadd.f32 %v1646, %v1688
  %1690 = vmatmul.bf16.gmra.mxu0 %v434
  %v1691 = vpop.f32.mrf.mxu0
  %v1692 = vadd.f32 %v1649, %v1691
  %v1693 = vpop.f32.mrf.mxu0
  %v1694 = vadd.f32 %v1651, %v1693
  %1695 = vmatmul.bf16.gmra.mxu0 %v443
  %v1696 = vpop.f32.mrf.mxu0
  %v1697 = vadd.f32 %v1654, %v1696
  %v1698 = vpop.f32.mrf.mxu0
  %v1699 = vadd.f32 %v1656, %v1698
  %1700 = vmatmul.bf16.gmra.mxu0 %v452
  %v1701 = vpop.f32.mrf.mxu0
  %v1702 = vadd.f32 %v1659, %v1701
  %v1703 = vpop.f32.mrf.mxu0
  %v1704 = vadd.f32 %v1661, %v1703
  %1705 = vmatmul.bf16.gmra.mxu0 %v461
  %v1706 = vpop.f32.mrf.mxu0
  %v1707 = vadd.f32 %v1664, %v1706
  %v1708 = vpop.f32.mrf.mxu0
  %1709 = vdwg.mxu0
  %1710 = vmatpush.bf16.msra.mxu0 %v986
  %1711 = vmatpush.bf16.msra.mxu0 %v984
  %1712 = vmatpush.bf16.msra.mxu0 %v982
  %1713 = vmatpush.bf16.msra.mxu0 %v980
  %1714 = vmatpush.bf16.msra.mxu0 %v978
  %1715 = vmatpush.bf16.msra.mxu0 %v976
  %1716 = vmatpush.bf16.msra.mxu0 %v974
  %1717 = vmatpush.bf16.msra.mxu0 %v972
  %1718 = vmatmul.bf16.gmra.mxu0 %v408
  %v1719 = vpop.f32.mrf.mxu0
  %v1720 = vadd.f32 %v1677, %v1719
  %v1721 = vpop.f32.mrf.mxu0
  %v1722 = vadd.f32 %v1679, %v1721
  %1723 = vmatmul.bf16.gmra.mxu0 %v417
  %v1724 = vpop.f32.mrf.mxu0
  %v1725 = vadd.f32 %v1682, %v1724
  %v1726 = vpop.f32.mrf.mxu0
  %v1727 = vadd.f32 %v1684, %v1726
  %1728 = vmatmul.bf16.gmra.mxu0 %v426
  %v1729 = vpop.f32.mrf.mxu0
  %v1730 = vadd.f32 %v1687, %v1729
  %v1731 = vpop.f32.mrf.mxu0
  %v1732 = vadd.f32 %v1689, %v1731
  %1733 = vmatmul.bf16.gmra.mxu0 %v435
  %v1734 = vpop.f32.mrf.mxu0
  %v1735 = vadd.f32 %v1692, %v1734
  %v1736 = vpop.f32.mrf.mxu0
  %v1737 = vadd.f32 %v1694, %v1736
  %1738 = vmatmul.bf16.gmra.mxu0 %v444
  %v1739 = vpop.f32.mrf.mxu0
  %v1740 = vadd.f32 %v1697, %v1739
  %v1741 = vpop.f32.mrf.mxu0
  %v1742 = vadd.f32 %v1699, %v1741
  %1743 = vmatmul.bf16.gmra.mxu0 %v453
  %v1744 = vpop.f32.mrf.mxu0
  %v1745 = vadd.f32 %v1702, %v1744
  %v1746 = vpop.f32.mrf.mxu0
  %v1747 = vadd.f32 %v1704, %v1746
  %1748 = vmatmul.bf16.gmra.mxu0 %v462
  %v1749 = vpop.f32.mrf.mxu0
  %v1750 = vadd.f32 %v1707, %v1749
  %v1751 = vpop.f32.mrf.mxu0
  %1752 = vdwg.mxu0
  %1753 = vmatpush.bf16.msra.mxu0 %v1002
  %1754 = vmatpush.bf16.msra.mxu0 %v1000
  %1755 = vmatpush.bf16.msra.mxu0 %v998
  %1756 = vmatpush.bf16.msra.mxu0 %v996
  %1757 = vmatpush.bf16.msra.mxu0 %v994
  %1758 = vmatpush.bf16.msra.mxu0 %v992
  %1759 = vmatpush.bf16.msra.mxu0 %v990
  %1760 = vmatpush.bf16.msra.mxu0 %v988
  %1761 = vmatmul.bf16.gmra.mxu0 %v409
  %v1762 = vpop.f32.mrf.mxu0
  %v1763 = vadd.f32 %v1720, %v1762
  %v1764 = vpop.f32.mrf.mxu0
  %v1765 = vadd.f32 %v1722, %v1764
  %1766 = vmatmul.bf16.gmra.mxu0 %v418
  %v1767 = vpop.f32.mrf.mxu0
  %v1768 = vadd.f32 %v1725, %v1767
  %v1769 = vpop.f32.mrf.mxu0
  %v1770 = vadd.f32 %v1727, %v1769
  %1771 = vmatmul.bf16.gmra.mxu0 %v427
  %v1772 = vpop.f32.mrf.mxu0
  %v1773 = vadd.f32 %v1730, %v1772
  %v1774 = vpop.f32.mrf.mxu0
  %v1775 = vadd.f32 %v1732, %v1774
  %1776 = vmatmul.bf16.gmra.mxu0 %v436
  %v1777 = vpop.f32.mrf.mxu0
  %v1778 = vadd.f32 %v1735, %v1777
  %v1779 = vpop.f32.mrf.mxu0
  %v1780 = vadd.f32 %v1737, %v1779
  %1781 = vmatmul.bf16.gmra.mxu0 %v445
  %v1782 = vpop.f32.mrf.mxu0
  %v1783 = vadd.f32 %v1740, %v1782
  %v1784 = vpop.f32.mrf.mxu0
  %v1785 = vadd.f32 %v1742, %v1784
  %1786 = vmatmul.bf16.gmra.mxu0 %v454
  %v1787 = vpop.f32.mrf.mxu0
  %v1788 = vadd.f32 %v1745, %v1787
  %v1789 = vpop.f32.mrf.mxu0
  %v1790 = vadd.f32 %v1747, %v1789
  %1791 = vmatmul.bf16.gmra.mxu0 %v463
  %v1792 = vpop.f32.mrf.mxu0
  %v1793 = vadd.f32 %v1750, %v1792
  %v1794 = vpop.f32.mrf.mxu0
  %1795 = vdwg.mxu0
  %1796 = vmatpush.bf16.msra.mxu0 %v1018
  %1797 = vmatpush.bf16.msra.mxu0 %v1016
  %1798 = vmatpush.bf16.msra.mxu0 %v1014
  %1799 = vmatpush.bf16.msra.mxu0 %v1012
  %1800 = vmatpush.bf16.msra.mxu0 %v1010
  %1801 = vmatpush.bf16.msra.mxu0 %v1008
  %1802 = vmatpush.bf16.msra.mxu0 %v1006
  %1803 = vmatpush.bf16.msra.mxu0 %v1004
  %1804 = vmatmul.bf16.gmra.mxu0 %v410
  %v1805 = vpop.f32.mrf.mxu0
  %v1806 = vadd.f32 %v1763, %v1805
  %v1807 = vpop.f32.mrf.mxu0
  %v1808 = vadd.f32 %v1765, %v1807
  %1809 = vmatmul.bf16.gmra.mxu0 %v419
  %v1810 = vpop.f32.mrf.mxu0
  %v1811 = vadd.f32 %v1768, %v1810
  %v1812 = vpop.f32.mrf.mxu0
  %v1813 = vadd.f32 %v1770, %v1812
  %1814 = vmatmul.bf16.gmra.mxu0 %v428
  %v1815 = vpop.f32.mrf.mxu0
  %v1816 = vadd.f32 %v1773, %v1815
  %v1817 = vpop.f32.mrf.mxu0
  %v1818 = vadd.f32 %v1775, %v1817
  %1819 = vmatmul.bf16.gmra.mxu0 %v437
  %v1820 = vpop.f32.mrf.mxu0
  %v1821 = vadd.f32 %v1778, %v1820
  %v1822 = vpop.f32.mrf.mxu0
  %v1823 = vadd.f32 %v1780, %v1822
  %1824 = vmatmul.bf16.gmra.mxu0 %v446
  %v1825 = vpop.f32.mrf.mxu0
  %v1826 = vadd.f32 %v1783, %v1825
  %v1827 = vpop.f32.mrf.mxu0
  %v1828 = vadd.f32 %v1785, %v1827
  %1829 = vmatmul.bf16.gmra.mxu0 %v455
  %v1830 = vpop.f32.mrf.mxu0
  %v1831 = vadd.f32 %v1788, %v1830
  %v1832 = vpop.f32.mrf.mxu0
  %v1833 = vadd.f32 %v1790, %v1832
  %1834 = vmatmul.bf16.gmra.mxu0 %v464
  %v1835 = vpop.f32.mrf.mxu0
  %v1836 = vadd.f32 %v1793, %v1835
  %v1837 = vpop.f32.mrf.mxu0
  %1838 = vdwg.mxu0
  %1839 = vmatpush.bf16.msra.mxu0 %v1034
  %1840 = vmatpush.bf16.msra.mxu0 %v1032
  %1841 = vmatpush.bf16.msra.mxu0 %v1030
  %1842 = vmatpush.bf16.msra.mxu0 %v1028
  %1843 = vmatpush.bf16.msra.mxu0 %v1026
  %1844 = vmatpush.bf16.msra.mxu0 %v1024
  %1845 = vmatpush.bf16.msra.mxu0 %v1022
  %1846 = vmatpush.bf16.msra.mxu0 %v1020
  %1847 = vmatmul.bf16.gmra.mxu0 %v411
  %v1848 = vpop.f32.mrf.mxu0
  %v1849 = vadd.f32 %v1806, %v1848
  %v1850 = vpop.f32.mrf.mxu0
  %v1851 = vadd.f32 %v1808, %v1850
  %1852 = vmatmul.bf16.gmra.mxu0 %v420
  %v1853 = vpop.f32.mrf.mxu0
  %v1854 = vadd.f32 %v1811, %v1853
  %v1855 = vpop.f32.mrf.mxu0
  %v1856 = vadd.f32 %v1813, %v1855
  %1857 = vmatmul.bf16.gmra.mxu0 %v429
  %v1858 = vpop.f32.mrf.mxu0
  %v1859 = vadd.f32 %v1816, %v1858
  %v1860 = vpop.f32.mrf.mxu0
  %v1861 = vadd.f32 %v1818, %v1860
  %1862 = vmatmul.bf16.gmra.mxu0 %v438
  %v1863 = vpop.f32.mrf.mxu0
  %v1864 = vadd.f32 %v1821, %v1863
  %v1865 = vpop.f32.mrf.mxu0
  %v1866 = vadd.f32 %v1823, %v1865
  %1867 = vmatmul.bf16.gmra.mxu0 %v447
  %v1868 = vpop.f32.mrf.mxu0
  %v1869 = vadd.f32 %v1826, %v1868
  %v1870 = vpop.f32.mrf.mxu0
  %v1871 = vadd.f32 %v1828, %v1870
  %1872 = vmatmul.bf16.gmra.mxu0 %v456
  %v1873 = vpop.f32.mrf.mxu0
  %v1874 = vadd.f32 %v1831, %v1873
  %v1875 = vpop.f32.mrf.mxu0
  %v1876 = vadd.f32 %v1833, %v1875
  %1877 = vmatmul.bf16.gmra.mxu0 %v465
  %v1878 = vpop.f32.mrf.mxu0
  %v1879 = vadd.f32 %v1836, %v1878
  %v1880 = vpop.f32.mrf.mxu0
  %1881 = vdwg.mxu0
  %1882 = vmatpush.bf16.msra.mxu0 %v1050
  %1883 = vmatpush.bf16.msra.mxu0 %v1048
  %1884 = vmatpush.bf16.msra.mxu0 %v1046
  %1885 = vmatpush.bf16.msra.mxu0 %v1044
  %1886 = vmatpush.bf16.msra.mxu0 %v1042
  %1887 = vmatpush.bf16.msra.mxu0 %v1040
  %1888 = vmatpush.bf16.msra.mxu0 %v1038
  %1889 = vmatpush.bf16.msra.mxu0 %v1036
  %1890 = vmatmul.bf16.gmra.mxu0 %v412
  %v1891 = vpop.f32.mrf.mxu0
  %v1892 = vadd.f32 %v1849, %v1891
  %v1893 = vpop.f32.mrf.mxu0
  %v1894 = vadd.f32 %v1851, %v1893
  %1895 = vmatmul.bf16.gmra.mxu0 %v421
  %v1896 = vpop.f32.mrf.mxu0
  %v1897 = vadd.f32 %v1854, %v1896
  %v1898 = vpop.f32.mrf.mxu0
  %v1899 = vadd.f32 %v1856, %v1898
  %1900 = vmatmul.bf16.gmra.mxu0 %v430
  %v1901 = vpop.f32.mrf.mxu0
  %v1902 = vadd.f32 %v1859, %v1901
  %v1903 = vpop.f32.mrf.mxu0
  %v1904 = vadd.f32 %v1861, %v1903
  %1905 = vmatmul.bf16.gmra.mxu0 %v439
  %v1906 = vpop.f32.mrf.mxu0
  %v1907 = vadd.f32 %v1864, %v1906
  %v1908 = vpop.f32.mrf.mxu0
  %v1909 = vadd.f32 %v1866, %v1908
  %1910 = vmatmul.bf16.gmra.mxu0 %v448
  %v1911 = vpop.f32.mrf.mxu0
  %v1912 = vadd.f32 %v1869, %v1911
  %v1913 = vpop.f32.mrf.mxu0
  %v1914 = vadd.f32 %v1871, %v1913
  %1915 = vmatmul.bf16.gmra.mxu0 %v457
  %v1916 = vpop.f32.mrf.mxu0
  %v1917 = vadd.f32 %v1874, %v1916
  %v1918 = vpop.f32.mrf.mxu0
  %v1919 = vadd.f32 %v1876, %v1918
  %1920 = vmatmul.bf16.gmra.mxu0 %v466
  %v1921 = vpop.f32.mrf.mxu0
  %v1922 = vadd.f32 %v1879, %v1921
  %v1923 = vpop.f32.mrf.mxu0
  %1924 = vdwg.mxu0
  %1925 = vmatpush.bf16.msra.mxu0 %v1066
  %1926 = vmatpush.bf16.msra.mxu0 %v1064
  %1927 = vmatpush.bf16.msra.mxu0 %v1062
  %1928 = vmatpush.bf16.msra.mxu0 %v1060
  %1929 = vmatpush.bf16.msra.mxu0 %v1058
  %1930 = vmatpush.bf16.msra.mxu0 %v1056
  %1931 = vmatpush.bf16.msra.mxu0 %v1054
  %1932 = vmatpush.bf16.msra.mxu0 %v1052
  %1933 = vmatmul.bf16.gmra.mxu0 %v413
  %v1934 = vpop.f32.mrf.mxu0
  %v1935 = vadd.f32 %v1892, %v1934
  %v1936 = vpop.f32.mrf.mxu0
  %v1937 = vadd.f32 %v1894, %v1936
  %1938 = vmatmul.bf16.gmra.mxu0 %v422
  %v1939 = vpop.f32.mrf.mxu0
  %v1940 = vadd.f32 %v1897, %v1939
  %v1941 = vpop.f32.mrf.mxu0
  %v1942 = vadd.f32 %v1899, %v1941
  %1943 = vmatmul.bf16.gmra.mxu0 %v431
  %v1944 = vpop.f32.mrf.mxu0
  %v1945 = vadd.f32 %v1902, %v1944
  %v1946 = vpop.f32.mrf.mxu0
  %v1947 = vadd.f32 %v1904, %v1946
  %1948 = vmatmul.bf16.gmra.mxu0 %v440
  %v1949 = vpop.f32.mrf.mxu0
  %v1950 = vadd.f32 %v1907, %v1949
  %v1951 = vpop.f32.mrf.mxu0
  %v1952 = vadd.f32 %v1909, %v1951
  %1953 = vmatmul.bf16.gmra.mxu0 %v449
  %v1954 = vpop.f32.mrf.mxu0
  %v1955 = vadd.f32 %v1912, %v1954
  %v1956 = vpop.f32.mrf.mxu0
  %v1957 = vadd.f32 %v1914, %v1956
  %1958 = vmatmul.bf16.gmra.mxu0 %v458
  %v1959 = vpop.f32.mrf.mxu0
  %v1960 = vadd.f32 %v1917, %v1959
  %v1961 = vpop.f32.mrf.mxu0
  %v1962 = vadd.f32 %v1919, %v1961
  %1963 = vmatmul.bf16.gmra.mxu0 %v467
  %v1964 = vpop.f32.mrf.mxu0
  %v1965 = vadd.f32 %v1922, %v1964
  %v1966 = vpop.f32.mrf.mxu0
  %1967 = vdwg.mxu0
  %1968 = vmatpush.bf16.msra.mxu0 0
  %1969 = vmatpush.bf16.msra.mxu0 0
  %1970 = vmatpush.bf16.msra.mxu0 0
  %1971 = vmatpush.bf16.msra.mxu0 %v1076
  %1972 = vmatpush.bf16.msra.mxu0 %v1074
  %1973 = vmatpush.bf16.msra.mxu0 %v1072
  %1974 = vmatpush.bf16.msra.mxu0 %v1070
  %1975 = vmatpush.bf16.msra.mxu0 %v1068
  %1976 = vmatmul.bf16.gmra.mxu0 %v1217
  %v1977 = vpop.f32.mrf.mxu0
  %v1978 = vadd.f32 %v1935, %v1977
  %v1979 = vpop.f32.mrf.mxu0
  %v1980 = vadd.f32 %v1937, %v1979
  %1981 = vmatmul.bf16.gmra.mxu0 %v1220
  %v1982 = vpop.f32.mrf.mxu0
  %v1983 = vadd.f32 %v1940, %v1982
  %v1984 = vpop.f32.mrf.mxu0
  %v1985 = vadd.f32 %v1942, %v1984
  %1986 = vmatmul.bf16.gmra.mxu0 %v1223
  %v1987 = vpop.f32.mrf.mxu0
  %v1988 = vadd.f32 %v1945, %v1987
  %v1989 = vpop.f32.mrf.mxu0
  %v1990 = vadd.f32 %v1947, %v1989
  %1991 = vmatmul.bf16.gmra.mxu0 %v1226
  %v1992 = vpop.f32.mrf.mxu0
  %v1993 = vadd.f32 %v1950, %v1992
  %v1994 = vpop.f32.mrf.mxu0
  %v1995 = vadd.f32 %v1952, %v1994
  %1996 = vmatmul.bf16.gmra.mxu0 %v1229
  %v1997 = vpop.f32.mrf.mxu0
  %v1998 = vadd.f32 %v1955, %v1997
  %v1999 = vpop.f32.mrf.mxu0
  %v2000 = vadd.f32 %v1957, %v1999
  %2001 = vmatmul.bf16.gmra.mxu0 %v1232
  %v2002 = vpop.f32.mrf.mxu0
  %v2003 = vadd.f32 %v1960, %v2002
  %v2004 = vpop.f32.mrf.mxu0
  %v2005 = vadd.f32 %v1962, %v2004
  %2006 = vmatmul.bf16.gmra.mxu0 %v1235
  %v2007 = vpop.f32.mrf.mxu0
  %v2008 = vadd.f32 %v1965, %v2007
  %v2009 = vpop.f32.mrf.mxu0
  %2010 = vdwg.mxu0
  %v2011 = vmax.f32 %v1591, 0.0
  %v2012 = vmax.f32 %v1978, 0.0
  %v2013 = vmax.f32 %v1593, 0.0
  %v2014 = vmax.f32 %v1980, 0.0
  %v2015 = vmax.f32 %v1596, 0.0
  %v2016 = vmax.f32 %v1983, 0.0
  %v2017 = vmax.f32 %v1598, 0.0
  %v2018 = vmax.f32 %v1985, 0.0
  %v2019 = vmax.f32 %v1601, 0.0
  %v2020 = vmax.f32 %v1988, 0.0
  %v2021 = vmax.f32 %v1603, 0.0
  %v2022 = vmax.f32 %v1990, 0.0
  %v2023 = vmax.f32 %v1606, 0.0
  %v2024 = vmax.f32 %v1993, 0.0
  %v2025 = vmax.f32 %v1608, 0.0
  %v2026 = vmax.f32 %v1995, 0.0
  %v2027 = vmax.f32 %v1611, 0.0
  %v2028 = vmax.f32 %v1998, 0.0
  %v2029 = vmax.f32 %v1613, 0.0
  %v2030 = vmax.f32 %v2000, 0.0
  %v2031 = vmax.f32 %v1616, 0.0
  %v2032 = vmax.f32 %v2003, 0.0
  %v2033 = vmax.f32 %v1618, 0.0
  %v2034 = vmax.f32 %v2005, 0.0
  %v2035 = vmax.f32 %v1621, 0.0
  %v2036 = vmax.f32 %v2008, 0.0
  %v2037 = vpack.c.bf16 %v2012, %v2011
  %v2038 = vpack.c.bf16 %v2014, %v2013
  %v2039 = vpack.c.bf16 %v2016, %v2015
  %v2040 = vpack.c.bf16 %v2018, %v2017
  %v2041 = vpack.c.bf16 %v2020, %v2019
  %v2042 = vpack.c.bf16 %v2022, %v2021
  %v2043 = vpack.c.bf16 %v2024, %v2023
  %v2044 = vpack.c.bf16 %v2026, %v2025
  %v2045 = vpack.c.bf16 %v2028, %v2027
  %v2046 = vpack.c.bf16 %v2030, %v2029
  %v2047 = vpack.c.bf16 %v2032, %v2031
  %v2048 = vpack.c.bf16 %v2034, %v2033
  %v2049 = vpack.c.bf16 %v2036, %v2035
  %2050 = vst [vmem:[%s3] sm:$0xff] %v2037
  %2051 = vst [vmem:[%s3 + $0x8] sm:$0xff] %v2038
  %2052 = vst [vmem:[%s3 + $0x10] sm:$0xff] %v2039
  %2053 = vst [vmem:[%s3 + $0x18] sm:$0xff] %v2040
  %2054 = vst [vmem:[%s3 + $0x20] sm:$0xff] %v2041
  %2055 = vst [vmem:[%s3 + $0x28] sm:$0xff] %v2042
  %2056 = vst [vmem:[%s3 + $0x30] sm:$0xff] %v2043
  %2057 = vst [vmem:[%s3 + $0x38] sm:$0xff] %v2044
  %2058 = vst [vmem:[%s3 + $0x40] sm:$0xff] %v2045
  %2059 = vst [vmem:[%s3 + $0x48] sm:$0xff] %v2046
  %2060 = vst [vmem:[%s3 + $0x50] sm:$0xff] %v2047
  %2061 = vst [vmem:[%s3 + $0x58] sm:$0xff] %v2048
  %2062 = vst [vmem:[%s3 + $0x60] sm:$0xff] %v2049
  // Predicated region
  $region14: #{neural_net_forward.16} parent=0 // pred_check
    _
  $region15: #{neural_net_forward.16} parent=0 // pred_check_branch
    %2064 = sbr.rel (0) target = $region17
  $region16: #{neural_net_forward.16} parent=0 // pred_region
    _
  $region17: #{neural_net_forward.16} parent=0 // pred_fallthru
    _
  // Predicated region
  $region18: #{neural_net_forward.16} parent=0 // pred_check
    _
  $region19: #{neural_net_forward.16} parent=0 // pred_check_branch
    %2066 = sbr.rel (0) target = $region21
  $region20: #{neural_net_forward.16} parent=0 // pred_region
    _
  $region21: #{neural_net_forward.16} parent=0 // pred_fallthru
    _

// kernel: neural_net_forward.17
$region0: #{neural_net_forward.17}
  #allocation0 [shape = 'u32[]', space=smem, size = 0x4, offset = 0x4, fixed_abs, tag = 'smem constant byte address 0x4 - core index']
  #allocation1 [shape = 'u32[72,128]{1,0:T(1,128)}', space=vmem, size = 0x9000, scoped, tag = 'internal scratch']
  %s0 = inlined_call_operand.vmem [shape: bf16[2,49,224], index: 0, kind: input, shape index: {}]
  %s1 = inlined_call_operand.vmem [shape: bf16[224,1024], index: 1, kind: input, shape index: {}]
  %s2 = inlined_call_operand.vmem [shape: f32[1,1024], index: 2, kind: input, shape index: {}]
  %s3 = inlined_call_operand.hbm [shape: f32[2,1024], index: 3, kind: output, shape index: {}]
  %s4 = sld [smem:[#allocation0]]
  $region22: #{neural_net_forward.17} parent=0
    _
  %s6 = ssub.s32 1, %s4
  %s7 = scalar_select 0, %s6, %s4
  $region1: #{neural_net_forward.17} parent=0
    #allocation2 [shape = 'u8[8192]{0}', space=vmem, size = 0x2000, scoped, tag = 'output window, operand 0, single buffered']
    #allocation3 [shape = 's32[1]{0}', space=sflag, size = 0x4, scoped, tag = 'scoped memory for neural_net_forward.17']
    %8 = vsyncpa [#allocation3], 0
    // Predicated region
    $region2: #{neural_net_forward.17} parent=1 // pred_check
      _
    $region3: #{neural_net_forward.17} parent=1 // pred_check_branch
      %10 = sbr.rel (0) target = $region5
    $region4: #{neural_net_forward.17} parent=1 // pred_region
      _
    $region5: #{neural_net_forward.17} parent=1 // pred_fallthru
      _
    // Predicated region
    $region6: #{neural_net_forward.17} parent=1 // pred_check
      _
    $region7: #{neural_net_forward.17} parent=1 // pred_check_branch
      %12 = sbr.rel (0) target = $region9
    $region8: #{neural_net_forward.17} parent=1 // pred_region
      _
    $region9: #{neural_net_forward.17} parent=1 // pred_fallthru
      _
    // Predicated region
    $region10: #{neural_net_forward.17} parent=1 // pred_check
      _
    $region11: #{neural_net_forward.17} parent=1 // pred_check_branch
      %14 = sbr.rel (0) target = $region13
    $region12: #{neural_net_forward.17} parent=1 // pred_region
      _
    $region13: #{neural_net_forward.17} parent=1 // pred_fallthru
      _
    %v16 = vld [vmem:[%s0] sm:$0xff]
    %v17 = vld [vmem:[%s0 + $0x8] sm:$0xff]
    %v18 = vld [vmem:[%s0 + $0x10] sm:$0xff]
    %v19 = vld [vmem:[%s0 + $0x18] sm:$0xff]
    %v20 = vld [vmem:[%s0 + $0x20] sm:$0xff]
    %v21 = vld [vmem:[%s0 + $0x28] sm:$0xff]
    %v22 = vld [vmem:[%s0 + $0x30] sm:$0x11]
    %v23 = vld [vmem:[%s0 + $0x38] sm:$0xff]
    %v24 = vld [vmem:[%s0 + $0x40] sm:$0xff]
    %v25 = vld [vmem:[%s0 + $0x48] sm:$0xff]
    %v26 = vld [vmem:[%s0 + $0x50] sm:$0xff]
    %v27 = vld [vmem:[%s0 + $0x58] sm:$0xff]
    %v28 = vld [vmem:[%s0 + $0x60] sm:$0xff]
    %v29 = vld [vmem:[%s0 + $0x68] sm:$0x11]
    %v30 = vunpack.c.l.bf16 %v16
    %v31 = vunpack.c.h.bf16 %v16
    %v32 = vunpack.c.l.bf16 %v17
    %v33 = vunpack.c.h.bf16 %v17
    %v34 = vunpack.c.l.bf16 %v18
    %v35 = vunpack.c.h.bf16 %v18
    %v36 = vunpack.c.l.bf16 %v19
    %v37 = vunpack.c.h.bf16 %v19
    %v38 = vunpack.c.l.bf16 %v20
    %v39 = vunpack.c.h.bf16 %v20
    %v40 = vunpack.c.l.bf16 %v21
    %v41 = vunpack.c.h.bf16 %v21
    %v42 = vunpack.c.l.bf16 %v22
    %v43 = vunpack.c.h.bf16 %v22
    %v44 = vunpack.c.l.bf16 %v23
    %v45 = vunpack.c.h.bf16 %v23
    %v46 = vunpack.c.l.bf16 %v24
    %v47 = vunpack.c.h.bf16 %v24
    %v48 = vunpack.c.l.bf16 %v25
    %v49 = vunpack.c.h.bf16 %v25
    %v50 = vunpack.c.l.bf16 %v26
    %v51 = vunpack.c.h.bf16 %v26
    %v52 = vunpack.c.l.bf16 %v27
    %v53 = vunpack.c.h.bf16 %v27
    %v54 = vunpack.c.l.bf16 %v28
    %v55 = vunpack.c.h.bf16 %v28
    %v56 = vunpack.c.l.bf16 %v29
    %v57 = vunpack.c.h.bf16 %v29
    %v58 = vadd.f32 %v30, %v32
    %v59 = vadd.f32 %v58, %v34
    %v60 = vadd.f32 %v59, %v36
    %v61 = vadd.f32 %v60, %v38
    %v62 = vadd.f32 %v61, %v40
    %vm63 = vcmask 1040384
    %v64 = vsel %vm63, %v42, 0.0
    %v65 = vadd.f32 %v62, %v64
    %v66 = vrot.slane %v65, 4
    %v67 = vadd.f32 %v65, %v66
    %v68 = vrot.slane %v67, 2
    %v69 = vadd.f32 %v67, %v68
    %v70 = vrot.slane %v69, 1
    %v71 = vadd.f32 %v69, %v70
    %vm72 = vcmask 785408
    %v73 = vsel %vm72, %v31, 0.0
    %v74 = vsel %vm72, %v33, 0.0
    %v75 = vadd.f32 %v73, %v74
    %v76 = vsel %vm72, %v35, 0.0
    %v77 = vadd.f32 %v75, %v76
    %v78 = vsel %vm72, %v37, 0.0
    %v79 = vadd.f32 %v77, %v78
    %v80 = vsel %vm72, %v39, 0.0
    %v81 = vadd.f32 %v79, %v80
    %v82 = vsel %vm72, %v41, 0.0
    %v83 = vadd.f32 %v81, %v82
    %vm84 = vcmask 778240
    %v85 = vsel %vm84, %v43, 0.0
    %v86 = vadd.f32 %v83, %v85
    %v87 = vrot.slane %v86, 4
    %v88 = vadd.f32 %v86, %v87
    %v89 = vrot.slane %v88, 2
    %v90 = vadd.f32 %v88, %v89
    %v91 = vrot.slane %v90, 1
    %v92 = vadd.f32 %v90, %v91
    %v93 = vadd.f32 %v44, %v46
    %v94 = vadd.f32 %v93, %v48
    %v95 = vadd.f32 %v94, %v50
    %v96 = vadd.f32 %v95, %v52
    %v97 = vadd.f32 %v96, %v54
    %v98 = vsel %vm63, %v56, 0.0
    %v99 = vadd.f32 %v97, %v98
    %v100 = vrot.slane %v99, 4
    %v101 = vadd.f32 %v99, %v100
    %v102 = vrot.slane %v101, 2
    %v103 = vadd.f32 %v101, %v102
    %v104 = vrot.slane %v103, 1
    %v105 = vadd.f32 %v103, %v104
    %v106 = vsel %vm72, %v45, 0.0
    %v107 = vsel %vm72, %v47, 0.0
    %v108 = vadd.f32 %v106, %v107
    %v109 = vsel %vm72, %v49, 0.0
    %v110 = vadd.f32 %v108, %v109
    %v111 = vsel %vm72, %v51, 0.0
    %v112 = vadd.f32 %v110, %v111
    %v113 = vsel %vm72, %v53, 0.0
    %v114 = vadd.f32 %v112, %v113
    %v115 = vsel %vm72, %v55, 0.0
    %v116 = vadd.f32 %v114, %v115
    %v117 = vsel %vm84, %v57, 0.0
    %v118 = vadd.f32 %v116, %v117
    %v119 = vrot.slane %v118, 4
    %v120 = vadd.f32 %v118, %v119
    %v121 = vrot.slane %v120, 2
    %v122 = vadd.f32 %v120, %v121
    %v123 = vrot.slane %v122, 1
    %v124 = vadd.f32 %v122, %v123
    %v125 = vrcp.pop 49.0
    %v126 = vmul.f32 49.0, %v125
    %v127 = vsub.f32 1.0, %v126
    %v128 = vmul.f32 %v125, %v127
    %v129 = vadd.f32 %v125, %v128
    %vm130 = vweird.f32 %v125
    %v131 = vsel %vm130, %v125, %v129
    %v132 = vmul.f32 %v71, %v131
    %v133 = vmul.f32 %v92, %v131
    %v134 = vmul.f32 %v105, %v131
    %v135 = vmul.f32 %v124, %v131
    %v136 = vpack.c.bf16 %v132, %v132
    %v137 = vpack.c.bf16 %v133, %v133
    %v138 = vpack.c.bf16 %v134, %v134
    %v139 = vpack.c.bf16 %v135, %v135
    %v140 = vld [vmem:[%s1] sm:$0xff]
    %v141 = vld [vmem:[%s1 + $0x8] sm:$0xff]
    %v142 = vld [vmem:[%s1 + $0x10] sm:$0xff]
    %v143 = vld [vmem:[%s1 + $0x18] sm:$0xff]
    %v144 = vld [vmem:[%s1 + $0x20] sm:$0xff]
    %v145 = vld [vmem:[%s1 + $0x28] sm:$0xff]
    %v146 = vld [vmem:[%s1 + $0x30] sm:$0xff]
    %v147 = vld [vmem:[%s1 + $0x38] sm:$0xff]
    %v148 = vld [vmem:[%s1 + $0x40] sm:$0xff]
    %v149 = vld [vmem:[%s1 + $0x48] sm:$0xff]
    %v150 = vld [vmem:[%s1 + $0x50] sm:$0xff]
    %v151 = vld [vmem:[%s1 + $0x58] sm:$0xff]
    %v152 = vld [vmem:[%s1 + $0x60] sm:$0xff]
    %v153 = vld [vmem:[%s1 + $0x68] sm:$0xff]
    %v154 = vld [vmem:[%s1 + $0x70] sm:$0xff]
    %v155 = vld [vmem:[%s1 + $0x78] sm:$0xff]
    %v156 = vld [vmem:[%s1 + $0x80] sm:$0xff]
    %v157 = vld [vmem:[%s1 + $0x88] sm:$0xff]
    %v158 = vld [vmem:[%s1 + $0x90] sm:$0xff]
    %v159 = vld [vmem:[%s1 + $0x98] sm:$0xff]
    %v160 = vld [vmem:[%s1 + $0xa0] sm:$0xff]
    %v161 = vld [vmem:[%s1 + $0xa8] sm:$0xff]
    %v162 = vld [vmem:[%s1 + $0xb0] sm:$0xff]
    %v163 = vld [vmem:[%s1 + $0xb8] sm:$0xff]
    %v164 = vld [vmem:[%s1 + $0xc0] sm:$0xff]
    %v165 = vld [vmem:[%s1 + $0xc8] sm:$0xff]
    %v166 = vld [vmem:[%s1 + $0xd0] sm:$0xff]
    %v167 = vld [vmem:[%s1 + $0xd8] sm:$0xff]
    %v168 = vld [vmem:[%s1 + $0xe0] sm:$0xff]
    %v169 = vld [vmem:[%s1 + $0xe8] sm:$0xff]
    %v170 = vld [vmem:[%s1 + $0xf0] sm:$0xff]
    %v171 = vld [vmem:[%s1 + $0xf8] sm:$0xff]
    %v172 = vld [vmem:[%s1 + $0x100] sm:$0xff]
    %v173 = vld [vmem:[%s1 + $0x108] sm:$0xff]
    %v174 = vld [vmem:[%s1 + $0x110] sm:$0xff]
    %v175 = vld [vmem:[%s1 + $0x118] sm:$0xff]
    %v176 = vld [vmem:[%s1 + $0x120] sm:$0xff]
    %v177 = vld [vmem:[%s1 + $0x128] sm:$0xff]
    %v178 = vld [vmem:[%s1 + $0x130] sm:$0xff]
    %v179 = vld [vmem:[%s1 + $0x138] sm:$0xff]
    %v180 = vld [vmem:[%s1 + $0x140] sm:$0xff]
    %v181 = vld [vmem:[%s1 + $0x148] sm:$0xff]
    %v182 = vld [vmem:[%s1 + $0x150] sm:$0xff]
    %v183 = vld [vmem:[%s1 + $0x158] sm:$0xff]
    %v184 = vld [vmem:[%s1 + $0x160] sm:$0xff]
    %v185 = vld [vmem:[%s1 + $0x168] sm:$0xff]
    %v186 = vld [vmem:[%s1 + $0x170] sm:$0xff]
    %v187 = vld [vmem:[%s1 + $0x178] sm:$0xff]
    %v188 = vld [vmem:[%s1 + $0x180] sm:$0xff]
    %v189 = vld [vmem:[%s1 + $0x188] sm:$0xff]
    %v190 = vld [vmem:[%s1 + $0x190] sm:$0xff]
    %v191 = vld [vmem:[%s1 + $0x198] sm:$0xff]
    %v192 = vld [vmem:[%s1 + $0x1a0] sm:$0xff]
    %v193 = vld [vmem:[%s1 + $0x1a8] sm:$0xff]
    %v194 = vld [vmem:[%s1 + $0x1b0] sm:$0xff]
    %v195 = vld [vmem:[%s1 + $0x1b8] sm:$0xff]
    %v196 = vld [vmem:[%s1 + $0x1c0] sm:$0xff]
    %v197 = vld [vmem:[%s1 + $0x1c8] sm:$0xff]
    %v198 = vld [vmem:[%s1 + $0x1d0] sm:$0xff]
    %v199 = vld [vmem:[%s1 + $0x1d8] sm:$0xff]
    %v200 = vld [vmem:[%s1 + $0x1e0] sm:$0xff]
    %v201 = vld [vmem:[%s1 + $0x1e8] sm:$0xff]
    %v202 = vld [vmem:[%s1 + $0x1f0] sm:$0xff]
    %v203 = vld [vmem:[%s1 + $0x1f8] sm:$0xff]
    %v204 = vld [vmem:[%s1 + $0x200] sm:$0xff]
    %v205 = vld [vmem:[%s1 + $0x208] sm:$0xff]
    %v206 = vld [vmem:[%s1 + $0x210] sm:$0xff]
    %v207 = vld [vmem:[%s1 + $0x218] sm:$0xff]
    %v208 = vld [vmem:[%s1 + $0x220] sm:$0xff]
    %v209 = vld [vmem:[%s1 + $0x228] sm:$0xff]
    %v210 = vld [vmem:[%s1 + $0x230] sm:$0xff]
    %v211 = vld [vmem:[%s1 + $0x238] sm:$0xff]
    %v212 = vld [vmem:[%s1 + $0x240] sm:$0xff]
    %v213 = vld [vmem:[%s1 + $0x248] sm:$0xff]
    %v214 = vld [vmem:[%s1 + $0x250] sm:$0xff]
    %v215 = vld [vmem:[%s1 + $0x258] sm:$0xff]
    %v216 = vld [vmem:[%s1 + $0x260] sm:$0xff]
    %v217 = vld [vmem:[%s1 + $0x268] sm:$0xff]
    %v218 = vld [vmem:[%s1 + $0x270] sm:$0xff]
    %v219 = vld [vmem:[%s1 + $0x278] sm:$0xff]
    %v220 = vld [vmem:[%s1 + $0x280] sm:$0xff]
    %v221 = vld [vmem:[%s1 + $0x288] sm:$0xff]
    %v222 = vld [vmem:[%s1 + $0x290] sm:$0xff]
    %v223 = vld [vmem:[%s1 + $0x298] sm:$0xff]
    %v224 = vld [vmem:[%s1 + $0x2a0] sm:$0xff]
    %v225 = vld [vmem:[%s1 + $0x2a8] sm:$0xff]
    %v226 = vld [vmem:[%s1 + $0x2b0] sm:$0xff]
    %v227 = vld [vmem:[%s1 + $0x2b8] sm:$0xff]
    %v228 = vld [vmem:[%s1 + $0x2c0] sm:$0xff]
    %v229 = vld [vmem:[%s1 + $0x2c8] sm:$0xff]
    %v230 = vld [vmem:[%s1 + $0x2d0] sm:$0xff]
    %v231 = vld [vmem:[%s1 + $0x2d8] sm:$0xff]
    %v232 = vld [vmem:[%s1 + $0x2e0] sm:$0xff]
    %v233 = vld [vmem:[%s1 + $0x2e8] sm:$0xff]
    %v234 = vld [vmem:[%s1 + $0x2f0] sm:$0xff]
    %v235 = vld [vmem:[%s1 + $0x2f8] sm:$0xff]
    %v236 = vld [vmem:[%s1 + $0x300] sm:$0xff]
    %v237 = vld [vmem:[%s1 + $0x308] sm:$0xff]
    %v238 = vld [vmem:[%s1 + $0x310] sm:$0xff]
    %v239 = vld [vmem:[%s1 + $0x318] sm:$0xff]
    %v240 = vld [vmem:[%s1 + $0x320] sm:$0xff]
    %v241 = vld [vmem:[%s1 + $0x328] sm:$0xff]
    %v242 = vld [vmem:[%s1 + $0x330] sm:$0xff]
    %v243 = vld [vmem:[%s1 + $0x338] sm:$0xff]
    %v244 = vld [vmem:[%s1 + $0x340] sm:$0xff]
    %v245 = vld [vmem:[%s1 + $0x348] sm:$0xff]
    %v246 = vld [vmem:[%s1 + $0x350] sm:$0xff]
    %v247 = vld [vmem:[%s1 + $0x358] sm:$0xff]
    %v248 = vld [vmem:[%s1 + $0x360] sm:$0xff]
    %v249 = vld [vmem:[%s1 + $0x368] sm:$0xff]
    %v250 = vld [vmem:[%s1 + $0x370] sm:$0xff]
    %v251 = vld [vmem:[%s1 + $0x378] sm:$0xff]
    %v252 = vld [vmem:[%s2] sm:$0xff]
    %v254 = vperm.slane %v252, 0
    %v255 = vperm.slane %v252, 1
    %v256 = vperm.slane %v252, 2
    %v257 = vperm.slane %v252, 3
    %v258 = vperm.slane %v252, 4
    %v259 = vperm.slane %v252, 5
    %v260 = vperm.slane %v252, 6
    %v261 = vperm.slane %v252, 7
    %v274 = vunpack.c.l.b16 %v136
    %v275 = vunpack.c.l.b16 %v137
    %v276 = vunpack.c.l.b16 %v138
    %v277 = vunpack.c.l.b16 %v139
    %vm278 = vcmask 1041409
    %v279 = vsel %vm278, %v276, %v274
    %v280 = vsel %vm278, %v277, %v275
    %v281 = vpack.c.b16 %v279, %v279
    %v282 = vpack.c.b16 %v280, %v280
    %v396 = vunpack.c.l.b16 %v140
    %v397 = vunpack.c.h.b16 %v140
    %v398 = vunpack.c.l.b16 %v141
    %v399 = vunpack.c.h.b16 %v141
    %v400 = vunpack.c.l.b16 %v142
    %v401 = vunpack.c.h.b16 %v142
    %v402 = vunpack.c.l.b16 %v143
    %v403 = vunpack.c.h.b16 %v143
    %v404 = vunpack.c.l.b16 %v144
    %v405 = vunpack.c.h.b16 %v144
    %v406 = vunpack.c.l.b16 %v145
    %v407 = vunpack.c.h.b16 %v145
    %v408 = vunpack.c.l.b16 %v146
    %v409 = vunpack.c.h.b16 %v146
    %v410 = vunpack.c.l.b16 %v147
    %v411 = vunpack.c.h.b16 %v147
    %v412 = vunpack.c.l.b16 %v148
    %v413 = vunpack.c.h.b16 %v148
    %v414 = vunpack.c.l.b16 %v149
    %v415 = vunpack.c.h.b16 %v149
    %v416 = vunpack.c.l.b16 %v150
    %v417 = vunpack.c.h.b16 %v150
    %v418 = vunpack.c.l.b16 %v151
    %v419 = vunpack.c.h.b16 %v151
    %v420 = vunpack.c.l.b16 %v152
    %v421 = vunpack.c.h.b16 %v152
    %v422 = vunpack.c.l.b16 %v153
    %v423 = vunpack.c.h.b16 %v153
    %v424 = vunpack.c.l.b16 %v154
    %v425 = vunpack.c.h.b16 %v154
    %v426 = vunpack.c.l.b16 %v155
    %v427 = vunpack.c.h.b16 %v155
    %v428 = vunpack.c.l.b16 %v156
    %v429 = vunpack.c.h.b16 %v156
    %v430 = vunpack.c.l.b16 %v157
    %v431 = vunpack.c.h.b16 %v157
    %v432 = vunpack.c.l.b16 %v158
    %v433 = vunpack.c.h.b16 %v158
    %v434 = vunpack.c.l.b16 %v159
    %v435 = vunpack.c.h.b16 %v159
    %v436 = vunpack.c.l.b16 %v160
    %v437 = vunpack.c.h.b16 %v160
    %v438 = vunpack.c.l.b16 %v161
    %v439 = vunpack.c.h.b16 %v161
    %v440 = vunpack.c.l.b16 %v162
    %v441 = vunpack.c.h.b16 %v162
    %v442 = vunpack.c.l.b16 %v163
    %v443 = vunpack.c.h.b16 %v163
    %v444 = vunpack.c.l.b16 %v164
    %v445 = vunpack.c.h.b16 %v164
    %v446 = vunpack.c.l.b16 %v165
    %v447 = vunpack.c.h.b16 %v165
    %v448 = vunpack.c.l.b16 %v166
    %v449 = vunpack.c.h.b16 %v166
    %v450 = vunpack.c.l.b16 %v167
    %v451 = vunpack.c.h.b16 %v167
    %v452 = vunpack.c.l.b16 %v168
    %v453 = vunpack.c.h.b16 %v168
    %v454 = vunpack.c.l.b16 %v169
    %v455 = vunpack.c.h.b16 %v169
    %v456 = vunpack.c.l.b16 %v170
    %v457 = vunpack.c.h.b16 %v170
    %v458 = vunpack.c.l.b16 %v171
    %v459 = vunpack.c.h.b16 %v171
    %v460 = vunpack.c.l.b16 %v172
    %v461 = vunpack.c.h.b16 %v172
    %v462 = vunpack.c.l.b16 %v173
    %v463 = vunpack.c.h.b16 %v173
    %v464 = vunpack.c.l.b16 %v174
    %v465 = vunpack.c.h.b16 %v174
    %v466 = vunpack.c.l.b16 %v175
    %v467 = vunpack.c.h.b16 %v175
    %v468 = vunpack.c.l.b16 %v176
    %v469 = vunpack.c.h.b16 %v176
    %v470 = vunpack.c.l.b16 %v177
    %v471 = vunpack.c.h.b16 %v177
    %v472 = vunpack.c.l.b16 %v178
    %v473 = vunpack.c.h.b16 %v178
    %v474 = vunpack.c.l.b16 %v179
    %v475 = vunpack.c.h.b16 %v179
    %v476 = vunpack.c.l.b16 %v180
    %v477 = vunpack.c.h.b16 %v180
    %v478 = vunpack.c.l.b16 %v181
    %v479 = vunpack.c.h.b16 %v181
    %v480 = vunpack.c.l.b16 %v182
    %v481 = vunpack.c.h.b16 %v182
    %v482 = vunpack.c.l.b16 %v183
    %v483 = vunpack.c.h.b16 %v183
    %v484 = vunpack.c.l.b16 %v184
    %v485 = vunpack.c.h.b16 %v184
    %v486 = vunpack.c.l.b16 %v185
    %v487 = vunpack.c.h.b16 %v185
    %v488 = vunpack.c.l.b16 %v186
    %v489 = vunpack.c.h.b16 %v186
    %v490 = vunpack.c.l.b16 %v187
    %v491 = vunpack.c.h.b16 %v187
    %v492 = vunpack.c.l.b16 %v188
    %v493 = vunpack.c.h.b16 %v188
    %v494 = vunpack.c.l.b16 %v189
    %v495 = vunpack.c.h.b16 %v189
    %v496 = vunpack.c.l.b16 %v190
    %v497 = vunpack.c.h.b16 %v190
    %v498 = vunpack.c.l.b16 %v191
    %v499 = vunpack.c.h.b16 %v191
    %v500 = vunpack.c.l.b16 %v192
    %v501 = vunpack.c.h.b16 %v192
    %v502 = vunpack.c.l.b16 %v193
    %v503 = vunpack.c.h.b16 %v193
    %v504 = vunpack.c.l.b16 %v194
    %v505 = vunpack.c.h.b16 %v194
    %v506 = vunpack.c.l.b16 %v195
    %v507 = vunpack.c.h.b16 %v195
    %v508 = vunpack.c.l.b16 %v196
    %v509 = vunpack.c.h.b16 %v196
    %v510 = vunpack.c.l.b16 %v197
    %v511 = vunpack.c.h.b16 %v197
    %v512 = vunpack.c.l.b16 %v198
    %v513 = vunpack.c.h.b16 %v198
    %v514 = vunpack.c.l.b16 %v199
    %v515 = vunpack.c.h.b16 %v199
    %v516 = vunpack.c.l.b16 %v200
    %v517 = vunpack.c.h.b16 %v200
    %v518 = vunpack.c.l.b16 %v201
    %v519 = vunpack.c.h.b16 %v201
    %v520 = vunpack.c.l.b16 %v202
    %v521 = vunpack.c.h.b16 %v202
    %v522 = vunpack.c.l.b16 %v203
    %v523 = vunpack.c.h.b16 %v203
    %v524 = vunpack.c.l.b16 %v204
    %v525 = vunpack.c.h.b16 %v204
    %v526 = vunpack.c.l.b16 %v205
    %v527 = vunpack.c.h.b16 %v205
    %v528 = vunpack.c.l.b16 %v206
    %v529 = vunpack.c.h.b16 %v206
    %v530 = vunpack.c.l.b16 %v207
    %v531 = vunpack.c.h.b16 %v207
    %v532 = vunpack.c.l.b16 %v208
    %v533 = vunpack.c.h.b16 %v208
    %v534 = vunpack.c.l.b16 %v209
    %v535 = vunpack.c.h.b16 %v209
    %v536 = vunpack.c.l.b16 %v210
    %v537 = vunpack.c.h.b16 %v210
    %v538 = vunpack.c.l.b16 %v211
    %v539 = vunpack.c.h.b16 %v211
    %v540 = vunpack.c.l.b16 %v212
    %v541 = vunpack.c.h.b16 %v212
    %v542 = vunpack.c.l.b16 %v213
    %v543 = vunpack.c.h.b16 %v213
    %v544 = vunpack.c.l.b16 %v214
    %v545 = vunpack.c.h.b16 %v214
    %v546 = vunpack.c.l.b16 %v215
    %v547 = vunpack.c.h.b16 %v215
    %v548 = vunpack.c.l.b16 %v216
    %v549 = vunpack.c.h.b16 %v216
    %v550 = vunpack.c.l.b16 %v217
    %v551 = vunpack.c.h.b16 %v217
    %v552 = vunpack.c.l.b16 %v218
    %v553 = vunpack.c.h.b16 %v218
    %v554 = vunpack.c.l.b16 %v219
    %v555 = vunpack.c.h.b16 %v219
    %v556 = vunpack.c.l.b16 %v220
    %v557 = vunpack.c.h.b16 %v220
    %v558 = vunpack.c.l.b16 %v221
    %v559 = vunpack.c.h.b16 %v221
    %v560 = vunpack.c.l.b16 %v222
    %v561 = vunpack.c.h.b16 %v222
    %v562 = vunpack.c.l.b16 %v223
    %v563 = vunpack.c.h.b16 %v223
    %v564 = vunpack.c.l.b16 %v224
    %v565 = vunpack.c.h.b16 %v224
    %v566 = vunpack.c.l.b16 %v225
    %v567 = vunpack.c.h.b16 %v225
    %v568 = vunpack.c.l.b16 %v226
    %v569 = vunpack.c.h.b16 %v226
    %v570 = vunpack.c.l.b16 %v227
    %v571 = vunpack.c.h.b16 %v227
    %v572 = vunpack.c.l.b16 %v228
    %v573 = vunpack.c.h.b16 %v228
    %v574 = vunpack.c.l.b16 %v229
    %v575 = vunpack.c.h.b16 %v229
    %v576 = vunpack.c.l.b16 %v230
    %v577 = vunpack.c.h.b16 %v230
    %v578 = vunpack.c.l.b16 %v231
    %v579 = vunpack.c.h.b16 %v231
    %v580 = vunpack.c.l.b16 %v232
    %v581 = vunpack.c.h.b16 %v232
    %v582 = vunpack.c.l.b16 %v233
    %v583 = vunpack.c.h.b16 %v233
    %v584 = vunpack.c.l.b16 %v234
    %v585 = vunpack.c.h.b16 %v234
    %v586 = vunpack.c.l.b16 %v235
    %v587 = vunpack.c.h.b16 %v235
    %v588 = vunpack.c.l.b16 %v236
    %v589 = vunpack.c.h.b16 %v236
    %v590 = vunpack.c.l.b16 %v237
    %v591 = vunpack.c.h.b16 %v237
    %v592 = vunpack.c.l.b16 %v238
    %v593 = vunpack.c.h.b16 %v238
    %v594 = vunpack.c.l.b16 %v239
    %v595 = vunpack.c.h.b16 %v239
    %v596 = vunpack.c.l.b16 %v240
    %v597 = vunpack.c.h.b16 %v240
    %v598 = vunpack.c.l.b16 %v241
    %v599 = vunpack.c.h.b16 %v241
    %v600 = vunpack.c.l.b16 %v242
    %v601 = vunpack.c.h.b16 %v242
    %v602 = vunpack.c.l.b16 %v243
    %v603 = vunpack.c.h.b16 %v243
    %v604 = vunpack.c.l.b16 %v244
    %v605 = vunpack.c.h.b16 %v244
    %v606 = vunpack.c.l.b16 %v245
    %v607 = vunpack.c.h.b16 %v245
    %v608 = vunpack.c.l.b16 %v246
    %v609 = vunpack.c.h.b16 %v246
    %v610 = vunpack.c.l.b16 %v247
    %v611 = vunpack.c.h.b16 %v247
    %v612 = vunpack.c.l.b16 %v248
    %v613 = vunpack.c.h.b16 %v248
    %v614 = vunpack.c.l.b16 %v249
    %v615 = vunpack.c.h.b16 %v249
    %v616 = vunpack.c.l.b16 %v250
    %v617 = vunpack.c.h.b16 %v250
    %v618 = vunpack.c.l.b16 %v251
    %v619 = vunpack.c.h.b16 %v251
    %v620 = vpack.c.b16 %v404, %v396
    %v621 = vpack.c.b16 %v405, %v397
    %v622 = vpack.c.b16 %v406, %v398
    %v623 = vpack.c.b16 %v407, %v399
    %v624 = vpack.c.b16 %v408, %v400
    %v625 = vpack.c.b16 %v409, %v401
    %v626 = vpack.c.b16 %v410, %v402
    %v627 = vpack.c.b16 %v411, %v403
    %v628 = vpack.c.b16 %v420, %v412
    %v629 = vpack.c.b16 %v421, %v413
    %v630 = vpack.c.b16 %v422, %v414
    %v631 = vpack.c.b16 %v423, %v415
    %v632 = vpack.c.b16 %v424, %v416
    %v633 = vpack.c.b16 %v425, %v417
    %v634 = vpack.c.b16 %v426, %v418
    %v635 = vpack.c.b16 %v427, %v419
    %v636 = vpack.c.b16 %v436, %v428
    %v637 = vpack.c.b16 %v437, %v429
    %v638 = vpack.c.b16 %v438, %v430
    %v639 = vpack.c.b16 %v439, %v431
    %v640 = vpack.c.b16 %v440, %v432
    %v641 = vpack.c.b16 %v441, %v433
    %v642 = vpack.c.b16 %v442, %v434
    %v643 = vpack.c.b16 %v443, %v435
    %v644 = vpack.c.b16 %v452, %v444
    %v645 = vpack.c.b16 %v453, %v445
    %v646 = vpack.c.b16 %v454, %v446
    %v647 = vpack.c.b16 %v455, %v447
    %v648 = vpack.c.b16 %v456, %v448
    %v649 = vpack.c.b16 %v457, %v449
    %v650 = vpack.c.b16 %v458, %v450
    %v651 = vpack.c.b16 %v459, %v451
    %v652 = vpack.c.b16 %v468, %v460
    %v653 = vpack.c.b16 %v469, %v461
    %v654 = vpack.c.b16 %v470, %v462
    %v655 = vpack.c.b16 %v471, %v463
    %v656 = vpack.c.b16 %v472, %v464
    %v657 = vpack.c.b16 %v473, %v465
    %v658 = vpack.c.b16 %v474, %v466
    %v659 = vpack.c.b16 %v475, %v467
    %v660 = vpack.c.b16 %v484, %v476
    %v661 = vpack.c.b16 %v485, %v477
    %v662 = vpack.c.b16 %v486, %v478
    %v663 = vpack.c.b16 %v487, %v479
    %v664 = vpack.c.b16 %v488, %v480
    %v665 = vpack.c.b16 %v489, %v481
    %v666 = vpack.c.b16 %v490, %v482
    %v667 = vpack.c.b16 %v491, %v483
    %v668 = vpack.c.b16 %v500, %v492
    %v669 = vpack.c.b16 %v501, %v493
    %v670 = vpack.c.b16 %v502, %v494
    %v671 = vpack.c.b16 %v503, %v495
    %v672 = vpack.c.b16 %v504, %v496
    %v673 = vpack.c.b16 %v505, %v497
    %v674 = vpack.c.b16 %v506, %v498
    %v675 = vpack.c.b16 %v507, %v499
    %v676 = vpack.c.b16 %v516, %v508
    %v677 = vpack.c.b16 %v517, %v509
    %v678 = vpack.c.b16 %v518, %v510
    %v679 = vpack.c.b16 %v519, %v511
    %v680 = vpack.c.b16 %v520, %v512
    %v681 = vpack.c.b16 %v521, %v513
    %v682 = vpack.c.b16 %v522, %v514
    %v683 = vpack.c.b16 %v523, %v515
    %v684 = vpack.c.b16 %v532, %v524
    %v685 = vpack.c.b16 %v533, %v525
    %v686 = vpack.c.b16 %v534, %v526
    %v687 = vpack.c.b16 %v535, %v527
    %v688 = vpack.c.b16 %v536, %v528
    %v689 = vpack.c.b16 %v537, %v529
    %v690 = vpack.c.b16 %v538, %v530
    %v691 = vpack.c.b16 %v539, %v531
    %v692 = vpack.c.b16 %v548, %v540
    %v693 = vpack.c.b16 %v549, %v541
    %v694 = vpack.c.b16 %v550, %v542
    %v695 = vpack.c.b16 %v551, %v543
    %v696 = vpack.c.b16 %v552, %v544
    %v697 = vpack.c.b16 %v553, %v545
    %v698 = vpack.c.b16 %v554, %v546
    %v699 = vpack.c.b16 %v555, %v547
    %v700 = vpack.c.b16 %v564, %v556
    %v701 = vpack.c.b16 %v565, %v557
    %v702 = vpack.c.b16 %v566, %v558
    %v703 = vpack.c.b16 %v567, %v559
    %v704 = vpack.c.b16 %v568, %v560
    %v705 = vpack.c.b16 %v569, %v561
    %v706 = vpack.c.b16 %v570, %v562
    %v707 = vpack.c.b16 %v571, %v563
    %v708 = vpack.c.b16 %v580, %v572
    %v709 = vpack.c.b16 %v581, %v573
    %v710 = vpack.c.b16 %v582, %v574
    %v711 = vpack.c.b16 %v583, %v575
    %v712 = vpack.c.b16 %v584, %v576
    %v713 = vpack.c.b16 %v585, %v577
    %v714 = vpack.c.b16 %v586, %v578
    %v715 = vpack.c.b16 %v587, %v579
    %v716 = vpack.c.b16 %v596, %v588
    %v717 = vpack.c.b16 %v597, %v589
    %v718 = vpack.c.b16 %v598, %v590
    %v719 = vpack.c.b16 %v599, %v591
    %v720 = vpack.c.b16 %v600, %v592
    %v721 = vpack.c.b16 %v601, %v593
    %v722 = vpack.c.b16 %v602, %v594
    %v723 = vpack.c.b16 %v603, %v595
    %v724 = vpack.c.b16 %v612, %v604
    %v725 = vpack.c.b16 %v613, %v605
    %v726 = vpack.c.b16 %v614, %v606
    %v727 = vpack.c.b16 %v615, %v607
    %v728 = vpack.c.b16 %v616, %v608
    %v729 = vpack.c.b16 %v617, %v609
    %v730 = vpack.c.b16 %v618, %v610
    %v731 = vpack.c.b16 %v619, %v611
    %v845 = vsel %vm72, %v282, 0
    %847 = vmatpush.bf16.msra.mxu0 %v676
    %848 = vmatpush.bf16.msra.mxu0 %v668
    %849 = vmatpush.bf16.msra.mxu0 %v660
    %850 = vmatpush.bf16.msra.mxu0 %v652
    %851 = vmatpush.bf16.msra.mxu0 %v644
    %852 = vmatpush.bf16.msra.mxu0 %v636
    %853 = vmatpush.bf16.msra.mxu0 %v628
    %854 = vmatpush.bf16.msra.mxu0 %v620
    %855 = vmatmul.bf16.gmra.mxu0 %v281
    %v856 = vpop.f32.mrf.mxu0
    %v857 = vadd.f32 %v254, %v856
    %v858 = vpop.f32.mrf.mxu0
    %859 = vdwg.mxu0
    %860 = vmatpush.bf16.msra.mxu0 0
    %861 = vmatpush.bf16.msra.mxu0 0
    %862 = vmatpush.bf16.msra.mxu0 %v724
    %863 = vmatpush.bf16.msra.mxu0 %v716
    %864 = vmatpush.bf16.msra.mxu0 %v708
    %865 = vmatpush.bf16.msra.mxu0 %v700
    %866 = vmatpush.bf16.msra.mxu0 %v692
    %867 = vmatpush.bf16.msra.mxu0 %v684
    %868 = vmatmul.bf16.gmra.mxu0 %v845
    %v869 = vpop.f32.mrf.mxu0
    %v870 = vadd.f32 %v857, %v869
    %v871 = vpop.f32.mrf.mxu0
    %872 = vdwg.mxu0
    %873 = vmatpush.bf16.msra.mxu0 %v677
    %874 = vmatpush.bf16.msra.mxu0 %v669
    %875 = vmatpush.bf16.msra.mxu0 %v661
    %876 = vmatpush.bf16.msra.mxu0 %v653
    %877 = vmatpush.bf16.msra.mxu0 %v645
    %878 = vmatpush.bf16.msra.mxu0 %v637
    %879 = vmatpush.bf16.msra.mxu0 %v629
    %880 = vmatpush.bf16.msra.mxu0 %v621
    %881 = vmatmul.bf16.gmra.mxu0 %v281
    %v882 = vpop.f32.mrf.mxu0
    %v883 = vadd.f32 %v255, %v882
    %v884 = vpop.f32.mrf.mxu0
    %885 = vdwg.mxu0
    %886 = vmatpush.bf16.msra.mxu0 0
    %887 = vmatpush.bf16.msra.mxu0 0
    %888 = vmatpush.bf16.msra.mxu0 %v725
    %889 = vmatpush.bf16.msra.mxu0 %v717
    %890 = vmatpush.bf16.msra.mxu0 %v709
    %891 = vmatpush.bf16.msra.mxu0 %v701
    %892 = vmatpush.bf16.msra.mxu0 %v693
    %893 = vmatpush.bf16.msra.mxu0 %v685
    %894 = vmatmul.bf16.gmra.mxu0 %v845
    %v895 = vpop.f32.mrf.mxu0
    %v896 = vadd.f32 %v883, %v895
    %v897 = vpop.f32.mrf.mxu0
    %898 = vdwg.mxu0
    %899 = vmatpush.bf16.msra.mxu0 %v678
    %900 = vmatpush.bf16.msra.mxu0 %v670
    %901 = vmatpush.bf16.msra.mxu0 %v662
    %902 = vmatpush.bf16.msra.mxu0 %v654
    %903 = vmatpush.bf16.msra.mxu0 %v646
    %904 = vmatpush.bf16.msra.mxu0 %v638
    %905 = vmatpush.bf16.msra.mxu0 %v630
    %906 = vmatpush.bf16.msra.mxu0 %v622
    %907 = vmatmul.bf16.gmra.mxu0 %v281
    %v908 = vpop.f32.mrf.mxu0
    %v909 = vadd.f32 %v256, %v908
    %v910 = vpop.f32.mrf.mxu0
    %911 = vdwg.mxu0
    %912 = vmatpush.bf16.msra.mxu0 0
    %913 = vmatpush.bf16.msra.mxu0 0
    %914 = vmatpush.bf16.msra.mxu0 %v726
    %915 = vmatpush.bf16.msra.mxu0 %v718
    %916 = vmatpush.bf16.msra.mxu0 %v710
    %917 = vmatpush.bf16.msra.mxu0 %v702
    %918 = vmatpush.bf16.msra.mxu0 %v694
    %919 = vmatpush.bf16.msra.mxu0 %v686
    %920 = vmatmul.bf16.gmra.mxu0 %v845
    %v921 = vpop.f32.mrf.mxu0
    %v922 = vadd.f32 %v909, %v921
    %v923 = vpop.f32.mrf.mxu0
    %924 = vdwg.mxu0
    %925 = vmatpush.bf16.msra.mxu0 %v679
    %926 = vmatpush.bf16.msra.mxu0 %v671
    %927 = vmatpush.bf16.msra.mxu0 %v663
    %928 = vmatpush.bf16.msra.mxu0 %v655
    %929 = vmatpush.bf16.msra.mxu0 %v647
    %930 = vmatpush.bf16.msra.mxu0 %v639
    %931 = vmatpush.bf16.msra.mxu0 %v631
    %932 = vmatpush.bf16.msra.mxu0 %v623
    %933 = vmatmul.bf16.gmra.mxu0 %v281
    %v934 = vpop.f32.mrf.mxu0
    %v935 = vadd.f32 %v257, %v934
    %v936 = vpop.f32.mrf.mxu0
    %937 = vdwg.mxu0
    %938 = vmatpush.bf16.msra.mxu0 0
    %939 = vmatpush.bf16.msra.mxu0 0
    %940 = vmatpush.bf16.msra.mxu0 %v727
    %941 = vmatpush.bf16.msra.mxu0 %v719
    %942 = vmatpush.bf16.msra.mxu0 %v711
    %943 = vmatpush.bf16.msra.mxu0 %v703
    %944 = vmatpush.bf16.msra.mxu0 %v695
    %945 = vmatpush.bf16.msra.mxu0 %v687
    %946 = vmatmul.bf16.gmra.mxu0 %v845
    %v947 = vpop.f32.mrf.mxu0
    %v948 = vadd.f32 %v935, %v947
    %v949 = vpop.f32.mrf.mxu0
    %950 = vdwg.mxu0
    %951 = vmatpush.bf16.msra.mxu0 %v680
    %952 = vmatpush.bf16.msra.mxu0 %v672
    %953 = vmatpush.bf16.msra.mxu0 %v664
    %954 = vmatpush.bf16.msra.mxu0 %v656
    %955 = vmatpush.bf16.msra.mxu0 %v648
    %956 = vmatpush.bf16.msra.mxu0 %v640
    %957 = vmatpush.bf16.msra.mxu0 %v632
    %958 = vmatpush.bf16.msra.mxu0 %v624
    %959 = vmatmul.bf16.gmra.mxu0 %v281
    %v960 = vpop.f32.mrf.mxu0
    %v961 = vadd.f32 %v258, %v960
    %v962 = vpop.f32.mrf.mxu0
    %963 = vdwg.mxu0
    %964 = vmatpush.bf16.msra.mxu0 0
    %965 = vmatpush.bf16.msra.mxu0 0
    %966 = vmatpush.bf16.msra.mxu0 %v728
    %967 = vmatpush.bf16.msra.mxu0 %v720
    %968 = vmatpush.bf16.msra.mxu0 %v712
    %969 = vmatpush.bf16.msra.mxu0 %v704
    %970 = vmatpush.bf16.msra.mxu0 %v696
    %971 = vmatpush.bf16.msra.mxu0 %v688
    %972 = vmatmul.bf16.gmra.mxu0 %v845
    %v973 = vpop.f32.mrf.mxu0
    %v974 = vadd.f32 %v961, %v973
    %v975 = vpop.f32.mrf.mxu0
    %976 = vdwg.mxu0
    %977 = vmatpush.bf16.msra.mxu0 %v681
    %978 = vmatpush.bf16.msra.mxu0 %v673
    %979 = vmatpush.bf16.msra.mxu0 %v665
    %980 = vmatpush.bf16.msra.mxu0 %v657
    %981 = vmatpush.bf16.msra.mxu0 %v649
    %982 = vmatpush.bf16.msra.mxu0 %v641
    %983 = vmatpush.bf16.msra.mxu0 %v633
    %984 = vmatpush.bf16.msra.mxu0 %v625
    %985 = vmatmul.bf16.gmra.mxu0 %v281
    %v986 = vpop.f32.mrf.mxu0
    %v987 = vadd.f32 %v259, %v986
    %v988 = vpop.f32.mrf.mxu0
    %989 = vdwg.mxu0
    %990 = vmatpush.bf16.msra.mxu0 0
    %991 = vmatpush.bf16.msra.mxu0 0
    %992 = vmatpush.bf16.msra.mxu0 %v729
    %993 = vmatpush.bf16.msra.mxu0 %v721
    %994 = vmatpush.bf16.msra.mxu0 %v713
    %995 = vmatpush.bf16.msra.mxu0 %v705
    %996 = vmatpush.bf16.msra.mxu0 %v697
    %997 = vmatpush.bf16.msra.mxu0 %v689
    %998 = vmatmul.bf16.gmra.mxu0 %v845
    %v999 = vpop.f32.mrf.mxu0
    %v1000 = vadd.f32 %v987, %v999
    %v1001 = vpop.f32.mrf.mxu0
    %1002 = vdwg.mxu0
    %1003 = vmatpush.bf16.msra.mxu0 %v682
    %1004 = vmatpush.bf16.msra.mxu0 %v674
    %1005 = vmatpush.bf16.msra.mxu0 %v666
    %1006 = vmatpush.bf16.msra.mxu0 %v658
    %1007 = vmatpush.bf16.msra.mxu0 %v650
    %1008 = vmatpush.bf16.msra.mxu0 %v642
    %1009 = vmatpush.bf16.msra.mxu0 %v634
    %1010 = vmatpush.bf16.msra.mxu0 %v626
    %1011 = vmatmul.bf16.gmra.mxu0 %v281
    %v1012 = vpop.f32.mrf.mxu0
    %v1013 = vadd.f32 %v260, %v1012
    %v1014 = vpop.f32.mrf.mxu0
    %1015 = vdwg.mxu0
    %1016 = vmatpush.bf16.msra.mxu0 0
    %1017 = vmatpush.bf16.msra.mxu0 0
    %1018 = vmatpush.bf16.msra.mxu0 %v730
    %1019 = vmatpush.bf16.msra.mxu0 %v722
    %1020 = vmatpush.bf16.msra.mxu0 %v714
    %1021 = vmatpush.bf16.msra.mxu0 %v706
    %1022 = vmatpush.bf16.msra.mxu0 %v698
    %1023 = vmatpush.bf16.msra.mxu0 %v690
    %1024 = vmatmul.bf16.gmra.mxu0 %v845
    %v1025 = vpop.f32.mrf.mxu0
    %v1026 = vadd.f32 %v1013, %v1025
    %v1027 = vpop.f32.mrf.mxu0
    %1028 = vdwg.mxu0
    %1029 = vmatpush.bf16.msra.mxu0 %v683
    %1030 = vmatpush.bf16.msra.mxu0 %v675
    %1031 = vmatpush.bf16.msra.mxu0 %v667
    %1032 = vmatpush.bf16.msra.mxu0 %v659
    %1033 = vmatpush.bf16.msra.mxu0 %v651
    %1034 = vmatpush.bf16.msra.mxu0 %v643
    %1035 = vmatpush.bf16.msra.mxu0 %v635
    %1036 = vmatpush.bf16.msra.mxu0 %v627
    %1037 = vmatmul.bf16.gmra.mxu0 %v281
    %v1038 = vpop.f32.mrf.mxu0
    %v1039 = vadd.f32 %v261, %v1038
    %v1040 = vpop.f32.mrf.mxu0
    %1041 = vdwg.mxu0
    %1042 = vmatpush.bf16.msra.mxu0 0
    %1043 = vmatpush.bf16.msra.mxu0 0
    %1044 = vmatpush.bf16.msra.mxu0 %v731
    %1045 = vmatpush.bf16.msra.mxu0 %v723
    %1046 = vmatpush.bf16.msra.mxu0 %v715
    %1047 = vmatpush.bf16.msra.mxu0 %v707
    %1048 = vmatpush.bf16.msra.mxu0 %v699
    %1049 = vmatpush.bf16.msra.mxu0 %v691
    %1050 = vmatmul.bf16.gmra.mxu0 %v845
    %v1051 = vpop.f32.mrf.mxu0
    %v1052 = vadd.f32 %v1039, %v1051
    %v1053 = vpop.f32.mrf.mxu0
    %1054 = vdwg.mxu0
    %v1063 = vrot.slane %v896, 6
    %v1064 = vrot.slane %v922, 4
    %v1065 = vrot.slane %v948, 2
    %v1066 = vrot.slane %v1000, 6
    %v1067 = vrot.slane %v1026, 4
    %v1068 = vrot.slane %v1052, 2
    %vm1069 = vcmask 1041408
    %v1070 = vsel %vm1069, %v870, %v1063
    %vm1071 = vcmask 1045508
    %v1072 = vsel %vm1071, %v1064, %v1065
    %vm1073 = vcmask 1043456
    %v1074 = vsel %vm1073, %v1070, %v1072
    %v1075 = vsel %vm1069, %v974, %v1066
    %v1076 = vsel %vm1071, %v1067, %v1068
    %v1077 = vsel %vm1073, %v1075, %v1076
    %1080 = vst [vmem:[#allocation2] sm:$0xff] %v1074
    %1081 = vst [vmem:[#allocation2 + $0x8] sm:$0xff] %v1077
    // Predicated region
    $region14: #{neural_net_forward.17} parent=1 // pred_check
      _
    $region15: #{neural_net_forward.17} parent=1 // pred_check_branch
      %1083 = sbr.rel (0) target = $region17
    $region16: #{neural_net_forward.17} parent=1 // pred_region
      %1085 = vsyncadd [#allocation3], 0
      %s1087 = sshll.u32 [#allocation2], 4
      %s1088 = int_to_ptr.vmem [resolvable:$true] %s1087
      %s1089 = sshll.u32 %s3, 4
      %s1090 = int_to_ptr.hbm [resolvable:$true] %s1089
      %1092 = dma.vmem_to_hbm [thread:$0]  %s1088, 256, %s1090, [#allocation3]
    $region17: #{neural_net_forward.17} parent=1 // pred_fallthru
      _
    // Predicated region
    $region18: #{neural_net_forward.17} parent=1 // pred_check
      _
    $region19: #{neural_net_forward.17} parent=1 // pred_check_branch
      %1094 = sbr.rel (0) target = $region21
    $region20: #{neural_net_forward.17} parent=1 // pred_region
      %1096 = dma.done [#allocation3], 256
    $region21: #{neural_net_forward.17} parent=1 // pred_fallthru
      _
    %1097 = vsyncpa [#allocation3], 1

</llo_original>
